<compile_context>
chip_gen: v7x
topology: tpu7x:2x2x1
jax: 0.10.0
libtpu: 0.0.40
codegen_flags: <defaults>
</compile_context>

<pallas_src>
import math
from functools import partial

import jax
import jax.numpy as jnp
from jax import lax
from jax.experimental import pallas as pl
from jax.experimental.pallas import tpu as pltpu

NEG_BIG = -1e30  # additive key-padding mask value (avoids NaN of -inf)


def _round_up(x, m):
    return ((x + m - 1) // m) * m


# ---------------------------------------------------------------------------
# In-kernel helpers (traced inside the Pallas kernel)
# ---------------------------------------------------------------------------
def _dotT(a, w):
    # a: [M, K], w: [N, K]  ->  a @ w.T : [M, N]   (MXU matmul, f32 accumulate)
    return lax.dot_general(a, w, (((1,), (1,)), ((), ())),
                           preferred_element_type=jnp.float32)


def _layer_norm(x, g, b, true_d, eps=1e-5):
    # Feature dim is zero-padded to Dp; padded entries of x are exactly 0, so
    # sums over the padded width equal sums over the true width.  Normalize
    # with the TRUE feature count (E[x^2] - mu^2 formulation).
    inv_d = 1.0 / true_d
    mu = jnp.sum(x, axis=-1, keepdims=True) * inv_d
    msq = jnp.sum(x * x, axis=-1, keepdims=True) * inv_d
    var = msq - mu * mu
    return (x - mu) * lax.rsqrt(var + eps) * g + b


# ---------------------------------------------------------------------------
# Fused Pallas kernel: all decoder layers + mu/logvar head, per batch block
# ---------------------------------------------------------------------------
def fused_forward_kernel(x_ref, tbias_ref, src_ref, sbias_ref, mcol_ref,
                         wqkv_ref, bqkv_ref, wo1_ref, bo1_ref, g1_ref, be1_ref,
                         wcq_ref, bcq_ref, wckv_ref, bckv_ref,
                         wo2_ref, bo2_ref, g2_ref, be2_ref,
                         w1_ref, b1_ref, w2_ref, b2_ref, g3_ref, be3_ref,
                         wmv_ref, bmv_ref, out_ref,
                         *, heads, num_layers, true_d, bblk, t_pad, s_pad):
    x = x_ref[...]                       # [M, Dp] f32 residual (M = bblk*t_pad)
    src = src_ref[...]                   # [Ms, Dp] bf16 (Ms = bblk*s_pad)
    tb = tbias_ref[...]                  # [bblk*heads, 1, t_pad] additive bias
    sb = sbias_ref[...]                  # [bblk*heads, 1, s_pad] additive bias
    mcol = mcol_ref[...]                 # [M, 1] target mask column
    Dp = x.shape[-1]
    hdp = Dp // heads                    # per-head (padded) width

    def mha(q2, k2, v2, bias, tq, tk):
        """q2: [bblk*tq, Dp], k2/v2: [bblk*tk, Dp], bias: [bblk*heads, 1, tk].
        Head split/merge via static (row-8 / lane-32 aligned) slices + stack;
        the attention core is ONE batched rank-3 einsum over bblk*heads."""
        def split(a, tn):
            parts = [a[b * tn:(b + 1) * tn, h * hdp:(h + 1) * hdp]
                     for b in range(bblk) for h in range(heads)]
            return jnp.stack(parts, axis=0).astype(jnp.bfloat16)   # [BH, tn, hdp]
        qh, kh, vh = split(q2, tq), split(k2, tk), split(v2, tk)
        s = jnp.einsum('hqd,hkd->hqk', qh, kh,
                       preferred_element_type=jnp.float32) + bias  # [BH, tq, tk]
        m = jnp.max(s, axis=-1, keepdims=True)
        e = jnp.exp(s - m)
        p = e * pl.reciprocal(jnp.sum(e, axis=-1, keepdims=True), approx=True)
        o = jnp.einsum('hqk,hkd->hqd', p.astype(jnp.bfloat16), vh,
                       preferred_element_type=jnp.float32)         # [BH, tq, hdp]
        rows = [jnp.concatenate([o[b * heads + h] for h in range(heads)], axis=-1)
                for b in range(bblk)]
        return jnp.concatenate(rows, axis=0)                       # [bblk*tq, Dp]

    for l in range(num_layers):          # static unroll over layers (weights resident)
        # ---- self attention + residual + post-LayerNorm ----
        xb = x.astype(jnp.bfloat16)
        qkv = _dotT(xb, wqkv_ref[l]) + bqkv_ref[l]         # one [M, 3Dp] matmul
        a = mha(qkv[:, 0:Dp], qkv[:, Dp:2 * Dp], qkv[:, 2 * Dp:3 * Dp],
                tb, t_pad, t_pad)
        a = _dotT(a.astype(jnp.bfloat16), wo1_ref[l]) + bo1_ref[l]
        x = _layer_norm(a + x, g1_ref[l], be1_ref[l], true_d)

        # ---- encoder-decoder (cross) attention + residual + post-LayerNorm ----
        xb = x.astype(jnp.bfloat16)
        q = _dotT(xb, wcq_ref[l]) + bcq_ref[l]             # Q-scale folded in
        kv = _dotT(src, wckv_ref[l]) + bckv_ref[l]         # one [Ms, 2Dp] matmul
        a = mha(q, kv[:, 0:Dp], kv[:, Dp:2 * Dp], sb, t_pad, s_pad)
        a = _dotT(a.astype(jnp.bfloat16), wo2_ref[l]) + bo2_ref[l]
        x = _layer_norm(a + x, g2_ref[l], be2_ref[l], true_d)

        # ---- position-wise feed forward + residual + post-LayerNorm ----
        xb = x.astype(jnp.bfloat16)
        h = jnp.maximum(_dotT(xb, w1_ref[l]) + b1_ref[l], 0.0)
        y = _dotT(h.astype(jnp.bfloat16), w2_ref[l]) + b2_ref[l]
        x = _layer_norm(x + y, g3_ref[l], be3_ref[l], true_d)

    # ---- fused mu/logvar head, masked; one lane-dense [M, Pout] store ----
    out = (_dotT(x.astype(jnp.bfloat16), wmv_ref[...]) + bmv_ref[...]) * mcol
    out_ref[...] = out.astype(out_ref.dtype)


# ---------------------------------------------------------------------------
# pallas_call wrapper (single launch for the whole forward)
# ---------------------------------------------------------------------------
def transformer_posterior_forward(params, tgt_sents, tgt_masks, src_enc, src_masks):
    heads = params["heads"]
    L = params["num_layers"]
    D = params["latent_dim"]
    Dp = params["d_pad"]
    Pout = params["out_pad"]
    pad_idx = params["padding_idx"]

    B, T = tgt_sents.shape
    S = src_enc.shape[1]
    T_pad = _round_up(T, 8)
    S_pad = _round_up(S, 8)

    # ---- embedding + positional encoding gathers kept in plain XLA ----
    emb = params["embed"][tgt_sents]                               # [B, T, Dp]
    nonpad = (tgt_sents != pad_idx).astype(jnp.int32)
    positions = jnp.cumsum(nonpad, axis=1) * nonpad + pad_idx      # fairseq-style
    pos = params["pos_table"][positions]
    x0 = (math.sqrt(D) * emb + pos).astype(jnp.float32)            # dropout p=0

    # pad sequence dims to sublane multiples; padded keys masked via bias below
    x0 = jnp.pad(x0, ((0, 0), (0, T_pad - T), (0, 0)))
    tm = jnp.pad(tgt_masks.astype(jnp.float32), ((0, 0), (0, T_pad - T)))
    sm = jnp.pad(src_masks.astype(jnp.float32), ((0, 0), (0, S_pad - S)))
    srcp = jnp.pad(src_enc.astype(jnp.float32),
                   ((0, 0), (0, S_pad - S), (0, Dp - src_enc.shape[-1])))

    # additive key-padding biases, built once at final [B*heads, 1, Tk] shape
    t_bias = jnp.broadcast_to(((1.0 - tm) * NEG_BIG)[:, None, None, :],
                              (B, heads, 1, T_pad)).reshape(B * heads, 1, T_pad)
    s_bias = jnp.broadcast_to(((1.0 - sm) * NEG_BIG)[:, None, None, :],
                              (B, heads, 1, S_pad)).reshape(B * heads, 1, S_pad)

    x2d = x0.reshape(B * T_pad, Dp)
    src2d = srcp.reshape(B * S_pad, Dp).astype(jnp.bfloat16)
    mcol = tm.reshape(B * T_pad, 1)

    # batch-block size: largest divisor of B with Bblk*T_pad <= 256 rows
    # (fills MXU row tiles; on v7x with tiny B this trades grid parallelism
    #  for matmul height, which is the bigger win at these shapes).
    Bblk = 1
    for d in range(1, B + 1):
        if B % d == 0 and d * T_pad <= 256:
            Bblk = d
    nb = B // Bblk
    M = Bblk * T_pad
    Ms = Bblk * S_pad

    def _row_spec2(rows, cols):
        return pl.BlockSpec((rows, cols), lambda i: (i, 0))

    def _row_spec3(a, b_, c):
        return pl.BlockSpec((a, b_, c), lambda i: (i, 0, 0))

    def _const_spec(arr):
        nd = arr.ndim
        return pl.BlockSpec(arr.shape, lambda i, _n=nd: (0,) * _n)

    w_order = ["wqkv", "bqkv", "wo1", "bo1", "g1", "be1",
               "wcq", "bcq", "wckv", "bckv", "wo2", "bo2", "g2", "be2",
               "w1", "b1", "w2", "b2", "g3", "be3"]
    ws = [params["stk"][k] for k in w_order] + [params["wmv"], params["bmv"]]

    in_specs = ([_row_spec2(M, Dp),                      # x2d
                 _row_spec3(Bblk * heads, 1, T_pad),     # t_bias
                 _row_spec2(Ms, Dp),                     # src2d
                 _row_spec3(Bblk * heads, 1, S_pad),     # s_bias
                 _row_spec2(M, 1)]                       # mcol
                + [_const_spec(w) for w in ws])          # resident weights

    # explicit scoped-VMEM limit from the actual footprint (cap 48 MiB so the
    # same config leaves headroom inside v7x's 64 MiB physical VMEM).
    est = sum(int(w.size) * w.dtype.itemsize for w in ws) * 2       # dbl-buffered
    est += 2 * 4 * (M * Dp + Ms * Dp + M * Pout)                    # activations
    est += 8 << 20                                                  # intermediates
    vmem_limit = int(min(max(est, 32 << 20), 48 << 20))

    out2d = pl.pallas_call(
        partial(fused_forward_kernel, heads=heads, num_layers=L,
                true_d=float(D), bblk=Bblk, t_pad=T_pad, s_pad=S_pad),
        grid=(nb,),
        in_specs=in_specs,
        out_specs=_row_spec2(M, Pout),                   # lane-dense 128-wide store
        out_shape=jax.ShapeDtypeStruct((B * T_pad, Pout), jnp.float32),
        compiler_params=pltpu.CompilerParams(
            dimension_semantics=("parallel",),
            vmem_limit_bytes=vmem_limit),
    )(x2d, t_bias, src2d, s_bias, mcol, *ws)

    out = out2d.reshape(B, T_pad, Pout)[:, :T]
    mu = out[:, :, 0:D]
    logvar = out[:, :, D:2 * D]
    return mu, logvar


# ---------------------------------------------------------------------------
# Parameter construction: pad feature dims to 128 lanes, bake per-head layout
# and Q scaling into the weights, pre-split cross-attn weights, stack layers.
# ---------------------------------------------------------------------------
def _pad_head_rows(w, b, heads, hd, hdp, in_p):
    # [heads*hd, in] -> [heads*hdp, in_p] with each head's rows padded to hdp.
    out, inn = w.shape
    wp = jnp.zeros((heads, hdp, in_p), w.dtype)
    wp = wp.at[:, :hd, :inn].set(w.reshape(heads, hd, inn))
    bp = jnp.zeros((heads, hdp), b.dtype).at[:, :hd].set(b.reshape(heads, hd))
    return wp.reshape(heads * hdp, in_p), bp.reshape(1, heads * hdp)


def _pad_head_cols(w, heads, hd, hdp, out_p):
    # [out, heads*hd] -> [out_p, heads*hdp] matching the per-head padded layout.
    out, _ = w.shape
    wp = jnp.zeros((out_p, heads, hdp), w.dtype)
    wp = wp.at[:out, :, :hd].set(w.reshape(out, heads, hd))
    return wp.reshape(out_p, heads * hdp)


def _pad_plain(w, b, out_p, in_p):
    out, inn = w.shape
    wp = jnp.zeros((out_p, in_p), w.dtype).at[:out, :inn].set(w)
    bp = jnp.zeros((1, out_p), b.dtype).at[0, :out].set(b)
    return wp, bp


def _pad_vec(b, out_p):
    return jnp.zeros((1, out_p), b.dtype).at[0, :b.shape[0]].set(b)


def sinusoidal_table(num, dim, padding_idx):
    half = dim // 2
    s = math.log(10000.0) / (half - 1)
    freqs = jnp.exp(jnp.arange(half, dtype=jnp.float32) * -s)
    ang = jnp.arange(num, dtype=jnp.float32)[:, None] * freqs[None, :]
    table = jnp.concatenate([jnp.sin(ang), jnp.cos(ang)], axis=1)
    if dim % 2 == 1:
        table = jnp.concatenate([table, jnp.zeros((num, 1), jnp.float32)], axis=1)
    return table.at[padding_idx].set(0.0)


def init_params(key, vocab, embed_dim, hidden, num_layers, heads,
                padding_idx, max_length):
    D = embed_dim
    hd = D // heads
    Dp = _round_up(D, 128)
    Hp = _round_up(hidden, 128)
    Pout = _round_up(2 * D, 128)
    assert Dp % heads == 0  # TODO(synk): generalize per-head padding otherwise
    hdp = Dp // heads
    scale = hd ** -0.5

    keys = iter(jax.random.split(key, 8 + num_layers * 32))

    def lin(out_f, in_f, w_std=0.05, b_std=0.01):
        w = jax.random.normal(next(keys), (out_f, in_f), jnp.float32) * w_std
        b = jax.random.normal(next(keys), (out_f,), jnp.float32) * b_std
        return w, b

    ln_g = jnp.zeros((1, Dp), jnp.float32).at[0, :D].set(1.0)   # padded g = 0
    ln_b = jnp.zeros((1, Dp), jnp.float32)

    layers = []
    for _ in range(num_layers):
        wq, bq = lin(D, D); wk, bk = lin(D, D); wv, bv = lin(D, D)
        wo1, bo1 = lin(D, D)
        wcq, bcq = lin(D, D); wck, bck = lin(D, D); wcv, bcv = lin(D, D)
        wo2, bo2 = lin(D, D)
        w1, b1 = lin(hidden, D); w2, b2 = lin(D, hidden)

        # fold 1/sqrt(head_dim) attention scaling into the Q projections
        wq, bq = wq * scale, bq * scale
        wcq, bcq = wcq * scale, bcq * scale

        wq_p, bq_p = _pad_head_rows(wq, bq, heads, hd, hdp, Dp)
        wk_p, bk_p = _pad_head_rows(wk, bk, heads, hd, hdp, Dp)
        wv_p, bv_p = _pad_head_rows(wv, bv, heads, hd, hdp, Dp)
        wcq_p, bcq_p = _pad_head_rows(wcq, bcq, heads, hd, hdp, Dp)
        wck_p, bck_p = _pad_head_rows(wck, bck, heads, hd, hdp, Dp)
        wcv_p, bcv_p = _pad_head_rows(wcv, bcv, heads, hd, hdp, Dp)

        w1_p, b1_p = _pad_plain(w1, b1, Hp, Dp)
        w2_p, b2_p = _pad_plain(w2, b2, Dp, Hp)

        layers.append(dict(
            wqkv=jnp.concatenate([wq_p, wk_p, wv_p], axis=0),      # [3Dp, Dp]
            bqkv=jnp.concatenate([bq_p, bk_p, bv_p], axis=1),      # [1, 3Dp]
            wo1=_pad_head_cols(wo1, heads, hd, hdp, Dp), bo1=_pad_vec(bo1, Dp),
            g1=ln_g, be1=ln_b,
            wcq=wcq_p, bcq=bcq_p,                                   # pre-split
            wckv=jnp.concatenate([wck_p, wcv_p], axis=0),           # [2Dp, Dp]
            bckv=jnp.concatenate([bck_p, bcv_p], axis=1),           # [1, 2Dp]
            wo2=_pad_head_cols(wo2, heads, hd, hdp, Dp), bo2=_pad_vec(bo2, Dp),
            g2=ln_g, be2=ln_b,
            w1=w1_p, b1=b1_p, w2=w2_p, b2=b2_p, g3=ln_g, be3=ln_b))

    # fused mu/logvar head -> one lane-dense [Pout, Dp] projection
    wmu, bmu = lin(D, D)
    wlv, blv = lin(D, D)
    wmv = jnp.zeros((Pout, Dp), jnp.float32)
    wmv = wmv.at[:D, :D].set(wmu).at[D:2 * D, :D].set(wlv)
    bmv = jnp.zeros((1, Pout), jnp.float32)
    bmv = bmv.at[0, :D].set(bmu).at[0, D:2 * D].set(blv)

    emb = jax.random.uniform(next(keys), (vocab, D), jnp.float32, -0.1, 0.1)
    emb = emb.at[padding_idx].set(0.0)
    emb = jnp.pad(emb, ((0, 0), (0, Dp - D)))
    pos_table = jnp.pad(sinusoidal_table(max_length + 1, D, padding_idx),
                        ((0, 0), (0, Dp - D)))

    # stack per-layer params on a leading layer axis; matmul weights -> bf16
    bf16_keys = {"wqkv", "wo1", "wcq", "wckv", "wo2", "w1", "w2"}
    stk = {}
    for k in layers[0]:
        arr = jnp.stack([lp[k] for lp in layers], axis=0)
        if k in bf16_keys:
            arr = arr.astype(jnp.bfloat16)
        stk[k] = arr

    return dict(embed=emb, pos_table=pos_table, stk=stk,
                wmv=wmv.astype(jnp.bfloat16), bmv=bmv,
                padding_idx=padding_idx, num_layers=num_layers, heads=heads,
                latent_dim=D, d_pad=Dp, h_pad=Hp, out_pad=Pout)


# ---------------------------------------------------------------------------
if __name__ == "__main__":
    vocab_size, embed_dim, padding_idx = 20, 32, 0
    num_layers, latent_dim, hidden_size, heads = 2, 32, 64, 4
    max_length = 100
    B, T, S = 2, 8, 10

    key = jax.random.PRNGKey(0)
    pkey, k1, k2 = jax.random.split(key, 3)
    params = init_params(pkey, vocab_size, embed_dim, hidden_size,
                         num_layers, heads, padding_idx, max_length)

    # target tokens + mask (lengths 8 and 5), padded positions = padding_idx
    tgt_len = jnp.array([8, 5])
    tgt_masks = (jnp.arange(T)[None, :] < tgt_len[:, None]).astype(jnp.float32)
    tok = jax.random.randint(k1, (B, T), 1, vocab_size)
    tgt_sents = jnp.where(tgt_masks > 0, tok, padding_idx).astype(jnp.int32)

    # source encoder states + mask (lengths 10 and 7)
    src_len = jnp.array([10, 7])
    src_masks = (jnp.arange(S)[None, :] < src_len[:, None]).astype(jnp.float32)
    src_enc = jax.random.normal(k2, (B, S, latent_dim), jnp.float32) * src_masks[:, :, None]

    mu, logvar = transformer_posterior_forward(params, tgt_sents, tgt_masks,
                                               src_enc, src_masks)
    jax.block_until_ready((mu, logvar))
    assert mu.shape == (B, T, latent_dim) and logvar.shape == (B, T, latent_dim)
    assert bool(jnp.all(jnp.isfinite(mu))) and bool(jnp.all(jnp.isfinite(logvar)))
    print("KERNEL_OK")
</pallas_src>

<mosaic_0001>
module attributes {stable_mosaic.version = 11 : i64} {
  func.func @fused_forward_kernel(%arg0: i32, %arg1: memref<16x128xf32, #tpu.memory_space<vmem>>, %arg2: memref<8x1x8xf32, #tpu.memory_space<vmem>>, %arg3: memref<32x128xbf16, #tpu.memory_space<vmem>>, %arg4: memref<8x1x16xf32, #tpu.memory_space<vmem>>, %arg5: memref<16x1xf32, #tpu.memory_space<vmem>>, %arg6: memref<2x384x128xbf16, #tpu.memory_space<vmem>>, %arg7: memref<2x1x384xf32, #tpu.memory_space<vmem>>, %arg8: memref<2x128x128xbf16, #tpu.memory_space<vmem>>, %arg9: memref<2x1x128xf32, #tpu.memory_space<vmem>>, %arg10: memref<2x1x128xf32, #tpu.memory_space<vmem>>, %arg11: memref<2x1x128xf32, #tpu.memory_space<vmem>>, %arg12: memref<2x128x128xbf16, #tpu.memory_space<vmem>>, %arg13: memref<2x1x128xf32, #tpu.memory_space<vmem>>, %arg14: memref<2x256x128xbf16, #tpu.memory_space<vmem>>, %arg15: memref<2x1x256xf32, #tpu.memory_space<vmem>>, %arg16: memref<2x128x128xbf16, #tpu.memory_space<vmem>>, %arg17: memref<2x1x128xf32, #tpu.memory_space<vmem>>, %arg18: memref<2x1x128xf32, #tpu.memory_space<vmem>>, %arg19: memref<2x1x128xf32, #tpu.memory_space<vmem>>, %arg20: memref<2x128x128xbf16, #tpu.memory_space<vmem>>, %arg21: memref<2x1x128xf32, #tpu.memory_space<vmem>>, %arg22: memref<2x128x128xbf16, #tpu.memory_space<vmem>>, %arg23: memref<2x1x128xf32, #tpu.memory_space<vmem>>, %arg24: memref<2x1x128xf32, #tpu.memory_space<vmem>>, %arg25: memref<2x1x128xf32, #tpu.memory_space<vmem>>, %arg26: memref<128x128xbf16, #tpu.memory_space<vmem>>, %arg27: memref<1x128xf32, #tpu.memory_space<vmem>>, %arg28: memref<16x128xf32, #tpu.memory_space<vmem>>) attributes {dimension_semantics = [#tpu.dimension_semantics<parallel>], iteration_bounds = array<i64: 1>, scalar_prefetch = 0 : i64, scratch_operands = 0 : i64, tpu.core_type = #tpu.core_type<tc>, window_params = [{transform_indices = @transform_0, window_bounds = array<i64: 16, 128>}, {transform_indices = @transform_1, window_bounds = array<i64: 8, 1, 8>}, {transform_indices = @transform_2, window_bounds = array<i64: 32, 128>}, {transform_indices = @transform_3, window_bounds = array<i64: 8, 1, 16>}, {transform_indices = @transform_4, window_bounds = array<i64: 16, 1>}, {pipeline_mode = #tpu.pipeline_mode<synchronous>, transform_indices = @transform_5, window_bounds = array<i64: 2, 384, 128>}, {pipeline_mode = #tpu.pipeline_mode<synchronous>, transform_indices = @transform_6, window_bounds = array<i64: 2, 1, 384>}, {pipeline_mode = #tpu.pipeline_mode<synchronous>, transform_indices = @transform_7, window_bounds = array<i64: 2, 128, 128>}, {pipeline_mode = #tpu.pipeline_mode<synchronous>, transform_indices = @transform_8, window_bounds = array<i64: 2, 1, 128>}, {pipeline_mode = #tpu.pipeline_mode<synchronous>, transform_indices = @transform_9, window_bounds = array<i64: 2, 1, 128>}, {pipeline_mode = #tpu.pipeline_mode<synchronous>, transform_indices = @transform_10, window_bounds = array<i64: 2, 1, 128>}, {pipeline_mode = #tpu.pipeline_mode<synchronous>, transform_indices = @transform_11, window_bounds = array<i64: 2, 128, 128>}, {pipeline_mode = #tpu.pipeline_mode<synchronous>, transform_indices = @transform_12, window_bounds = array<i64: 2, 1, 128>}, {pipeline_mode = #tpu.pipeline_mode<synchronous>, transform_indices = @transform_13, window_bounds = array<i64: 2, 256, 128>}, {pipeline_mode = #tpu.pipeline_mode<synchronous>, transform_indices = @transform_14, window_bounds = array<i64: 2, 1, 256>}, {pipeline_mode = #tpu.pipeline_mode<synchronous>, transform_indices = @transform_15, window_bounds = array<i64: 2, 128, 128>}, {pipeline_mode = #tpu.pipeline_mode<synchronous>, transform_indices = @transform_16, window_bounds = array<i64: 2, 1, 128>}, {pipeline_mode = #tpu.pipeline_mode<synchronous>, transform_indices = @transform_17, window_bounds = array<i64: 2, 1, 128>}, {pipeline_mode = #tpu.pipeline_mode<synchronous>, transform_indices = @transform_18, window_bounds = array<i64: 2, 1, 128>}, {pipeline_mode = #tpu.pipeline_mode<synchronous>, transform_indices = @transform_19, window_bounds = array<i64: 2, 128, 128>}, {pipeline_mode = #tpu.pipeline_mode<synchronous>, transform_indices = @transform_20, window_bounds = array<i64: 2, 1, 128>}, {pipeline_mode = #tpu.pipeline_mode<synchronous>, transform_indices = @transform_21, window_bounds = array<i64: 2, 128, 128>}, {pipeline_mode = #tpu.pipeline_mode<synchronous>, transform_indices = @transform_22, window_bounds = array<i64: 2, 1, 128>}, {pipeline_mode = #tpu.pipeline_mode<synchronous>, transform_indices = @transform_23, window_bounds = array<i64: 2, 1, 128>}, {pipeline_mode = #tpu.pipeline_mode<synchronous>, transform_indices = @transform_24, window_bounds = array<i64: 2, 1, 128>}, {pipeline_mode = #tpu.pipeline_mode<synchronous>, transform_indices = @transform_25, window_bounds = array<i64: 128, 128>}, {pipeline_mode = #tpu.pipeline_mode<synchronous>, transform_indices = @transform_26, window_bounds = array<i64: 1, 128>}, {transform_indices = @transform_27, window_bounds = array<i64: 16, 128>}]} {
    %c0 = arith.constant 0 : index
    %c0_0 = arith.constant 0 : index
    %0 = vector.load %arg1[%c0, %c0_0] : memref<16x128xf32, #tpu.memory_space<vmem>>, vector<16x128xf32>
    %c0_1 = arith.constant 0 : index
    %c0_2 = arith.constant 0 : index
    %1 = vector.load %arg3[%c0_1, %c0_2] : memref<32x128xbf16, #tpu.memory_space<vmem>>, vector<32x128xbf16>
    %c0_3 = arith.constant 0 : index
    %c0_4 = arith.constant 0 : index
    %c0_5 = arith.constant 0 : index
    %2 = vector.load %arg2[%c0_3, %c0_4, %c0_5] : memref<8x1x8xf32, #tpu.memory_space<vmem>>, vector<8x1x8xf32>
    %c0_6 = arith.constant 0 : index
    %c0_7 = arith.constant 0 : index
    %c0_8 = arith.constant 0 : index
    %3 = vector.load %arg4[%c0_6, %c0_7, %c0_8] : memref<8x1x16xf32, #tpu.memory_space<vmem>>, vector<8x1x16xf32>
    %c0_9 = arith.constant 0 : index
    %c0_10 = arith.constant 0 : index
    %4 = vector.load %arg5[%c0_9, %c0_10] : memref<16x1xf32, #tpu.memory_space<vmem>>, vector<16x1xf32>
    %5 = arith.truncf %0 : vector<16x128xf32> to vector<16x128xbf16>
    %c0_11 = arith.constant 0 : index
    %c0_12 = arith.constant 0 : index
    %c0_13 = arith.constant 0 : index
    %6 = vector.load %arg6[%c0_11, %c0_12, %c0_13] : memref<2x384x128xbf16, #tpu.memory_space<vmem>>, vector<1x384x128xbf16>
    %7 = vector.shape_cast %6 : vector<1x384x128xbf16> to vector<384x128xbf16>
    %cst = arith.constant dense<0.000000e+00> : vector<16x384xf32>
    %8 = tpu.matmul %5, %7, %cst {dimension_numbers = #tpu.dot_dimension_numbers<[1], [1], [0], [0], [0, 0, 1, 0], [], []>} : vector<16x128xbf16>, vector<384x128xbf16>, vector<16x384xf32> -> vector<16x384xf32>
    %c0_14 = arith.constant 0 : index
    %c0_15 = arith.constant 0 : index
    %c0_16 = arith.constant 0 : index
    %9 = vector.load %arg7[%c0_14, %c0_15, %c0_16] : memref<2x1x384xf32, #tpu.memory_space<vmem>>, vector<1x1x384xf32>
    %10 = vector.shape_cast %9 : vector<1x1x384xf32> to vector<1x384xf32>
    %11 = vector.broadcast %10 : vector<1x384xf32> to vector<16x384xf32>
    %12 = arith.addf %8, %11 : vector<16x384xf32>
    %13 = vector.extract_strided_slice %12 {offsets = [0, 0], sizes = [16, 128], strides = [1, 1]} : vector<16x384xf32> to vector<16x128xf32>
    %14 = vector.extract_strided_slice %12 {offsets = [0, 128], sizes = [16, 128], strides = [1, 1]} : vector<16x384xf32> to vector<16x128xf32>
    %15 = vector.extract_strided_slice %12 {offsets = [0, 256], sizes = [16, 128], strides = [1, 1]} : vector<16x384xf32> to vector<16x128xf32>
    %16 = vector.extract_strided_slice %13 {offsets = [0, 0], sizes = [8, 32], strides = [1, 1]} : vector<16x128xf32> to vector<8x32xf32>
    %17 = vector.extract_strided_slice %13 {offsets = [0, 32], sizes = [8, 32], strides = [1, 1]} : vector<16x128xf32> to vector<8x32xf32>
    %18 = vector.extract_strided_slice %13 {offsets = [0, 64], sizes = [8, 32], strides = [1, 1]} : vector<16x128xf32> to vector<8x32xf32>
    %19 = vector.extract_strided_slice %13 {offsets = [0, 96], sizes = [8, 32], strides = [1, 1]} : vector<16x128xf32> to vector<8x32xf32>
    %20 = vector.extract_strided_slice %13 {offsets = [8, 0], sizes = [8, 32], strides = [1, 1]} : vector<16x128xf32> to vector<8x32xf32>
    %21 = vector.extract_strided_slice %13 {offsets = [8, 32], sizes = [8, 32], strides = [1, 1]} : vector<16x128xf32> to vector<8x32xf32>
    %22 = vector.extract_strided_slice %13 {offsets = [8, 64], sizes = [8, 32], strides = [1, 1]} : vector<16x128xf32> to vector<8x32xf32>
    %23 = vector.extract_strided_slice %13 {offsets = [8, 96], sizes = [8, 32], strides = [1, 1]} : vector<16x128xf32> to vector<8x32xf32>
    %24 = vector.shape_cast %16 : vector<8x32xf32> to vector<1x8x32xf32>
    %25 = vector.shape_cast %17 : vector<8x32xf32> to vector<1x8x32xf32>
    %26 = vector.shape_cast %18 : vector<8x32xf32> to vector<1x8x32xf32>
    %27 = vector.shape_cast %19 : vector<8x32xf32> to vector<1x8x32xf32>
    %28 = vector.shape_cast %20 : vector<8x32xf32> to vector<1x8x32xf32>
    %29 = vector.shape_cast %21 : vector<8x32xf32> to vector<1x8x32xf32>
    %30 = vector.shape_cast %22 : vector<8x32xf32> to vector<1x8x32xf32>
    %31 = vector.shape_cast %23 : vector<8x32xf32> to vector<1x8x32xf32>
    %32 = tpu.concatenate %24, %25, %26, %27, %28, %29, %30, %31 in 0 : vector<1x8x32xf32>, vector<1x8x32xf32>, vector<1x8x32xf32>, vector<1x8x32xf32>, vector<1x8x32xf32>, vector<1x8x32xf32>, vector<1x8x32xf32>, vector<1x8x32xf32> -> vector<8x8x32xf32>
    %33 = arith.truncf %32 : vector<8x8x32xf32> to vector<8x8x32xbf16>
    %34 = vector.extract_strided_slice %14 {offsets = [0, 0], sizes = [8, 32], strides = [1, 1]} : vector<16x128xf32> to vector<8x32xf32>
    %35 = vector.extract_strided_slice %14 {offsets = [0, 32], sizes = [8, 32], strides = [1, 1]} : vector<16x128xf32> to vector<8x32xf32>
    %36 = vector.extract_strided_slice %14 {offsets = [0, 64], sizes = [8, 32], strides = [1, 1]} : vector<16x128xf32> to vector<8x32xf32>
    %37 = vector.extract_strided_slice %14 {offsets = [0, 96], sizes = [8, 32], strides = [1, 1]} : vector<16x128xf32> to vector<8x32xf32>
    %38 = vector.extract_strided_slice %14 {offsets = [8, 0], sizes = [8, 32], strides = [1, 1]} : vector<16x128xf32> to vector<8x32xf32>
    %39 = vector.extract_strided_slice %14 {offsets = [8, 32], sizes = [8, 32], strides = [1, 1]} : vector<16x128xf32> to vector<8x32xf32>
    %40 = vector.extract_strided_slice %14 {offsets = [8, 64], sizes = [8, 32], strides = [1, 1]} : vector<16x128xf32> to vector<8x32xf32>
    %41 = vector.extract_strided_slice %14 {offsets = [8, 96], sizes = [8, 32], strides = [1, 1]} : vector<16x128xf32> to vector<8x32xf32>
    %42 = vector.shape_cast %34 : vector<8x32xf32> to vector<1x8x32xf32>
    %43 = vector.shape_cast %35 : vector<8x32xf32> to vector<1x8x32xf32>
    %44 = vector.shape_cast %36 : vector<8x32xf32> to vector<1x8x32xf32>
    %45 = vector.shape_cast %37 : vector<8x32xf32> to vector<1x8x32xf32>
    %46 = vector.shape_cast %38 : vector<8x32xf32> to vector<1x8x32xf32>
    %47 = vector.shape_cast %39 : vector<8x32xf32> to vector<1x8x32xf32>
    %48 = vector.shape_cast %40 : vector<8x32xf32> to vector<1x8x32xf32>
    %49 = vector.shape_cast %41 : vector<8x32xf32> to vector<1x8x32xf32>
    %50 = tpu.concatenate %42, %43, %44, %45, %46, %47, %48, %49 in 0 : vector<1x8x32xf32>, vector<1x8x32xf32>, vector<1x8x32xf32>, vector<1x8x32xf32>, vector<1x8x32xf32>, vector<1x8x32xf32>, vector<1x8x32xf32>, vector<1x8x32xf32> -> vector<8x8x32xf32>
    %51 = arith.truncf %50 : vector<8x8x32xf32> to vector<8x8x32xbf16>
    %52 = vector.extract_strided_slice %15 {offsets = [0, 0], sizes = [8, 32], strides = [1, 1]} : vector<16x128xf32> to vector<8x32xf32>
    %53 = vector.extract_strided_slice %15 {offsets = [0, 32], sizes = [8, 32], strides = [1, 1]} : vector<16x128xf32> to vector<8x32xf32>
    %54 = vector.extract_strided_slice %15 {offsets = [0, 64], sizes = [8, 32], strides = [1, 1]} : vector<16x128xf32> to vector<8x32xf32>
    %55 = vector.extract_strided_slice %15 {offsets = [0, 96], sizes = [8, 32], strides = [1, 1]} : vector<16x128xf32> to vector<8x32xf32>
    %56 = vector.extract_strided_slice %15 {offsets = [8, 0], sizes = [8, 32], strides = [1, 1]} : vector<16x128xf32> to vector<8x32xf32>
    %57 = vector.extract_strided_slice %15 {offsets = [8, 32], sizes = [8, 32], strides = [1, 1]} : vector<16x128xf32> to vector<8x32xf32>
    %58 = vector.extract_strided_slice %15 {offsets = [8, 64], sizes = [8, 32], strides = [1, 1]} : vector<16x128xf32> to vector<8x32xf32>
    %59 = vector.extract_strided_slice %15 {offsets = [8, 96], sizes = [8, 32], strides = [1, 1]} : vector<16x128xf32> to vector<8x32xf32>
    %60 = vector.shape_cast %52 : vector<8x32xf32> to vector<1x8x32xf32>
    %61 = vector.shape_cast %53 : vector<8x32xf32> to vector<1x8x32xf32>
    %62 = vector.shape_cast %54 : vector<8x32xf32> to vector<1x8x32xf32>
    %63 = vector.shape_cast %55 : vector<8x32xf32> to vector<1x8x32xf32>
    %64 = vector.shape_cast %56 : vector<8x32xf32> to vector<1x8x32xf32>
    %65 = vector.shape_cast %57 : vector<8x32xf32> to vector<1x8x32xf32>
    %66 = vector.shape_cast %58 : vector<8x32xf32> to vector<1x8x32xf32>
    %67 = vector.shape_cast %59 : vector<8x32xf32> to vector<1x8x32xf32>
    %68 = tpu.concatenate %60, %61, %62, %63, %64, %65, %66, %67 in 0 : vector<1x8x32xf32>, vector<1x8x32xf32>, vector<1x8x32xf32>, vector<1x8x32xf32>, vector<1x8x32xf32>, vector<1x8x32xf32>, vector<1x8x32xf32>, vector<1x8x32xf32> -> vector<8x8x32xf32>
    %69 = arith.truncf %68 : vector<8x8x32xf32> to vector<8x8x32xbf16>
    "tpu.trace_start"() <{level = 10 : i32, message = "hqd,hkd->hqk"}> : () -> ()
    %cst_17 = arith.constant dense<0.000000e+00> : vector<8x8x8xf32>
    %70 = tpu.matmul %33, %51, %cst_17 {dimension_numbers = #tpu.dot_dimension_numbers<[2], [2], [1], [1], [0, 0, 0, 1, 1, 1], [0], [0]>} : vector<8x8x32xbf16>, vector<8x8x32xbf16>, vector<8x8x8xf32> -> vector<8x8x8xf32>
    "tpu.trace_stop"() : () -> ()
    %71 = vector.broadcast %2 : vector<8x1x8xf32> to vector<8x8x8xf32>
    %72 = arith.addf %70, %71 : vector<8x8x8xf32>
    %cst_18 = arith.constant dense<0xFF800000> : vector<8x8xf32>
    %73 = vector.multi_reduction <maximumf>, %72, %cst_18 [2] : vector<8x8x8xf32> to vector<8x8xf32>
    %74 = vector.shape_cast %73 : vector<8x8xf32> to vector<8x8x1xf32>
    %75 = vector.broadcast %74 : vector<8x8x1xf32> to vector<8x8x8xf32>
    %76 = arith.subf %72, %75 : vector<8x8x8xf32>
    %77 = math.exp %76 : vector<8x8x8xf32>
    %cst_19 = arith.constant dense<0.000000e+00> : vector<8x8xf32>
    %78 = vector.multi_reduction <add>, %77, %cst_19 [2] : vector<8x8x8xf32> to vector<8x8xf32>
    %79 = vector.shape_cast %78 : vector<8x8xf32> to vector<8x8x1xf32>
    %80 = tpu.reciprocal %79 {approx = true} : vector<8x8x1xf32> -> vector<8x8x1xf32>
    %81 = vector.broadcast %80 : vector<8x8x1xf32> to vector<8x8x8xf32>
    %82 = arith.mulf %77, %81 : vector<8x8x8xf32>
    %83 = arith.truncf %82 : vector<8x8x8xf32> to vector<8x8x8xbf16>
    "tpu.trace_start"() <{level = 10 : i32, message = "hqk,hkd->hqd"}> : () -> ()
    %cst_20 = arith.constant dense<0.000000e+00> : vector<8x8x32xf32>
    %84 = tpu.matmul %83, %69, %cst_20 {dimension_numbers = #tpu.dot_dimension_numbers<[2], [1], [1], [2], [0, 0, 0, 1, 1, 2], [0], [0]>} : vector<8x8x8xbf16>, vector<8x8x32xbf16>, vector<8x8x32xf32> -> vector<8x8x32xf32>
    "tpu.trace_stop"() : () -> ()
    %85 = vector.extract_strided_slice %84 {offsets = [0, 0, 0], sizes = [1, 8, 32], strides = [1, 1, 1]} : vector<8x8x32xf32> to vector<1x8x32xf32>
    %86 = vector.shape_cast %85 : vector<1x8x32xf32> to vector<8x32xf32>
    %87 = vector.extract_strided_slice %84 {offsets = [1, 0, 0], sizes = [1, 8, 32], strides = [1, 1, 1]} : vector<8x8x32xf32> to vector<1x8x32xf32>
    %88 = vector.shape_cast %87 : vector<1x8x32xf32> to vector<8x32xf32>
    %89 = vector.extract_strided_slice %84 {offsets = [2, 0, 0], sizes = [1, 8, 32], strides = [1, 1, 1]} : vector<8x8x32xf32> to vector<1x8x32xf32>
    %90 = vector.shape_cast %89 : vector<1x8x32xf32> to vector<8x32xf32>
    %91 = vector.extract_strided_slice %84 {offsets = [3, 0, 0], sizes = [1, 8, 32], strides = [1, 1, 1]} : vector<8x8x32xf32> to vector<1x8x32xf32>
    %92 = vector.shape_cast %91 : vector<1x8x32xf32> to vector<8x32xf32>
    %93 = tpu.concatenate %86, %88, %90, %92 in 1 : vector<8x32xf32>, vector<8x32xf32>, vector<8x32xf32>, vector<8x32xf32> -> vector<8x128xf32>
    %94 = vector.extract_strided_slice %84 {offsets = [4, 0, 0], sizes = [1, 8, 32], strides = [1, 1, 1]} : vector<8x8x32xf32> to vector<1x8x32xf32>
    %95 = vector.shape_cast %94 : vector<1x8x32xf32> to vector<8x32xf32>
    %96 = vector.extract_strided_slice %84 {offsets = [5, 0, 0], sizes = [1, 8, 32], strides = [1, 1, 1]} : vector<8x8x32xf32> to vector<1x8x32xf32>
    %97 = vector.shape_cast %96 : vector<1x8x32xf32> to vector<8x32xf32>
    %98 = vector.extract_strided_slice %84 {offsets = [6, 0, 0], sizes = [1, 8, 32], strides = [1, 1, 1]} : vector<8x8x32xf32> to vector<1x8x32xf32>
    %99 = vector.shape_cast %98 : vector<1x8x32xf32> to vector<8x32xf32>
    %100 = vector.extract_strided_slice %84 {offsets = [7, 0, 0], sizes = [1, 8, 32], strides = [1, 1, 1]} : vector<8x8x32xf32> to vector<1x8x32xf32>
    %101 = vector.shape_cast %100 : vector<1x8x32xf32> to vector<8x32xf32>
    %102 = tpu.concatenate %95, %97, %99, %101 in 1 : vector<8x32xf32>, vector<8x32xf32>, vector<8x32xf32>, vector<8x32xf32> -> vector<8x128xf32>
    %103 = tpu.concatenate %93, %102 in 0 : vector<8x128xf32>, vector<8x128xf32> -> vector<16x128xf32>
    %104 = arith.truncf %103 : vector<16x128xf32> to vector<16x128xbf16>
    %c0_21 = arith.constant 0 : index
    %c0_22 = arith.constant 0 : index
    %c0_23 = arith.constant 0 : index
    %105 = vector.load %arg8[%c0_21, %c0_22, %c0_23] : memref<2x128x128xbf16, #tpu.memory_space<vmem>>, vector<1x128x128xbf16>
    %106 = vector.shape_cast %105 : vector<1x128x128xbf16> to vector<128x128xbf16>
    %cst_24 = arith.constant dense<0.000000e+00> : vector<16x128xf32>
    %107 = tpu.matmul %104, %106, %cst_24 {dimension_numbers = #tpu.dot_dimension_numbers<[1], [1], [0], [0], [0, 0, 1, 0], [], []>} : vector<16x128xbf16>, vector<128x128xbf16>, vector<16x128xf32> -> vector<16x128xf32>
    %c0_25 = arith.constant 0 : index
    %c0_26 = arith.constant 0 : index
    %c0_27 = arith.constant 0 : index
    %108 = vector.load %arg9[%c0_25, %c0_26, %c0_27] : memref<2x1x128xf32, #tpu.memory_space<vmem>>, vector<1x1x128xf32>
    %109 = vector.shape_cast %108 : vector<1x1x128xf32> to vector<1x128xf32>
    %110 = vector.broadcast %109 : vector<1x128xf32> to vector<16x128xf32>
    %111 = arith.addf %107, %110 : vector<16x128xf32>
    %112 = arith.addf %111, %0 : vector<16x128xf32>
    %c0_28 = arith.constant 0 : index
    %c0_29 = arith.constant 0 : index
    %c0_30 = arith.constant 0 : index
    %113 = vector.load %arg10[%c0_28, %c0_29, %c0_30] : memref<2x1x128xf32, #tpu.memory_space<vmem>>, vector<1x1x128xf32>
    %114 = vector.shape_cast %113 : vector<1x1x128xf32> to vector<1x128xf32>
    %c0_31 = arith.constant 0 : index
    %c0_32 = arith.constant 0 : index
    %c0_33 = arith.constant 0 : index
    %115 = vector.load %arg11[%c0_31, %c0_32, %c0_33] : memref<2x1x128xf32, #tpu.memory_space<vmem>>, vector<1x1x128xf32>
    %116 = vector.shape_cast %115 : vector<1x1x128xf32> to vector<1x128xf32>
    %cst_34 = arith.constant dense<0.000000e+00> : vector<16xf32>
    %117 = vector.multi_reduction <add>, %112, %cst_34 [1] : vector<16x128xf32> to vector<16xf32>
    %118 = vector.shape_cast %117 : vector<16xf32> to vector<16x1xf32>
    %cst_35 = arith.constant 3.125000e-02 : f32
    %119 = vector.broadcast %cst_35 : f32 to vector<16x1xf32>
    %120 = arith.mulf %118, %119 : vector<16x1xf32>
    %121 = arith.mulf %112, %112 : vector<16x128xf32>
    %cst_36 = arith.constant dense<0.000000e+00> : vector<16xf32>
    %122 = vector.multi_reduction <add>, %121, %cst_36 [1] : vector<16x128xf32> to vector<16xf32>
    %123 = vector.shape_cast %122 : vector<16xf32> to vector<16x1xf32>
    %cst_37 = arith.constant 3.125000e-02 : f32
    %124 = vector.broadcast %cst_37 : f32 to vector<16x1xf32>
    %125 = arith.mulf %123, %124 : vector<16x1xf32>
    %126 = arith.mulf %120, %120 : vector<16x1xf32>
    %127 = arith.subf %125, %126 : vector<16x1xf32>
    %128 = vector.broadcast %120 : vector<16x1xf32> to vector<16x128xf32>
    %129 = arith.subf %112, %128 : vector<16x128xf32>
    %cst_38 = arith.constant 9.99999974E-6 : f32
    %130 = vector.broadcast %cst_38 : f32 to vector<16x1xf32>
    %131 = arith.addf %127, %130 : vector<16x1xf32>
    %132 = math.rsqrt %131 : vector<16x1xf32>
    %133 = vector.broadcast %132 : vector<16x1xf32> to vector<16x128xf32>
    %134 = arith.mulf %129, %133 : vector<16x128xf32>
    %135 = vector.broadcast %114 : vector<1x128xf32> to vector<16x128xf32>
    %136 = arith.mulf %134, %135 : vector<16x128xf32>
    %137 = vector.broadcast %116 : vector<1x128xf32> to vector<16x128xf32>
    %138 = arith.addf %136, %137 : vector<16x128xf32>
    %139 = arith.truncf %138 : vector<16x128xf32> to vector<16x128xbf16>
    %c0_39 = arith.constant 0 : index
    %c0_40 = arith.constant 0 : index
    %c0_41 = arith.constant 0 : index
    %140 = vector.load %arg12[%c0_39, %c0_40, %c0_41] : memref<2x128x128xbf16, #tpu.memory_space<vmem>>, vector<1x128x128xbf16>
    %141 = vector.shape_cast %140 : vector<1x128x128xbf16> to vector<128x128xbf16>
    %cst_42 = arith.constant dense<0.000000e+00> : vector<16x128xf32>
    %142 = tpu.matmul %139, %141, %cst_42 {dimension_numbers = #tpu.dot_dimension_numbers<[1], [1], [0], [0], [0, 0, 1, 0], [], []>} : vector<16x128xbf16>, vector<128x128xbf16>, vector<16x128xf32> -> vector<16x128xf32>
    %c0_43 = arith.constant 0 : index
    %c0_44 = arith.constant 0 : index
    %c0_45 = arith.constant 0 : index
    %143 = vector.load %arg13[%c0_43, %c0_44, %c0_45] : memref<2x1x128xf32, #tpu.memory_space<vmem>>, vector<1x1x128xf32>
    %144 = vector.shape_cast %143 : vector<1x1x128xf32> to vector<1x128xf32>
    %145 = vector.broadcast %144 : vector<1x128xf32> to vector<16x128xf32>
    %146 = arith.addf %142, %145 : vector<16x128xf32>
    %c0_46 = arith.constant 0 : index
    %c0_47 = arith.constant 0 : index
    %c0_48 = arith.constant 0 : index
    %147 = vector.load %arg14[%c0_46, %c0_47, %c0_48] : memref<2x256x128xbf16, #tpu.memory_space<vmem>>, vector<1x256x128xbf16>
    %148 = vector.shape_cast %147 : vector<1x256x128xbf16> to vector<256x128xbf16>
    %cst_49 = arith.constant dense<0.000000e+00> : vector<32x256xf32>
    %149 = tpu.matmul %1, %148, %cst_49 {dimension_numbers = #tpu.dot_dimension_numbers<[1], [1], [0], [0], [0, 0, 1, 0], [], []>} : vector<32x128xbf16>, vector<256x128xbf16>, vector<32x256xf32> -> vector<32x256xf32>
    %c0_50 = arith.constant 0 : index
    %c0_51 = arith.constant 0 : index
    %c0_52 = arith.constant 0 : index
    %150 = vector.load %arg15[%c0_50, %c0_51, %c0_52] : memref<2x1x256xf32, #tpu.memory_space<vmem>>, vector<1x1x256xf32>
    %151 = vector.shape_cast %150 : vector<1x1x256xf32> to vector<1x256xf32>
    %152 = vector.broadcast %151 : vector<1x256xf32> to vector<32x256xf32>
    %153 = arith.addf %149, %152 : vector<32x256xf32>
    %154 = vector.extract_strided_slice %153 {offsets = [0, 0], sizes = [32, 128], strides = [1, 1]} : vector<32x256xf32> to vector<32x128xf32>
    %155 = vector.extract_strided_slice %153 {offsets = [0, 128], sizes = [32, 128], strides = [1, 1]} : vector<32x256xf32> to vector<32x128xf32>
    %156 = vector.extract_strided_slice %146 {offsets = [0, 0], sizes = [8, 32], strides = [1, 1]} : vector<16x128xf32> to vector<8x32xf32>
    %157 = vector.extract_strided_slice %146 {offsets = [0, 32], sizes = [8, 32], strides = [1, 1]} : vector<16x128xf32> to vector<8x32xf32>
    %158 = vector.extract_strided_slice %146 {offsets = [0, 64], sizes = [8, 32], strides = [1, 1]} : vector<16x128xf32> to vector<8x32xf32>
    %159 = vector.extract_strided_slice %146 {offsets = [0, 96], sizes = [8, 32], strides = [1, 1]} : vector<16x128xf32> to vector<8x32xf32>
    %160 = vector.extract_strided_slice %146 {offsets = [8, 0], sizes = [8, 32], strides = [1, 1]} : vector<16x128xf32> to vector<8x32xf32>
    %161 = vector.extract_strided_slice %146 {offsets = [8, 32], sizes = [8, 32], strides = [1, 1]} : vector<16x128xf32> to vector<8x32xf32>
    %162 = vector.extract_strided_slice %146 {offsets = [8, 64], sizes = [8, 32], strides = [1, 1]} : vector<16x128xf32> to vector<8x32xf32>
    %163 = vector.extract_strided_slice %146 {offsets = [8, 96], sizes = [8, 32], strides = [1, 1]} : vector<16x128xf32> to vector<8x32xf32>
    %164 = vector.shape_cast %156 : vector<8x32xf32> to vector<1x8x32xf32>
    %165 = vector.shape_cast %157 : vector<8x32xf32> to vector<1x8x32xf32>
    %166 = vector.shape_cast %158 : vector<8x32xf32> to vector<1x8x32xf32>
    %167 = vector.shape_cast %159 : vector<8x32xf32> to vector<1x8x32xf32>
    %168 = vector.shape_cast %160 : vector<8x32xf32> to vector<1x8x32xf32>
    %169 = vector.shape_cast %161 : vector<8x32xf32> to vector<1x8x32xf32>
    %170 = vector.shape_cast %162 : vector<8x32xf32> to vector<1x8x32xf32>
    %171 = vector.shape_cast %163 : vector<8x32xf32> to vector<1x8x32xf32>
    %172 = tpu.concatenate %164, %165, %166, %167, %168, %169, %170, %171 in 0 : vector<1x8x32xf32>, vector<1x8x32xf32>, vector<1x8x32xf32>, vector<1x8x32xf32>, vector<1x8x32xf32>, vector<1x8x32xf32>, vector<1x8x32xf32>, vector<1x8x32xf32> -> vector<8x8x32xf32>
    %173 = arith.truncf %172 : vector<8x8x32xf32> to vector<8x8x32xbf16>
    %174 = vector.extract_strided_slice %154 {offsets = [0, 0], sizes = [16, 32], strides = [1, 1]} : vector<32x128xf32> to vector<16x32xf32>
    %175 = vector.extract_strided_slice %154 {offsets = [0, 32], sizes = [16, 32], strides = [1, 1]} : vector<32x128xf32> to vector<16x32xf32>
    %176 = vector.extract_strided_slice %154 {offsets = [0, 64], sizes = [16, 32], strides = [1, 1]} : vector<32x128xf32> to vector<16x32xf32>
    %177 = vector.extract_strided_slice %154 {offsets = [0, 96], sizes = [16, 32], strides = [1, 1]} : vector<32x128xf32> to vector<16x32xf32>
    %178 = vector.extract_strided_slice %154 {offsets = [16, 0], sizes = [16, 32], strides = [1, 1]} : vector<32x128xf32> to vector<16x32xf32>
    %179 = vector.extract_strided_slice %154 {offsets = [16, 32], sizes = [16, 32], strides = [1, 1]} : vector<32x128xf32> to vector<16x32xf32>
    %180 = vector.extract_strided_slice %154 {offsets = [16, 64], sizes = [16, 32], strides = [1, 1]} : vector<32x128xf32> to vector<16x32xf32>
    %181 = vector.extract_strided_slice %154 {offsets = [16, 96], sizes = [16, 32], strides = [1, 1]} : vector<32x128xf32> to vector<16x32xf32>
    %182 = vector.shape_cast %174 : vector<16x32xf32> to vector<1x16x32xf32>
    %183 = vector.shape_cast %175 : vector<16x32xf32> to vector<1x16x32xf32>
    %184 = vector.shape_cast %176 : vector<16x32xf32> to vector<1x16x32xf32>
    %185 = vector.shape_cast %177 : vector<16x32xf32> to vector<1x16x32xf32>
    %186 = vector.shape_cast %178 : vector<16x32xf32> to vector<1x16x32xf32>
    %187 = vector.shape_cast %179 : vector<16x32xf32> to vector<1x16x32xf32>
    %188 = vector.shape_cast %180 : vector<16x32xf32> to vector<1x16x32xf32>
    %189 = vector.shape_cast %181 : vector<16x32xf32> to vector<1x16x32xf32>
    %190 = tpu.concatenate %182, %183, %184, %185, %186, %187, %188, %189 in 0 : vector<1x16x32xf32>, vector<1x16x32xf32>, vector<1x16x32xf32>, vector<1x16x32xf32>, vector<1x16x32xf32>, vector<1x16x32xf32>, vector<1x16x32xf32>, vector<1x16x32xf32> -> vector<8x16x32xf32>
    %191 = arith.truncf %190 : vector<8x16x32xf32> to vector<8x16x32xbf16>
    %192 = vector.extract_strided_slice %155 {offsets = [0, 0], sizes = [16, 32], strides = [1, 1]} : vector<32x128xf32> to vector<16x32xf32>
    %193 = vector.extract_strided_slice %155 {offsets = [0, 32], sizes = [16, 32], strides = [1, 1]} : vector<32x128xf32> to vector<16x32xf32>
    %194 = vector.extract_strided_slice %155 {offsets = [0, 64], sizes = [16, 32], strides = [1, 1]} : vector<32x128xf32> to vector<16x32xf32>
    %195 = vector.extract_strided_slice %155 {offsets = [0, 96], sizes = [16, 32], strides = [1, 1]} : vector<32x128xf32> to vector<16x32xf32>
    %196 = vector.extract_strided_slice %155 {offsets = [16, 0], sizes = [16, 32], strides = [1, 1]} : vector<32x128xf32> to vector<16x32xf32>
    %197 = vector.extract_strided_slice %155 {offsets = [16, 32], sizes = [16, 32], strides = [1, 1]} : vector<32x128xf32> to vector<16x32xf32>
    %198 = vector.extract_strided_slice %155 {offsets = [16, 64], sizes = [16, 32], strides = [1, 1]} : vector<32x128xf32> to vector<16x32xf32>
    %199 = vector.extract_strided_slice %155 {offsets = [16, 96], sizes = [16, 32], strides = [1, 1]} : vector<32x128xf32> to vector<16x32xf32>
    %200 = vector.shape_cast %192 : vector<16x32xf32> to vector<1x16x32xf32>
    %201 = vector.shape_cast %193 : vector<16x32xf32> to vector<1x16x32xf32>
    %202 = vector.shape_cast %194 : vector<16x32xf32> to vector<1x16x32xf32>
    %203 = vector.shape_cast %195 : vector<16x32xf32> to vector<1x16x32xf32>
    %204 = vector.shape_cast %196 : vector<16x32xf32> to vector<1x16x32xf32>
    %205 = vector.shape_cast %197 : vector<16x32xf32> to vector<1x16x32xf32>
    %206 = vector.shape_cast %198 : vector<16x32xf32> to vector<1x16x32xf32>
    %207 = vector.shape_cast %199 : vector<16x32xf32> to vector<1x16x32xf32>
    %208 = tpu.concatenate %200, %201, %202, %203, %204, %205, %206, %207 in 0 : vector<1x16x32xf32>, vector<1x16x32xf32>, vector<1x16x32xf32>, vector<1x16x32xf32>, vector<1x16x32xf32>, vector<1x16x32xf32>, vector<1x16x32xf32>, vector<1x16x32xf32> -> vector<8x16x32xf32>
    %209 = arith.truncf %208 : vector<8x16x32xf32> to vector<8x16x32xbf16>
    "tpu.trace_start"() <{level = 10 : i32, message = "hqd,hkd->hqk"}> : () -> ()
    %cst_53 = arith.constant dense<0.000000e+00> : vector<8x8x16xf32>
    %210 = tpu.matmul %173, %191, %cst_53 {dimension_numbers = #tpu.dot_dimension_numbers<[2], [2], [1], [1], [0, 0, 0, 1, 1, 1], [0], [0]>} : vector<8x8x32xbf16>, vector<8x16x32xbf16>, vector<8x8x16xf32> -> vector<8x8x16xf32>
    "tpu.trace_stop"() : () -> ()
    %211 = vector.broadcast %3 : vector<8x1x16xf32> to vector<8x8x16xf32>
    %212 = arith.addf %210, %211 : vector<8x8x16xf32>
    %cst_54 = arith.constant dense<0xFF800000> : vector<8x8xf32>
    %213 = vector.multi_reduction <maximumf>, %212, %cst_54 [2] : vector<8x8x16xf32> to vector<8x8xf32>
    %214 = vector.shape_cast %213 : vector<8x8xf32> to vector<8x8x1xf32>
    %215 = vector.broadcast %214 : vector<8x8x1xf32> to vector<8x8x16xf32>
    %216 = arith.subf %212, %215 : vector<8x8x16xf32>
    %217 = math.exp %216 : vector<8x8x16xf32>
    %cst_55 = arith.constant dense<0.000000e+00> : vector<8x8xf32>
    %218 = vector.multi_reduction <add>, %217, %cst_55 [2] : vector<8x8x16xf32> to vector<8x8xf32>
    %219 = vector.shape_cast %218 : vector<8x8xf32> to vector<8x8x1xf32>
    %220 = tpu.reciprocal %219 {approx = true} : vector<8x8x1xf32> -> vector<8x8x1xf32>
    %221 = vector.broadcast %220 : vector<8x8x1xf32> to vector<8x8x16xf32>
    %222 = arith.mulf %217, %221 : vector<8x8x16xf32>
    %223 = arith.truncf %222 : vector<8x8x16xf32> to vector<8x8x16xbf16>
    "tpu.trace_start"() <{level = 10 : i32, message = "hqk,hkd->hqd"}> : () -> ()
    %cst_56 = arith.constant dense<0.000000e+00> : vector<8x8x32xf32>
    %224 = tpu.matmul %223, %209, %cst_56 {dimension_numbers = #tpu.dot_dimension_numbers<[2], [1], [1], [2], [0, 0, 0, 1, 1, 2], [0], [0]>} : vector<8x8x16xbf16>, vector<8x16x32xbf16>, vector<8x8x32xf32> -> vector<8x8x32xf32>
    "tpu.trace_stop"() : () -> ()
    %225 = vector.extract_strided_slice %224 {offsets = [0, 0, 0], sizes = [1, 8, 32], strides = [1, 1, 1]} : vector<8x8x32xf32> to vector<1x8x32xf32>
    %226 = vector.shape_cast %225 : vector<1x8x32xf32> to vector<8x32xf32>
    %227 = vector.extract_strided_slice %224 {offsets = [1, 0, 0], sizes = [1, 8, 32], strides = [1, 1, 1]} : vector<8x8x32xf32> to vector<1x8x32xf32>
    %228 = vector.shape_cast %227 : vector<1x8x32xf32> to vector<8x32xf32>
    %229 = vector.extract_strided_slice %224 {offsets = [2, 0, 0], sizes = [1, 8, 32], strides = [1, 1, 1]} : vector<8x8x32xf32> to vector<1x8x32xf32>
    %230 = vector.shape_cast %229 : vector<1x8x32xf32> to vector<8x32xf32>
    %231 = vector.extract_strided_slice %224 {offsets = [3, 0, 0], sizes = [1, 8, 32], strides = [1, 1, 1]} : vector<8x8x32xf32> to vector<1x8x32xf32>
    %232 = vector.shape_cast %231 : vector<1x8x32xf32> to vector<8x32xf32>
    %233 = tpu.concatenate %226, %228, %230, %232 in 1 : vector<8x32xf32>, vector<8x32xf32>, vector<8x32xf32>, vector<8x32xf32> -> vector<8x128xf32>
    %234 = vector.extract_strided_slice %224 {offsets = [4, 0, 0], sizes = [1, 8, 32], strides = [1, 1, 1]} : vector<8x8x32xf32> to vector<1x8x32xf32>
    %235 = vector.shape_cast %234 : vector<1x8x32xf32> to vector<8x32xf32>
    %236 = vector.extract_strided_slice %224 {offsets = [5, 0, 0], sizes = [1, 8, 32], strides = [1, 1, 1]} : vector<8x8x32xf32> to vector<1x8x32xf32>
    %237 = vector.shape_cast %236 : vector<1x8x32xf32> to vector<8x32xf32>
    %238 = vector.extract_strided_slice %224 {offsets = [6, 0, 0], sizes = [1, 8, 32], strides = [1, 1, 1]} : vector<8x8x32xf32> to vector<1x8x32xf32>
    %239 = vector.shape_cast %238 : vector<1x8x32xf32> to vector<8x32xf32>
    %240 = vector.extract_strided_slice %224 {offsets = [7, 0, 0], sizes = [1, 8, 32], strides = [1, 1, 1]} : vector<8x8x32xf32> to vector<1x8x32xf32>
    %241 = vector.shape_cast %240 : vector<1x8x32xf32> to vector<8x32xf32>
    %242 = tpu.concatenate %235, %237, %239, %241 in 1 : vector<8x32xf32>, vector<8x32xf32>, vector<8x32xf32>, vector<8x32xf32> -> vector<8x128xf32>
    %243 = tpu.concatenate %233, %242 in 0 : vector<8x128xf32>, vector<8x128xf32> -> vector<16x128xf32>
    %244 = arith.truncf %243 : vector<16x128xf32> to vector<16x128xbf16>
    %c0_57 = arith.constant 0 : index
    %c0_58 = arith.constant 0 : index
    %c0_59 = arith.constant 0 : index
    %245 = vector.load %arg16[%c0_57, %c0_58, %c0_59] : memref<2x128x128xbf16, #tpu.memory_space<vmem>>, vector<1x128x128xbf16>
    %246 = vector.shape_cast %245 : vector<1x128x128xbf16> to vector<128x128xbf16>
    %cst_60 = arith.constant dense<0.000000e+00> : vector<16x128xf32>
    %247 = tpu.matmul %244, %246, %cst_60 {dimension_numbers = #tpu.dot_dimension_numbers<[1], [1], [0], [0], [0, 0, 1, 0], [], []>} : vector<16x128xbf16>, vector<128x128xbf16>, vector<16x128xf32> -> vector<16x128xf32>
    %c0_61 = arith.constant 0 : index
    %c0_62 = arith.constant 0 : index
    %c0_63 = arith.constant 0 : index
    %248 = vector.load %arg17[%c0_61, %c0_62, %c0_63] : memref<2x1x128xf32, #tpu.memory_space<vmem>>, vector<1x1x128xf32>
    %249 = vector.shape_cast %248 : vector<1x1x128xf32> to vector<1x128xf32>
    %250 = vector.broadcast %249 : vector<1x128xf32> to vector<16x128xf32>
    %251 = arith.addf %247, %250 : vector<16x128xf32>
    %252 = arith.addf %251, %138 : vector<16x128xf32>
    %c0_64 = arith.constant 0 : index
    %c0_65 = arith.constant 0 : index
    %c0_66 = arith.constant 0 : index
    %253 = vector.load %arg18[%c0_64, %c0_65, %c0_66] : memref<2x1x128xf32, #tpu.memory_space<vmem>>, vector<1x1x128xf32>
    %254 = vector.shape_cast %253 : vector<1x1x128xf32> to vector<1x128xf32>
    %c0_67 = arith.constant 0 : index
    %c0_68 = arith.constant 0 : index
    %c0_69 = arith.constant 0 : index
    %255 = vector.load %arg19[%c0_67, %c0_68, %c0_69] : memref<2x1x128xf32, #tpu.memory_space<vmem>>, vector<1x1x128xf32>
    %256 = vector.shape_cast %255 : vector<1x1x128xf32> to vector<1x128xf32>
    %cst_70 = arith.constant dense<0.000000e+00> : vector<16xf32>
    %257 = vector.multi_reduction <add>, %252, %cst_70 [1] : vector<16x128xf32> to vector<16xf32>
    %258 = vector.shape_cast %257 : vector<16xf32> to vector<16x1xf32>
    %cst_71 = arith.constant 3.125000e-02 : f32
    %259 = vector.broadcast %cst_71 : f32 to vector<16x1xf32>
    %260 = arith.mulf %258, %259 : vector<16x1xf32>
    %261 = arith.mulf %252, %252 : vector<16x128xf32>
    %cst_72 = arith.constant dense<0.000000e+00> : vector<16xf32>
    %262 = vector.multi_reduction <add>, %261, %cst_72 [1] : vector<16x128xf32> to vector<16xf32>
    %263 = vector.shape_cast %262 : vector<16xf32> to vector<16x1xf32>
    %cst_73 = arith.constant 3.125000e-02 : f32
    %264 = vector.broadcast %cst_73 : f32 to vector<16x1xf32>
    %265 = arith.mulf %263, %264 : vector<16x1xf32>
    %266 = arith.mulf %260, %260 : vector<16x1xf32>
    %267 = arith.subf %265, %266 : vector<16x1xf32>
    %268 = vector.broadcast %260 : vector<16x1xf32> to vector<16x128xf32>
    %269 = arith.subf %252, %268 : vector<16x128xf32>
    %cst_74 = arith.constant 9.99999974E-6 : f32
    %270 = vector.broadcast %cst_74 : f32 to vector<16x1xf32>
    %271 = arith.addf %267, %270 : vector<16x1xf32>
    %272 = math.rsqrt %271 : vector<16x1xf32>
    %273 = vector.broadcast %272 : vector<16x1xf32> to vector<16x128xf32>
    %274 = arith.mulf %269, %273 : vector<16x128xf32>
    %275 = vector.broadcast %254 : vector<1x128xf32> to vector<16x128xf32>
    %276 = arith.mulf %274, %275 : vector<16x128xf32>
    %277 = vector.broadcast %256 : vector<1x128xf32> to vector<16x128xf32>
    %278 = arith.addf %276, %277 : vector<16x128xf32>
    %279 = arith.truncf %278 : vector<16x128xf32> to vector<16x128xbf16>
    %c0_75 = arith.constant 0 : index
    %c0_76 = arith.constant 0 : index
    %c0_77 = arith.constant 0 : index
    %280 = vector.load %arg20[%c0_75, %c0_76, %c0_77] : memref<2x128x128xbf16, #tpu.memory_space<vmem>>, vector<1x128x128xbf16>
    %281 = vector.shape_cast %280 : vector<1x128x128xbf16> to vector<128x128xbf16>
    %cst_78 = arith.constant dense<0.000000e+00> : vector<16x128xf32>
    %282 = tpu.matmul %279, %281, %cst_78 {dimension_numbers = #tpu.dot_dimension_numbers<[1], [1], [0], [0], [0, 0, 1, 0], [], []>} : vector<16x128xbf16>, vector<128x128xbf16>, vector<16x128xf32> -> vector<16x128xf32>
    %c0_79 = arith.constant 0 : index
    %c0_80 = arith.constant 0 : index
    %c0_81 = arith.constant 0 : index
    %283 = vector.load %arg21[%c0_79, %c0_80, %c0_81] : memref<2x1x128xf32, #tpu.memory_space<vmem>>, vector<1x1x128xf32>
    %284 = vector.shape_cast %283 : vector<1x1x128xf32> to vector<1x128xf32>
    %285 = vector.broadcast %284 : vector<1x128xf32> to vector<16x128xf32>
    %286 = arith.addf %282, %285 : vector<16x128xf32>
    %cst_82 = arith.constant 0.000000e+00 : f32
    %287 = vector.broadcast %cst_82 : f32 to vector<16x128xf32>
    %288 = arith.maximumf %286, %287 : vector<16x128xf32>
    %289 = arith.truncf %288 : vector<16x128xf32> to vector<16x128xbf16>
    %c0_83 = arith.constant 0 : index
    %c0_84 = arith.constant 0 : index
    %c0_85 = arith.constant 0 : index
    %290 = vector.load %arg22[%c0_83, %c0_84, %c0_85] : memref<2x128x128xbf16, #tpu.memory_space<vmem>>, vector<1x128x128xbf16>
    %291 = vector.shape_cast %290 : vector<1x128x128xbf16> to vector<128x128xbf16>
    %cst_86 = arith.constant dense<0.000000e+00> : vector<16x128xf32>
    %292 = tpu.matmul %289, %291, %cst_86 {dimension_numbers = #tpu.dot_dimension_numbers<[1], [1], [0], [0], [0, 0, 1, 0], [], []>} : vector<16x128xbf16>, vector<128x128xbf16>, vector<16x128xf32> -> vector<16x128xf32>
    %c0_87 = arith.constant 0 : index
    %c0_88 = arith.constant 0 : index
    %c0_89 = arith.constant 0 : index
    %293 = vector.load %arg23[%c0_87, %c0_88, %c0_89] : memref<2x1x128xf32, #tpu.memory_space<vmem>>, vector<1x1x128xf32>
    %294 = vector.shape_cast %293 : vector<1x1x128xf32> to vector<1x128xf32>
    %295 = vector.broadcast %294 : vector<1x128xf32> to vector<16x128xf32>
    %296 = arith.addf %292, %295 : vector<16x128xf32>
    %297 = arith.addf %278, %296 : vector<16x128xf32>
    %c0_90 = arith.constant 0 : index
    %c0_91 = arith.constant 0 : index
    %c0_92 = arith.constant 0 : index
    %298 = vector.load %arg24[%c0_90, %c0_91, %c0_92] : memref<2x1x128xf32, #tpu.memory_space<vmem>>, vector<1x1x128xf32>
    %299 = vector.shape_cast %298 : vector<1x1x128xf32> to vector<1x128xf32>
    %c0_93 = arith.constant 0 : index
    %c0_94 = arith.constant 0 : index
    %c0_95 = arith.constant 0 : index
    %300 = vector.load %arg25[%c0_93, %c0_94, %c0_95] : memref<2x1x128xf32, #tpu.memory_space<vmem>>, vector<1x1x128xf32>
    %301 = vector.shape_cast %300 : vector<1x1x128xf32> to vector<1x128xf32>
    %cst_96 = arith.constant dense<0.000000e+00> : vector<16xf32>
    %302 = vector.multi_reduction <add>, %297, %cst_96 [1] : vector<16x128xf32> to vector<16xf32>
    %303 = vector.shape_cast %302 : vector<16xf32> to vector<16x1xf32>
    %cst_97 = arith.constant 3.125000e-02 : f32
    %304 = vector.broadcast %cst_97 : f32 to vector<16x1xf32>
    %305 = arith.mulf %303, %304 : vector<16x1xf32>
    %306 = arith.mulf %297, %297 : vector<16x128xf32>
    %cst_98 = arith.constant dense<0.000000e+00> : vector<16xf32>
    %307 = vector.multi_reduction <add>, %306, %cst_98 [1] : vector<16x128xf32> to vector<16xf32>
    %308 = vector.shape_cast %307 : vector<16xf32> to vector<16x1xf32>
    %cst_99 = arith.constant 3.125000e-02 : f32
    %309 = vector.broadcast %cst_99 : f32 to vector<16x1xf32>
    %310 = arith.mulf %308, %309 : vector<16x1xf32>
    %311 = arith.mulf %305, %305 : vector<16x1xf32>
    %312 = arith.subf %310, %311 : vector<16x1xf32>
    %313 = vector.broadcast %305 : vector<16x1xf32> to vector<16x128xf32>
    %314 = arith.subf %297, %313 : vector<16x128xf32>
    %cst_100 = arith.constant 9.99999974E-6 : f32
    %315 = vector.broadcast %cst_100 : f32 to vector<16x1xf32>
    %316 = arith.addf %312, %315 : vector<16x1xf32>
    %317 = math.rsqrt %316 : vector<16x1xf32>
    %318 = vector.broadcast %317 : vector<16x1xf32> to vector<16x128xf32>
    %319 = arith.mulf %314, %318 : vector<16x128xf32>
    %320 = vector.broadcast %299 : vector<1x128xf32> to vector<16x128xf32>
    %321 = arith.mulf %319, %320 : vector<16x128xf32>
    %322 = vector.broadcast %301 : vector<1x128xf32> to vector<16x128xf32>
    %323 = arith.addf %321, %322 : vector<16x128xf32>
    %324 = arith.truncf %323 : vector<16x128xf32> to vector<16x128xbf16>
    %c1 = arith.constant 1 : index
    %c0_101 = arith.constant 0 : index
    %c0_102 = arith.constant 0 : index
    %325 = vector.load %arg6[%c1, %c0_101, %c0_102] : memref<2x384x128xbf16, #tpu.memory_space<vmem>>, vector<1x384x128xbf16>
    %326 = vector.shape_cast %325 : vector<1x384x128xbf16> to vector<384x128xbf16>
    %cst_103 = arith.constant dense<0.000000e+00> : vector<16x384xf32>
    %327 = tpu.matmul %324, %326, %cst_103 {dimension_numbers = #tpu.dot_dimension_numbers<[1], [1], [0], [0], [0, 0, 1, 0], [], []>} : vector<16x128xbf16>, vector<384x128xbf16>, vector<16x384xf32> -> vector<16x384xf32>
    %c1_104 = arith.constant 1 : index
    %c0_105 = arith.constant 0 : index
    %c0_106 = arith.constant 0 : index
    %328 = vector.load %arg7[%c1_104, %c0_105, %c0_106] : memref<2x1x384xf32, #tpu.memory_space<vmem>>, vector<1x1x384xf32>
    %329 = vector.shape_cast %328 : vector<1x1x384xf32> to vector<1x384xf32>
    %330 = vector.broadcast %329 : vector<1x384xf32> to vector<16x384xf32>
    %331 = arith.addf %327, %330 : vector<16x384xf32>
    %332 = vector.extract_strided_slice %331 {offsets = [0, 0], sizes = [16, 128], strides = [1, 1]} : vector<16x384xf32> to vector<16x128xf32>
    %333 = vector.extract_strided_slice %331 {offsets = [0, 128], sizes = [16, 128], strides = [1, 1]} : vector<16x384xf32> to vector<16x128xf32>
    %334 = vector.extract_strided_slice %331 {offsets = [0, 256], sizes = [16, 128], strides = [1, 1]} : vector<16x384xf32> to vector<16x128xf32>
    %335 = vector.extract_strided_slice %332 {offsets = [0, 0], sizes = [8, 32], strides = [1, 1]} : vector<16x128xf32> to vector<8x32xf32>
    %336 = vector.extract_strided_slice %332 {offsets = [0, 32], sizes = [8, 32], strides = [1, 1]} : vector<16x128xf32> to vector<8x32xf32>
    %337 = vector.extract_strided_slice %332 {offsets = [0, 64], sizes = [8, 32], strides = [1, 1]} : vector<16x128xf32> to vector<8x32xf32>
    %338 = vector.extract_strided_slice %332 {offsets = [0, 96], sizes = [8, 32], strides = [1, 1]} : vector<16x128xf32> to vector<8x32xf32>
    %339 = vector.extract_strided_slice %332 {offsets = [8, 0], sizes = [8, 32], strides = [1, 1]} : vector<16x128xf32> to vector<8x32xf32>
    %340 = vector.extract_strided_slice %332 {offsets = [8, 32], sizes = [8, 32], strides = [1, 1]} : vector<16x128xf32> to vector<8x32xf32>
    %341 = vector.extract_strided_slice %332 {offsets = [8, 64], sizes = [8, 32], strides = [1, 1]} : vector<16x128xf32> to vector<8x32xf32>
    %342 = vector.extract_strided_slice %332 {offsets = [8, 96], sizes = [8, 32], strides = [1, 1]} : vector<16x128xf32> to vector<8x32xf32>
    %343 = vector.shape_cast %335 : vector<8x32xf32> to vector<1x8x32xf32>
    %344 = vector.shape_cast %336 : vector<8x32xf32> to vector<1x8x32xf32>
    %345 = vector.shape_cast %337 : vector<8x32xf32> to vector<1x8x32xf32>
    %346 = vector.shape_cast %338 : vector<8x32xf32> to vector<1x8x32xf32>
    %347 = vector.shape_cast %339 : vector<8x32xf32> to vector<1x8x32xf32>
    %348 = vector.shape_cast %340 : vector<8x32xf32> to vector<1x8x32xf32>
    %349 = vector.shape_cast %341 : vector<8x32xf32> to vector<1x8x32xf32>
    %350 = vector.shape_cast %342 : vector<8x32xf32> to vector<1x8x32xf32>
    %351 = tpu.concatenate %343, %344, %345, %346, %347, %348, %349, %350 in 0 : vector<1x8x32xf32>, vector<1x8x32xf32>, vector<1x8x32xf32>, vector<1x8x32xf32>, vector<1x8x32xf32>, vector<1x8x32xf32>, vector<1x8x32xf32>, vector<1x8x32xf32> -> vector<8x8x32xf32>
    %352 = arith.truncf %351 : vector<8x8x32xf32> to vector<8x8x32xbf16>
    %353 = vector.extract_strided_slice %333 {offsets = [0, 0], sizes = [8, 32], strides = [1, 1]} : vector<16x128xf32> to vector<8x32xf32>
    %354 = vector.extract_strided_slice %333 {offsets = [0, 32], sizes = [8, 32], strides = [1, 1]} : vector<16x128xf32> to vector<8x32xf32>
    %355 = vector.extract_strided_slice %333 {offsets = [0, 64], sizes = [8, 32], strides = [1, 1]} : vector<16x128xf32> to vector<8x32xf32>
    %356 = vector.extract_strided_slice %333 {offsets = [0, 96], sizes = [8, 32], strides = [1, 1]} : vector<16x128xf32> to vector<8x32xf32>
    %357 = vector.extract_strided_slice %333 {offsets = [8, 0], sizes = [8, 32], strides = [1, 1]} : vector<16x128xf32> to vector<8x32xf32>
    %358 = vector.extract_strided_slice %333 {offsets = [8, 32], sizes = [8, 32], strides = [1, 1]} : vector<16x128xf32> to vector<8x32xf32>
    %359 = vector.extract_strided_slice %333 {offsets = [8, 64], sizes = [8, 32], strides = [1, 1]} : vector<16x128xf32> to vector<8x32xf32>
    %360 = vector.extract_strided_slice %333 {offsets = [8, 96], sizes = [8, 32], strides = [1, 1]} : vector<16x128xf32> to vector<8x32xf32>
    %361 = vector.shape_cast %353 : vector<8x32xf32> to vector<1x8x32xf32>
    %362 = vector.shape_cast %354 : vector<8x32xf32> to vector<1x8x32xf32>
    %363 = vector.shape_cast %355 : vector<8x32xf32> to vector<1x8x32xf32>
    %364 = vector.shape_cast %356 : vector<8x32xf32> to vector<1x8x32xf32>
    %365 = vector.shape_cast %357 : vector<8x32xf32> to vector<1x8x32xf32>
    %366 = vector.shape_cast %358 : vector<8x32xf32> to vector<1x8x32xf32>
    %367 = vector.shape_cast %359 : vector<8x32xf32> to vector<1x8x32xf32>
    %368 = vector.shape_cast %360 : vector<8x32xf32> to vector<1x8x32xf32>
    %369 = tpu.concatenate %361, %362, %363, %364, %365, %366, %367, %368 in 0 : vector<1x8x32xf32>, vector<1x8x32xf32>, vector<1x8x32xf32>, vector<1x8x32xf32>, vector<1x8x32xf32>, vector<1x8x32xf32>, vector<1x8x32xf32>, vector<1x8x32xf32> -> vector<8x8x32xf32>
    %370 = arith.truncf %369 : vector<8x8x32xf32> to vector<8x8x32xbf16>
    %371 = vector.extract_strided_slice %334 {offsets = [0, 0], sizes = [8, 32], strides = [1, 1]} : vector<16x128xf32> to vector<8x32xf32>
    %372 = vector.extract_strided_slice %334 {offsets = [0, 32], sizes = [8, 32], strides = [1, 1]} : vector<16x128xf32> to vector<8x32xf32>
    %373 = vector.extract_strided_slice %334 {offsets = [0, 64], sizes = [8, 32], strides = [1, 1]} : vector<16x128xf32> to vector<8x32xf32>
    %374 = vector.extract_strided_slice %334 {offsets = [0, 96], sizes = [8, 32], strides = [1, 1]} : vector<16x128xf32> to vector<8x32xf32>
    %375 = vector.extract_strided_slice %334 {offsets = [8, 0], sizes = [8, 32], strides = [1, 1]} : vector<16x128xf32> to vector<8x32xf32>
    %376 = vector.extract_strided_slice %334 {offsets = [8, 32], sizes = [8, 32], strides = [1, 1]} : vector<16x128xf32> to vector<8x32xf32>
    %377 = vector.extract_strided_slice %334 {offsets = [8, 64], sizes = [8, 32], strides = [1, 1]} : vector<16x128xf32> to vector<8x32xf32>
    %378 = vector.extract_strided_slice %334 {offsets = [8, 96], sizes = [8, 32], strides = [1, 1]} : vector<16x128xf32> to vector<8x32xf32>
    %379 = vector.shape_cast %371 : vector<8x32xf32> to vector<1x8x32xf32>
    %380 = vector.shape_cast %372 : vector<8x32xf32> to vector<1x8x32xf32>
    %381 = vector.shape_cast %373 : vector<8x32xf32> to vector<1x8x32xf32>
    %382 = vector.shape_cast %374 : vector<8x32xf32> to vector<1x8x32xf32>
    %383 = vector.shape_cast %375 : vector<8x32xf32> to vector<1x8x32xf32>
    %384 = vector.shape_cast %376 : vector<8x32xf32> to vector<1x8x32xf32>
    %385 = vector.shape_cast %377 : vector<8x32xf32> to vector<1x8x32xf32>
    %386 = vector.shape_cast %378 : vector<8x32xf32> to vector<1x8x32xf32>
    %387 = tpu.concatenate %379, %380, %381, %382, %383, %384, %385, %386 in 0 : vector<1x8x32xf32>, vector<1x8x32xf32>, vector<1x8x32xf32>, vector<1x8x32xf32>, vector<1x8x32xf32>, vector<1x8x32xf32>, vector<1x8x32xf32>, vector<1x8x32xf32> -> vector<8x8x32xf32>
    %388 = arith.truncf %387 : vector<8x8x32xf32> to vector<8x8x32xbf16>
    "tpu.trace_start"() <{level = 10 : i32, message = "hqd,hkd->hqk"}> : () -> ()
    %cst_107 = arith.constant dense<0.000000e+00> : vector<8x8x8xf32>
    %389 = tpu.matmul %352, %370, %cst_107 {dimension_numbers = #tpu.dot_dimension_numbers<[2], [2], [1], [1], [0, 0, 0, 1, 1, 1], [0], [0]>} : vector<8x8x32xbf16>, vector<8x8x32xbf16>, vector<8x8x8xf32> -> vector<8x8x8xf32>
    "tpu.trace_stop"() : () -> ()
    %390 = vector.broadcast %2 : vector<8x1x8xf32> to vector<8x8x8xf32>
    %391 = arith.addf %389, %390 : vector<8x8x8xf32>
    %cst_108 = arith.constant dense<0xFF800000> : vector<8x8xf32>
    %392 = vector.multi_reduction <maximumf>, %391, %cst_108 [2] : vector<8x8x8xf32> to vector<8x8xf32>
    %393 = vector.shape_cast %392 : vector<8x8xf32> to vector<8x8x1xf32>
    %394 = vector.broadcast %393 : vector<8x8x1xf32> to vector<8x8x8xf32>
    %395 = arith.subf %391, %394 : vector<8x8x8xf32>
    %396 = math.exp %395 : vector<8x8x8xf32>
    %cst_109 = arith.constant dense<0.000000e+00> : vector<8x8xf32>
    %397 = vector.multi_reduction <add>, %396, %cst_109 [2] : vector<8x8x8xf32> to vector<8x8xf32>
    %398 = vector.shape_cast %397 : vector<8x8xf32> to vector<8x8x1xf32>
    %399 = tpu.reciprocal %398 {approx = true} : vector<8x8x1xf32> -> vector<8x8x1xf32>
    %400 = vector.broadcast %399 : vector<8x8x1xf32> to vector<8x8x8xf32>
    %401 = arith.mulf %396, %400 : vector<8x8x8xf32>
    %402 = arith.truncf %401 : vector<8x8x8xf32> to vector<8x8x8xbf16>
    "tpu.trace_start"() <{level = 10 : i32, message = "hqk,hkd->hqd"}> : () -> ()
    %cst_110 = arith.constant dense<0.000000e+00> : vector<8x8x32xf32>
    %403 = tpu.matmul %402, %388, %cst_110 {dimension_numbers = #tpu.dot_dimension_numbers<[2], [1], [1], [2], [0, 0, 0, 1, 1, 2], [0], [0]>} : vector<8x8x8xbf16>, vector<8x8x32xbf16>, vector<8x8x32xf32> -> vector<8x8x32xf32>
    "tpu.trace_stop"() : () -> ()
    %404 = vector.extract_strided_slice %403 {offsets = [0, 0, 0], sizes = [1, 8, 32], strides = [1, 1, 1]} : vector<8x8x32xf32> to vector<1x8x32xf32>
    %405 = vector.shape_cast %404 : vector<1x8x32xf32> to vector<8x32xf32>
    %406 = vector.extract_strided_slice %403 {offsets = [1, 0, 0], sizes = [1, 8, 32], strides = [1, 1, 1]} : vector<8x8x32xf32> to vector<1x8x32xf32>
    %407 = vector.shape_cast %406 : vector<1x8x32xf32> to vector<8x32xf32>
    %408 = vector.extract_strided_slice %403 {offsets = [2, 0, 0], sizes = [1, 8, 32], strides = [1, 1, 1]} : vector<8x8x32xf32> to vector<1x8x32xf32>
    %409 = vector.shape_cast %408 : vector<1x8x32xf32> to vector<8x32xf32>
    %410 = vector.extract_strided_slice %403 {offsets = [3, 0, 0], sizes = [1, 8, 32], strides = [1, 1, 1]} : vector<8x8x32xf32> to vector<1x8x32xf32>
    %411 = vector.shape_cast %410 : vector<1x8x32xf32> to vector<8x32xf32>
    %412 = tpu.concatenate %405, %407, %409, %411 in 1 : vector<8x32xf32>, vector<8x32xf32>, vector<8x32xf32>, vector<8x32xf32> -> vector<8x128xf32>
    %413 = vector.extract_strided_slice %403 {offsets = [4, 0, 0], sizes = [1, 8, 32], strides = [1, 1, 1]} : vector<8x8x32xf32> to vector<1x8x32xf32>
    %414 = vector.shape_cast %413 : vector<1x8x32xf32> to vector<8x32xf32>
    %415 = vector.extract_strided_slice %403 {offsets = [5, 0, 0], sizes = [1, 8, 32], strides = [1, 1, 1]} : vector<8x8x32xf32> to vector<1x8x32xf32>
    %416 = vector.shape_cast %415 : vector<1x8x32xf32> to vector<8x32xf32>
    %417 = vector.extract_strided_slice %403 {offsets = [6, 0, 0], sizes = [1, 8, 32], strides = [1, 1, 1]} : vector<8x8x32xf32> to vector<1x8x32xf32>
    %418 = vector.shape_cast %417 : vector<1x8x32xf32> to vector<8x32xf32>
    %419 = vector.extract_strided_slice %403 {offsets = [7, 0, 0], sizes = [1, 8, 32], strides = [1, 1, 1]} : vector<8x8x32xf32> to vector<1x8x32xf32>
    %420 = vector.shape_cast %419 : vector<1x8x32xf32> to vector<8x32xf32>
    %421 = tpu.concatenate %414, %416, %418, %420 in 1 : vector<8x32xf32>, vector<8x32xf32>, vector<8x32xf32>, vector<8x32xf32> -> vector<8x128xf32>
    %422 = tpu.concatenate %412, %421 in 0 : vector<8x128xf32>, vector<8x128xf32> -> vector<16x128xf32>
    %423 = arith.truncf %422 : vector<16x128xf32> to vector<16x128xbf16>
    %c1_111 = arith.constant 1 : index
    %c0_112 = arith.constant 0 : index
    %c0_113 = arith.constant 0 : index
    %424 = vector.load %arg8[%c1_111, %c0_112, %c0_113] : memref<2x128x128xbf16, #tpu.memory_space<vmem>>, vector<1x128x128xbf16>
    %425 = vector.shape_cast %424 : vector<1x128x128xbf16> to vector<128x128xbf16>
    %cst_114 = arith.constant dense<0.000000e+00> : vector<16x128xf32>
    %426 = tpu.matmul %423, %425, %cst_114 {dimension_numbers = #tpu.dot_dimension_numbers<[1], [1], [0], [0], [0, 0, 1, 0], [], []>} : vector<16x128xbf16>, vector<128x128xbf16>, vector<16x128xf32> -> vector<16x128xf32>
    %c1_115 = arith.constant 1 : index
    %c0_116 = arith.constant 0 : index
    %c0_117 = arith.constant 0 : index
    %427 = vector.load %arg9[%c1_115, %c0_116, %c0_117] : memref<2x1x128xf32, #tpu.memory_space<vmem>>, vector<1x1x128xf32>
    %428 = vector.shape_cast %427 : vector<1x1x128xf32> to vector<1x128xf32>
    %429 = vector.broadcast %428 : vector<1x128xf32> to vector<16x128xf32>
    %430 = arith.addf %426, %429 : vector<16x128xf32>
    %431 = arith.addf %430, %323 : vector<16x128xf32>
    %c1_118 = arith.constant 1 : index
    %c0_119 = arith.constant 0 : index
    %c0_120 = arith.constant 0 : index
    %432 = vector.load %arg10[%c1_118, %c0_119, %c0_120] : memref<2x1x128xf32, #tpu.memory_space<vmem>>, vector<1x1x128xf32>
    %433 = vector.shape_cast %432 : vector<1x1x128xf32> to vector<1x128xf32>
    %c1_121 = arith.constant 1 : index
    %c0_122 = arith.constant 0 : index
    %c0_123 = arith.constant 0 : index
    %434 = vector.load %arg11[%c1_121, %c0_122, %c0_123] : memref<2x1x128xf32, #tpu.memory_space<vmem>>, vector<1x1x128xf32>
    %435 = vector.shape_cast %434 : vector<1x1x128xf32> to vector<1x128xf32>
    %cst_124 = arith.constant dense<0.000000e+00> : vector<16xf32>
    %436 = vector.multi_reduction <add>, %431, %cst_124 [1] : vector<16x128xf32> to vector<16xf32>
    %437 = vector.shape_cast %436 : vector<16xf32> to vector<16x1xf32>
    %cst_125 = arith.constant 3.125000e-02 : f32
    %438 = vector.broadcast %cst_125 : f32 to vector<16x1xf32>
    %439 = arith.mulf %437, %438 : vector<16x1xf32>
    %440 = arith.mulf %431, %431 : vector<16x128xf32>
    %cst_126 = arith.constant dense<0.000000e+00> : vector<16xf32>
    %441 = vector.multi_reduction <add>, %440, %cst_126 [1] : vector<16x128xf32> to vector<16xf32>
    %442 = vector.shape_cast %441 : vector<16xf32> to vector<16x1xf32>
    %cst_127 = arith.constant 3.125000e-02 : f32
    %443 = vector.broadcast %cst_127 : f32 to vector<16x1xf32>
    %444 = arith.mulf %442, %443 : vector<16x1xf32>
    %445 = arith.mulf %439, %439 : vector<16x1xf32>
    %446 = arith.subf %444, %445 : vector<16x1xf32>
    %447 = vector.broadcast %439 : vector<16x1xf32> to vector<16x128xf32>
    %448 = arith.subf %431, %447 : vector<16x128xf32>
    %cst_128 = arith.constant 9.99999974E-6 : f32
    %449 = vector.broadcast %cst_128 : f32 to vector<16x1xf32>
    %450 = arith.addf %446, %449 : vector<16x1xf32>
    %451 = math.rsqrt %450 : vector<16x1xf32>
    %452 = vector.broadcast %451 : vector<16x1xf32> to vector<16x128xf32>
    %453 = arith.mulf %448, %452 : vector<16x128xf32>
    %454 = vector.broadcast %433 : vector<1x128xf32> to vector<16x128xf32>
    %455 = arith.mulf %453, %454 : vector<16x128xf32>
    %456 = vector.broadcast %435 : vector<1x128xf32> to vector<16x128xf32>
    %457 = arith.addf %455, %456 : vector<16x128xf32>
    %458 = arith.truncf %457 : vector<16x128xf32> to vector<16x128xbf16>
    %c1_129 = arith.constant 1 : index
    %c0_130 = arith.constant 0 : index
    %c0_131 = arith.constant 0 : index
    %459 = vector.load %arg12[%c1_129, %c0_130, %c0_131] : memref<2x128x128xbf16, #tpu.memory_space<vmem>>, vector<1x128x128xbf16>
    %460 = vector.shape_cast %459 : vector<1x128x128xbf16> to vector<128x128xbf16>
    %cst_132 = arith.constant dense<0.000000e+00> : vector<16x128xf32>
    %461 = tpu.matmul %458, %460, %cst_132 {dimension_numbers = #tpu.dot_dimension_numbers<[1], [1], [0], [0], [0, 0, 1, 0], [], []>} : vector<16x128xbf16>, vector<128x128xbf16>, vector<16x128xf32> -> vector<16x128xf32>
    %c1_133 = arith.constant 1 : index
    %c0_134 = arith.constant 0 : index
    %c0_135 = arith.constant 0 : index
    %462 = vector.load %arg13[%c1_133, %c0_134, %c0_135] : memref<2x1x128xf32, #tpu.memory_space<vmem>>, vector<1x1x128xf32>
    %463 = vector.shape_cast %462 : vector<1x1x128xf32> to vector<1x128xf32>
    %464 = vector.broadcast %463 : vector<1x128xf32> to vector<16x128xf32>
    %465 = arith.addf %461, %464 : vector<16x128xf32>
    %c1_136 = arith.constant 1 : index
    %c0_137 = arith.constant 0 : index
    %c0_138 = arith.constant 0 : index
    %466 = vector.load %arg14[%c1_136, %c0_137, %c0_138] : memref<2x256x128xbf16, #tpu.memory_space<vmem>>, vector<1x256x128xbf16>
    %467 = vector.shape_cast %466 : vector<1x256x128xbf16> to vector<256x128xbf16>
    %cst_139 = arith.constant dense<0.000000e+00> : vector<32x256xf32>
    %468 = tpu.matmul %1, %467, %cst_139 {dimension_numbers = #tpu.dot_dimension_numbers<[1], [1], [0], [0], [0, 0, 1, 0], [], []>} : vector<32x128xbf16>, vector<256x128xbf16>, vector<32x256xf32> -> vector<32x256xf32>
    %c1_140 = arith.constant 1 : index
    %c0_141 = arith.constant 0 : index
    %c0_142 = arith.constant 0 : index
    %469 = vector.load %arg15[%c1_140, %c0_141, %c0_142] : memref<2x1x256xf32, #tpu.memory_space<vmem>>, vector<1x1x256xf32>
    %470 = vector.shape_cast %469 : vector<1x1x256xf32> to vector<1x256xf32>
    %471 = vector.broadcast %470 : vector<1x256xf32> to vector<32x256xf32>
    %472 = arith.addf %468, %471 : vector<32x256xf32>
    %473 = vector.extract_strided_slice %472 {offsets = [0, 0], sizes = [32, 128], strides = [1, 1]} : vector<32x256xf32> to vector<32x128xf32>
    %474 = vector.extract_strided_slice %472 {offsets = [0, 128], sizes = [32, 128], strides = [1, 1]} : vector<32x256xf32> to vector<32x128xf32>
    %475 = vector.extract_strided_slice %465 {offsets = [0, 0], sizes = [8, 32], strides = [1, 1]} : vector<16x128xf32> to vector<8x32xf32>
    %476 = vector.extract_strided_slice %465 {offsets = [0, 32], sizes = [8, 32], strides = [1, 1]} : vector<16x128xf32> to vector<8x32xf32>
    %477 = vector.extract_strided_slice %465 {offsets = [0, 64], sizes = [8, 32], strides = [1, 1]} : vector<16x128xf32> to vector<8x32xf32>
    %478 = vector.extract_strided_slice %465 {offsets = [0, 96], sizes = [8, 32], strides = [1, 1]} : vector<16x128xf32> to vector<8x32xf32>
    %479 = vector.extract_strided_slice %465 {offsets = [8, 0], sizes = [8, 32], strides = [1, 1]} : vector<16x128xf32> to vector<8x32xf32>
    %480 = vector.extract_strided_slice %465 {offsets = [8, 32], sizes = [8, 32], strides = [1, 1]} : vector<16x128xf32> to vector<8x32xf32>
    %481 = vector.extract_strided_slice %465 {offsets = [8, 64], sizes = [8, 32], strides = [1, 1]} : vector<16x128xf32> to vector<8x32xf32>
    %482 = vector.extract_strided_slice %465 {offsets = [8, 96], sizes = [8, 32], strides = [1, 1]} : vector<16x128xf32> to vector<8x32xf32>
    %483 = vector.shape_cast %475 : vector<8x32xf32> to vector<1x8x32xf32>
    %484 = vector.shape_cast %476 : vector<8x32xf32> to vector<1x8x32xf32>
    %485 = vector.shape_cast %477 : vector<8x32xf32> to vector<1x8x32xf32>
    %486 = vector.shape_cast %478 : vector<8x32xf32> to vector<1x8x32xf32>
    %487 = vector.shape_cast %479 : vector<8x32xf32> to vector<1x8x32xf32>
    %488 = vector.shape_cast %480 : vector<8x32xf32> to vector<1x8x32xf32>
    %489 = vector.shape_cast %481 : vector<8x32xf32> to vector<1x8x32xf32>
    %490 = vector.shape_cast %482 : vector<8x32xf32> to vector<1x8x32xf32>
    %491 = tpu.concatenate %483, %484, %485, %486, %487, %488, %489, %490 in 0 : vector<1x8x32xf32>, vector<1x8x32xf32>, vector<1x8x32xf32>, vector<1x8x32xf32>, vector<1x8x32xf32>, vector<1x8x32xf32>, vector<1x8x32xf32>, vector<1x8x32xf32> -> vector<8x8x32xf32>
    %492 = arith.truncf %491 : vector<8x8x32xf32> to vector<8x8x32xbf16>
    %493 = vector.extract_strided_slice %473 {offsets = [0, 0], sizes = [16, 32], strides = [1, 1]} : vector<32x128xf32> to vector<16x32xf32>
    %494 = vector.extract_strided_slice %473 {offsets = [0, 32], sizes = [16, 32], strides = [1, 1]} : vector<32x128xf32> to vector<16x32xf32>
    %495 = vector.extract_strided_slice %473 {offsets = [0, 64], sizes = [16, 32], strides = [1, 1]} : vector<32x128xf32> to vector<16x32xf32>
    %496 = vector.extract_strided_slice %473 {offsets = [0, 96], sizes = [16, 32], strides = [1, 1]} : vector<32x128xf32> to vector<16x32xf32>
    %497 = vector.extract_strided_slice %473 {offsets = [16, 0], sizes = [16, 32], strides = [1, 1]} : vector<32x128xf32> to vector<16x32xf32>
    %498 = vector.extract_strided_slice %473 {offsets = [16, 32], sizes = [16, 32], strides = [1, 1]} : vector<32x128xf32> to vector<16x32xf32>
    %499 = vector.extract_strided_slice %473 {offsets = [16, 64], sizes = [16, 32], strides = [1, 1]} : vector<32x128xf32> to vector<16x32xf32>
    %500 = vector.extract_strided_slice %473 {offsets = [16, 96], sizes = [16, 32], strides = [1, 1]} : vector<32x128xf32> to vector<16x32xf32>
    %501 = vector.shape_cast %493 : vector<16x32xf32> to vector<1x16x32xf32>
    %502 = vector.shape_cast %494 : vector<16x32xf32> to vector<1x16x32xf32>
    %503 = vector.shape_cast %495 : vector<16x32xf32> to vector<1x16x32xf32>
    %504 = vector.shape_cast %496 : vector<16x32xf32> to vector<1x16x32xf32>
    %505 = vector.shape_cast %497 : vector<16x32xf32> to vector<1x16x32xf32>
    %506 = vector.shape_cast %498 : vector<16x32xf32> to vector<1x16x32xf32>
    %507 = vector.shape_cast %499 : vector<16x32xf32> to vector<1x16x32xf32>
    %508 = vector.shape_cast %500 : vector<16x32xf32> to vector<1x16x32xf32>
    %509 = tpu.concatenate %501, %502, %503, %504, %505, %506, %507, %508 in 0 : vector<1x16x32xf32>, vector<1x16x32xf32>, vector<1x16x32xf32>, vector<1x16x32xf32>, vector<1x16x32xf32>, vector<1x16x32xf32>, vector<1x16x32xf32>, vector<1x16x32xf32> -> vector<8x16x32xf32>
    %510 = arith.truncf %509 : vector<8x16x32xf32> to vector<8x16x32xbf16>
    %511 = vector.extract_strided_slice %474 {offsets = [0, 0], sizes = [16, 32], strides = [1, 1]} : vector<32x128xf32> to vector<16x32xf32>
    %512 = vector.extract_strided_slice %474 {offsets = [0, 32], sizes = [16, 32], strides = [1, 1]} : vector<32x128xf32> to vector<16x32xf32>
    %513 = vector.extract_strided_slice %474 {offsets = [0, 64], sizes = [16, 32], strides = [1, 1]} : vector<32x128xf32> to vector<16x32xf32>
    %514 = vector.extract_strided_slice %474 {offsets = [0, 96], sizes = [16, 32], strides = [1, 1]} : vector<32x128xf32> to vector<16x32xf32>
    %515 = vector.extract_strided_slice %474 {offsets = [16, 0], sizes = [16, 32], strides = [1, 1]} : vector<32x128xf32> to vector<16x32xf32>
    %516 = vector.extract_strided_slice %474 {offsets = [16, 32], sizes = [16, 32], strides = [1, 1]} : vector<32x128xf32> to vector<16x32xf32>
    %517 = vector.extract_strided_slice %474 {offsets = [16, 64], sizes = [16, 32], strides = [1, 1]} : vector<32x128xf32> to vector<16x32xf32>
    %518 = vector.extract_strided_slice %474 {offsets = [16, 96], sizes = [16, 32], strides = [1, 1]} : vector<32x128xf32> to vector<16x32xf32>
    %519 = vector.shape_cast %511 : vector<16x32xf32> to vector<1x16x32xf32>
    %520 = vector.shape_cast %512 : vector<16x32xf32> to vector<1x16x32xf32>
    %521 = vector.shape_cast %513 : vector<16x32xf32> to vector<1x16x32xf32>
    %522 = vector.shape_cast %514 : vector<16x32xf32> to vector<1x16x32xf32>
    %523 = vector.shape_cast %515 : vector<16x32xf32> to vector<1x16x32xf32>
    %524 = vector.shape_cast %516 : vector<16x32xf32> to vector<1x16x32xf32>
    %525 = vector.shape_cast %517 : vector<16x32xf32> to vector<1x16x32xf32>
    %526 = vector.shape_cast %518 : vector<16x32xf32> to vector<1x16x32xf32>
    %527 = tpu.concatenate %519, %520, %521, %522, %523, %524, %525, %526 in 0 : vector<1x16x32xf32>, vector<1x16x32xf32>, vector<1x16x32xf32>, vector<1x16x32xf32>, vector<1x16x32xf32>, vector<1x16x32xf32>, vector<1x16x32xf32>, vector<1x16x32xf32> -> vector<8x16x32xf32>
    %528 = arith.truncf %527 : vector<8x16x32xf32> to vector<8x16x32xbf16>
    "tpu.trace_start"() <{level = 10 : i32, message = "hqd,hkd->hqk"}> : () -> ()
    %cst_143 = arith.constant dense<0.000000e+00> : vector<8x8x16xf32>
    %529 = tpu.matmul %492, %510, %cst_143 {dimension_numbers = #tpu.dot_dimension_numbers<[2], [2], [1], [1], [0, 0, 0, 1, 1, 1], [0], [0]>} : vector<8x8x32xbf16>, vector<8x16x32xbf16>, vector<8x8x16xf32> -> vector<8x8x16xf32>
    "tpu.trace_stop"() : () -> ()
    %530 = vector.broadcast %3 : vector<8x1x16xf32> to vector<8x8x16xf32>
    %531 = arith.addf %529, %530 : vector<8x8x16xf32>
    %cst_144 = arith.constant dense<0xFF800000> : vector<8x8xf32>
    %532 = vector.multi_reduction <maximumf>, %531, %cst_144 [2] : vector<8x8x16xf32> to vector<8x8xf32>
    %533 = vector.shape_cast %532 : vector<8x8xf32> to vector<8x8x1xf32>
    %534 = vector.broadcast %533 : vector<8x8x1xf32> to vector<8x8x16xf32>
    %535 = arith.subf %531, %534 : vector<8x8x16xf32>
    %536 = math.exp %535 : vector<8x8x16xf32>
    %cst_145 = arith.constant dense<0.000000e+00> : vector<8x8xf32>
    %537 = vector.multi_reduction <add>, %536, %cst_145 [2] : vector<8x8x16xf32> to vector<8x8xf32>
    %538 = vector.shape_cast %537 : vector<8x8xf32> to vector<8x8x1xf32>
    %539 = tpu.reciprocal %538 {approx = true} : vector<8x8x1xf32> -> vector<8x8x1xf32>
    %540 = vector.broadcast %539 : vector<8x8x1xf32> to vector<8x8x16xf32>
    %541 = arith.mulf %536, %540 : vector<8x8x16xf32>
    %542 = arith.truncf %541 : vector<8x8x16xf32> to vector<8x8x16xbf16>
    "tpu.trace_start"() <{level = 10 : i32, message = "hqk,hkd->hqd"}> : () -> ()
    %cst_146 = arith.constant dense<0.000000e+00> : vector<8x8x32xf32>
    %543 = tpu.matmul %542, %528, %cst_146 {dimension_numbers = #tpu.dot_dimension_numbers<[2], [1], [1], [2], [0, 0, 0, 1, 1, 2], [0], [0]>} : vector<8x8x16xbf16>, vector<8x16x32xbf16>, vector<8x8x32xf32> -> vector<8x8x32xf32>
    "tpu.trace_stop"() : () -> ()
    %544 = vector.extract_strided_slice %543 {offsets = [0, 0, 0], sizes = [1, 8, 32], strides = [1, 1, 1]} : vector<8x8x32xf32> to vector<1x8x32xf32>
    %545 = vector.shape_cast %544 : vector<1x8x32xf32> to vector<8x32xf32>
    %546 = vector.extract_strided_slice %543 {offsets = [1, 0, 0], sizes = [1, 8, 32], strides = [1, 1, 1]} : vector<8x8x32xf32> to vector<1x8x32xf32>
    %547 = vector.shape_cast %546 : vector<1x8x32xf32> to vector<8x32xf32>
    %548 = vector.extract_strided_slice %543 {offsets = [2, 0, 0], sizes = [1, 8, 32], strides = [1, 1, 1]} : vector<8x8x32xf32> to vector<1x8x32xf32>
    %549 = vector.shape_cast %548 : vector<1x8x32xf32> to vector<8x32xf32>
    %550 = vector.extract_strided_slice %543 {offsets = [3, 0, 0], sizes = [1, 8, 32], strides = [1, 1, 1]} : vector<8x8x32xf32> to vector<1x8x32xf32>
    %551 = vector.shape_cast %550 : vector<1x8x32xf32> to vector<8x32xf32>
    %552 = tpu.concatenate %545, %547, %549, %551 in 1 : vector<8x32xf32>, vector<8x32xf32>, vector<8x32xf32>, vector<8x32xf32> -> vector<8x128xf32>
    %553 = vector.extract_strided_slice %543 {offsets = [4, 0, 0], sizes = [1, 8, 32], strides = [1, 1, 1]} : vector<8x8x32xf32> to vector<1x8x32xf32>
    %554 = vector.shape_cast %553 : vector<1x8x32xf32> to vector<8x32xf32>
    %555 = vector.extract_strided_slice %543 {offsets = [5, 0, 0], sizes = [1, 8, 32], strides = [1, 1, 1]} : vector<8x8x32xf32> to vector<1x8x32xf32>
    %556 = vector.shape_cast %555 : vector<1x8x32xf32> to vector<8x32xf32>
    %557 = vector.extract_strided_slice %543 {offsets = [6, 0, 0], sizes = [1, 8, 32], strides = [1, 1, 1]} : vector<8x8x32xf32> to vector<1x8x32xf32>
    %558 = vector.shape_cast %557 : vector<1x8x32xf32> to vector<8x32xf32>
    %559 = vector.extract_strided_slice %543 {offsets = [7, 0, 0], sizes = [1, 8, 32], strides = [1, 1, 1]} : vector<8x8x32xf32> to vector<1x8x32xf32>
    %560 = vector.shape_cast %559 : vector<1x8x32xf32> to vector<8x32xf32>
    %561 = tpu.concatenate %554, %556, %558, %560 in 1 : vector<8x32xf32>, vector<8x32xf32>, vector<8x32xf32>, vector<8x32xf32> -> vector<8x128xf32>
    %562 = tpu.concatenate %552, %561 in 0 : vector<8x128xf32>, vector<8x128xf32> -> vector<16x128xf32>
    %563 = arith.truncf %562 : vector<16x128xf32> to vector<16x128xbf16>
    %c1_147 = arith.constant 1 : index
    %c0_148 = arith.constant 0 : index
    %c0_149 = arith.constant 0 : index
    %564 = vector.load %arg16[%c1_147, %c0_148, %c0_149] : memref<2x128x128xbf16, #tpu.memory_space<vmem>>, vector<1x128x128xbf16>
    %565 = vector.shape_cast %564 : vector<1x128x128xbf16> to vector<128x128xbf16>
    %cst_150 = arith.constant dense<0.000000e+00> : vector<16x128xf32>
    %566 = tpu.matmul %563, %565, %cst_150 {dimension_numbers = #tpu.dot_dimension_numbers<[1], [1], [0], [0], [0, 0, 1, 0], [], []>} : vector<16x128xbf16>, vector<128x128xbf16>, vector<16x128xf32> -> vector<16x128xf32>
    %c1_151 = arith.constant 1 : index
    %c0_152 = arith.constant 0 : index
    %c0_153 = arith.constant 0 : index
    %567 = vector.load %arg17[%c1_151, %c0_152, %c0_153] : memref<2x1x128xf32, #tpu.memory_space<vmem>>, vector<1x1x128xf32>
    %568 = vector.shape_cast %567 : vector<1x1x128xf32> to vector<1x128xf32>
    %569 = vector.broadcast %568 : vector<1x128xf32> to vector<16x128xf32>
    %570 = arith.addf %566, %569 : vector<16x128xf32>
    %571 = arith.addf %570, %457 : vector<16x128xf32>
    %c1_154 = arith.constant 1 : index
    %c0_155 = arith.constant 0 : index
    %c0_156 = arith.constant 0 : index
    %572 = vector.load %arg18[%c1_154, %c0_155, %c0_156] : memref<2x1x128xf32, #tpu.memory_space<vmem>>, vector<1x1x128xf32>
    %573 = vector.shape_cast %572 : vector<1x1x128xf32> to vector<1x128xf32>
    %c1_157 = arith.constant 1 : index
    %c0_158 = arith.constant 0 : index
    %c0_159 = arith.constant 0 : index
    %574 = vector.load %arg19[%c1_157, %c0_158, %c0_159] : memref<2x1x128xf32, #tpu.memory_space<vmem>>, vector<1x1x128xf32>
    %575 = vector.shape_cast %574 : vector<1x1x128xf32> to vector<1x128xf32>
    %cst_160 = arith.constant dense<0.000000e+00> : vector<16xf32>
    %576 = vector.multi_reduction <add>, %571, %cst_160 [1] : vector<16x128xf32> to vector<16xf32>
    %577 = vector.shape_cast %576 : vector<16xf32> to vector<16x1xf32>
    %cst_161 = arith.constant 3.125000e-02 : f32
    %578 = vector.broadcast %cst_161 : f32 to vector<16x1xf32>
    %579 = arith.mulf %577, %578 : vector<16x1xf32>
    %580 = arith.mulf %571, %571 : vector<16x128xf32>
    %cst_162 = arith.constant dense<0.000000e+00> : vector<16xf32>
    %581 = vector.multi_reduction <add>, %580, %cst_162 [1] : vector<16x128xf32> to vector<16xf32>
    %582 = vector.shape_cast %581 : vector<16xf32> to vector<16x1xf32>
    %cst_163 = arith.constant 3.125000e-02 : f32
    %583 = vector.broadcast %cst_163 : f32 to vector<16x1xf32>
    %584 = arith.mulf %582, %583 : vector<16x1xf32>
    %585 = arith.mulf %579, %579 : vector<16x1xf32>
    %586 = arith.subf %584, %585 : vector<16x1xf32>
    %587 = vector.broadcast %579 : vector<16x1xf32> to vector<16x128xf32>
    %588 = arith.subf %571, %587 : vector<16x128xf32>
    %cst_164 = arith.constant 9.99999974E-6 : f32
    %589 = vector.broadcast %cst_164 : f32 to vector<16x1xf32>
    %590 = arith.addf %586, %589 : vector<16x1xf32>
    %591 = math.rsqrt %590 : vector<16x1xf32>
    %592 = vector.broadcast %591 : vector<16x1xf32> to vector<16x128xf32>
    %593 = arith.mulf %588, %592 : vector<16x128xf32>
    %594 = vector.broadcast %573 : vector<1x128xf32> to vector<16x128xf32>
    %595 = arith.mulf %593, %594 : vector<16x128xf32>
    %596 = vector.broadcast %575 : vector<1x128xf32> to vector<16x128xf32>
    %597 = arith.addf %595, %596 : vector<16x128xf32>
    %598 = arith.truncf %597 : vector<16x128xf32> to vector<16x128xbf16>
    %c1_165 = arith.constant 1 : index
    %c0_166 = arith.constant 0 : index
    %c0_167 = arith.constant 0 : index
    %599 = vector.load %arg20[%c1_165, %c0_166, %c0_167] : memref<2x128x128xbf16, #tpu.memory_space<vmem>>, vector<1x128x128xbf16>
    %600 = vector.shape_cast %599 : vector<1x128x128xbf16> to vector<128x128xbf16>
    %cst_168 = arith.constant dense<0.000000e+00> : vector<16x128xf32>
    %601 = tpu.matmul %598, %600, %cst_168 {dimension_numbers = #tpu.dot_dimension_numbers<[1], [1], [0], [0], [0, 0, 1, 0], [], []>} : vector<16x128xbf16>, vector<128x128xbf16>, vector<16x128xf32> -> vector<16x128xf32>
    %c1_169 = arith.constant 1 : index
    %c0_170 = arith.constant 0 : index
    %c0_171 = arith.constant 0 : index
    %602 = vector.load %arg21[%c1_169, %c0_170, %c0_171] : memref<2x1x128xf32, #tpu.memory_space<vmem>>, vector<1x1x128xf32>
    %603 = vector.shape_cast %602 : vector<1x1x128xf32> to vector<1x128xf32>
    %604 = vector.broadcast %603 : vector<1x128xf32> to vector<16x128xf32>
    %605 = arith.addf %601, %604 : vector<16x128xf32>
    %cst_172 = arith.constant 0.000000e+00 : f32
    %606 = vector.broadcast %cst_172 : f32 to vector<16x128xf32>
    %607 = arith.maximumf %605, %606 : vector<16x128xf32>
    %608 = arith.truncf %607 : vector<16x128xf32> to vector<16x128xbf16>
    %c1_173 = arith.constant 1 : index
    %c0_174 = arith.constant 0 : index
    %c0_175 = arith.constant 0 : index
    %609 = vector.load %arg22[%c1_173, %c0_174, %c0_175] : memref<2x128x128xbf16, #tpu.memory_space<vmem>>, vector<1x128x128xbf16>
    %610 = vector.shape_cast %609 : vector<1x128x128xbf16> to vector<128x128xbf16>
    %cst_176 = arith.constant dense<0.000000e+00> : vector<16x128xf32>
    %611 = tpu.matmul %608, %610, %cst_176 {dimension_numbers = #tpu.dot_dimension_numbers<[1], [1], [0], [0], [0, 0, 1, 0], [], []>} : vector<16x128xbf16>, vector<128x128xbf16>, vector<16x128xf32> -> vector<16x128xf32>
    %c1_177 = arith.constant 1 : index
    %c0_178 = arith.constant 0 : index
    %c0_179 = arith.constant 0 : index
    %612 = vector.load %arg23[%c1_177, %c0_178, %c0_179] : memref<2x1x128xf32, #tpu.memory_space<vmem>>, vector<1x1x128xf32>
    %613 = vector.shape_cast %612 : vector<1x1x128xf32> to vector<1x128xf32>
    %614 = vector.broadcast %613 : vector<1x128xf32> to vector<16x128xf32>
    %615 = arith.addf %611, %614 : vector<16x128xf32>
    %616 = arith.addf %597, %615 : vector<16x128xf32>
    %c1_180 = arith.constant 1 : index
    %c0_181 = arith.constant 0 : index
    %c0_182 = arith.constant 0 : index
    %617 = vector.load %arg24[%c1_180, %c0_181, %c0_182] : memref<2x1x128xf32, #tpu.memory_space<vmem>>, vector<1x1x128xf32>
    %618 = vector.shape_cast %617 : vector<1x1x128xf32> to vector<1x128xf32>
    %c1_183 = arith.constant 1 : index
    %c0_184 = arith.constant 0 : index
    %c0_185 = arith.constant 0 : index
    %619 = vector.load %arg25[%c1_183, %c0_184, %c0_185] : memref<2x1x128xf32, #tpu.memory_space<vmem>>, vector<1x1x128xf32>
    %620 = vector.shape_cast %619 : vector<1x1x128xf32> to vector<1x128xf32>
    %cst_186 = arith.constant dense<0.000000e+00> : vector<16xf32>
    %621 = vector.multi_reduction <add>, %616, %cst_186 [1] : vector<16x128xf32> to vector<16xf32>
    %622 = vector.shape_cast %621 : vector<16xf32> to vector<16x1xf32>
    %cst_187 = arith.constant 3.125000e-02 : f32
    %623 = vector.broadcast %cst_187 : f32 to vector<16x1xf32>
    %624 = arith.mulf %622, %623 : vector<16x1xf32>
    %625 = arith.mulf %616, %616 : vector<16x128xf32>
    %cst_188 = arith.constant dense<0.000000e+00> : vector<16xf32>
    %626 = vector.multi_reduction <add>, %625, %cst_188 [1] : vector<16x128xf32> to vector<16xf32>
    %627 = vector.shape_cast %626 : vector<16xf32> to vector<16x1xf32>
    %cst_189 = arith.constant 3.125000e-02 : f32
    %628 = vector.broadcast %cst_189 : f32 to vector<16x1xf32>
    %629 = arith.mulf %627, %628 : vector<16x1xf32>
    %630 = arith.mulf %624, %624 : vector<16x1xf32>
    %631 = arith.subf %629, %630 : vector<16x1xf32>
    %632 = vector.broadcast %624 : vector<16x1xf32> to vector<16x128xf32>
    %633 = arith.subf %616, %632 : vector<16x128xf32>
    %cst_190 = arith.constant 9.99999974E-6 : f32
    %634 = vector.broadcast %cst_190 : f32 to vector<16x1xf32>
    %635 = arith.addf %631, %634 : vector<16x1xf32>
    %636 = math.rsqrt %635 : vector<16x1xf32>
    %637 = vector.broadcast %636 : vector<16x1xf32> to vector<16x128xf32>
    %638 = arith.mulf %633, %637 : vector<16x128xf32>
    %639 = vector.broadcast %618 : vector<1x128xf32> to vector<16x128xf32>
    %640 = arith.mulf %638, %639 : vector<16x128xf32>
    %641 = vector.broadcast %620 : vector<1x128xf32> to vector<16x128xf32>
    %642 = arith.addf %640, %641 : vector<16x128xf32>
    %643 = arith.truncf %642 : vector<16x128xf32> to vector<16x128xbf16>
    %c0_191 = arith.constant 0 : index
    %c0_192 = arith.constant 0 : index
    %644 = vector.load %arg26[%c0_191, %c0_192] : memref<128x128xbf16, #tpu.memory_space<vmem>>, vector<128x128xbf16>
    %cst_193 = arith.constant dense<0.000000e+00> : vector<16x128xf32>
    %645 = tpu.matmul %643, %644, %cst_193 {dimension_numbers = #tpu.dot_dimension_numbers<[1], [1], [0], [0], [0, 0, 1, 0], [], []>} : vector<16x128xbf16>, vector<128x128xbf16>, vector<16x128xf32> -> vector<16x128xf32>
    %c0_194 = arith.constant 0 : index
    %c0_195 = arith.constant 0 : index
    %646 = vector.load %arg27[%c0_194, %c0_195] : memref<1x128xf32, #tpu.memory_space<vmem>>, vector<1x128xf32>
    %647 = vector.broadcast %646 : vector<1x128xf32> to vector<16x128xf32>
    %648 = arith.addf %645, %647 : vector<16x128xf32>
    %649 = vector.broadcast %4 : vector<16x1xf32> to vector<16x128xf32>
    %650 = arith.mulf %648, %649 : vector<16x128xf32>
    %c0_196 = arith.constant 0 : index
    %c0_197 = arith.constant 0 : index
    %651 = vector.load %arg28[%c0_196, %c0_197] : memref<16x128xf32, #tpu.memory_space<vmem>>, vector<16x128xf32>
    tpu.vector_store %arg28[%c0_196, %c0_197], %650 {strides = array<i32>} : memref<16x128xf32, #tpu.memory_space<vmem>>, vector<16x128xf32>,
    return
  }
  func.func @transform_0(%arg0: i32) -> (i32, i32) {
    %c0_i32 = arith.constant 0 : i32
    %c0_i32_0 = arith.constant 0 : i32
    return %arg0, %c0_i32 : i32, i32
  }
  func.func @transform_1(%arg0: i32) -> (i32, i32, i32) {
    %c0_i32 = arith.constant 0 : i32
    %c0_i32_0 = arith.constant 0 : i32
    %c0_i32_1 = arith.constant 0 : i32
    return %arg0, %c0_i32, %c0_i32_0 : i32, i32, i32
  }
  func.func @transform_2(%arg0: i32) -> (i32, i32) {
    %c0_i32 = arith.constant 0 : i32
    %c0_i32_0 = arith.constant 0 : i32
    return %arg0, %c0_i32 : i32, i32
  }
  func.func @transform_3(%arg0: i32) -> (i32, i32, i32) {
    %c0_i32 = arith.constant 0 : i32
    %c0_i32_0 = arith.constant 0 : i32
    %c0_i32_1 = arith.constant 0 : i32
    return %arg0, %c0_i32, %c0_i32_0 : i32, i32, i32
  }
  func.func @transform_4(%arg0: i32) -> (i32, i32) {
    %c0_i32 = arith.constant 0 : i32
    %c0_i32_0 = arith.constant 0 : i32
    return %arg0, %c0_i32 : i32, i32
  }
  func.func @transform_5(%arg0: i32) -> (i32, i32, i32) {
    %c0_i32 = arith.constant 0 : i32
    %c0_i32_0 = arith.constant 0 : i32
    %c0_i32_1 = arith.constant 0 : i32
    %c0_i32_2 = arith.constant 0 : i32
    return %c0_i32, %c0_i32_0, %c0_i32_1 : i32, i32, i32
  }
  func.func @transform_6(%arg0: i32) -> (i32, i32, i32) {
    %c0_i32 = arith.constant 0 : i32
    %c0_i32_0 = arith.constant 0 : i32
    %c0_i32_1 = arith.constant 0 : i32
    %c0_i32_2 = arith.constant 0 : i32
    return %c0_i32, %c0_i32_0, %c0_i32_1 : i32, i32, i32
  }
  func.func @transform_7(%arg0: i32) -> (i32, i32, i32) {
    %c0_i32 = arith.constant 0 : i32
    %c0_i32_0 = arith.constant 0 : i32
    %c0_i32_1 = arith.constant 0 : i32
    %c0_i32_2 = arith.constant 0 : i32
    return %c0_i32, %c0_i32_0, %c0_i32_1 : i32, i32, i32
  }
  func.func @transform_8(%arg0: i32) -> (i32, i32, i32) {
    %c0_i32 = arith.constant 0 : i32
    %c0_i32_0 = arith.constant 0 : i32
    %c0_i32_1 = arith.constant 0 : i32
    %c0_i32_2 = arith.constant 0 : i32
    return %c0_i32, %c0_i32_0, %c0_i32_1 : i32, i32, i32
  }
  func.func @transform_9(%arg0: i32) -> (i32, i32, i32) {
    %c0_i32 = arith.constant 0 : i32
    %c0_i32_0 = arith.constant 0 : i32
    %c0_i32_1 = arith.constant 0 : i32
    %c0_i32_2 = arith.constant 0 : i32
    return %c0_i32, %c0_i32_0, %c0_i32_1 : i32, i32, i32
  }
  func.func @transform_10(%arg0: i32) -> (i32, i32, i32) {
    %c0_i32 = arith.constant 0 : i32
    %c0_i32_0 = arith.constant 0 : i32
    %c0_i32_1 = arith.constant 0 : i32
    %c0_i32_2 = arith.constant 0 : i32
    return %c0_i32, %c0_i32_0, %c0_i32_1 : i32, i32, i32
  }
  func.func @transform_11(%arg0: i32) -> (i32, i32, i32) {
    %c0_i32 = arith.constant 0 : i32
    %c0_i32_0 = arith.constant 0 : i32
    %c0_i32_1 = arith.constant 0 : i32
    %c0_i32_2 = arith.constant 0 : i32
    return %c0_i32, %c0_i32_0, %c0_i32_1 : i32, i32, i32
  }
  func.func @transform_12(%arg0: i32) -> (i32, i32, i32) {
    %c0_i32 = arith.constant 0 : i32
    %c0_i32_0 = arith.constant 0 : i32
    %c0_i32_1 = arith.constant 0 : i32
    %c0_i32_2 = arith.constant 0 : i32
    return %c0_i32, %c0_i32_0, %c0_i32_1 : i32, i32, i32
  }
  func.func @transform_13(%arg0: i32) -> (i32, i32, i32) {
    %c0_i32 = arith.constant 0 : i32
    %c0_i32_0 = arith.constant 0 : i32
    %c0_i32_1 = arith.constant 0 : i32
    %c0_i32_2 = arith.constant 0 : i32
    return %c0_i32, %c0_i32_0, %c0_i32_1 : i32, i32, i32
  }
  func.func @transform_14(%arg0: i32) -> (i32, i32, i32) {
    %c0_i32 = arith.constant 0 : i32
    %c0_i32_0 = arith.constant 0 : i32
    %c0_i32_1 = arith.constant 0 : i32
    %c0_i32_2 = arith.constant 0 : i32
    return %c0_i32, %c0_i32_0, %c0_i32_1 : i32, i32, i32
  }
  func.func @transform_15(%arg0: i32) -> (i32, i32, i32) {
    %c0_i32 = arith.constant 0 : i32
    %c0_i32_0 = arith.constant 0 : i32
    %c0_i32_1 = arith.constant 0 : i32
    %c0_i32_2 = arith.constant 0 : i32
    return %c0_i32, %c0_i32_0, %c0_i32_1 : i32, i32, i32
  }
  func.func @transform_16(%arg0: i32) -> (i32, i32, i32) {
    %c0_i32 = arith.constant 0 : i32
    %c0_i32_0 = arith.constant 0 : i32
    %c0_i32_1 = arith.constant 0 : i32
    %c0_i32_2 = arith.constant 0 : i32
    return %c0_i32, %c0_i32_0, %c0_i32_1 : i32, i32, i32
  }
  func.func @transform_17(%arg0: i32) -> (i32, i32, i32) {
    %c0_i32 = arith.constant 0 : i32
    %c0_i32_0 = arith.constant 0 : i32
    %c0_i32_1 = arith.constant 0 : i32
    %c0_i32_2 = arith.constant 0 : i32
    return %c0_i32, %c0_i32_0, %c0_i32_1 : i32, i32, i32
  }
  func.func @transform_18(%arg0: i32) -> (i32, i32, i32) {
    %c0_i32 = arith.constant 0 : i32
    %c0_i32_0 = arith.constant 0 : i32
    %c0_i32_1 = arith.constant 0 : i32
    %c0_i32_2 = arith.constant 0 : i32
    return %c0_i32, %c0_i32_0, %c0_i32_1 : i32, i32, i32
  }
  func.func @transform_19(%arg0: i32) -> (i32, i32, i32) {
    %c0_i32 = arith.constant 0 : i32
    %c0_i32_0 = arith.constant 0 : i32
    %c0_i32_1 = arith.constant 0 : i32
    %c0_i32_2 = arith.constant 0 : i32
    return %c0_i32, %c0_i32_0, %c0_i32_1 : i32, i32, i32
  }
  func.func @transform_20(%arg0: i32) -> (i32, i32, i32) {
    %c0_i32 = arith.constant 0 : i32
    %c0_i32_0 = arith.constant 0 : i32
    %c0_i32_1 = arith.constant 0 : i32
    %c0_i32_2 = arith.constant 0 : i32
    return %c0_i32, %c0_i32_0, %c0_i32_1 : i32, i32, i32
  }
  func.func @transform_21(%arg0: i32) -> (i32, i32, i32) {
    %c0_i32 = arith.constant 0 : i32
    %c0_i32_0 = arith.constant 0 : i32
    %c0_i32_1 = arith.constant 0 : i32
    %c0_i32_2 = arith.constant 0 : i32
    return %c0_i32, %c0_i32_0, %c0_i32_1 : i32, i32, i32
  }
  func.func @transform_22(%arg0: i32) -> (i32, i32, i32) {
    %c0_i32 = arith.constant 0 : i32
    %c0_i32_0 = arith.constant 0 : i32
    %c0_i32_1 = arith.constant 0 : i32
    %c0_i32_2 = arith.constant 0 : i32
    return %c0_i32, %c0_i32_0, %c0_i32_1 : i32, i32, i32
  }
  func.func @transform_23(%arg0: i32) -> (i32, i32, i32) {
    %c0_i32 = arith.constant 0 : i32
    %c0_i32_0 = arith.constant 0 : i32
    %c0_i32_1 = arith.constant 0 : i32
    %c0_i32_2 = arith.constant 0 : i32
    return %c0_i32, %c0_i32_0, %c0_i32_1 : i32, i32, i32
  }
  func.func @transform_24(%arg0: i32) -> (i32, i32, i32) {
    %c0_i32 = arith.constant 0 : i32
    %c0_i32_0 = arith.constant 0 : i32
    %c0_i32_1 = arith.constant 0 : i32
    %c0_i32_2 = arith.constant 0 : i32
    return %c0_i32, %c0_i32_0, %c0_i32_1 : i32, i32, i32
  }
  func.func @transform_25(%arg0: i32) -> (i32, i32) {
    %c0_i32 = arith.constant 0 : i32
    %c0_i32_0 = arith.constant 0 : i32
    %c0_i32_1 = arith.constant 0 : i32
    return %c0_i32, %c0_i32_0 : i32, i32
  }
  func.func @transform_26(%arg0: i32) -> (i32, i32) {
    %c0_i32 = arith.constant 0 : i32
    %c0_i32_0 = arith.constant 0 : i32
    %c0_i32_1 = arith.constant 0 : i32
    return %c0_i32, %c0_i32_0 : i32, i32
  }
  func.func @transform_27(%arg0: i32) -> (i32, i32) {
    %c0_i32 = arith.constant 0 : i32
    %c0_i32_0 = arith.constant 0 : i32
    return %arg0, %c0_i32 : i32, i32
  }
}

</mosaic_0001>

<llo_original>
// kernel: tpu_custom_call.1
$region0: #{tpu_custom_call.1}
  #allocation0 [shape = 'u32[]', space=smem, size = 0x4, offset = 0x4, fixed_abs, tag = 'smem constant byte address 0x4 - core index']
  #allocation1 [shape = 'u32[144,128]{1,0:T(1,128)}', space=vmem, size = 0x12000, scoped, tag = 'internal scratch']
  %s0 = inlined_call_operand.vmem [shape: f32[16,128], index: 0, kind: input, shape index: {}]
  %s1 = inlined_call_operand.hbm [shape: f32[8,1,8], index: 1, kind: input, shape index: {}]
  %s2 = inlined_call_operand.hbm [shape: bf16[32,128], index: 2, kind: input, shape index: {}]
  %s3 = inlined_call_operand.vmem [shape: f32[8,1,16], index: 3, kind: input, shape index: {}]
  %s4 = inlined_call_operand.vmem [shape: f32[16,1], index: 4, kind: input, shape index: {}]
  %s5 = inlined_call_operand.hbm [shape: bf16[2,384,128], index: 5, kind: input, shape index: {}]
  %s6 = inlined_call_operand.vmem [shape: f32[2,1,384], index: 6, kind: input, shape index: {}]
  %s7 = inlined_call_operand.hbm [shape: bf16[2,128,128], index: 7, kind: input, shape index: {}]
  %s8 = inlined_call_operand.vmem [shape: f32[2,1,128], index: 8, kind: input, shape index: {}]
  %s9 = inlined_call_operand.vmem [shape: f32[2,1,128], index: 9, kind: input, shape index: {}]
  %s10 = inlined_call_operand.vmem [shape: f32[2,1,128], index: 10, kind: input, shape index: {}]
  %s11 = inlined_call_operand.hbm [shape: bf16[2,128,128], index: 11, kind: input, shape index: {}]
  %s12 = inlined_call_operand.vmem [shape: f32[2,1,128], index: 12, kind: input, shape index: {}]
  %s13 = inlined_call_operand.hbm [shape: bf16[2,256,128], index: 13, kind: input, shape index: {}]
  %s14 = inlined_call_operand.vmem [shape: f32[2,1,256], index: 14, kind: input, shape index: {}]
  %s15 = inlined_call_operand.hbm [shape: bf16[2,128,128], index: 15, kind: input, shape index: {}]
  %s16 = inlined_call_operand.vmem [shape: f32[2,1,128], index: 16, kind: input, shape index: {}]
  %s17 = inlined_call_operand.vmem [shape: f32[2,1,128], index: 17, kind: input, shape index: {}]
  %s18 = inlined_call_operand.hbm [shape: f32[2,1,128], index: 18, kind: input, shape index: {}]
  %s19 = inlined_call_operand.hbm [shape: bf16[2,128,128], index: 19, kind: input, shape index: {}]
  %s20 = inlined_call_operand.hbm [shape: f32[2,1,128], index: 20, kind: input, shape index: {}]
  %s21 = inlined_call_operand.hbm [shape: bf16[2,128,128], index: 21, kind: input, shape index: {}]
  %s22 = inlined_call_operand.hbm [shape: f32[2,1,128], index: 22, kind: input, shape index: {}]
  %s23 = inlined_call_operand.hbm [shape: f32[2,1,128], index: 23, kind: input, shape index: {}]
  %s24 = inlined_call_operand.hbm [shape: f32[2,1,128], index: 24, kind: input, shape index: {}]
  %s25 = inlined_call_operand.vmem [shape: bf16[128,128], index: 25, kind: input, shape index: {}]
  %s26 = inlined_call_operand.vmem [shape: f32[1,128], index: 26, kind: input, shape index: {}]
  %s27 = inlined_call_operand.hbm [shape: f32[16,128], index: 27, kind: output, shape index: {}]
  %s28 = sld [smem:[#allocation0]]
  $region174: #{tpu_custom_call.1} parent=0
    _
  %s30 = ssub.s32 1, %s28
  %s31 = scalar_select 0, %s30, %s28
  $region1: #{tpu_custom_call.1} parent=0
    #allocation2 [shape = 'u8[4096]{0}', space=vmem, size = 0x1000, scoped, tag = 'input window, operand 1, single buffered']
    #allocation3 [shape = 's32[1]{0}', space=sflag, size = 0x4, scoped, tag = 'scoped memory for tpu_custom_call.1']
    #allocation4 [shape = 's32[1]{0}', space=sflag, size = 0x4, scoped, tag = 'scoped memory for tpu_custom_call.1']
    #allocation5 [shape = 'u8[8192]{0}', space=vmem, size = 0x2000, scoped, tag = 'input window, operand 2, single buffered']
    #allocation6 [shape = 's32[1]{0}', space=sflag, size = 0x4, scoped, tag = 'scoped memory for tpu_custom_call.1']
    #allocation7 [shape = 'u8[196608]{0}', space=vmem, size = 0x30000, scoped, tag = 'input window, operand 5, single buffered']
    #allocation8 [shape = 'u8[65536]{0}', space=vmem, size = 0x10000, scoped, tag = 'input window, operand 7, single buffered']
    #allocation9 [shape = 's32[1]{0}', space=sflag, size = 0x4, scoped, tag = 'scoped memory for tpu_custom_call.1']
    #allocation10 [shape = 'u8[65536]{0}', space=vmem, size = 0x10000, scoped, tag = 'input window, operand 11, single buffered']
    #allocation11 [shape = 'u8[131072]{0}', space=vmem, size = 0x20000, scoped, tag = 'input window, operand 13, single buffered']
    #allocation12 [shape = 's32[1]{0}', space=sflag, size = 0x4, scoped, tag = 'scoped memory for tpu_custom_call.1']
    #allocation13 [shape = 'u8[65536]{0}', space=vmem, size = 0x10000, scoped, tag = 'input window, operand 15, single buffered']
    #allocation14 [shape = 'u8[1024]{0}', space=vmem, size = 0x400, scoped, tag = 'input window, operand 18, single buffered']
    #allocation15 [shape = 's32[1]{0}', space=sflag, size = 0x4, scoped, tag = 'scoped memory for tpu_custom_call.1']
    #allocation16 [shape = 'u8[65536]{0}', space=vmem, size = 0x10000, scoped, tag = 'input window, operand 19, single buffered']
    #allocation17 [shape = 'u8[1024]{0}', space=vmem, size = 0x400, scoped, tag = 'input window, operand 20, single buffered']
    #allocation18 [shape = 's32[1]{0}', space=sflag, size = 0x4, scoped, tag = 'scoped memory for tpu_custom_call.1']
    #allocation19 [shape = 'u8[65536]{0}', space=vmem, size = 0x10000, scoped, tag = 'input window, operand 21, single buffered']
    #allocation20 [shape = 'u8[1024]{0}', space=vmem, size = 0x400, scoped, tag = 'input window, operand 22, single buffered']
    #allocation21 [shape = 's32[1]{0}', space=sflag, size = 0x4, scoped, tag = 'scoped memory for tpu_custom_call.1']
    #allocation22 [shape = 'u8[1024]{0}', space=vmem, size = 0x400, scoped, tag = 'input window, operand 23, single buffered']
    #allocation23 [shape = 'u8[1024]{0}', space=vmem, size = 0x400, scoped, tag = 'input window, operand 24, single buffered']
    #allocation24 [shape = 's32[1]{0}', space=sflag, size = 0x4, scoped, tag = 'scoped memory for tpu_custom_call.1']
    #allocation25 [shape = 'u8[8192]{0}', space=vmem, size = 0x2000, scoped, tag = 'output window, operand 0, single buffered']
    %32 = vsyncpa [#allocation3], 0
    %33 = vsyncpa [#allocation6], 0
    %34 = vsyncpa [#allocation9], 0
    %35 = vsyncpa [#allocation12], 0
    %36 = vsyncpa [#allocation15], 0
    %37 = vsyncpa [#allocation18], 0
    %38 = vsyncpa [#allocation21], 0
    %39 = vsyncpa [#allocation24], 0
    %40 = vsyncpa [#allocation4], 0
    // Predicated region
    $region2: #{tpu_custom_call.1} parent=1 // pred_check
      _
    $region3: #{tpu_custom_call.1} parent=1 // pred_check_branch
      %42 = sbr.rel (0) target = $region5
    $region4: #{tpu_custom_call.1} parent=1 // pred_region
      _
    $region5: #{tpu_custom_call.1} parent=1 // pred_fallthru
      _
    // Predicated region
    $region6: #{tpu_custom_call.1} parent=1 // pred_check
      _
    $region7: #{tpu_custom_call.1} parent=1 // pred_check_branch
      %44 = sbr.rel (0) target = $region9
    $region8: #{tpu_custom_call.1} parent=1 // pred_region
      %s46 = ssub.s32 128, 128
      %47 = vsyncadd [#allocation3], %s46
      %s48 = sshll.u32 [#allocation2], 4
      %s49 = int_to_ptr.vmem [resolvable:$true] %s48
      %54 = dma.hbm_to_vmem [thread:$0]  %s1, 128, %s49, [#allocation3], 16, 16, 1
    $region9: #{tpu_custom_call.1} parent=1 // pred_fallthru
      _
    // Predicated region
    $region10: #{tpu_custom_call.1} parent=1 // pred_check
      _
    $region11: #{tpu_custom_call.1} parent=1 // pred_check_branch
      %56 = sbr.rel (0) target = $region13
    $region12: #{tpu_custom_call.1} parent=1 // pred_region
      %s58 = ssub.s32 256, 256
      %59 = vsyncadd [#allocation6], %s58
      %s60 = sshll.u32 [#allocation5], 4
      %s61 = int_to_ptr.vmem [resolvable:$true] %s60
      %66 = dma.hbm_to_vmem [thread:$0]  %s2, 256, %s61, [#allocation6], 64, 64, 4
    $region13: #{tpu_custom_call.1} parent=1 // pred_fallthru
      _
    // Predicated region
    $region14: #{tpu_custom_call.1} parent=1 // pred_check
      _
    $region15: #{tpu_custom_call.1} parent=1 // pred_check_branch
      %68 = sbr.rel (0) target = $region17
    $region16: #{tpu_custom_call.1} parent=1 // pred_region
      _
    $region17: #{tpu_custom_call.1} parent=1 // pred_fallthru
      _
    // Predicated region
    $region18: #{tpu_custom_call.1} parent=1 // pred_check
      _
    $region19: #{tpu_custom_call.1} parent=1 // pred_check_branch
      %70 = sbr.rel (0) target = $region21
    $region20: #{tpu_custom_call.1} parent=1 // pred_region
      _
    $region21: #{tpu_custom_call.1} parent=1 // pred_fallthru
      _
    // Predicated region
    $region22: #{tpu_custom_call.1} parent=1 // pred_check
      _
    $region23: #{tpu_custom_call.1} parent=1 // pred_check_branch
      %72 = sbr.rel (0) target = $region25
    $region24: #{tpu_custom_call.1} parent=1 // pred_region
      %s74 = ssub.s32 6144, 6144
      %75 = vsyncadd [#allocation6], %s74
      %s76 = sshll.u32 [#allocation7], 4
      %s77 = int_to_ptr.vmem [resolvable:$true] %s76
      %82 = dma.hbm_to_vmem [thread:$0]  %s5, 6144, %s77, [#allocation6], 64, 64, 4
    $region25: #{tpu_custom_call.1} parent=1 // pred_fallthru
      _
    // Predicated region
    $region26: #{tpu_custom_call.1} parent=1 // pred_check
      _
    $region27: #{tpu_custom_call.1} parent=1 // pred_check_branch
      %84 = sbr.rel (0) target = $region29
    $region28: #{tpu_custom_call.1} parent=1 // pred_region
      _
    $region29: #{tpu_custom_call.1} parent=1 // pred_fallthru
      _
    // Predicated region
    $region30: #{tpu_custom_call.1} parent=1 // pred_check
      _
    $region31: #{tpu_custom_call.1} parent=1 // pred_check_branch
      %86 = sbr.rel (0) target = $region33
    $region32: #{tpu_custom_call.1} parent=1 // pred_region
      %s88 = ssub.s32 2048, 2048
      %89 = vsyncadd [#allocation9], %s88
      %s90 = sshll.u32 [#allocation8], 4
      %s91 = int_to_ptr.vmem [resolvable:$true] %s90
      %96 = dma.hbm_to_vmem [thread:$0]  %s7, 2048, %s91, [#allocation9], 64, 64, 4
    $region33: #{tpu_custom_call.1} parent=1 // pred_fallthru
      _
    // Predicated region
    $region34: #{tpu_custom_call.1} parent=1 // pred_check
      _
    $region35: #{tpu_custom_call.1} parent=1 // pred_check_branch
      %98 = sbr.rel (0) target = $region37
    $region36: #{tpu_custom_call.1} parent=1 // pred_region
      _
    $region37: #{tpu_custom_call.1} parent=1 // pred_fallthru
      _
    // Predicated region
    $region38: #{tpu_custom_call.1} parent=1 // pred_check
      _
    $region39: #{tpu_custom_call.1} parent=1 // pred_check_branch
      %100 = sbr.rel (0) target = $region41
    $region40: #{tpu_custom_call.1} parent=1 // pred_region
      _
    $region41: #{tpu_custom_call.1} parent=1 // pred_fallthru
      _
    // Predicated region
    $region42: #{tpu_custom_call.1} parent=1 // pred_check
      _
    $region43: #{tpu_custom_call.1} parent=1 // pred_check_branch
      %102 = sbr.rel (0) target = $region45
    $region44: #{tpu_custom_call.1} parent=1 // pred_region
      _
    $region45: #{tpu_custom_call.1} parent=1 // pred_fallthru
      _
    // Predicated region
    $region46: #{tpu_custom_call.1} parent=1 // pred_check
      _
    $region47: #{tpu_custom_call.1} parent=1 // pred_check_branch
      %104 = sbr.rel (0) target = $region49
    $region48: #{tpu_custom_call.1} parent=1 // pred_region
      %s106 = ssub.s32 2048, 2048
      %107 = vsyncadd [#allocation9], %s106
      %s108 = sshll.u32 [#allocation10], 4
      %s109 = int_to_ptr.vmem [resolvable:$true] %s108
      %114 = dma.hbm_to_vmem [thread:$0]  %s11, 2048, %s109, [#allocation9], 64, 64, 4
    $region49: #{tpu_custom_call.1} parent=1 // pred_fallthru
      _
    // Predicated region
    $region50: #{tpu_custom_call.1} parent=1 // pred_check
      _
    $region51: #{tpu_custom_call.1} parent=1 // pred_check_branch
      %116 = sbr.rel (0) target = $region53
    $region52: #{tpu_custom_call.1} parent=1 // pred_region
      _
    $region53: #{tpu_custom_call.1} parent=1 // pred_fallthru
      _
    // Predicated region
    $region54: #{tpu_custom_call.1} parent=1 // pred_check
      _
    $region55: #{tpu_custom_call.1} parent=1 // pred_check_branch
      %118 = sbr.rel (0) target = $region57
    $region56: #{tpu_custom_call.1} parent=1 // pred_region
      %s120 = ssub.s32 4096, 4096
      %121 = vsyncadd [#allocation12], %s120
      %s122 = sshll.u32 [#allocation11], 4
      %s123 = int_to_ptr.vmem [resolvable:$true] %s122
      %128 = dma.hbm_to_vmem [thread:$0]  %s13, 4096, %s123, [#allocation12], 64, 64, 4
    $region57: #{tpu_custom_call.1} parent=1 // pred_fallthru
      _
    // Predicated region
    $region58: #{tpu_custom_call.1} parent=1 // pred_check
      _
    $region59: #{tpu_custom_call.1} parent=1 // pred_check_branch
      %130 = sbr.rel (0) target = $region61
    $region60: #{tpu_custom_call.1} parent=1 // pred_region
      _
    $region61: #{tpu_custom_call.1} parent=1 // pred_fallthru
      _
    // Predicated region
    $region62: #{tpu_custom_call.1} parent=1 // pred_check
      _
    $region63: #{tpu_custom_call.1} parent=1 // pred_check_branch
      %132 = sbr.rel (0) target = $region65
    $region64: #{tpu_custom_call.1} parent=1 // pred_region
      %s134 = ssub.s32 2048, 2048
      %135 = vsyncadd [#allocation12], %s134
      %s136 = sshll.u32 [#allocation13], 4
      %s137 = int_to_ptr.vmem [resolvable:$true] %s136
      %142 = dma.hbm_to_vmem [thread:$0]  %s15, 2048, %s137, [#allocation12], 64, 64, 4
    $region65: #{tpu_custom_call.1} parent=1 // pred_fallthru
      _
    // Predicated region
    $region66: #{tpu_custom_call.1} parent=1 // pred_check
      _
    $region67: #{tpu_custom_call.1} parent=1 // pred_check_branch
      %144 = sbr.rel (0) target = $region69
    $region68: #{tpu_custom_call.1} parent=1 // pred_region
      _
    $region69: #{tpu_custom_call.1} parent=1 // pred_fallthru
      _
    // Predicated region
    $region70: #{tpu_custom_call.1} parent=1 // pred_check
      _
    $region71: #{tpu_custom_call.1} parent=1 // pred_check_branch
      %146 = sbr.rel (0) target = $region73
    $region72: #{tpu_custom_call.1} parent=1 // pred_region
      _
    $region73: #{tpu_custom_call.1} parent=1 // pred_fallthru
      _
    // Predicated region
    $region74: #{tpu_custom_call.1} parent=1 // pred_check
      _
    $region75: #{tpu_custom_call.1} parent=1 // pred_check_branch
      %148 = sbr.rel (0) target = $region77
    $region76: #{tpu_custom_call.1} parent=1 // pred_region
      %s150 = ssub.s32 32, 32
      %151 = vsyncadd [#allocation15], %s150
      %s152 = sshll.u32 [#allocation14], 4
      %s153 = int_to_ptr.vmem [resolvable:$true] %s152
      %158 = dma.hbm_to_vmem [thread:$0]  %s18, 32, %s153, [#allocation15], 16, 16, 1
    $region77: #{tpu_custom_call.1} parent=1 // pred_fallthru
      _
    // Predicated region
    $region78: #{tpu_custom_call.1} parent=1 // pred_check
      _
    $region79: #{tpu_custom_call.1} parent=1 // pred_check_branch
      %160 = sbr.rel (0) target = $region81
    $region80: #{tpu_custom_call.1} parent=1 // pred_region
      %s162 = ssub.s32 2048, 2048
      %163 = vsyncadd [#allocation15], %s162
      %s164 = sshll.u32 [#allocation16], 4
      %s165 = int_to_ptr.vmem [resolvable:$true] %s164
      %170 = dma.hbm_to_vmem [thread:$0]  %s19, 2048, %s165, [#allocation15], 64, 64, 4
    $region81: #{tpu_custom_call.1} parent=1 // pred_fallthru
      _
    // Predicated region
    $region82: #{tpu_custom_call.1} parent=1 // pred_check
      _
    $region83: #{tpu_custom_call.1} parent=1 // pred_check_branch
      %172 = sbr.rel (0) target = $region85
    $region84: #{tpu_custom_call.1} parent=1 // pred_region
      %s174 = ssub.s32 32, 32
      %175 = vsyncadd [#allocation18], %s174
      %s176 = sshll.u32 [#allocation17], 4
      %s177 = int_to_ptr.vmem [resolvable:$true] %s176
      %182 = dma.hbm_to_vmem [thread:$0]  %s20, 32, %s177, [#allocation18], 16, 16, 1
    $region85: #{tpu_custom_call.1} parent=1 // pred_fallthru
      _
    // Predicated region
    $region86: #{tpu_custom_call.1} parent=1 // pred_check
      _
    $region87: #{tpu_custom_call.1} parent=1 // pred_check_branch
      %184 = sbr.rel (0) target = $region89
    $region88: #{tpu_custom_call.1} parent=1 // pred_region
      %s186 = ssub.s32 2048, 2048
      %187 = vsyncadd [#allocation18], %s186
      %s188 = sshll.u32 [#allocation19], 4
      %s189 = int_to_ptr.vmem [resolvable:$true] %s188
      %194 = dma.hbm_to_vmem [thread:$0]  %s21, 2048, %s189, [#allocation18], 64, 64, 4
    $region89: #{tpu_custom_call.1} parent=1 // pred_fallthru
      _
    // Predicated region
    $region90: #{tpu_custom_call.1} parent=1 // pred_check
      _
    $region91: #{tpu_custom_call.1} parent=1 // pred_check_branch
      %196 = sbr.rel (0) target = $region93
    $region92: #{tpu_custom_call.1} parent=1 // pred_region
      %s198 = ssub.s32 32, 32
      %199 = vsyncadd [#allocation21], %s198
      %s200 = sshll.u32 [#allocation20], 4
      %s201 = int_to_ptr.vmem [resolvable:$true] %s200
      %206 = dma.hbm_to_vmem [thread:$0]  %s22, 32, %s201, [#allocation21], 16, 16, 1
    $region93: #{tpu_custom_call.1} parent=1 // pred_fallthru
      _
    // Predicated region
    $region94: #{tpu_custom_call.1} parent=1 // pred_check
      _
    $region95: #{tpu_custom_call.1} parent=1 // pred_check_branch
      %208 = sbr.rel (0) target = $region97
    $region96: #{tpu_custom_call.1} parent=1 // pred_region
      %s210 = ssub.s32 32, 32
      %211 = vsyncadd [#allocation21], %s210
      %s212 = sshll.u32 [#allocation22], 4
      %s213 = int_to_ptr.vmem [resolvable:$true] %s212
      %218 = dma.hbm_to_vmem [thread:$0]  %s23, 32, %s213, [#allocation21], 16, 16, 1
    $region97: #{tpu_custom_call.1} parent=1 // pred_fallthru
      _
    // Predicated region
    $region98: #{tpu_custom_call.1} parent=1 // pred_check
      _
    $region99: #{tpu_custom_call.1} parent=1 // pred_check_branch
      %220 = sbr.rel (0) target = $region101
    $region100: #{tpu_custom_call.1} parent=1 // pred_region
      %s222 = ssub.s32 32, 32
      %223 = vsyncadd [#allocation24], %s222
      %s224 = sshll.u32 [#allocation23], 4
      %s225 = int_to_ptr.vmem [resolvable:$true] %s224
      %230 = dma.hbm_to_vmem [thread:$0]  %s24, 32, %s225, [#allocation24], 16, 16, 1
    $region101: #{tpu_custom_call.1} parent=1 // pred_fallthru
      _
    // Predicated region
    $region102: #{tpu_custom_call.1} parent=1 // pred_check
      _
    $region103: #{tpu_custom_call.1} parent=1 // pred_check_branch
      %232 = sbr.rel (0) target = $region105
    $region104: #{tpu_custom_call.1} parent=1 // pred_region
      _
    $region105: #{tpu_custom_call.1} parent=1 // pred_fallthru
      _
    // Predicated region
    $region106: #{tpu_custom_call.1} parent=1 // pred_check
      _
    $region107: #{tpu_custom_call.1} parent=1 // pred_check_branch
      %234 = sbr.rel (0) target = $region109
    $region108: #{tpu_custom_call.1} parent=1 // pred_region
      _
    $region109: #{tpu_custom_call.1} parent=1 // pred_fallthru
      _
    // Predicated region
    $region110: #{tpu_custom_call.1} parent=1 // pred_check
      _
    $region111: #{tpu_custom_call.1} parent=1 // pred_check_branch
      %236 = sbr.rel (0) target = $region113
    $region112: #{tpu_custom_call.1} parent=1 // pred_region
      %237 = dma.done [#allocation3], 128
    $region113: #{tpu_custom_call.1} parent=1 // pred_fallthru
      _
    // Predicated region
    $region114: #{tpu_custom_call.1} parent=1 // pred_check
      _
    $region115: #{tpu_custom_call.1} parent=1 // pred_check_branch
      %239 = sbr.rel (0) target = $region117
    $region116: #{tpu_custom_call.1} parent=1 // pred_region
      %240 = dma.done [#allocation6], 256
    $region117: #{tpu_custom_call.1} parent=1 // pred_fallthru
      _
    // Predicated region
    $region118: #{tpu_custom_call.1} parent=1 // pred_check
      _
    $region119: #{tpu_custom_call.1} parent=1 // pred_check_branch
      %242 = sbr.rel (0) target = $region121
    $region120: #{tpu_custom_call.1} parent=1 // pred_region
      %243 = dma.done [#allocation6], 6144
    $region121: #{tpu_custom_call.1} parent=1 // pred_fallthru
      _
    // Predicated region
    $region122: #{tpu_custom_call.1} parent=1 // pred_check
      _
    $region123: #{tpu_custom_call.1} parent=1 // pred_check_branch
      %245 = sbr.rel (0) target = $region125
    $region124: #{tpu_custom_call.1} parent=1 // pred_region
      %246 = dma.done [#allocation9], 2048
    $region125: #{tpu_custom_call.1} parent=1 // pred_fallthru
      _
    // Predicated region
    $region126: #{tpu_custom_call.1} parent=1 // pred_check
      _
    $region127: #{tpu_custom_call.1} parent=1 // pred_check_branch
      %248 = sbr.rel (0) target = $region129
    $region128: #{tpu_custom_call.1} parent=1 // pred_region
      %249 = dma.done [#allocation9], 2048
    $region129: #{tpu_custom_call.1} parent=1 // pred_fallthru
      _
    // Predicated region
    $region130: #{tpu_custom_call.1} parent=1 // pred_check
      _
    $region131: #{tpu_custom_call.1} parent=1 // pred_check_branch
      %251 = sbr.rel (0) target = $region133
    $region132: #{tpu_custom_call.1} parent=1 // pred_region
      %252 = dma.done [#allocation12], 4096
    $region133: #{tpu_custom_call.1} parent=1 // pred_fallthru
      _
    // Predicated region
    $region134: #{tpu_custom_call.1} parent=1 // pred_check
      _
    $region135: #{tpu_custom_call.1} parent=1 // pred_check_branch
      %254 = sbr.rel (0) target = $region137
    $region136: #{tpu_custom_call.1} parent=1 // pred_region
      %255 = dma.done [#allocation12], 2048
    $region137: #{tpu_custom_call.1} parent=1 // pred_fallthru
      _
    // Predicated region
    $region138: #{tpu_custom_call.1} parent=1 // pred_check
      _
    $region139: #{tpu_custom_call.1} parent=1 // pred_check_branch
      %257 = sbr.rel (0) target = $region141
    $region140: #{tpu_custom_call.1} parent=1 // pred_region
      %258 = dma.done [#allocation15], 32
    $region141: #{tpu_custom_call.1} parent=1 // pred_fallthru
      _
    // Predicated region
    $region142: #{tpu_custom_call.1} parent=1 // pred_check
      _
    $region143: #{tpu_custom_call.1} parent=1 // pred_check_branch
      %260 = sbr.rel (0) target = $region145
    $region144: #{tpu_custom_call.1} parent=1 // pred_region
      %261 = dma.done [#allocation15], 2048
    $region145: #{tpu_custom_call.1} parent=1 // pred_fallthru
      _
    // Predicated region
    $region146: #{tpu_custom_call.1} parent=1 // pred_check
      _
    $region147: #{tpu_custom_call.1} parent=1 // pred_check_branch
      %263 = sbr.rel (0) target = $region149
    $region148: #{tpu_custom_call.1} parent=1 // pred_region
      %264 = dma.done [#allocation18], 32
    $region149: #{tpu_custom_call.1} parent=1 // pred_fallthru
      _
    // Predicated region
    $region150: #{tpu_custom_call.1} parent=1 // pred_check
      _
    $region151: #{tpu_custom_call.1} parent=1 // pred_check_branch
      %266 = sbr.rel (0) target = $region153
    $region152: #{tpu_custom_call.1} parent=1 // pred_region
      %267 = dma.done [#allocation18], 2048
    $region153: #{tpu_custom_call.1} parent=1 // pred_fallthru
      _
    // Predicated region
    $region154: #{tpu_custom_call.1} parent=1 // pred_check
      _
    $region155: #{tpu_custom_call.1} parent=1 // pred_check_branch
      %269 = sbr.rel (0) target = $region157
    $region156: #{tpu_custom_call.1} parent=1 // pred_region
      %270 = dma.done [#allocation21], 32
    $region157: #{tpu_custom_call.1} parent=1 // pred_fallthru
      _
    // Predicated region
    $region158: #{tpu_custom_call.1} parent=1 // pred_check
      _
    $region159: #{tpu_custom_call.1} parent=1 // pred_check_branch
      %272 = sbr.rel (0) target = $region161
    $region160: #{tpu_custom_call.1} parent=1 // pred_region
      %273 = dma.done [#allocation21], 32
    $region161: #{tpu_custom_call.1} parent=1 // pred_fallthru
      _
    // Predicated region
    $region162: #{tpu_custom_call.1} parent=1 // pred_check
      _
    $region163: #{tpu_custom_call.1} parent=1 // pred_check_branch
      %275 = sbr.rel (0) target = $region165
    $region164: #{tpu_custom_call.1} parent=1 // pred_region
      %276 = dma.done [#allocation24], 32
    $region165: #{tpu_custom_call.1} parent=1 // pred_fallthru
      _
    %v278 = vld [vmem:[%s0] sm:$0xff]
    %v279 = vld [vmem:[%s0 + $0x8] sm:$0xff]
    %v280 = vld [vmem:[#allocation5] sm:$0xf]
    %v281 = vld [vmem:[#allocation5 + $0x4] sm:$0xf]
    %v282 = vld [vmem:[#allocation5 + $0x8] sm:$0xf]
    %v283 = vld [vmem:[#allocation5 + $0xc] sm:$0xf]
    %v284 = vld [vmem:[#allocation2] sm:$0x1]
    %v285 = vld [vmem:[#allocation2 + $0x1] sm:$0x1]
    %v286 = vld [vmem:[#allocation2 + $0x2] sm:$0x1]
    %v287 = vld [vmem:[#allocation2 + $0x3] sm:$0x1]
    %v288 = vld [vmem:[#allocation2 + $0x4] sm:$0x1]
    %v289 = vld [vmem:[#allocation2 + $0x5] sm:$0x1]
    %v290 = vld [vmem:[#allocation2 + $0x6] sm:$0x1]
    %v291 = vld [vmem:[#allocation2 + $0x7] sm:$0x1]
    %v292 = vld [vmem:[%s3] sm:$0x1]
    %v293 = vld [vmem:[%s3 + $0x1] sm:$0x1]
    %v294 = vld [vmem:[%s3 + $0x2] sm:$0x1]
    %v295 = vld [vmem:[%s3 + $0x3] sm:$0x1]
    %v296 = vld [vmem:[%s3 + $0x4] sm:$0x1]
    %v297 = vld [vmem:[%s3 + $0x5] sm:$0x1]
    %v298 = vld [vmem:[%s3 + $0x6] sm:$0x1]
    %v299 = vld [vmem:[%s3 + $0x7] sm:$0x1]
    %v300 = vld [vmem:[%s4] sm:$0xff]
    %v301 = vld [vmem:[%s4 + $0x8] sm:$0xff]
    %v302 = vpack.c.bf16 %v279, %v278
    %v303 = vld [vmem:[#allocation7] sm:$0xf]
    %v304 = vld [vmem:[#allocation7 + $0x4] sm:$0xf]
    %v305 = vld [vmem:[#allocation7 + $0x8] sm:$0xf]
    %v306 = vld [vmem:[#allocation7 + $0xc] sm:$0xf]
    %v307 = vld [vmem:[#allocation7 + $0x10] sm:$0xf]
    %v308 = vld [vmem:[#allocation7 + $0x14] sm:$0xf]
    %v309 = vld [vmem:[#allocation7 + $0x18] sm:$0xf]
    %v310 = vld [vmem:[#allocation7 + $0x1c] sm:$0xf]
    %v311 = vld [vmem:[#allocation7 + $0x20] sm:$0xf]
    %v312 = vld [vmem:[#allocation7 + $0x24] sm:$0xf]
    %v313 = vld [vmem:[#allocation7 + $0x28] sm:$0xf]
    %v314 = vld [vmem:[#allocation7 + $0x2c] sm:$0xf]
    %v315 = vld [vmem:[#allocation7 + $0x30] sm:$0xf]
    %v316 = vld [vmem:[#allocation7 + $0x34] sm:$0xf]
    %v317 = vld [vmem:[#allocation7 + $0x38] sm:$0xf]
    %v318 = vld [vmem:[#allocation7 + $0x3c] sm:$0xf]
    %v319 = vld [vmem:[#allocation7 + $0x40] sm:$0xf]
    %v320 = vld [vmem:[#allocation7 + $0x44] sm:$0xf]
    %v321 = vld [vmem:[#allocation7 + $0x48] sm:$0xf]
    %v322 = vld [vmem:[#allocation7 + $0x4c] sm:$0xf]
    %v323 = vld [vmem:[#allocation7 + $0x50] sm:$0xf]
    %v324 = vld [vmem:[#allocation7 + $0x54] sm:$0xf]
    %v325 = vld [vmem:[#allocation7 + $0x58] sm:$0xf]
    %v326 = vld [vmem:[#allocation7 + $0x5c] sm:$0xf]
    %v327 = vld [vmem:[#allocation7 + $0x60] sm:$0xf]
    %v328 = vld [vmem:[#allocation7 + $0x64] sm:$0xf]
    %v329 = vld [vmem:[#allocation7 + $0x68] sm:$0xf]
    %v330 = vld [vmem:[#allocation7 + $0x6c] sm:$0xf]
    %v331 = vld [vmem:[#allocation7 + $0x70] sm:$0xf]
    %v332 = vld [vmem:[#allocation7 + $0x74] sm:$0xf]
    %v333 = vld [vmem:[#allocation7 + $0x78] sm:$0xf]
    %v334 = vld [vmem:[#allocation7 + $0x7c] sm:$0xf]
    %v335 = vld [vmem:[#allocation7 + $0x80] sm:$0xf]
    %v336 = vld [vmem:[#allocation7 + $0x84] sm:$0xf]
    %v337 = vld [vmem:[#allocation7 + $0x88] sm:$0xf]
    %v338 = vld [vmem:[#allocation7 + $0x8c] sm:$0xf]
    %v339 = vld [vmem:[#allocation7 + $0x90] sm:$0xf]
    %v340 = vld [vmem:[#allocation7 + $0x94] sm:$0xf]
    %v341 = vld [vmem:[#allocation7 + $0x98] sm:$0xf]
    %v342 = vld [vmem:[#allocation7 + $0x9c] sm:$0xf]
    %v343 = vld [vmem:[#allocation7 + $0xa0] sm:$0xf]
    %v344 = vld [vmem:[#allocation7 + $0xa4] sm:$0xf]
    %v345 = vld [vmem:[#allocation7 + $0xa8] sm:$0xf]
    %v346 = vld [vmem:[#allocation7 + $0xac] sm:$0xf]
    %v347 = vld [vmem:[#allocation7 + $0xb0] sm:$0xf]
    %v348 = vld [vmem:[#allocation7 + $0xb4] sm:$0xf]
    %v349 = vld [vmem:[#allocation7 + $0xb8] sm:$0xf]
    %v350 = vld [vmem:[#allocation7 + $0xbc] sm:$0xf]
    %v351 = vld [vmem:[%s6] sm:$0x7]
    %v353 = vlaneseq
    %v354 = vshrl.u32 %v353, 7
    %v355 = vsub.s32 0, %v354
    %v356 = vrot.slane %v351, %v355
    %v357 = vlaneseq
    %v358 = vshrl.u32 %v357, 7
    %v359 = vsub.s32 1, %v358
    %v360 = vrot.slane %v351, %v359
    %v361 = vlaneseq
    %v362 = vshrl.u32 %v361, 7
    %v363 = vsub.s32 2, %v362
    %v364 = vrot.slane %v351, %v363
    %v416 = vunpack.c.l.b16 %v303
    %v417 = vunpack.c.l.b16 %v304
    %v418 = vunpack.c.l.b16 %v305
    %v419 = vunpack.c.l.b16 %v306
    %v420 = vunpack.c.l.b16 %v307
    %v421 = vunpack.c.l.b16 %v308
    %v422 = vunpack.c.l.b16 %v309
    %v423 = vunpack.c.l.b16 %v310
    %v424 = vunpack.c.l.b16 %v311
    %v425 = vunpack.c.l.b16 %v312
    %v426 = vunpack.c.l.b16 %v313
    %v427 = vunpack.c.l.b16 %v314
    %v428 = vunpack.c.l.b16 %v315
    %v429 = vunpack.c.l.b16 %v316
    %v430 = vunpack.c.l.b16 %v317
    %v431 = vunpack.c.l.b16 %v318
    %v432 = vunpack.c.l.b16 %v319
    %v433 = vunpack.c.l.b16 %v320
    %v434 = vunpack.c.l.b16 %v321
    %v435 = vunpack.c.l.b16 %v322
    %v436 = vunpack.c.l.b16 %v323
    %v437 = vunpack.c.l.b16 %v324
    %v438 = vunpack.c.l.b16 %v325
    %v439 = vunpack.c.l.b16 %v326
    %v440 = vunpack.c.l.b16 %v327
    %v441 = vunpack.c.l.b16 %v328
    %v442 = vunpack.c.l.b16 %v329
    %v443 = vunpack.c.l.b16 %v330
    %v444 = vunpack.c.l.b16 %v331
    %v445 = vunpack.c.l.b16 %v332
    %v446 = vunpack.c.l.b16 %v333
    %v447 = vunpack.c.l.b16 %v334
    %v448 = vunpack.c.l.b16 %v335
    %v449 = vunpack.c.l.b16 %v336
    %v450 = vunpack.c.l.b16 %v337
    %v451 = vunpack.c.l.b16 %v338
    %v452 = vunpack.c.l.b16 %v339
    %v453 = vunpack.c.l.b16 %v340
    %v454 = vunpack.c.l.b16 %v341
    %v455 = vunpack.c.l.b16 %v342
    %v456 = vunpack.c.l.b16 %v343
    %v457 = vunpack.c.l.b16 %v344
    %v458 = vunpack.c.l.b16 %v345
    %v459 = vunpack.c.l.b16 %v346
    %v460 = vunpack.c.l.b16 %v347
    %v461 = vunpack.c.l.b16 %v348
    %v462 = vunpack.c.l.b16 %v349
    %v463 = vunpack.c.l.b16 %v350
    %v464 = vpack.c.b16 %v417, %v416
    %v465 = vpack.c.b16 %v419, %v418
    %v466 = vpack.c.b16 %v421, %v420
    %v467 = vpack.c.b16 %v423, %v422
    %v468 = vpack.c.b16 %v425, %v424
    %v469 = vpack.c.b16 %v427, %v426
    %v470 = vpack.c.b16 %v429, %v428
    %v471 = vpack.c.b16 %v431, %v430
    %v472 = vpack.c.b16 %v433, %v432
    %v473 = vpack.c.b16 %v435, %v434
    %v474 = vpack.c.b16 %v437, %v436
    %v475 = vpack.c.b16 %v439, %v438
    %v476 = vpack.c.b16 %v441, %v440
    %v477 = vpack.c.b16 %v443, %v442
    %v478 = vpack.c.b16 %v445, %v444
    %v479 = vpack.c.b16 %v447, %v446
    %v480 = vpack.c.b16 %v449, %v448
    %v481 = vpack.c.b16 %v451, %v450
    %v482 = vpack.c.b16 %v453, %v452
    %v483 = vpack.c.b16 %v455, %v454
    %v484 = vpack.c.b16 %v457, %v456
    %v485 = vpack.c.b16 %v459, %v458
    %v486 = vpack.c.b16 %v461, %v460
    %v487 = vpack.c.b16 %v463, %v462
    %512 = vmatprep.subr.bf16.mxu0 0
    %513 = vmatpush1.bf16.xpose.msra.mxu0 %v464
    %514 = vmatprep.subr.bf16.mxu0 0
    %515 = vmatpush1.bf16.xpose.msra.mxu0 %v465
    %516 = vmatprep.subr.bf16.mxu0 0
    %517 = vmatpush1.bf16.xpose.msra.mxu0 %v466
    %518 = vmatprep.subr.bf16.mxu0 0
    %519 = vmatpush1.bf16.xpose.msra.mxu0 %v467
    %520 = vmatprep.subr.bf16.mxu0 0
    %521 = vmatpush1.bf16.xpose.msra.mxu0 %v468
    %522 = vmatprep.subr.bf16.mxu0 0
    %523 = vmatpush1.bf16.xpose.msra.mxu0 %v469
    %524 = vmatprep.subr.bf16.mxu0 0
    %525 = vmatpush1.bf16.xpose.msra.mxu0 %v470
    %526 = vmatprep.subr.bf16.mxu0 0
    %527 = vmatpush1.bf16.xpose.msra.mxu0 %v471
    %528 = vmatprep.subr.bf16.mxu0 0
    %529 = vmatpush1.bf16.xpose.msra.mxu0 %v472
    %530 = vmatprep.subr.bf16.mxu0 0
    %531 = vmatpush1.bf16.xpose.msra.mxu0 %v473
    %532 = vmatprep.subr.bf16.mxu0 0
    %533 = vmatpush1.bf16.xpose.msra.mxu0 %v474
    %534 = vmatprep.subr.bf16.mxu0 0
    %535 = vmatpush1.bf16.xpose.msra.mxu0 %v475
    %536 = vmatprep.subr.bf16.mxu0 0
    %537 = vmatpush1.bf16.xpose.msra.mxu0 %v476
    %538 = vmatprep.subr.bf16.mxu0 0
    %539 = vmatpush1.bf16.xpose.msra.mxu0 %v477
    %540 = vmatprep.subr.bf16.mxu0 0
    %541 = vmatpush1.bf16.xpose.msra.mxu0 %v478
    %542 = vmatprep.subr.bf16.mxu0 0
    %543 = vmatpush1.bf16.xpose.msra.mxu0 %v479
    %544 = vmatprep.mubr.bf16.mxu0 0
    %545 = vmatmul.mubr.bf16.gmra.mrb[0].mxu0 %v302
    %v546 = vpop.f32.mrb[0].mxu0
    %v547 = vadd.f32 %v356, %v546
    %v548 = vpop.f32.mrb[0].mxu0
    %v549 = vadd.f32 %v360, %v548
    %v550 = vpop.f32.mrb[0].mxu0
    %v551 = vadd.f32 %v356, %v550
    %v552 = vpop.f32.mrb[0].mxu0
    %v553 = vadd.f32 %v360, %v552
    %554 = vdwg.mxu0
    %555 = vmatprep.subr.bf16.mxu0 0
    %556 = vmatpush1.bf16.xpose.msra.mxu0 %v480
    %557 = vmatprep.subr.bf16.mxu0 0
    %558 = vmatpush1.bf16.xpose.msra.mxu0 %v481
    %559 = vmatprep.subr.bf16.mxu0 0
    %560 = vmatpush1.bf16.xpose.msra.mxu0 %v482
    %561 = vmatprep.subr.bf16.mxu0 0
    %562 = vmatpush1.bf16.xpose.msra.mxu0 %v483
    %563 = vmatprep.subr.bf16.mxu0 0
    %564 = vmatpush1.bf16.xpose.msra.mxu0 %v484
    %565 = vmatprep.subr.bf16.mxu0 0
    %566 = vmatpush1.bf16.xpose.msra.mxu0 %v485
    %567 = vmatprep.subr.bf16.mxu0 0
    %568 = vmatpush1.bf16.xpose.msra.mxu0 %v486
    %569 = vmatprep.subr.bf16.mxu0 0
    %570 = vmatpush1.bf16.xpose.msra.mxu0 %v487
    %571 = vmatprep.subr.bf16.mxu0 0
    %572 = vmatpush1.bf16.xpose.msra.mxu0 0
    %573 = vmatprep.subr.bf16.mxu0 0
    %574 = vmatpush1.bf16.xpose.msra.mxu0 0
    %575 = vmatprep.subr.bf16.mxu0 0
    %576 = vmatpush1.bf16.xpose.msra.mxu0 0
    %577 = vmatprep.subr.bf16.mxu0 0
    %578 = vmatpush1.bf16.xpose.msra.mxu0 0
    %579 = vmatprep.subr.bf16.mxu0 0
    %580 = vmatpush1.bf16.xpose.msra.mxu0 0
    %581 = vmatprep.subr.bf16.mxu0 0
    %582 = vmatpush1.bf16.xpose.msra.mxu0 0
    %583 = vmatprep.subr.bf16.mxu0 0
    %584 = vmatpush1.bf16.xpose.msra.mxu0 0
    %585 = vmatprep.subr.bf16.mxu0 0
    %586 = vmatpush1.bf16.xpose.msra.mxu0 0
    %587 = vmatprep.mubr.bf16.mxu0 0
    %588 = vmatmul.mubr.bf16.gmra.mrb[0].mxu0 %v302
    %v589 = vpop.f32.mrb[0].mxu0
    %v590 = vadd.f32 %v364, %v589
    %v591 = vpop.f32.mrb[0].mxu0
    %v592 = vpop.f32.mrb[0].mxu0
    %v593 = vadd.f32 %v364, %v592
    %v594 = vpop.f32.mrb[0].mxu0
    %595 = vdwg.mxu0
    %597 = vrot.lane.b32.xlu0 %v547, 96
    %v598 = vpop.permute.xlu0 %597
    %600 = vrot.lane.b32.xlu0 %v547, 64
    %v601 = vpop.permute.xlu0 %600
    %603 = vrot.lane.b32.xlu0 %v547, 32
    %v604 = vpop.permute.xlu0 %603
    %607 = vrot.lane.b32.xlu0 %v551, 96
    %v608 = vpop.permute.xlu0 %607
    %610 = vrot.lane.b32.xlu0 %v551, 64
    %v611 = vpop.permute.xlu0 %610
    %613 = vrot.lane.b32.xlu0 %v551, 32
    %v614 = vpop.permute.xlu0 %613
    %v616 = vpack.c.bf16 %v547, %v547
    %v617 = vpack.c.bf16 %v598, %v598
    %v618 = vpack.c.bf16 %v601, %v601
    %v619 = vpack.c.bf16 %v604, %v604
    %v620 = vpack.c.bf16 %v551, %v551
    %v621 = vpack.c.bf16 %v608, %v608
    %v622 = vpack.c.bf16 %v611, %v611
    %v623 = vpack.c.bf16 %v614, %v614
    %625 = vrot.lane.b32.xlu0 %v549, 96
    %v626 = vpop.permute.xlu0 %625
    %628 = vrot.lane.b32.xlu0 %v549, 64
    %v629 = vpop.permute.xlu0 %628
    %631 = vrot.lane.b32.xlu0 %v549, 32
    %v632 = vpop.permute.xlu0 %631
    %635 = vrot.lane.b32.xlu0 %v553, 96
    %v636 = vpop.permute.xlu0 %635
    %638 = vrot.lane.b32.xlu0 %v553, 64
    %v639 = vpop.permute.xlu0 %638
    %641 = vrot.lane.b32.xlu0 %v553, 32
    %v642 = vpop.permute.xlu0 %641
    %v644 = vpack.c.bf16 %v549, %v549
    %v645 = vpack.c.bf16 %v626, %v626
    %v646 = vpack.c.bf16 %v629, %v629
    %v647 = vpack.c.bf16 %v632, %v632
    %v648 = vpack.c.bf16 %v553, %v553
    %v649 = vpack.c.bf16 %v636, %v636
    %v650 = vpack.c.bf16 %v639, %v639
    %v651 = vpack.c.bf16 %v642, %v642
    %653 = vrot.lane.b32.xlu0 %v590, 96
    %v654 = vpop.permute.xlu0 %653
    %656 = vrot.lane.b32.xlu0 %v590, 64
    %v657 = vpop.permute.xlu0 %656
    %659 = vrot.lane.b32.xlu0 %v590, 32
    %v660 = vpop.permute.xlu0 %659
    %663 = vrot.lane.b32.xlu0 %v593, 96
    %v664 = vpop.permute.xlu0 %663
    %666 = vrot.lane.b32.xlu0 %v593, 64
    %v667 = vpop.permute.xlu0 %666
    %669 = vrot.lane.b32.xlu0 %v593, 32
    %v670 = vpop.permute.xlu0 %669
    %v672 = vpack.c.bf16 %v590, %v590
    %v673 = vpack.c.bf16 %v654, %v654
    %v674 = vpack.c.bf16 %v657, %v657
    %v675 = vpack.c.bf16 %v660, %v660
    %v676 = vpack.c.bf16 %v593, %v593
    %v677 = vpack.c.bf16 %v664, %v664
    %v678 = vpack.c.bf16 %v667, %v667
    %v679 = vpack.c.bf16 %v670, %v670
    %v688 = vlaneseq
    %v689 = vshrl.u32 %v688, 7
    %v690 = vsub.s32 0, %v689
    %v691 = vrot.slane %v284, %v690
    %v692 = vlaneseq
    %v693 = vshrl.u32 %v692, 7
    %v694 = vsub.s32 0, %v693
    %v695 = vrot.slane %v285, %v694
    %v696 = vlaneseq
    %v697 = vshrl.u32 %v696, 7
    %v698 = vsub.s32 0, %v697
    %v699 = vrot.slane %v286, %v698
    %v700 = vlaneseq
    %v701 = vshrl.u32 %v700, 7
    %v702 = vsub.s32 0, %v701
    %v703 = vrot.slane %v287, %v702
    %v704 = vlaneseq
    %v705 = vshrl.u32 %v704, 7
    %v706 = vsub.s32 0, %v705
    %v707 = vrot.slane %v288, %v706
    %v708 = vlaneseq
    %v709 = vshrl.u32 %v708, 7
    %v710 = vsub.s32 0, %v709
    %v711 = vrot.slane %v289, %v710
    %v712 = vlaneseq
    %v713 = vshrl.u32 %v712, 7
    %v714 = vsub.s32 0, %v713
    %v715 = vrot.slane %v290, %v714
    %v716 = vlaneseq
    %v717 = vshrl.u32 %v716, 7
    %v718 = vsub.s32 0, %v717
    %v719 = vrot.slane %v291, %v718
    %vm728 = vcmask 261120
    %v730 = vsel %vm728, %v616, 0
    %v733 = vsel %vm728, %v644, 0
    %735 = vmatprep.subr.bf16.mxu0 0
    %736 = vmatpush1.bf16.xpose.msra.mxu0 %v733
    %737 = vmatprep.subr.bf16.mxu0 0
    %738 = vmatpush1.bf16.xpose.msra.mxu0 0
    %739 = vmatprep.subr.bf16.mxu0 0
    %740 = vmatpush1.bf16.xpose.msra.mxu0 0
    %741 = vmatprep.subr.bf16.mxu0 0
    %742 = vmatpush1.bf16.xpose.msra.mxu0 0
    %743 = vmatprep.subr.bf16.mxu0 0
    %744 = vmatpush1.bf16.xpose.msra.mxu0 0
    %745 = vmatprep.subr.bf16.mxu0 0
    %746 = vmatpush1.bf16.xpose.msra.mxu0 0
    %747 = vmatprep.subr.bf16.mxu0 0
    %748 = vmatpush1.bf16.xpose.msra.mxu0 0
    %749 = vmatprep.subr.bf16.mxu0 0
    %750 = vmatpush1.bf16.xpose.msra.mxu0 0
    %751 = vmatprep.subr.bf16.mxu0 0
    %752 = vmatpush1.bf16.xpose.msra.mxu0 0
    %753 = vmatprep.subr.bf16.mxu0 0
    %754 = vmatpush1.bf16.xpose.msra.mxu0 0
    %755 = vmatprep.subr.bf16.mxu0 0
    %756 = vmatpush1.bf16.xpose.msra.mxu0 0
    %757 = vmatprep.subr.bf16.mxu0 0
    %758 = vmatpush1.bf16.xpose.msra.mxu0 0
    %759 = vmatprep.subr.bf16.mxu0 0
    %760 = vmatpush1.bf16.xpose.msra.mxu0 0
    %761 = vmatprep.subr.bf16.mxu0 0
    %762 = vmatpush1.bf16.xpose.msra.mxu0 0
    %763 = vmatprep.subr.bf16.mxu0 0
    %764 = vmatpush1.bf16.xpose.msra.mxu0 0
    %765 = vmatprep.subr.bf16.mxu0 0
    %766 = vmatpush1.bf16.xpose.msra.mxu0 0
    %767 = vmatprep.mubr.bf16.mxu0 0
    %768 = vmatmul.mubr.bf16.gmra.mrb[0].mxu0 %v730
    %v769 = vpop.f32.mrb[0].mxu0
    %v770 = vadd.f32 %v691, %v769
    %v771 = vpop.f32.mrb[0].mxu0
    %v772 = vpop.f32.mrb[0].mxu0
    %v773 = vpop.f32.mrb[0].mxu0
    %774 = vdwg.mxu0
    %v776 = vsel %vm728, %v617, 0
    %v779 = vsel %vm728, %v645, 0
    %781 = vmatprep.subr.bf16.mxu0 0
    %782 = vmatpush1.bf16.xpose.msra.mxu0 %v779
    %783 = vmatprep.subr.bf16.mxu0 0
    %784 = vmatpush1.bf16.xpose.msra.mxu0 0
    %785 = vmatprep.subr.bf16.mxu0 0
    %786 = vmatpush1.bf16.xpose.msra.mxu0 0
    %787 = vmatprep.subr.bf16.mxu0 0
    %788 = vmatpush1.bf16.xpose.msra.mxu0 0
    %789 = vmatprep.subr.bf16.mxu0 0
    %790 = vmatpush1.bf16.xpose.msra.mxu0 0
    %791 = vmatprep.subr.bf16.mxu0 0
    %792 = vmatpush1.bf16.xpose.msra.mxu0 0
    %793 = vmatprep.subr.bf16.mxu0 0
    %794 = vmatpush1.bf16.xpose.msra.mxu0 0
    %795 = vmatprep.subr.bf16.mxu0 0
    %796 = vmatpush1.bf16.xpose.msra.mxu0 0
    %797 = vmatprep.subr.bf16.mxu0 0
    %798 = vmatpush1.bf16.xpose.msra.mxu0 0
    %799 = vmatprep.subr.bf16.mxu0 0
    %800 = vmatpush1.bf16.xpose.msra.mxu0 0
    %801 = vmatprep.subr.bf16.mxu0 0
    %802 = vmatpush1.bf16.xpose.msra.mxu0 0
    %803 = vmatprep.subr.bf16.mxu0 0
    %804 = vmatpush1.bf16.xpose.msra.mxu0 0
    %805 = vmatprep.subr.bf16.mxu0 0
    %806 = vmatpush1.bf16.xpose.msra.mxu0 0
    %807 = vmatprep.subr.bf16.mxu0 0
    %808 = vmatpush1.bf16.xpose.msra.mxu0 0
    %809 = vmatprep.subr.bf16.mxu0 0
    %810 = vmatpush1.bf16.xpose.msra.mxu0 0
    %811 = vmatprep.subr.bf16.mxu0 0
    %812 = vmatpush1.bf16.xpose.msra.mxu0 0
    %813 = vmatprep.mubr.bf16.mxu0 0
    %814 = vmatmul.mubr.bf16.gmra.mrb[0].mxu0 %v776
    %v815 = vpop.f32.mrb[0].mxu0
    %v816 = vadd.f32 %v695, %v815
    %v817 = vpop.f32.mrb[0].mxu0
    %v818 = vpop.f32.mrb[0].mxu0
    %v819 = vpop.f32.mrb[0].mxu0
    %820 = vdwg.mxu0
    %v822 = vsel %vm728, %v618, 0
    %v825 = vsel %vm728, %v646, 0
    %827 = vmatprep.subr.bf16.mxu0 0
    %828 = vmatpush1.bf16.xpose.msra.mxu0 %v825
    %829 = vmatprep.subr.bf16.mxu0 0
    %830 = vmatpush1.bf16.xpose.msra.mxu0 0
    %831 = vmatprep.subr.bf16.mxu0 0
    %832 = vmatpush1.bf16.xpose.msra.mxu0 0
    %833 = vmatprep.subr.bf16.mxu0 0
    %834 = vmatpush1.bf16.xpose.msra.mxu0 0
    %835 = vmatprep.subr.bf16.mxu0 0
    %836 = vmatpush1.bf16.xpose.msra.mxu0 0
    %837 = vmatprep.subr.bf16.mxu0 0
    %838 = vmatpush1.bf16.xpose.msra.mxu0 0
    %839 = vmatprep.subr.bf16.mxu0 0
    %840 = vmatpush1.bf16.xpose.msra.mxu0 0
    %841 = vmatprep.subr.bf16.mxu0 0
    %842 = vmatpush1.bf16.xpose.msra.mxu0 0
    %843 = vmatprep.subr.bf16.mxu0 0
    %844 = vmatpush1.bf16.xpose.msra.mxu0 0
    %845 = vmatprep.subr.bf16.mxu0 0
    %846 = vmatpush1.bf16.xpose.msra.mxu0 0
    %847 = vmatprep.subr.bf16.mxu0 0
    %848 = vmatpush1.bf16.xpose.msra.mxu0 0
    %849 = vmatprep.subr.bf16.mxu0 0
    %850 = vmatpush1.bf16.xpose.msra.mxu0 0
    %851 = vmatprep.subr.bf16.mxu0 0
    %852 = vmatpush1.bf16.xpose.msra.mxu0 0
    %853 = vmatprep.subr.bf16.mxu0 0
    %854 = vmatpush1.bf16.xpose.msra.mxu0 0
    %855 = vmatprep.subr.bf16.mxu0 0
    %856 = vmatpush1.bf16.xpose.msra.mxu0 0
    %857 = vmatprep.subr.bf16.mxu0 0
    %858 = vmatpush1.bf16.xpose.msra.mxu0 0
    %859 = vmatprep.mubr.bf16.mxu0 0
    %860 = vmatmul.mubr.bf16.gmra.mrb[0].mxu0 %v822
    %v861 = vpop.f32.mrb[0].mxu0
    %v862 = vadd.f32 %v699, %v861
    %v863 = vpop.f32.mrb[0].mxu0
    %v864 = vpop.f32.mrb[0].mxu0
    %v865 = vpop.f32.mrb[0].mxu0
    %866 = vdwg.mxu0
    %v868 = vsel %vm728, %v619, 0
    %v871 = vsel %vm728, %v647, 0
    %873 = vmatprep.subr.bf16.mxu0 0
    %874 = vmatpush1.bf16.xpose.msra.mxu0 %v871
    %875 = vmatprep.subr.bf16.mxu0 0
    %876 = vmatpush1.bf16.xpose.msra.mxu0 0
    %877 = vmatprep.subr.bf16.mxu0 0
    %878 = vmatpush1.bf16.xpose.msra.mxu0 0
    %879 = vmatprep.subr.bf16.mxu0 0
    %880 = vmatpush1.bf16.xpose.msra.mxu0 0
    %881 = vmatprep.subr.bf16.mxu0 0
    %882 = vmatpush1.bf16.xpose.msra.mxu0 0
    %883 = vmatprep.subr.bf16.mxu0 0
    %884 = vmatpush1.bf16.xpose.msra.mxu0 0
    %885 = vmatprep.subr.bf16.mxu0 0
    %886 = vmatpush1.bf16.xpose.msra.mxu0 0
    %887 = vmatprep.subr.bf16.mxu0 0
    %888 = vmatpush1.bf16.xpose.msra.mxu0 0
    %889 = vmatprep.subr.bf16.mxu0 0
    %890 = vmatpush1.bf16.xpose.msra.mxu0 0
    %891 = vmatprep.subr.bf16.mxu0 0
    %892 = vmatpush1.bf16.xpose.msra.mxu0 0
    %893 = vmatprep.subr.bf16.mxu0 0
    %894 = vmatpush1.bf16.xpose.msra.mxu0 0
    %895 = vmatprep.subr.bf16.mxu0 0
    %896 = vmatpush1.bf16.xpose.msra.mxu0 0
    %897 = vmatprep.subr.bf16.mxu0 0
    %898 = vmatpush1.bf16.xpose.msra.mxu0 0
    %899 = vmatprep.subr.bf16.mxu0 0
    %900 = vmatpush1.bf16.xpose.msra.mxu0 0
    %901 = vmatprep.subr.bf16.mxu0 0
    %902 = vmatpush1.bf16.xpose.msra.mxu0 0
    %903 = vmatprep.subr.bf16.mxu0 0
    %904 = vmatpush1.bf16.xpose.msra.mxu0 0
    %905 = vmatprep.mubr.bf16.mxu0 0
    %906 = vmatmul.mubr.bf16.gmra.mrb[0].mxu0 %v868
    %v907 = vpop.f32.mrb[0].mxu0
    %v908 = vadd.f32 %v703, %v907
    %v909 = vpop.f32.mrb[0].mxu0
    %v910 = vpop.f32.mrb[0].mxu0
    %v911 = vpop.f32.mrb[0].mxu0
    %912 = vdwg.mxu0
    %v914 = vsel %vm728, %v620, 0
    %v917 = vsel %vm728, %v648, 0
    %919 = vmatprep.subr.bf16.mxu0 0
    %920 = vmatpush1.bf16.xpose.msra.mxu0 %v917
    %921 = vmatprep.subr.bf16.mxu0 0
    %922 = vmatpush1.bf16.xpose.msra.mxu0 0
    %923 = vmatprep.subr.bf16.mxu0 0
    %924 = vmatpush1.bf16.xpose.msra.mxu0 0
    %925 = vmatprep.subr.bf16.mxu0 0
    %926 = vmatpush1.bf16.xpose.msra.mxu0 0
    %927 = vmatprep.subr.bf16.mxu0 0
    %928 = vmatpush1.bf16.xpose.msra.mxu0 0
    %929 = vmatprep.subr.bf16.mxu0 0
    %930 = vmatpush1.bf16.xpose.msra.mxu0 0
    %931 = vmatprep.subr.bf16.mxu0 0
    %932 = vmatpush1.bf16.xpose.msra.mxu0 0
    %933 = vmatprep.subr.bf16.mxu0 0
    %934 = vmatpush1.bf16.xpose.msra.mxu0 0
    %935 = vmatprep.subr.bf16.mxu0 0
    %936 = vmatpush1.bf16.xpose.msra.mxu0 0
    %937 = vmatprep.subr.bf16.mxu0 0
    %938 = vmatpush1.bf16.xpose.msra.mxu0 0
    %939 = vmatprep.subr.bf16.mxu0 0
    %940 = vmatpush1.bf16.xpose.msra.mxu0 0
    %941 = vmatprep.subr.bf16.mxu0 0
    %942 = vmatpush1.bf16.xpose.msra.mxu0 0
    %943 = vmatprep.subr.bf16.mxu0 0
    %944 = vmatpush1.bf16.xpose.msra.mxu0 0
    %945 = vmatprep.subr.bf16.mxu0 0
    %946 = vmatpush1.bf16.xpose.msra.mxu0 0
    %947 = vmatprep.subr.bf16.mxu0 0
    %948 = vmatpush1.bf16.xpose.msra.mxu0 0
    %949 = vmatprep.subr.bf16.mxu0 0
    %950 = vmatpush1.bf16.xpose.msra.mxu0 0
    %951 = vmatprep.mubr.bf16.mxu0 0
    %952 = vmatmul.mubr.bf16.gmra.mrb[0].mxu0 %v914
    %v953 = vpop.f32.mrb[0].mxu0
    %v954 = vadd.f32 %v707, %v953
    %v955 = vpop.f32.mrb[0].mxu0
    %v956 = vpop.f32.mrb[0].mxu0
    %v957 = vpop.f32.mrb[0].mxu0
    %958 = vdwg.mxu0
    %v960 = vsel %vm728, %v621, 0
    %v963 = vsel %vm728, %v649, 0
    %965 = vmatprep.subr.bf16.mxu0 0
    %966 = vmatpush1.bf16.xpose.msra.mxu0 %v963
    %967 = vmatprep.subr.bf16.mxu0 0
    %968 = vmatpush1.bf16.xpose.msra.mxu0 0
    %969 = vmatprep.subr.bf16.mxu0 0
    %970 = vmatpush1.bf16.xpose.msra.mxu0 0
    %971 = vmatprep.subr.bf16.mxu0 0
    %972 = vmatpush1.bf16.xpose.msra.mxu0 0
    %973 = vmatprep.subr.bf16.mxu0 0
    %974 = vmatpush1.bf16.xpose.msra.mxu0 0
    %975 = vmatprep.subr.bf16.mxu0 0
    %976 = vmatpush1.bf16.xpose.msra.mxu0 0
    %977 = vmatprep.subr.bf16.mxu0 0
    %978 = vmatpush1.bf16.xpose.msra.mxu0 0
    %979 = vmatprep.subr.bf16.mxu0 0
    %980 = vmatpush1.bf16.xpose.msra.mxu0 0
    %981 = vmatprep.subr.bf16.mxu0 0
    %982 = vmatpush1.bf16.xpose.msra.mxu0 0
    %983 = vmatprep.subr.bf16.mxu0 0
    %984 = vmatpush1.bf16.xpose.msra.mxu0 0
    %985 = vmatprep.subr.bf16.mxu0 0
    %986 = vmatpush1.bf16.xpose.msra.mxu0 0
    %987 = vmatprep.subr.bf16.mxu0 0
    %988 = vmatpush1.bf16.xpose.msra.mxu0 0
    %989 = vmatprep.subr.bf16.mxu0 0
    %990 = vmatpush1.bf16.xpose.msra.mxu0 0
    %991 = vmatprep.subr.bf16.mxu0 0
    %992 = vmatpush1.bf16.xpose.msra.mxu0 0
    %993 = vmatprep.subr.bf16.mxu0 0
    %994 = vmatpush1.bf16.xpose.msra.mxu0 0
    %995 = vmatprep.subr.bf16.mxu0 0
    %996 = vmatpush1.bf16.xpose.msra.mxu0 0
    %997 = vmatprep.mubr.bf16.mxu0 0
    %998 = vmatmul.mubr.bf16.gmra.mrb[0].mxu0 %v960
    %v999 = vpop.f32.mrb[0].mxu0
    %v1000 = vadd.f32 %v711, %v999
    %v1001 = vpop.f32.mrb[0].mxu0
    %v1002 = vpop.f32.mrb[0].mxu0
    %v1003 = vpop.f32.mrb[0].mxu0
    %1004 = vdwg.mxu0
    %v1006 = vsel %vm728, %v622, 0
    %v1009 = vsel %vm728, %v650, 0
    %1011 = vmatprep.subr.bf16.mxu0 0
    %1012 = vmatpush1.bf16.xpose.msra.mxu0 %v1009
    %1013 = vmatprep.subr.bf16.mxu0 0
    %1014 = vmatpush1.bf16.xpose.msra.mxu0 0
    %1015 = vmatprep.subr.bf16.mxu0 0
    %1016 = vmatpush1.bf16.xpose.msra.mxu0 0
    %1017 = vmatprep.subr.bf16.mxu0 0
    %1018 = vmatpush1.bf16.xpose.msra.mxu0 0
    %1019 = vmatprep.subr.bf16.mxu0 0
    %1020 = vmatpush1.bf16.xpose.msra.mxu0 0
    %1021 = vmatprep.subr.bf16.mxu0 0
    %1022 = vmatpush1.bf16.xpose.msra.mxu0 0
    %1023 = vmatprep.subr.bf16.mxu0 0
    %1024 = vmatpush1.bf16.xpose.msra.mxu0 0
    %1025 = vmatprep.subr.bf16.mxu0 0
    %1026 = vmatpush1.bf16.xpose.msra.mxu0 0
    %1027 = vmatprep.subr.bf16.mxu0 0
    %1028 = vmatpush1.bf16.xpose.msra.mxu0 0
    %1029 = vmatprep.subr.bf16.mxu0 0
    %1030 = vmatpush1.bf16.xpose.msra.mxu0 0
    %1031 = vmatprep.subr.bf16.mxu0 0
    %1032 = vmatpush1.bf16.xpose.msra.mxu0 0
    %1033 = vmatprep.subr.bf16.mxu0 0
    %1034 = vmatpush1.bf16.xpose.msra.mxu0 0
    %1035 = vmatprep.subr.bf16.mxu0 0
    %1036 = vmatpush1.bf16.xpose.msra.mxu0 0
    %1037 = vmatprep.subr.bf16.mxu0 0
    %1038 = vmatpush1.bf16.xpose.msra.mxu0 0
    %1039 = vmatprep.subr.bf16.mxu0 0
    %1040 = vmatpush1.bf16.xpose.msra.mxu0 0
    %1041 = vmatprep.subr.bf16.mxu0 0
    %1042 = vmatpush1.bf16.xpose.msra.mxu0 0
    %1043 = vmatprep.mubr.bf16.mxu0 0
    %1044 = vmatmul.mubr.bf16.gmra.mrb[0].mxu0 %v1006
    %v1045 = vpop.f32.mrb[0].mxu0
    %v1046 = vadd.f32 %v715, %v1045
    %v1047 = vpop.f32.mrb[0].mxu0
    %v1048 = vpop.f32.mrb[0].mxu0
    %v1049 = vpop.f32.mrb[0].mxu0
    %1050 = vdwg.mxu0
    %v1052 = vsel %vm728, %v623, 0
    %v1055 = vsel %vm728, %v651, 0
    %1057 = vmatprep.subr.bf16.mxu0 0
    %1058 = vmatpush1.bf16.xpose.msra.mxu0 %v1055
    %1059 = vmatprep.subr.bf16.mxu0 0
    %1060 = vmatpush1.bf16.xpose.msra.mxu0 0
    %1061 = vmatprep.subr.bf16.mxu0 0
    %1062 = vmatpush1.bf16.xpose.msra.mxu0 0
    %1063 = vmatprep.subr.bf16.mxu0 0
    %1064 = vmatpush1.bf16.xpose.msra.mxu0 0
    %1065 = vmatprep.subr.bf16.mxu0 0
    %1066 = vmatpush1.bf16.xpose.msra.mxu0 0
    %1067 = vmatprep.subr.bf16.mxu0 0
    %1068 = vmatpush1.bf16.xpose.msra.mxu0 0
    %1069 = vmatprep.subr.bf16.mxu0 0
    %1070 = vmatpush1.bf16.xpose.msra.mxu0 0
    %1071 = vmatprep.subr.bf16.mxu0 0
    %1072 = vmatpush1.bf16.xpose.msra.mxu0 0
    %1073 = vmatprep.subr.bf16.mxu0 0
    %1074 = vmatpush1.bf16.xpose.msra.mxu0 0
    %1075 = vmatprep.subr.bf16.mxu0 0
    %1076 = vmatpush1.bf16.xpose.msra.mxu0 0
    %1077 = vmatprep.subr.bf16.mxu0 0
    %1078 = vmatpush1.bf16.xpose.msra.mxu0 0
    %1079 = vmatprep.subr.bf16.mxu0 0
    %1080 = vmatpush1.bf16.xpose.msra.mxu0 0
    %1081 = vmatprep.subr.bf16.mxu0 0
    %1082 = vmatpush1.bf16.xpose.msra.mxu0 0
    %1083 = vmatprep.subr.bf16.mxu0 0
    %1084 = vmatpush1.bf16.xpose.msra.mxu0 0
    %1085 = vmatprep.subr.bf16.mxu0 0
    %1086 = vmatpush1.bf16.xpose.msra.mxu0 0
    %1087 = vmatprep.subr.bf16.mxu0 0
    %1088 = vmatpush1.bf16.xpose.msra.mxu0 0
    %1089 = vmatprep.mubr.bf16.mxu0 0
    %1090 = vmatmul.mubr.bf16.gmra.mrb[0].mxu0 %v1052
    %v1091 = vpop.f32.mrb[0].mxu0
    %v1092 = vadd.f32 %v719, %v1091
    %v1093 = vpop.f32.mrb[0].mxu0
    %v1094 = vpop.f32.mrb[0].mxu0
    %v1095 = vpop.f32.mrb[0].mxu0
    %1096 = vdwg.mxu0
    %vm1097 = vcmask 64512
    %v1098 = vsel %vm1097, %v770, -inf
    %1099 = vmax.xlane.f32.xlu0 %v1098
    %v1100 = vpop.xlane.xlu0 %1099
    %v1101 = vsel %vm1097, %v816, -inf
    %1102 = vmax.xlane.f32.xlu0 %v1101
    %v1103 = vpop.xlane.xlu0 %1102
    %v1104 = vsel %vm1097, %v862, -inf
    %1105 = vmax.xlane.f32.xlu0 %v1104
    %v1106 = vpop.xlane.xlu0 %1105
    %v1107 = vsel %vm1097, %v908, -inf
    %1108 = vmax.xlane.f32.xlu0 %v1107
    %v1109 = vpop.xlane.xlu0 %1108
    %v1110 = vsel %vm1097, %v954, -inf
    %1111 = vmax.xlane.f32.xlu0 %v1110
    %v1112 = vpop.xlane.xlu0 %1111
    %v1113 = vsel %vm1097, %v1000, -inf
    %1114 = vmax.xlane.f32.xlu0 %v1113
    %v1115 = vpop.xlane.xlu0 %1114
    %v1116 = vsel %vm1097, %v1046, -inf
    %1117 = vmax.xlane.f32.xlu0 %v1116
    %v1118 = vpop.xlane.xlu0 %1117
    %v1119 = vsel %vm1097, %v1092, -inf
    %1120 = vmax.xlane.f32.xlu0 %v1119
    %v1121 = vpop.xlane.xlu0 %1120
    %v1122 = vsub.f32 %v770, %v1100
    %v1123 = vsub.f32 %v816, %v1103
    %v1124 = vsub.f32 %v862, %v1106
    %v1125 = vsub.f32 %v908, %v1109
    %v1126 = vsub.f32 %v954, %v1112
    %v1127 = vsub.f32 %v1000, %v1115
    %v1128 = vsub.f32 %v1046, %v1118
    %v1129 = vsub.f32 %v1092, %v1121
    %v1130 = vmul.f32 %v1122, 1.442695
    %v1131 = vpow.pop %v1130
    %v1132 = vmul.f32 %v1123, 1.442695
    %v1133 = vpow.pop %v1132
    %v1134 = vmul.f32 %v1124, 1.442695
    %v1135 = vpow.pop %v1134
    %v1136 = vmul.f32 %v1125, 1.442695
    %v1137 = vpow.pop %v1136
    %v1138 = vmul.f32 %v1126, 1.442695
    %v1139 = vpow.pop %v1138
    %v1140 = vmul.f32 %v1127, 1.442695
    %v1141 = vpow.pop %v1140
    %v1142 = vmul.f32 %v1128, 1.442695
    %v1143 = vpow.pop %v1142
    %v1144 = vmul.f32 %v1129, 1.442695
    %v1145 = vpow.pop %v1144
    %v1146 = vsel %vm1097, %v1131, 0.0
    %1147 = vadd.xlane.f32.xlu0 %v1146
    %v1148 = vpop.xlane.xlu0 %1147
    %v1149 = vsel %vm1097, %v1133, 0.0
    %1150 = vadd.xlane.f32.xlu0 %v1149
    %v1151 = vpop.xlane.xlu0 %1150
    %v1152 = vsel %vm1097, %v1135, 0.0
    %1153 = vadd.xlane.f32.xlu0 %v1152
    %v1154 = vpop.xlane.xlu0 %1153
    %v1155 = vsel %vm1097, %v1137, 0.0
    %1156 = vadd.xlane.f32.xlu0 %v1155
    %v1157 = vpop.xlane.xlu0 %1156
    %v1158 = vsel %vm1097, %v1139, 0.0
    %1159 = vadd.xlane.f32.xlu0 %v1158
    %v1160 = vpop.xlane.xlu0 %1159
    %v1161 = vsel %vm1097, %v1141, 0.0
    %1162 = vadd.xlane.f32.xlu0 %v1161
    %v1163 = vpop.xlane.xlu0 %1162
    %v1164 = vsel %vm1097, %v1143, 0.0
    %1165 = vadd.xlane.f32.xlu0 %v1164
    %v1166 = vpop.xlane.xlu0 %1165
    %v1167 = vsel %vm1097, %v1145, 0.0
    %1168 = vadd.xlane.f32.xlu0 %v1167
    %v1169 = vpop.xlane.xlu0 %1168
    %v1170 = vrcp.pop %v1148
    %v1171 = vrcp.pop %v1151
    %v1172 = vrcp.pop %v1154
    %v1173 = vrcp.pop %v1157
    %v1174 = vrcp.pop %v1160
    %v1175 = vrcp.pop %v1163
    %v1176 = vrcp.pop %v1166
    %v1177 = vrcp.pop %v1169
    %v1178 = vmul.f32 %v1131, %v1170
    %v1179 = vmul.f32 %v1133, %v1171
    %v1180 = vmul.f32 %v1135, %v1172
    %v1181 = vmul.f32 %v1137, %v1173
    %v1182 = vmul.f32 %v1139, %v1174
    %v1183 = vmul.f32 %v1141, %v1175
    %v1184 = vmul.f32 %v1143, %v1176
    %v1185 = vmul.f32 %v1145, %v1177
    %v1186 = vpack.c.bf16 %v1178, %v1178
    %v1187 = vpack.c.bf16 %v1179, %v1179
    %v1188 = vpack.c.bf16 %v1180, %v1180
    %v1189 = vpack.c.bf16 %v1181, %v1181
    %v1190 = vpack.c.bf16 %v1182, %v1182
    %v1191 = vpack.c.bf16 %v1183, %v1183
    %v1192 = vpack.c.bf16 %v1184, %v1184
    %v1193 = vpack.c.bf16 %v1185, %v1185
    %v1195 = vsel %vm1097, %v1186, 0
    %vm1197 = vcmask 1043456
    %v1199 = vsel %vm1197, %v672, 0
    %1201 = vmatprep.subr.bf16.mxu0 0
    %1202 = vmatpush1.bf16.msra.mxu0 %v1199
    %1203 = vmatprep.subr.bf16.mxu0 0
    %1204 = vmatpush1.bf16.msra.mxu0 0
    %1205 = vmatprep.subr.bf16.mxu0 0
    %1206 = vmatpush1.bf16.msra.mxu0 0
    %1207 = vmatprep.subr.bf16.mxu0 0
    %1208 = vmatpush1.bf16.msra.mxu0 0
    %1209 = vmatprep.subr.bf16.mxu0 0
    %1210 = vmatpush1.bf16.msra.mxu0 0
    %1211 = vmatprep.subr.bf16.mxu0 0
    %1212 = vmatpush1.bf16.msra.mxu0 0
    %1213 = vmatprep.subr.bf16.mxu0 0
    %1214 = vmatpush1.bf16.msra.mxu0 0
    %1215 = vmatprep.subr.bf16.mxu0 0
    %1216 = vmatpush1.bf16.msra.mxu0 0
    %1217 = vmatprep.subr.bf16.mxu0 0
    %1218 = vmatpush1.bf16.msra.mxu0 0
    %1219 = vmatprep.subr.bf16.mxu0 0
    %1220 = vmatpush1.bf16.msra.mxu0 0
    %1221 = vmatprep.subr.bf16.mxu0 0
    %1222 = vmatpush1.bf16.msra.mxu0 0
    %1223 = vmatprep.subr.bf16.mxu0 0
    %1224 = vmatpush1.bf16.msra.mxu0 0
    %1225 = vmatprep.subr.bf16.mxu0 0
    %1226 = vmatpush1.bf16.msra.mxu0 0
    %1227 = vmatprep.subr.bf16.mxu0 0
    %1228 = vmatpush1.bf16.msra.mxu0 0
    %1229 = vmatprep.subr.bf16.mxu0 0
    %1230 = vmatpush1.bf16.msra.mxu0 0
    %1231 = vmatprep.subr.bf16.mxu0 0
    %1232 = vmatpush1.bf16.msra.mxu0 0
    %1233 = vmatprep.mubr.bf16.mxu0 0
    %1234 = vmatmul.mubr.bf16.gmra.mrb[0].mxu0 %v1195
    %v1235 = vpop.f32.mrb[0].mxu0
    %v1236 = vadd.f32 0.0, %v1235
    %v1237 = vpop.f32.mrb[0].mxu0
    %v1238 = vpop.f32.mrb[0].mxu0
    %v1239 = vpop.f32.mrb[0].mxu0
    %1240 = vdwg.mxu0
    %v1242 = vsel %vm1097, %v1187, 0
    %v1245 = vsel %vm1197, %v673, 0
    %1247 = vmatprep.subr.bf16.mxu0 0
    %1248 = vmatpush1.bf16.msra.mxu0 %v1245
    %1249 = vmatprep.subr.bf16.mxu0 0
    %1250 = vmatpush1.bf16.msra.mxu0 0
    %1251 = vmatprep.subr.bf16.mxu0 0
    %1252 = vmatpush1.bf16.msra.mxu0 0
    %1253 = vmatprep.subr.bf16.mxu0 0
    %1254 = vmatpush1.bf16.msra.mxu0 0
    %1255 = vmatprep.subr.bf16.mxu0 0
    %1256 = vmatpush1.bf16.msra.mxu0 0
    %1257 = vmatprep.subr.bf16.mxu0 0
    %1258 = vmatpush1.bf16.msra.mxu0 0
    %1259 = vmatprep.subr.bf16.mxu0 0
    %1260 = vmatpush1.bf16.msra.mxu0 0
    %1261 = vmatprep.subr.bf16.mxu0 0
    %1262 = vmatpush1.bf16.msra.mxu0 0
    %1263 = vmatprep.subr.bf16.mxu0 0
    %1264 = vmatpush1.bf16.msra.mxu0 0
    %1265 = vmatprep.subr.bf16.mxu0 0
    %1266 = vmatpush1.bf16.msra.mxu0 0
    %1267 = vmatprep.subr.bf16.mxu0 0
    %1268 = vmatpush1.bf16.msra.mxu0 0
    %1269 = vmatprep.subr.bf16.mxu0 0
    %1270 = vmatpush1.bf16.msra.mxu0 0
    %1271 = vmatprep.subr.bf16.mxu0 0
    %1272 = vmatpush1.bf16.msra.mxu0 0
    %1273 = vmatprep.subr.bf16.mxu0 0
    %1274 = vmatpush1.bf16.msra.mxu0 0
    %1275 = vmatprep.subr.bf16.mxu0 0
    %1276 = vmatpush1.bf16.msra.mxu0 0
    %1277 = vmatprep.subr.bf16.mxu0 0
    %1278 = vmatpush1.bf16.msra.mxu0 0
    %1279 = vmatprep.mubr.bf16.mxu0 0
    %1280 = vmatmul.mubr.bf16.gmra.mrb[0].mxu0 %v1242
    %v1281 = vpop.f32.mrb[0].mxu0
    %v1282 = vadd.f32 0.0, %v1281
    %v1283 = vpop.f32.mrb[0].mxu0
    %v1284 = vpop.f32.mrb[0].mxu0
    %v1285 = vpop.f32.mrb[0].mxu0
    %1286 = vdwg.mxu0
    %v1288 = vsel %vm1097, %v1188, 0
    %v1291 = vsel %vm1197, %v674, 0
    %1293 = vmatprep.subr.bf16.mxu0 0
    %1294 = vmatpush1.bf16.msra.mxu0 %v1291
    %1295 = vmatprep.subr.bf16.mxu0 0
    %1296 = vmatpush1.bf16.msra.mxu0 0
    %1297 = vmatprep.subr.bf16.mxu0 0
    %1298 = vmatpush1.bf16.msra.mxu0 0
    %1299 = vmatprep.subr.bf16.mxu0 0
    %1300 = vmatpush1.bf16.msra.mxu0 0
    %1301 = vmatprep.subr.bf16.mxu0 0
    %1302 = vmatpush1.bf16.msra.mxu0 0
    %1303 = vmatprep.subr.bf16.mxu0 0
    %1304 = vmatpush1.bf16.msra.mxu0 0
    %1305 = vmatprep.subr.bf16.mxu0 0
    %1306 = vmatpush1.bf16.msra.mxu0 0
    %1307 = vmatprep.subr.bf16.mxu0 0
    %1308 = vmatpush1.bf16.msra.mxu0 0
    %1309 = vmatprep.subr.bf16.mxu0 0
    %1310 = vmatpush1.bf16.msra.mxu0 0
    %1311 = vmatprep.subr.bf16.mxu0 0
    %1312 = vmatpush1.bf16.msra.mxu0 0
    %1313 = vmatprep.subr.bf16.mxu0 0
    %1314 = vmatpush1.bf16.msra.mxu0 0
    %1315 = vmatprep.subr.bf16.mxu0 0
    %1316 = vmatpush1.bf16.msra.mxu0 0
    %1317 = vmatprep.subr.bf16.mxu0 0
    %1318 = vmatpush1.bf16.msra.mxu0 0
    %1319 = vmatprep.subr.bf16.mxu0 0
    %1320 = vmatpush1.bf16.msra.mxu0 0
    %1321 = vmatprep.subr.bf16.mxu0 0
    %1322 = vmatpush1.bf16.msra.mxu0 0
    %1323 = vmatprep.subr.bf16.mxu0 0
    %1324 = vmatpush1.bf16.msra.mxu0 0
    %1325 = vmatprep.mubr.bf16.mxu0 0
    %1326 = vmatmul.mubr.bf16.gmra.mrb[0].mxu0 %v1288
    %v1327 = vpop.f32.mrb[0].mxu0
    %v1328 = vadd.f32 0.0, %v1327
    %v1329 = vpop.f32.mrb[0].mxu0
    %v1330 = vpop.f32.mrb[0].mxu0
    %v1331 = vpop.f32.mrb[0].mxu0
    %1332 = vdwg.mxu0
    %v1334 = vsel %vm1097, %v1189, 0
    %v1337 = vsel %vm1197, %v675, 0
    %1339 = vmatprep.subr.bf16.mxu0 0
    %1340 = vmatpush1.bf16.msra.mxu0 %v1337
    %1341 = vmatprep.subr.bf16.mxu0 0
    %1342 = vmatpush1.bf16.msra.mxu0 0
    %1343 = vmatprep.subr.bf16.mxu0 0
    %1344 = vmatpush1.bf16.msra.mxu0 0
    %1345 = vmatprep.subr.bf16.mxu0 0
    %1346 = vmatpush1.bf16.msra.mxu0 0
    %1347 = vmatprep.subr.bf16.mxu0 0
    %1348 = vmatpush1.bf16.msra.mxu0 0
    %1349 = vmatprep.subr.bf16.mxu0 0
    %1350 = vmatpush1.bf16.msra.mxu0 0
    %1351 = vmatprep.subr.bf16.mxu0 0
    %1352 = vmatpush1.bf16.msra.mxu0 0
    %1353 = vmatprep.subr.bf16.mxu0 0
    %1354 = vmatpush1.bf16.msra.mxu0 0
    %1355 = vmatprep.subr.bf16.mxu0 0
    %1356 = vmatpush1.bf16.msra.mxu0 0
    %1357 = vmatprep.subr.bf16.mxu0 0
    %1358 = vmatpush1.bf16.msra.mxu0 0
    %1359 = vmatprep.subr.bf16.mxu0 0
    %1360 = vmatpush1.bf16.msra.mxu0 0
    %1361 = vmatprep.subr.bf16.mxu0 0
    %1362 = vmatpush1.bf16.msra.mxu0 0
    %1363 = vmatprep.subr.bf16.mxu0 0
    %1364 = vmatpush1.bf16.msra.mxu0 0
    %1365 = vmatprep.subr.bf16.mxu0 0
    %1366 = vmatpush1.bf16.msra.mxu0 0
    %1367 = vmatprep.subr.bf16.mxu0 0
    %1368 = vmatpush1.bf16.msra.mxu0 0
    %1369 = vmatprep.subr.bf16.mxu0 0
    %1370 = vmatpush1.bf16.msra.mxu0 0
    %1371 = vmatprep.mubr.bf16.mxu0 0
    %1372 = vmatmul.mubr.bf16.gmra.mrb[0].mxu0 %v1334
    %v1373 = vpop.f32.mrb[0].mxu0
    %v1374 = vadd.f32 0.0, %v1373
    %v1375 = vpop.f32.mrb[0].mxu0
    %v1376 = vpop.f32.mrb[0].mxu0
    %v1377 = vpop.f32.mrb[0].mxu0
    %1378 = vdwg.mxu0
    %v1380 = vsel %vm1097, %v1190, 0
    %v1383 = vsel %vm1197, %v676, 0
    %1385 = vmatprep.subr.bf16.mxu0 0
    %1386 = vmatpush1.bf16.msra.mxu0 %v1383
    %1387 = vmatprep.subr.bf16.mxu0 0
    %1388 = vmatpush1.bf16.msra.mxu0 0
    %1389 = vmatprep.subr.bf16.mxu0 0
    %1390 = vmatpush1.bf16.msra.mxu0 0
    %1391 = vmatprep.subr.bf16.mxu0 0
    %1392 = vmatpush1.bf16.msra.mxu0 0
    %1393 = vmatprep.subr.bf16.mxu0 0
    %1394 = vmatpush1.bf16.msra.mxu0 0
    %1395 = vmatprep.subr.bf16.mxu0 0
    %1396 = vmatpush1.bf16.msra.mxu0 0
    %1397 = vmatprep.subr.bf16.mxu0 0
    %1398 = vmatpush1.bf16.msra.mxu0 0
    %1399 = vmatprep.subr.bf16.mxu0 0
    %1400 = vmatpush1.bf16.msra.mxu0 0
    %1401 = vmatprep.subr.bf16.mxu0 0
    %1402 = vmatpush1.bf16.msra.mxu0 0
    %1403 = vmatprep.subr.bf16.mxu0 0
    %1404 = vmatpush1.bf16.msra.mxu0 0
    %1405 = vmatprep.subr.bf16.mxu0 0
    %1406 = vmatpush1.bf16.msra.mxu0 0
    %1407 = vmatprep.subr.bf16.mxu0 0
    %1408 = vmatpush1.bf16.msra.mxu0 0
    %1409 = vmatprep.subr.bf16.mxu0 0
    %1410 = vmatpush1.bf16.msra.mxu0 0
    %1411 = vmatprep.subr.bf16.mxu0 0
    %1412 = vmatpush1.bf16.msra.mxu0 0
    %1413 = vmatprep.subr.bf16.mxu0 0
    %1414 = vmatpush1.bf16.msra.mxu0 0
    %1415 = vmatprep.subr.bf16.mxu0 0
    %1416 = vmatpush1.bf16.msra.mxu0 0
    %1417 = vmatprep.mubr.bf16.mxu0 0
    %1418 = vmatmul.mubr.bf16.gmra.mrb[0].mxu0 %v1380
    %v1419 = vpop.f32.mrb[0].mxu0
    %v1420 = vadd.f32 0.0, %v1419
    %v1421 = vpop.f32.mrb[0].mxu0
    %v1422 = vpop.f32.mrb[0].mxu0
    %v1423 = vpop.f32.mrb[0].mxu0
    %1424 = vdwg.mxu0
    %v1426 = vsel %vm1097, %v1191, 0
    %v1429 = vsel %vm1197, %v677, 0
    %1431 = vmatprep.subr.bf16.mxu0 0
    %1432 = vmatpush1.bf16.msra.mxu0 %v1429
    %1433 = vmatprep.subr.bf16.mxu0 0
    %1434 = vmatpush1.bf16.msra.mxu0 0
    %1435 = vmatprep.subr.bf16.mxu0 0
    %1436 = vmatpush1.bf16.msra.mxu0 0
    %1437 = vmatprep.subr.bf16.mxu0 0
    %1438 = vmatpush1.bf16.msra.mxu0 0
    %1439 = vmatprep.subr.bf16.mxu0 0
    %1440 = vmatpush1.bf16.msra.mxu0 0
    %1441 = vmatprep.subr.bf16.mxu0 0
    %1442 = vmatpush1.bf16.msra.mxu0 0
    %1443 = vmatprep.subr.bf16.mxu0 0
    %1444 = vmatpush1.bf16.msra.mxu0 0
    %1445 = vmatprep.subr.bf16.mxu0 0
    %1446 = vmatpush1.bf16.msra.mxu0 0
    %1447 = vmatprep.subr.bf16.mxu0 0
    %1448 = vmatpush1.bf16.msra.mxu0 0
    %1449 = vmatprep.subr.bf16.mxu0 0
    %1450 = vmatpush1.bf16.msra.mxu0 0
    %1451 = vmatprep.subr.bf16.mxu0 0
    %1452 = vmatpush1.bf16.msra.mxu0 0
    %1453 = vmatprep.subr.bf16.mxu0 0
    %1454 = vmatpush1.bf16.msra.mxu0 0
    %1455 = vmatprep.subr.bf16.mxu0 0
    %1456 = vmatpush1.bf16.msra.mxu0 0
    %1457 = vmatprep.subr.bf16.mxu0 0
    %1458 = vmatpush1.bf16.msra.mxu0 0
    %1459 = vmatprep.subr.bf16.mxu0 0
    %1460 = vmatpush1.bf16.msra.mxu0 0
    %1461 = vmatprep.subr.bf16.mxu0 0
    %1462 = vmatpush1.bf16.msra.mxu0 0
    %1463 = vmatprep.mubr.bf16.mxu0 0
    %1464 = vmatmul.mubr.bf16.gmra.mrb[0].mxu0 %v1426
    %v1465 = vpop.f32.mrb[0].mxu0
    %v1466 = vadd.f32 0.0, %v1465
    %v1467 = vpop.f32.mrb[0].mxu0
    %v1468 = vpop.f32.mrb[0].mxu0
    %v1469 = vpop.f32.mrb[0].mxu0
    %1470 = vdwg.mxu0
    %v1472 = vsel %vm1097, %v1192, 0
    %v1475 = vsel %vm1197, %v678, 0
    %1477 = vmatprep.subr.bf16.mxu0 0
    %1478 = vmatpush1.bf16.msra.mxu0 %v1475
    %1479 = vmatprep.subr.bf16.mxu0 0
    %1480 = vmatpush1.bf16.msra.mxu0 0
    %1481 = vmatprep.subr.bf16.mxu0 0
    %1482 = vmatpush1.bf16.msra.mxu0 0
    %1483 = vmatprep.subr.bf16.mxu0 0
    %1484 = vmatpush1.bf16.msra.mxu0 0
    %1485 = vmatprep.subr.bf16.mxu0 0
    %1486 = vmatpush1.bf16.msra.mxu0 0
    %1487 = vmatprep.subr.bf16.mxu0 0
    %1488 = vmatpush1.bf16.msra.mxu0 0
    %1489 = vmatprep.subr.bf16.mxu0 0
    %1490 = vmatpush1.bf16.msra.mxu0 0
    %1491 = vmatprep.subr.bf16.mxu0 0
    %1492 = vmatpush1.bf16.msra.mxu0 0
    %1493 = vmatprep.subr.bf16.mxu0 0
    %1494 = vmatpush1.bf16.msra.mxu0 0
    %1495 = vmatprep.subr.bf16.mxu0 0
    %1496 = vmatpush1.bf16.msra.mxu0 0
    %1497 = vmatprep.subr.bf16.mxu0 0
    %1498 = vmatpush1.bf16.msra.mxu0 0
    %1499 = vmatprep.subr.bf16.mxu0 0
    %1500 = vmatpush1.bf16.msra.mxu0 0
    %1501 = vmatprep.subr.bf16.mxu0 0
    %1502 = vmatpush1.bf16.msra.mxu0 0
    %1503 = vmatprep.subr.bf16.mxu0 0
    %1504 = vmatpush1.bf16.msra.mxu0 0
    %1505 = vmatprep.subr.bf16.mxu0 0
    %1506 = vmatpush1.bf16.msra.mxu0 0
    %1507 = vmatprep.subr.bf16.mxu0 0
    %1508 = vmatpush1.bf16.msra.mxu0 0
    %1509 = vmatprep.mubr.bf16.mxu0 0
    %1510 = vmatmul.mubr.bf16.gmra.mrb[0].mxu0 %v1472
    %v1511 = vpop.f32.mrb[0].mxu0
    %v1512 = vadd.f32 0.0, %v1511
    %v1513 = vpop.f32.mrb[0].mxu0
    %v1514 = vpop.f32.mrb[0].mxu0
    %v1515 = vpop.f32.mrb[0].mxu0
    %1516 = vdwg.mxu0
    %v1518 = vsel %vm1097, %v1193, 0
    %v1521 = vsel %vm1197, %v679, 0
    %1523 = vmatprep.subr.bf16.mxu0 0
    %1524 = vmatpush1.bf16.msra.mxu0 %v1521
    %1525 = vmatprep.subr.bf16.mxu0 0
    %1526 = vmatpush1.bf16.msra.mxu0 0
    %1527 = vmatprep.subr.bf16.mxu0 0
    %1528 = vmatpush1.bf16.msra.mxu0 0
    %1529 = vmatprep.subr.bf16.mxu0 0
    %1530 = vmatpush1.bf16.msra.mxu0 0
    %1531 = vmatprep.subr.bf16.mxu0 0
    %1532 = vmatpush1.bf16.msra.mxu0 0
    %1533 = vmatprep.subr.bf16.mxu0 0
    %1534 = vmatpush1.bf16.msra.mxu0 0
    %1535 = vmatprep.subr.bf16.mxu0 0
    %1536 = vmatpush1.bf16.msra.mxu0 0
    %1537 = vmatprep.subr.bf16.mxu0 0
    %1538 = vmatpush1.bf16.msra.mxu0 0
    %1539 = vmatprep.subr.bf16.mxu0 0
    %1540 = vmatpush1.bf16.msra.mxu0 0
    %1541 = vmatprep.subr.bf16.mxu0 0
    %1542 = vmatpush1.bf16.msra.mxu0 0
    %1543 = vmatprep.subr.bf16.mxu0 0
    %1544 = vmatpush1.bf16.msra.mxu0 0
    %1545 = vmatprep.subr.bf16.mxu0 0
    %1546 = vmatpush1.bf16.msra.mxu0 0
    %1547 = vmatprep.subr.bf16.mxu0 0
    %1548 = vmatpush1.bf16.msra.mxu0 0
    %1549 = vmatprep.subr.bf16.mxu0 0
    %1550 = vmatpush1.bf16.msra.mxu0 0
    %1551 = vmatprep.subr.bf16.mxu0 0
    %1552 = vmatpush1.bf16.msra.mxu0 0
    %1553 = vmatprep.subr.bf16.mxu0 0
    %1554 = vmatpush1.bf16.msra.mxu0 0
    %1555 = vmatprep.mubr.bf16.mxu0 0
    %1556 = vmatmul.mubr.bf16.gmra.mrb[0].mxu0 %v1518
    %v1557 = vpop.f32.mrb[0].mxu0
    %v1558 = vadd.f32 0.0, %v1557
    %v1559 = vpop.f32.mrb[0].mxu0
    %v1560 = vpop.f32.mrb[0].mxu0
    %v1561 = vpop.f32.mrb[0].mxu0
    %1562 = vdwg.mxu0
    %1564 = vrot.lane.b32.xlu0 %v1282, 32
    %v1565 = vpop.permute.xlu0 %1564
    %1568 = vrot.lane.b32.xlu0 %v1328, 64
    %v1569 = vpop.permute.xlu0 %1568
    %1572 = vrot.lane.b32.xlu0 %v1374, 96
    %v1573 = vpop.permute.xlu0 %1572
    %v1575 = vsel %vm728, %v1236, %v1565
    %vm1576 = vcmask 523264
    %v1577 = vsel %vm1576, %v1575, %v1569
    %vm1578 = vcmask 785408
    %v1579 = vsel %vm1578, %v1577, %v1573
    %1581 = vrot.lane.b32.xlu0 %v1466, 32
    %v1582 = vpop.permute.xlu0 %1581
    %1585 = vrot.lane.b32.xlu0 %v1512, 64
    %v1586 = vpop.permute.xlu0 %1585
    %1589 = vrot.lane.b32.xlu0 %v1558, 96
    %v1590 = vpop.permute.xlu0 %1589
    %v1592 = vsel %vm728, %v1420, %v1582
    %v1593 = vsel %vm1576, %v1592, %v1586
    %v1594 = vsel %vm1578, %v1593, %v1590
    %v1595 = vpack.c.bf16 %v1594, %v1579
    %v1596 = vld [vmem:[#allocation8] sm:$0xf]
    %v1597 = vld [vmem:[#allocation8 + $0x4] sm:$0xf]
    %v1598 = vld [vmem:[#allocation8 + $0x8] sm:$0xf]
    %v1599 = vld [vmem:[#allocation8 + $0xc] sm:$0xf]
    %v1600 = vld [vmem:[#allocation8 + $0x10] sm:$0xf]
    %v1601 = vld [vmem:[#allocation8 + $0x14] sm:$0xf]
    %v1602 = vld [vmem:[#allocation8 + $0x18] sm:$0xf]
    %v1603 = vld [vmem:[#allocation8 + $0x1c] sm:$0xf]
    %v1604 = vld [vmem:[#allocation8 + $0x20] sm:$0xf]
    %v1605 = vld [vmem:[#allocation8 + $0x24] sm:$0xf]
    %v1606 = vld [vmem:[#allocation8 + $0x28] sm:$0xf]
    %v1607 = vld [vmem:[#allocation8 + $0x2c] sm:$0xf]
    %v1608 = vld [vmem:[#allocation8 + $0x30] sm:$0xf]
    %v1609 = vld [vmem:[#allocation8 + $0x34] sm:$0xf]
    %v1610 = vld [vmem:[#allocation8 + $0x38] sm:$0xf]
    %v1611 = vld [vmem:[#allocation8 + $0x3c] sm:$0xf]
    %v1612 = vld [vmem:[%s8] sm:$0x1]
    %v1614 = vlaneseq
    %v1615 = vshrl.u32 %v1614, 7
    %v1616 = vsub.s32 0, %v1615
    %v1617 = vrot.slane %v1612, %v1616
    %v1635 = vunpack.c.l.b16 %v1596
    %v1636 = vunpack.c.l.b16 %v1597
    %v1637 = vunpack.c.l.b16 %v1598
    %v1638 = vunpack.c.l.b16 %v1599
    %v1639 = vunpack.c.l.b16 %v1600
    %v1640 = vunpack.c.l.b16 %v1601
    %v1641 = vunpack.c.l.b16 %v1602
    %v1642 = vunpack.c.l.b16 %v1603
    %v1643 = vunpack.c.l.b16 %v1604
    %v1644 = vunpack.c.l.b16 %v1605
    %v1645 = vunpack.c.l.b16 %v1606
    %v1646 = vunpack.c.l.b16 %v1607
    %v1647 = vunpack.c.l.b16 %v1608
    %v1648 = vunpack.c.l.b16 %v1609
    %v1649 = vunpack.c.l.b16 %v1610
    %v1650 = vunpack.c.l.b16 %v1611
    %v1651 = vpack.c.b16 %v1636, %v1635
    %v1652 = vpack.c.b16 %v1638, %v1637
    %v1653 = vpack.c.b16 %v1640, %v1639
    %v1654 = vpack.c.b16 %v1642, %v1641
    %v1655 = vpack.c.b16 %v1644, %v1643
    %v1656 = vpack.c.b16 %v1646, %v1645
    %v1657 = vpack.c.b16 %v1648, %v1647
    %v1658 = vpack.c.b16 %v1650, %v1649
    %1667 = vmatprep.subr.bf16.mxu0 0
    %1668 = vmatpush1.bf16.xpose.msra.mxu0 %v1651
    %1669 = vmatprep.subr.bf16.mxu0 0
    %1670 = vmatpush1.bf16.xpose.msra.mxu0 %v1652
    %1671 = vmatprep.subr.bf16.mxu0 0
    %1672 = vmatpush1.bf16.xpose.msra.mxu0 %v1653
    %1673 = vmatprep.subr.bf16.mxu0 0
    %1674 = vmatpush1.bf16.xpose.msra.mxu0 %v1654
    %1675 = vmatprep.subr.bf16.mxu0 0
    %1676 = vmatpush1.bf16.xpose.msra.mxu0 %v1655
    %1677 = vmatprep.subr.bf16.mxu0 0
    %1678 = vmatpush1.bf16.xpose.msra.mxu0 %v1656
    %1679 = vmatprep.subr.bf16.mxu0 0
    %1680 = vmatpush1.bf16.xpose.msra.mxu0 %v1657
    %1681 = vmatprep.subr.bf16.mxu0 0
    %1682 = vmatpush1.bf16.xpose.msra.mxu0 %v1658
    %1683 = vmatprep.subr.bf16.mxu0 0
    %1684 = vmatpush1.bf16.xpose.msra.mxu0 0
    %1685 = vmatprep.subr.bf16.mxu0 0
    %1686 = vmatpush1.bf16.xpose.msra.mxu0 0
    %1687 = vmatprep.subr.bf16.mxu0 0
    %1688 = vmatpush1.bf16.xpose.msra.mxu0 0
    %1689 = vmatprep.subr.bf16.mxu0 0
    %1690 = vmatpush1.bf16.xpose.msra.mxu0 0
    %1691 = vmatprep.subr.bf16.mxu0 0
    %1692 = vmatpush1.bf16.xpose.msra.mxu0 0
    %1693 = vmatprep.subr.bf16.mxu0 0
    %1694 = vmatpush1.bf16.xpose.msra.mxu0 0
    %1695 = vmatprep.subr.bf16.mxu0 0
    %1696 = vmatpush1.bf16.xpose.msra.mxu0 0
    %1697 = vmatprep.subr.bf16.mxu0 0
    %1698 = vmatpush1.bf16.xpose.msra.mxu0 0
    %1699 = vmatprep.mubr.bf16.mxu0 0
    %1700 = vmatmul.mubr.bf16.gmra.mrb[0].mxu0 %v1595
    %v1701 = vpop.f32.mrb[0].mxu0
    %v1702 = vadd.f32 %v1617, %v1701
    %v1703 = vpop.f32.mrb[0].mxu0
    %v1704 = vpop.f32.mrb[0].mxu0
    %v1705 = vadd.f32 %v1617, %v1704
    %v1706 = vpop.f32.mrb[0].mxu0
    %1707 = vdwg.mxu0
    %v1708 = vadd.f32 %v1702, %v278
    %v1709 = vadd.f32 %v1705, %v279
    %v1710 = vld [vmem:[%s9] sm:$0x1]
    %v1711 = vld [vmem:[%s10] sm:$0x1]
    %1712 = vadd.xlane.f32.xlu0 %v1708
    %v1713 = vpop.xlane.xlu0 %1712
    %1714 = vadd.xlane.f32.xlu0 %v1709
    %v1715 = vpop.xlane.xlu0 %1714
    %v1716 = vmul.f32 %v1713, 0.03125
    %v1717 = vmul.f32 %v1715, 0.03125
    %v1718 = vmul.f32 %v1708, %v1708
    %v1719 = vmul.f32 %v1709, %v1709
    %1720 = vadd.xlane.f32.xlu0 %v1718
    %v1721 = vpop.xlane.xlu0 %1720
    %1722 = vadd.xlane.f32.xlu0 %v1719
    %v1723 = vpop.xlane.xlu0 %1722
    %v1724 = vmul.f32 %v1721, 0.03125
    %v1725 = vmul.f32 %v1723, 0.03125
    %v1726 = vmul.f32 %v1716, %v1716
    %v1727 = vmul.f32 %v1717, %v1717
    %v1728 = vsub.f32 %v1724, %v1726
    %v1729 = vsub.f32 %v1725, %v1727
    %v1730 = vsub.f32 %v1708, %v1716
    %v1731 = vsub.f32 %v1709, %v1717
    %v1732 = vadd.f32 %v1728, 1e-05
    %v1733 = vadd.f32 %v1729, 1e-05
    %v1734 = vrsqrt.pop %v1732
    %v1735 = vrsqrt.pop %v1733
    %v1736 = vmul.f32 %v1730, %v1734
    %v1737 = vmul.f32 %v1731, %v1735
    %v1739 = vlaneseq
    %v1740 = vshrl.u32 %v1739, 7
    %v1741 = vsub.s32 0, %v1740
    %v1742 = vrot.slane %v1710, %v1741
    %v1744 = vmul.f32 %v1736, %v1742
    %v1745 = vmul.f32 %v1737, %v1742
    %v1747 = vlaneseq
    %v1748 = vshrl.u32 %v1747, 7
    %v1749 = vsub.s32 0, %v1748
    %v1750 = vrot.slane %v1711, %v1749
    %v1752 = vadd.f32 %v1744, %v1750
    %v1753 = vadd.f32 %v1745, %v1750
    %v1754 = vpack.c.bf16 %v1753, %v1752
    %v1755 = vld [vmem:[#allocation10] sm:$0xf]
    %v1756 = vld [vmem:[#allocation10 + $0x4] sm:$0xf]
    %v1757 = vld [vmem:[#allocation10 + $0x8] sm:$0xf]
    %v1758 = vld [vmem:[#allocation10 + $0xc] sm:$0xf]
    %v1759 = vld [vmem:[#allocation10 + $0x10] sm:$0xf]
    %v1760 = vld [vmem:[#allocation10 + $0x14] sm:$0xf]
    %v1761 = vld [vmem:[#allocation10 + $0x18] sm:$0xf]
    %v1762 = vld [vmem:[#allocation10 + $0x1c] sm:$0xf]
    %v1763 = vld [vmem:[#allocation10 + $0x20] sm:$0xf]
    %v1764 = vld [vmem:[#allocation10 + $0x24] sm:$0xf]
    %v1765 = vld [vmem:[#allocation10 + $0x28] sm:$0xf]
    %v1766 = vld [vmem:[#allocation10 + $0x2c] sm:$0xf]
    %v1767 = vld [vmem:[#allocation10 + $0x30] sm:$0xf]
    %v1768 = vld [vmem:[#allocation10 + $0x34] sm:$0xf]
    %v1769 = vld [vmem:[#allocation10 + $0x38] sm:$0xf]
    %v1770 = vld [vmem:[#allocation10 + $0x3c] sm:$0xf]
    %v1771 = vld [vmem:[%s12] sm:$0x1]
    %v1773 = vlaneseq
    %v1774 = vshrl.u32 %v1773, 7
    %v1775 = vsub.s32 0, %v1774
    %v1776 = vrot.slane %v1771, %v1775
    %v1794 = vunpack.c.l.b16 %v1755
    %v1795 = vunpack.c.l.b16 %v1756
    %v1796 = vunpack.c.l.b16 %v1757
    %v1797 = vunpack.c.l.b16 %v1758
    %v1798 = vunpack.c.l.b16 %v1759
    %v1799 = vunpack.c.l.b16 %v1760
    %v1800 = vunpack.c.l.b16 %v1761
    %v1801 = vunpack.c.l.b16 %v1762
    %v1802 = vunpack.c.l.b16 %v1763
    %v1803 = vunpack.c.l.b16 %v1764
    %v1804 = vunpack.c.l.b16 %v1765
    %v1805 = vunpack.c.l.b16 %v1766
    %v1806 = vunpack.c.l.b16 %v1767
    %v1807 = vunpack.c.l.b16 %v1768
    %v1808 = vunpack.c.l.b16 %v1769
    %v1809 = vunpack.c.l.b16 %v1770
    %v1810 = vpack.c.b16 %v1795, %v1794
    %v1811 = vpack.c.b16 %v1797, %v1796
    %v1812 = vpack.c.b16 %v1799, %v1798
    %v1813 = vpack.c.b16 %v1801, %v1800
    %v1814 = vpack.c.b16 %v1803, %v1802
    %v1815 = vpack.c.b16 %v1805, %v1804
    %v1816 = vpack.c.b16 %v1807, %v1806
    %v1817 = vpack.c.b16 %v1809, %v1808
    %1826 = vmatprep.subr.bf16.mxu0 0
    %1827 = vmatpush1.bf16.xpose.msra.mxu0 %v1810
    %1828 = vmatprep.subr.bf16.mxu0 0
    %1829 = vmatpush1.bf16.xpose.msra.mxu0 %v1811
    %1830 = vmatprep.subr.bf16.mxu0 0
    %1831 = vmatpush1.bf16.xpose.msra.mxu0 %v1812
    %1832 = vmatprep.subr.bf16.mxu0 0
    %1833 = vmatpush1.bf16.xpose.msra.mxu0 %v1813
    %1834 = vmatprep.subr.bf16.mxu0 0
    %1835 = vmatpush1.bf16.xpose.msra.mxu0 %v1814
    %1836 = vmatprep.subr.bf16.mxu0 0
    %1837 = vmatpush1.bf16.xpose.msra.mxu0 %v1815
    %1838 = vmatprep.subr.bf16.mxu0 0
    %1839 = vmatpush1.bf16.xpose.msra.mxu0 %v1816
    %1840 = vmatprep.subr.bf16.mxu0 0
    %1841 = vmatpush1.bf16.xpose.msra.mxu0 %v1817
    %1842 = vmatprep.subr.bf16.mxu0 0
    %1843 = vmatpush1.bf16.xpose.msra.mxu0 0
    %1844 = vmatprep.subr.bf16.mxu0 0
    %1845 = vmatpush1.bf16.xpose.msra.mxu0 0
    %1846 = vmatprep.subr.bf16.mxu0 0
    %1847 = vmatpush1.bf16.xpose.msra.mxu0 0
    %1848 = vmatprep.subr.bf16.mxu0 0
    %1849 = vmatpush1.bf16.xpose.msra.mxu0 0
    %1850 = vmatprep.subr.bf16.mxu0 0
    %1851 = vmatpush1.bf16.xpose.msra.mxu0 0
    %1852 = vmatprep.subr.bf16.mxu0 0
    %1853 = vmatpush1.bf16.xpose.msra.mxu0 0
    %1854 = vmatprep.subr.bf16.mxu0 0
    %1855 = vmatpush1.bf16.xpose.msra.mxu0 0
    %1856 = vmatprep.subr.bf16.mxu0 0
    %1857 = vmatpush1.bf16.xpose.msra.mxu0 0
    %1858 = vmatprep.mubr.bf16.mxu0 0
    %1859 = vmatmul.mubr.bf16.gmra.mrb[0].mxu0 %v1754
    %v1860 = vpop.f32.mrb[0].mxu0
    %v1861 = vadd.f32 %v1776, %v1860
    %v1862 = vpop.f32.mrb[0].mxu0
    %v1863 = vpop.f32.mrb[0].mxu0
    %v1864 = vadd.f32 %v1776, %v1863
    %v1865 = vpop.f32.mrb[0].mxu0
    %1866 = vdwg.mxu0
    %v1867 = vld [vmem:[#allocation11] sm:$0xf]
    %v1868 = vld [vmem:[#allocation11 + $0x4] sm:$0xf]
    %v1869 = vld [vmem:[#allocation11 + $0x8] sm:$0xf]
    %v1870 = vld [vmem:[#allocation11 + $0xc] sm:$0xf]
    %v1871 = vld [vmem:[#allocation11 + $0x10] sm:$0xf]
    %v1872 = vld [vmem:[#allocation11 + $0x14] sm:$0xf]
    %v1873 = vld [vmem:[#allocation11 + $0x18] sm:$0xf]
    %v1874 = vld [vmem:[#allocation11 + $0x1c] sm:$0xf]
    %v1875 = vld [vmem:[#allocation11 + $0x20] sm:$0xf]
    %v1876 = vld [vmem:[#allocation11 + $0x24] sm:$0xf]
    %v1877 = vld [vmem:[#allocation11 + $0x28] sm:$0xf]
    %v1878 = vld [vmem:[#allocation11 + $0x2c] sm:$0xf]
    %v1879 = vld [vmem:[#allocation11 + $0x30] sm:$0xf]
    %v1880 = vld [vmem:[#allocation11 + $0x34] sm:$0xf]
    %v1881 = vld [vmem:[#allocation11 + $0x38] sm:$0xf]
    %v1882 = vld [vmem:[#allocation11 + $0x3c] sm:$0xf]
    %v1883 = vld [vmem:[#allocation11 + $0x40] sm:$0xf]
    %v1884 = vld [vmem:[#allocation11 + $0x44] sm:$0xf]
    %v1885 = vld [vmem:[#allocation11 + $0x48] sm:$0xf]
    %v1886 = vld [vmem:[#allocation11 + $0x4c] sm:$0xf]
    %v1887 = vld [vmem:[#allocation11 + $0x50] sm:$0xf]
    %v1888 = vld [vmem:[#allocation11 + $0x54] sm:$0xf]
    %v1889 = vld [vmem:[#allocation11 + $0x58] sm:$0xf]
    %v1890 = vld [vmem:[#allocation11 + $0x5c] sm:$0xf]
    %v1891 = vld [vmem:[#allocation11 + $0x60] sm:$0xf]
    %v1892 = vld [vmem:[#allocation11 + $0x64] sm:$0xf]
    %v1893 = vld [vmem:[#allocation11 + $0x68] sm:$0xf]
    %v1894 = vld [vmem:[#allocation11 + $0x6c] sm:$0xf]
    %v1895 = vld [vmem:[#allocation11 + $0x70] sm:$0xf]
    %v1896 = vld [vmem:[#allocation11 + $0x74] sm:$0xf]
    %v1897 = vld [vmem:[#allocation11 + $0x78] sm:$0xf]
    %v1898 = vld [vmem:[#allocation11 + $0x7c] sm:$0xf]
    %v1899 = vld [vmem:[%s14] sm:$0x3]
    %v1901 = vlaneseq
    %v1902 = vshrl.u32 %v1901, 7
    %v1903 = vsub.s32 0, %v1902
    %v1904 = vrot.slane %v1899, %v1903
    %v1905 = vlaneseq
    %v1906 = vshrl.u32 %v1905, 7
    %v1907 = vsub.s32 1, %v1906
    %v1908 = vrot.slane %v1899, %v1907
    %v1915 = vunpack.c.l.b16 %v280
    %v1916 = vunpack.c.l.b16 %v281
    %v1917 = vunpack.c.l.b16 %v282
    %v1918 = vunpack.c.l.b16 %v283
    %v1919 = vpack.c.b16 %v1916, %v1915
    %v1920 = vpack.c.b16 %v1918, %v1917
    %v1955 = vunpack.c.l.b16 %v1867
    %v1956 = vunpack.c.l.b16 %v1868
    %v1957 = vunpack.c.l.b16 %v1869
    %v1958 = vunpack.c.l.b16 %v1870
    %v1959 = vunpack.c.l.b16 %v1871
    %v1960 = vunpack.c.l.b16 %v1872
    %v1961 = vunpack.c.l.b16 %v1873
    %v1962 = vunpack.c.l.b16 %v1874
    %v1963 = vunpack.c.l.b16 %v1875
    %v1964 = vunpack.c.l.b16 %v1876
    %v1965 = vunpack.c.l.b16 %v1877
    %v1966 = vunpack.c.l.b16 %v1878
    %v1967 = vunpack.c.l.b16 %v1879
    %v1968 = vunpack.c.l.b16 %v1880
    %v1969 = vunpack.c.l.b16 %v1881
    %v1970 = vunpack.c.l.b16 %v1882
    %v1971 = vunpack.c.l.b16 %v1883
    %v1972 = vunpack.c.l.b16 %v1884
    %v1973 = vunpack.c.l.b16 %v1885
    %v1974 = vunpack.c.l.b16 %v1886
    %v1975 = vunpack.c.l.b16 %v1887
    %v1976 = vunpack.c.l.b16 %v1888
    %v1977 = vunpack.c.l.b16 %v1889
    %v1978 = vunpack.c.l.b16 %v1890
    %v1979 = vunpack.c.l.b16 %v1891
    %v1980 = vunpack.c.l.b16 %v1892
    %v1981 = vunpack.c.l.b16 %v1893
    %v1982 = vunpack.c.l.b16 %v1894
    %v1983 = vunpack.c.l.b16 %v1895
    %v1984 = vunpack.c.l.b16 %v1896
    %v1985 = vunpack.c.l.b16 %v1897
    %v1986 = vunpack.c.l.b16 %v1898
    %v1987 = vpack.c.b16 %v1956, %v1955
    %v1988 = vpack.c.b16 %v1958, %v1957
    %v1989 = vpack.c.b16 %v1960, %v1959
    %v1990 = vpack.c.b16 %v1962, %v1961
    %v1991 = vpack.c.b16 %v1964, %v1963
    %v1992 = vpack.c.b16 %v1966, %v1965
    %v1993 = vpack.c.b16 %v1968, %v1967
    %v1994 = vpack.c.b16 %v1970, %v1969
    %v1995 = vpack.c.b16 %v1972, %v1971
    %v1996 = vpack.c.b16 %v1974, %v1973
    %v1997 = vpack.c.b16 %v1976, %v1975
    %v1998 = vpack.c.b16 %v1978, %v1977
    %v1999 = vpack.c.b16 %v1980, %v1979
    %v2000 = vpack.c.b16 %v1982, %v1981
    %v2001 = vpack.c.b16 %v1984, %v1983
    %v2002 = vpack.c.b16 %v1986, %v1985
    %2019 = vmatprep.subr.bf16.mxu0 0
    %2020 = vmatpush1.bf16.xpose.msra.mxu0 %v1987
    %2021 = vmatprep.subr.bf16.mxu0 0
    %2022 = vmatpush1.bf16.xpose.msra.mxu0 %v1988
    %2023 = vmatprep.subr.bf16.mxu0 0
    %2024 = vmatpush1.bf16.xpose.msra.mxu0 %v1989
    %2025 = vmatprep.subr.bf16.mxu0 0
    %2026 = vmatpush1.bf16.xpose.msra.mxu0 %v1990
    %2027 = vmatprep.subr.bf16.mxu0 0
    %2028 = vmatpush1.bf16.xpose.msra.mxu0 %v1991
    %2029 = vmatprep.subr.bf16.mxu0 0
    %2030 = vmatpush1.bf16.xpose.msra.mxu0 %v1992
    %2031 = vmatprep.subr.bf16.mxu0 0
    %2032 = vmatpush1.bf16.xpose.msra.mxu0 %v1993
    %2033 = vmatprep.subr.bf16.mxu0 0
    %2034 = vmatpush1.bf16.xpose.msra.mxu0 %v1994
    %2035 = vmatprep.subr.bf16.mxu0 0
    %2036 = vmatpush1.bf16.xpose.msra.mxu0 %v1995
    %2037 = vmatprep.subr.bf16.mxu0 0
    %2038 = vmatpush1.bf16.xpose.msra.mxu0 %v1996
    %2039 = vmatprep.subr.bf16.mxu0 0
    %2040 = vmatpush1.bf16.xpose.msra.mxu0 %v1997
    %2041 = vmatprep.subr.bf16.mxu0 0
    %2042 = vmatpush1.bf16.xpose.msra.mxu0 %v1998
    %2043 = vmatprep.subr.bf16.mxu0 0
    %2044 = vmatpush1.bf16.xpose.msra.mxu0 %v1999
    %2045 = vmatprep.subr.bf16.mxu0 0
    %2046 = vmatpush1.bf16.xpose.msra.mxu0 %v2000
    %2047 = vmatprep.subr.bf16.mxu0 0
    %2048 = vmatpush1.bf16.xpose.msra.mxu0 %v2001
    %2049 = vmatprep.subr.bf16.mxu0 0
    %2050 = vmatpush1.bf16.xpose.msra.mxu0 %v2002
    %2051 = vmatprep.mubr.bf16.mxu0 0
    %2052 = vmatmul.mubr.bf16.gmra.mrb[0].mxu0 %v1919
    %v2053 = vpop.f32.mrb[0].mxu0
    %v2054 = vadd.f32 %v1904, %v2053
    %v2055 = vpop.f32.mrb[0].mxu0
    %v2056 = vadd.f32 %v1908, %v2055
    %v2057 = vpop.f32.mrb[0].mxu0
    %v2058 = vadd.f32 %v1904, %v2057
    %v2059 = vpop.f32.mrb[0].mxu0
    %v2060 = vadd.f32 %v1908, %v2059
    %2061 = vmatprep.mubr.bf16.mxu0 0
    %2062 = vmatmul.mubr.bf16.gmra.mrb[0].mxu0 %v1920
    %v2063 = vpop.f32.mrb[0].mxu0
    %v2064 = vadd.f32 %v1904, %v2063
    %v2065 = vpop.f32.mrb[0].mxu0
    %v2066 = vadd.f32 %v1908, %v2065
    %v2067 = vpop.f32.mrb[0].mxu0
    %v2068 = vadd.f32 %v1904, %v2067
    %v2069 = vpop.f32.mrb[0].mxu0
    %v2070 = vadd.f32 %v1908, %v2069
    %2071 = vdwg.mxu0
    %2073 = vrot.lane.b32.xlu0 %v1861, 96
    %v2074 = vpop.permute.xlu0 %2073
    %2076 = vrot.lane.b32.xlu0 %v1861, 64
    %v2077 = vpop.permute.xlu0 %2076
    %2079 = vrot.lane.b32.xlu0 %v1861, 32
    %v2080 = vpop.permute.xlu0 %2079
    %2083 = vrot.lane.b32.xlu0 %v1864, 96
    %v2084 = vpop.permute.xlu0 %2083
    %2086 = vrot.lane.b32.xlu0 %v1864, 64
    %v2087 = vpop.permute.xlu0 %2086
    %2089 = vrot.lane.b32.xlu0 %v1864, 32
    %v2090 = vpop.permute.xlu0 %2089
    %v2092 = vpack.c.bf16 %v1861, %v1861
    %v2093 = vpack.c.bf16 %v2074, %v2074
    %v2094 = vpack.c.bf16 %v2077, %v2077
    %v2095 = vpack.c.bf16 %v2080, %v2080
    %v2096 = vpack.c.bf16 %v1864, %v1864
    %v2097 = vpack.c.bf16 %v2084, %v2084
    %v2098 = vpack.c.bf16 %v2087, %v2087
    %v2099 = vpack.c.bf16 %v2090, %v2090
    %2102 = vrot.lane.b32.xlu0 %v2054, 96
    %v2103 = vpop.permute.xlu0 %2102
    %2104 = vrot.lane.b32.xlu0 %v2058, 96
    %v2105 = vpop.permute.xlu0 %2104
    %2108 = vrot.lane.b32.xlu0 %v2054, 64
    %v2109 = vpop.permute.xlu0 %2108
    %2110 = vrot.lane.b32.xlu0 %v2058, 64
    %v2111 = vpop.permute.xlu0 %2110
    %2114 = vrot.lane.b32.xlu0 %v2054, 32
    %v2115 = vpop.permute.xlu0 %2114
    %2116 = vrot.lane.b32.xlu0 %v2058, 32
    %v2117 = vpop.permute.xlu0 %2116
    %2122 = vrot.lane.b32.xlu0 %v2064, 96
    %v2123 = vpop.permute.xlu0 %2122
    %2124 = vrot.lane.b32.xlu0 %v2068, 96
    %v2125 = vpop.permute.xlu0 %2124
    %2128 = vrot.lane.b32.xlu0 %v2064, 64
    %v2129 = vpop.permute.xlu0 %2128
    %2130 = vrot.lane.b32.xlu0 %v2068, 64
    %v2131 = vpop.permute.xlu0 %2130
    %2134 = vrot.lane.b32.xlu0 %v2064, 32
    %v2135 = vpop.permute.xlu0 %2134
    %2136 = vrot.lane.b32.xlu0 %v2068, 32
    %v2137 = vpop.permute.xlu0 %2136
    %v2140 = vpack.c.bf16 %v2058, %v2054
    %v2141 = vpack.c.bf16 %v2105, %v2103
    %v2142 = vpack.c.bf16 %v2111, %v2109
    %v2143 = vpack.c.bf16 %v2117, %v2115
    %v2144 = vpack.c.bf16 %v2068, %v2064
    %v2145 = vpack.c.bf16 %v2125, %v2123
    %v2146 = vpack.c.bf16 %v2131, %v2129
    %v2147 = vpack.c.bf16 %v2137, %v2135
    %2150 = vrot.lane.b32.xlu0 %v2056, 96
    %v2151 = vpop.permute.xlu0 %2150
    %2152 = vrot.lane.b32.xlu0 %v2060, 96
    %v2153 = vpop.permute.xlu0 %2152
    %2156 = vrot.lane.b32.xlu0 %v2056, 64
    %v2157 = vpop.permute.xlu0 %2156
    %2158 = vrot.lane.b32.xlu0 %v2060, 64
    %v2159 = vpop.permute.xlu0 %2158
    %2162 = vrot.lane.b32.xlu0 %v2056, 32
    %v2163 = vpop.permute.xlu0 %2162
    %2164 = vrot.lane.b32.xlu0 %v2060, 32
    %v2165 = vpop.permute.xlu0 %2164
    %2170 = vrot.lane.b32.xlu0 %v2066, 96
    %v2171 = vpop.permute.xlu0 %2170
    %2172 = vrot.lane.b32.xlu0 %v2070, 96
    %v2173 = vpop.permute.xlu0 %2172
    %2176 = vrot.lane.b32.xlu0 %v2066, 64
    %v2177 = vpop.permute.xlu0 %2176
    %2178 = vrot.lane.b32.xlu0 %v2070, 64
    %v2179 = vpop.permute.xlu0 %2178
    %2182 = vrot.lane.b32.xlu0 %v2066, 32
    %v2183 = vpop.permute.xlu0 %2182
    %2184 = vrot.lane.b32.xlu0 %v2070, 32
    %v2185 = vpop.permute.xlu0 %2184
    %v2188 = vpack.c.bf16 %v2060, %v2056
    %v2189 = vpack.c.bf16 %v2153, %v2151
    %v2190 = vpack.c.bf16 %v2159, %v2157
    %v2191 = vpack.c.bf16 %v2165, %v2163
    %v2192 = vpack.c.bf16 %v2070, %v2066
    %v2193 = vpack.c.bf16 %v2173, %v2171
    %v2194 = vpack.c.bf16 %v2179, %v2177
    %v2195 = vpack.c.bf16 %v2185, %v2183
    %v2204 = vlaneseq
    %v2205 = vshrl.u32 %v2204, 7
    %v2206 = vsub.s32 0, %v2205
    %v2207 = vrot.slane %v292, %v2206
    %v2208 = vlaneseq
    %v2209 = vshrl.u32 %v2208, 7
    %v2210 = vsub.s32 0, %v2209
    %v2211 = vrot.slane %v293, %v2210
    %v2212 = vlaneseq
    %v2213 = vshrl.u32 %v2212, 7
    %v2214 = vsub.s32 0, %v2213
    %v2215 = vrot.slane %v294, %v2214
    %v2216 = vlaneseq
    %v2217 = vshrl.u32 %v2216, 7
    %v2218 = vsub.s32 0, %v2217
    %v2219 = vrot.slane %v295, %v2218
    %v2220 = vlaneseq
    %v2221 = vshrl.u32 %v2220, 7
    %v2222 = vsub.s32 0, %v2221
    %v2223 = vrot.slane %v296, %v2222
    %v2224 = vlaneseq
    %v2225 = vshrl.u32 %v2224, 7
    %v2226 = vsub.s32 0, %v2225
    %v2227 = vrot.slane %v297, %v2226
    %v2228 = vlaneseq
    %v2229 = vshrl.u32 %v2228, 7
    %v2230 = vsub.s32 0, %v2229
    %v2231 = vrot.slane %v298, %v2230
    %v2232 = vlaneseq
    %v2233 = vshrl.u32 %v2232, 7
    %v2234 = vsub.s32 0, %v2233
    %v2235 = vrot.slane %v299, %v2234
    %v2245 = vsel %vm728, %v2092, 0
    %v2248 = vsel %vm728, %v2140, 0
    %2250 = vmatprep.subr.bf16.mxu0 0
    %2251 = vmatpush1.bf16.xpose.msra.mxu0 %v2248
    %2252 = vmatprep.subr.bf16.mxu0 0
    %2253 = vmatpush1.bf16.xpose.msra.mxu0 0
    %2254 = vmatprep.subr.bf16.mxu0 0
    %2255 = vmatpush1.bf16.xpose.msra.mxu0 0
    %2256 = vmatprep.subr.bf16.mxu0 0
    %2257 = vmatpush1.bf16.xpose.msra.mxu0 0
    %2258 = vmatprep.subr.bf16.mxu0 0
    %2259 = vmatpush1.bf16.xpose.msra.mxu0 0
    %2260 = vmatprep.subr.bf16.mxu0 0
    %2261 = vmatpush1.bf16.xpose.msra.mxu0 0
    %2262 = vmatprep.subr.bf16.mxu0 0
    %2263 = vmatpush1.bf16.xpose.msra.mxu0 0
    %2264 = vmatprep.subr.bf16.mxu0 0
    %2265 = vmatpush1.bf16.xpose.msra.mxu0 0
    %2266 = vmatprep.subr.bf16.mxu0 0
    %2267 = vmatpush1.bf16.xpose.msra.mxu0 0
    %2268 = vmatprep.subr.bf16.mxu0 0
    %2269 = vmatpush1.bf16.xpose.msra.mxu0 0
    %2270 = vmatprep.subr.bf16.mxu0 0
    %2271 = vmatpush1.bf16.xpose.msra.mxu0 0
    %2272 = vmatprep.subr.bf16.mxu0 0
    %2273 = vmatpush1.bf16.xpose.msra.mxu0 0
    %2274 = vmatprep.subr.bf16.mxu0 0
    %2275 = vmatpush1.bf16.xpose.msra.mxu0 0
    %2276 = vmatprep.subr.bf16.mxu0 0
    %2277 = vmatpush1.bf16.xpose.msra.mxu0 0
    %2278 = vmatprep.subr.bf16.mxu0 0
    %2279 = vmatpush1.bf16.xpose.msra.mxu0 0
    %2280 = vmatprep.subr.bf16.mxu0 0
    %2281 = vmatpush1.bf16.xpose.msra.mxu0 0
    %2282 = vmatprep.mubr.bf16.mxu0 0
    %2283 = vmatmul.mubr.bf16.gmra.mrb[0].mxu0 %v2245
    %v2284 = vpop.f32.mrb[0].mxu0
    %v2285 = vadd.f32 %v2207, %v2284
    %v2286 = vpop.f32.mrb[0].mxu0
    %v2287 = vpop.f32.mrb[0].mxu0
    %v2288 = vpop.f32.mrb[0].mxu0
    %2289 = vdwg.mxu0
    %v2291 = vsel %vm728, %v2093, 0
    %v2294 = vsel %vm728, %v2141, 0
    %2296 = vmatprep.subr.bf16.mxu0 0
    %2297 = vmatpush1.bf16.xpose.msra.mxu0 %v2294
    %2298 = vmatprep.subr.bf16.mxu0 0
    %2299 = vmatpush1.bf16.xpose.msra.mxu0 0
    %2300 = vmatprep.subr.bf16.mxu0 0
    %2301 = vmatpush1.bf16.xpose.msra.mxu0 0
    %2302 = vmatprep.subr.bf16.mxu0 0
    %2303 = vmatpush1.bf16.xpose.msra.mxu0 0
    %2304 = vmatprep.subr.bf16.mxu0 0
    %2305 = vmatpush1.bf16.xpose.msra.mxu0 0
    %2306 = vmatprep.subr.bf16.mxu0 0
    %2307 = vmatpush1.bf16.xpose.msra.mxu0 0
    %2308 = vmatprep.subr.bf16.mxu0 0
    %2309 = vmatpush1.bf16.xpose.msra.mxu0 0
    %2310 = vmatprep.subr.bf16.mxu0 0
    %2311 = vmatpush1.bf16.xpose.msra.mxu0 0
    %2312 = vmatprep.subr.bf16.mxu0 0
    %2313 = vmatpush1.bf16.xpose.msra.mxu0 0
    %2314 = vmatprep.subr.bf16.mxu0 0
    %2315 = vmatpush1.bf16.xpose.msra.mxu0 0
    %2316 = vmatprep.subr.bf16.mxu0 0
    %2317 = vmatpush1.bf16.xpose.msra.mxu0 0
    %2318 = vmatprep.subr.bf16.mxu0 0
    %2319 = vmatpush1.bf16.xpose.msra.mxu0 0
    %2320 = vmatprep.subr.bf16.mxu0 0
    %2321 = vmatpush1.bf16.xpose.msra.mxu0 0
    %2322 = vmatprep.subr.bf16.mxu0 0
    %2323 = vmatpush1.bf16.xpose.msra.mxu0 0
    %2324 = vmatprep.subr.bf16.mxu0 0
    %2325 = vmatpush1.bf16.xpose.msra.mxu0 0
    %2326 = vmatprep.subr.bf16.mxu0 0
    %2327 = vmatpush1.bf16.xpose.msra.mxu0 0
    %2328 = vmatprep.mubr.bf16.mxu0 0
    %2329 = vmatmul.mubr.bf16.gmra.mrb[0].mxu0 %v2291
    %v2330 = vpop.f32.mrb[0].mxu0
    %v2331 = vadd.f32 %v2211, %v2330
    %v2332 = vpop.f32.mrb[0].mxu0
    %v2333 = vpop.f32.mrb[0].mxu0
    %v2334 = vpop.f32.mrb[0].mxu0
    %2335 = vdwg.mxu0
    %v2337 = vsel %vm728, %v2094, 0
    %v2340 = vsel %vm728, %v2142, 0
    %2342 = vmatprep.subr.bf16.mxu0 0
    %2343 = vmatpush1.bf16.xpose.msra.mxu0 %v2340
    %2344 = vmatprep.subr.bf16.mxu0 0
    %2345 = vmatpush1.bf16.xpose.msra.mxu0 0
    %2346 = vmatprep.subr.bf16.mxu0 0
    %2347 = vmatpush1.bf16.xpose.msra.mxu0 0
    %2348 = vmatprep.subr.bf16.mxu0 0
    %2349 = vmatpush1.bf16.xpose.msra.mxu0 0
    %2350 = vmatprep.subr.bf16.mxu0 0
    %2351 = vmatpush1.bf16.xpose.msra.mxu0 0
    %2352 = vmatprep.subr.bf16.mxu0 0
    %2353 = vmatpush1.bf16.xpose.msra.mxu0 0
    %2354 = vmatprep.subr.bf16.mxu0 0
    %2355 = vmatpush1.bf16.xpose.msra.mxu0 0
    %2356 = vmatprep.subr.bf16.mxu0 0
    %2357 = vmatpush1.bf16.xpose.msra.mxu0 0
    %2358 = vmatprep.subr.bf16.mxu0 0
    %2359 = vmatpush1.bf16.xpose.msra.mxu0 0
    %2360 = vmatprep.subr.bf16.mxu0 0
    %2361 = vmatpush1.bf16.xpose.msra.mxu0 0
    %2362 = vmatprep.subr.bf16.mxu0 0
    %2363 = vmatpush1.bf16.xpose.msra.mxu0 0
    %2364 = vmatprep.subr.bf16.mxu0 0
    %2365 = vmatpush1.bf16.xpose.msra.mxu0 0
    %2366 = vmatprep.subr.bf16.mxu0 0
    %2367 = vmatpush1.bf16.xpose.msra.mxu0 0
    %2368 = vmatprep.subr.bf16.mxu0 0
    %2369 = vmatpush1.bf16.xpose.msra.mxu0 0
    %2370 = vmatprep.subr.bf16.mxu0 0
    %2371 = vmatpush1.bf16.xpose.msra.mxu0 0
    %2372 = vmatprep.subr.bf16.mxu0 0
    %2373 = vmatpush1.bf16.xpose.msra.mxu0 0
    %2374 = vmatprep.mubr.bf16.mxu0 0
    %2375 = vmatmul.mubr.bf16.gmra.mrb[0].mxu0 %v2337
    %v2376 = vpop.f32.mrb[0].mxu0
    %v2377 = vadd.f32 %v2215, %v2376
    %v2378 = vpop.f32.mrb[0].mxu0
    %v2379 = vpop.f32.mrb[0].mxu0
    %v2380 = vpop.f32.mrb[0].mxu0
    %2381 = vdwg.mxu0
    %v2383 = vsel %vm728, %v2095, 0
    %v2386 = vsel %vm728, %v2143, 0
    %2388 = vmatprep.subr.bf16.mxu0 0
    %2389 = vmatpush1.bf16.xpose.msra.mxu0 %v2386
    %2390 = vmatprep.subr.bf16.mxu0 0
    %2391 = vmatpush1.bf16.xpose.msra.mxu0 0
    %2392 = vmatprep.subr.bf16.mxu0 0
    %2393 = vmatpush1.bf16.xpose.msra.mxu0 0
    %2394 = vmatprep.subr.bf16.mxu0 0
    %2395 = vmatpush1.bf16.xpose.msra.mxu0 0
    %2396 = vmatprep.subr.bf16.mxu0 0
    %2397 = vmatpush1.bf16.xpose.msra.mxu0 0
    %2398 = vmatprep.subr.bf16.mxu0 0
    %2399 = vmatpush1.bf16.xpose.msra.mxu0 0
    %2400 = vmatprep.subr.bf16.mxu0 0
    %2401 = vmatpush1.bf16.xpose.msra.mxu0 0
    %2402 = vmatprep.subr.bf16.mxu0 0
    %2403 = vmatpush1.bf16.xpose.msra.mxu0 0
    %2404 = vmatprep.subr.bf16.mxu0 0
    %2405 = vmatpush1.bf16.xpose.msra.mxu0 0
    %2406 = vmatprep.subr.bf16.mxu0 0
    %2407 = vmatpush1.bf16.xpose.msra.mxu0 0
    %2408 = vmatprep.subr.bf16.mxu0 0
    %2409 = vmatpush1.bf16.xpose.msra.mxu0 0
    %2410 = vmatprep.subr.bf16.mxu0 0
    %2411 = vmatpush1.bf16.xpose.msra.mxu0 0
    %2412 = vmatprep.subr.bf16.mxu0 0
    %2413 = vmatpush1.bf16.xpose.msra.mxu0 0
    %2414 = vmatprep.subr.bf16.mxu0 0
    %2415 = vmatpush1.bf16.xpose.msra.mxu0 0
    %2416 = vmatprep.subr.bf16.mxu0 0
    %2417 = vmatpush1.bf16.xpose.msra.mxu0 0
    %2418 = vmatprep.subr.bf16.mxu0 0
    %2419 = vmatpush1.bf16.xpose.msra.mxu0 0
    %2420 = vmatprep.mubr.bf16.mxu0 0
    %2421 = vmatmul.mubr.bf16.gmra.mrb[0].mxu0 %v2383
    %v2422 = vpop.f32.mrb[0].mxu0
    %v2423 = vadd.f32 %v2219, %v2422
    %v2424 = vpop.f32.mrb[0].mxu0
    %v2425 = vpop.f32.mrb[0].mxu0
    %v2426 = vpop.f32.mrb[0].mxu0
    %2427 = vdwg.mxu0
    %v2429 = vsel %vm728, %v2096, 0
    %v2432 = vsel %vm728, %v2144, 0
    %2434 = vmatprep.subr.bf16.mxu0 0
    %2435 = vmatpush1.bf16.xpose.msra.mxu0 %v2432
    %2436 = vmatprep.subr.bf16.mxu0 0
    %2437 = vmatpush1.bf16.xpose.msra.mxu0 0
    %2438 = vmatprep.subr.bf16.mxu0 0
    %2439 = vmatpush1.bf16.xpose.msra.mxu0 0
    %2440 = vmatprep.subr.bf16.mxu0 0
    %2441 = vmatpush1.bf16.xpose.msra.mxu0 0
    %2442 = vmatprep.subr.bf16.mxu0 0
    %2443 = vmatpush1.bf16.xpose.msra.mxu0 0
    %2444 = vmatprep.subr.bf16.mxu0 0
    %2445 = vmatpush1.bf16.xpose.msra.mxu0 0
    %2446 = vmatprep.subr.bf16.mxu0 0
    %2447 = vmatpush1.bf16.xpose.msra.mxu0 0
    %2448 = vmatprep.subr.bf16.mxu0 0
    %2449 = vmatpush1.bf16.xpose.msra.mxu0 0
    %2450 = vmatprep.subr.bf16.mxu0 0
    %2451 = vmatpush1.bf16.xpose.msra.mxu0 0
    %2452 = vmatprep.subr.bf16.mxu0 0
    %2453 = vmatpush1.bf16.xpose.msra.mxu0 0
    %2454 = vmatprep.subr.bf16.mxu0 0
    %2455 = vmatpush1.bf16.xpose.msra.mxu0 0
    %2456 = vmatprep.subr.bf16.mxu0 0
    %2457 = vmatpush1.bf16.xpose.msra.mxu0 0
    %2458 = vmatprep.subr.bf16.mxu0 0
    %2459 = vmatpush1.bf16.xpose.msra.mxu0 0
    %2460 = vmatprep.subr.bf16.mxu0 0
    %2461 = vmatpush1.bf16.xpose.msra.mxu0 0
    %2462 = vmatprep.subr.bf16.mxu0 0
    %2463 = vmatpush1.bf16.xpose.msra.mxu0 0
    %2464 = vmatprep.subr.bf16.mxu0 0
    %2465 = vmatpush1.bf16.xpose.msra.mxu0 0
    %2466 = vmatprep.mubr.bf16.mxu0 0
    %2467 = vmatmul.mubr.bf16.gmra.mrb[0].mxu0 %v2429
    %v2468 = vpop.f32.mrb[0].mxu0
    %v2469 = vadd.f32 %v2223, %v2468
    %v2470 = vpop.f32.mrb[0].mxu0
    %v2471 = vpop.f32.mrb[0].mxu0
    %v2472 = vpop.f32.mrb[0].mxu0
    %2473 = vdwg.mxu0
    %v2475 = vsel %vm728, %v2097, 0
    %v2478 = vsel %vm728, %v2145, 0
    %2480 = vmatprep.subr.bf16.mxu0 0
    %2481 = vmatpush1.bf16.xpose.msra.mxu0 %v2478
    %2482 = vmatprep.subr.bf16.mxu0 0
    %2483 = vmatpush1.bf16.xpose.msra.mxu0 0
    %2484 = vmatprep.subr.bf16.mxu0 0
    %2485 = vmatpush1.bf16.xpose.msra.mxu0 0
    %2486 = vmatprep.subr.bf16.mxu0 0
    %2487 = vmatpush1.bf16.xpose.msra.mxu0 0
    %2488 = vmatprep.subr.bf16.mxu0 0
    %2489 = vmatpush1.bf16.xpose.msra.mxu0 0
    %2490 = vmatprep.subr.bf16.mxu0 0
    %2491 = vmatpush1.bf16.xpose.msra.mxu0 0
    %2492 = vmatprep.subr.bf16.mxu0 0
    %2493 = vmatpush1.bf16.xpose.msra.mxu0 0
    %2494 = vmatprep.subr.bf16.mxu0 0
    %2495 = vmatpush1.bf16.xpose.msra.mxu0 0
    %2496 = vmatprep.subr.bf16.mxu0 0
    %2497 = vmatpush1.bf16.xpose.msra.mxu0 0
    %2498 = vmatprep.subr.bf16.mxu0 0
    %2499 = vmatpush1.bf16.xpose.msra.mxu0 0
    %2500 = vmatprep.subr.bf16.mxu0 0
    %2501 = vmatpush1.bf16.xpose.msra.mxu0 0
    %2502 = vmatprep.subr.bf16.mxu0 0
    %2503 = vmatpush1.bf16.xpose.msra.mxu0 0
    %2504 = vmatprep.subr.bf16.mxu0 0
    %2505 = vmatpush1.bf16.xpose.msra.mxu0 0
    %2506 = vmatprep.subr.bf16.mxu0 0
    %2507 = vmatpush1.bf16.xpose.msra.mxu0 0
    %2508 = vmatprep.subr.bf16.mxu0 0
    %2509 = vmatpush1.bf16.xpose.msra.mxu0 0
    %2510 = vmatprep.subr.bf16.mxu0 0
    %2511 = vmatpush1.bf16.xpose.msra.mxu0 0
    %2512 = vmatprep.mubr.bf16.mxu0 0
    %2513 = vmatmul.mubr.bf16.gmra.mrb[0].mxu0 %v2475
    %v2514 = vpop.f32.mrb[0].mxu0
    %v2515 = vadd.f32 %v2227, %v2514
    %v2516 = vpop.f32.mrb[0].mxu0
    %v2517 = vpop.f32.mrb[0].mxu0
    %v2518 = vpop.f32.mrb[0].mxu0
    %2519 = vdwg.mxu0
    %v2521 = vsel %vm728, %v2098, 0
    %v2524 = vsel %vm728, %v2146, 0
    %2526 = vmatprep.subr.bf16.mxu0 0
    %2527 = vmatpush1.bf16.xpose.msra.mxu0 %v2524
    %2528 = vmatprep.subr.bf16.mxu0 0
    %2529 = vmatpush1.bf16.xpose.msra.mxu0 0
    %2530 = vmatprep.subr.bf16.mxu0 0
    %2531 = vmatpush1.bf16.xpose.msra.mxu0 0
    %2532 = vmatprep.subr.bf16.mxu0 0
    %2533 = vmatpush1.bf16.xpose.msra.mxu0 0
    %2534 = vmatprep.subr.bf16.mxu0 0
    %2535 = vmatpush1.bf16.xpose.msra.mxu0 0
    %2536 = vmatprep.subr.bf16.mxu0 0
    %2537 = vmatpush1.bf16.xpose.msra.mxu0 0
    %2538 = vmatprep.subr.bf16.mxu0 0
    %2539 = vmatpush1.bf16.xpose.msra.mxu0 0
    %2540 = vmatprep.subr.bf16.mxu0 0
    %2541 = vmatpush1.bf16.xpose.msra.mxu0 0
    %2542 = vmatprep.subr.bf16.mxu0 0
    %2543 = vmatpush1.bf16.xpose.msra.mxu0 0
    %2544 = vmatprep.subr.bf16.mxu0 0
    %2545 = vmatpush1.bf16.xpose.msra.mxu0 0
    %2546 = vmatprep.subr.bf16.mxu0 0
    %2547 = vmatpush1.bf16.xpose.msra.mxu0 0
    %2548 = vmatprep.subr.bf16.mxu0 0
    %2549 = vmatpush1.bf16.xpose.msra.mxu0 0
    %2550 = vmatprep.subr.bf16.mxu0 0
    %2551 = vmatpush1.bf16.xpose.msra.mxu0 0
    %2552 = vmatprep.subr.bf16.mxu0 0
    %2553 = vmatpush1.bf16.xpose.msra.mxu0 0
    %2554 = vmatprep.subr.bf16.mxu0 0
    %2555 = vmatpush1.bf16.xpose.msra.mxu0 0
    %2556 = vmatprep.subr.bf16.mxu0 0
    %2557 = vmatpush1.bf16.xpose.msra.mxu0 0
    %2558 = vmatprep.mubr.bf16.mxu0 0
    %2559 = vmatmul.mubr.bf16.gmra.mrb[0].mxu0 %v2521
    %v2560 = vpop.f32.mrb[0].mxu0
    %v2561 = vadd.f32 %v2231, %v2560
    %v2562 = vpop.f32.mrb[0].mxu0
    %v2563 = vpop.f32.mrb[0].mxu0
    %v2564 = vpop.f32.mrb[0].mxu0
    %2565 = vdwg.mxu0
    %v2567 = vsel %vm728, %v2099, 0
    %v2570 = vsel %vm728, %v2147, 0
    %2572 = vmatprep.subr.bf16.mxu0 0
    %2573 = vmatpush1.bf16.xpose.msra.mxu0 %v2570
    %2574 = vmatprep.subr.bf16.mxu0 0
    %2575 = vmatpush1.bf16.xpose.msra.mxu0 0
    %2576 = vmatprep.subr.bf16.mxu0 0
    %2577 = vmatpush1.bf16.xpose.msra.mxu0 0
    %2578 = vmatprep.subr.bf16.mxu0 0
    %2579 = vmatpush1.bf16.xpose.msra.mxu0 0
    %2580 = vmatprep.subr.bf16.mxu0 0
    %2581 = vmatpush1.bf16.xpose.msra.mxu0 0
    %2582 = vmatprep.subr.bf16.mxu0 0
    %2583 = vmatpush1.bf16.xpose.msra.mxu0 0
    %2584 = vmatprep.subr.bf16.mxu0 0
    %2585 = vmatpush1.bf16.xpose.msra.mxu0 0
    %2586 = vmatprep.subr.bf16.mxu0 0
    %2587 = vmatpush1.bf16.xpose.msra.mxu0 0
    %2588 = vmatprep.subr.bf16.mxu0 0
    %2589 = vmatpush1.bf16.xpose.msra.mxu0 0
    %2590 = vmatprep.subr.bf16.mxu0 0
    %2591 = vmatpush1.bf16.xpose.msra.mxu0 0
    %2592 = vmatprep.subr.bf16.mxu0 0
    %2593 = vmatpush1.bf16.xpose.msra.mxu0 0
    %2594 = vmatprep.subr.bf16.mxu0 0
    %2595 = vmatpush1.bf16.xpose.msra.mxu0 0
    %2596 = vmatprep.subr.bf16.mxu0 0
    %2597 = vmatpush1.bf16.xpose.msra.mxu0 0
    %2598 = vmatprep.subr.bf16.mxu0 0
    %2599 = vmatpush1.bf16.xpose.msra.mxu0 0
    %2600 = vmatprep.subr.bf16.mxu0 0
    %2601 = vmatpush1.bf16.xpose.msra.mxu0 0
    %2602 = vmatprep.subr.bf16.mxu0 0
    %2603 = vmatpush1.bf16.xpose.msra.mxu0 0
    %2604 = vmatprep.mubr.bf16.mxu0 0
    %2605 = vmatmul.mubr.bf16.gmra.mrb[0].mxu0 %v2567
    %v2606 = vpop.f32.mrb[0].mxu0
    %v2607 = vadd.f32 %v2235, %v2606
    %v2608 = vpop.f32.mrb[0].mxu0
    %v2609 = vpop.f32.mrb[0].mxu0
    %v2610 = vpop.f32.mrb[0].mxu0
    %2611 = vdwg.mxu0
    %vm2612 = vcmask 130048
    %v2613 = vsel %vm2612, %v2285, -inf
    %2614 = vmax.xlane.f32.xlu0 %v2613
    %v2615 = vpop.xlane.xlu0 %2614
    %v2616 = vsel %vm2612, %v2331, -inf
    %2617 = vmax.xlane.f32.xlu0 %v2616
    %v2618 = vpop.xlane.xlu0 %2617
    %v2619 = vsel %vm2612, %v2377, -inf
    %2620 = vmax.xlane.f32.xlu0 %v2619
    %v2621 = vpop.xlane.xlu0 %2620
    %v2622 = vsel %vm2612, %v2423, -inf
    %2623 = vmax.xlane.f32.xlu0 %v2622
    %v2624 = vpop.xlane.xlu0 %2623
    %v2625 = vsel %vm2612, %v2469, -inf
    %2626 = vmax.xlane.f32.xlu0 %v2625
    %v2627 = vpop.xlane.xlu0 %2626
    %v2628 = vsel %vm2612, %v2515, -inf
    %2629 = vmax.xlane.f32.xlu0 %v2628
    %v2630 = vpop.xlane.xlu0 %2629
    %v2631 = vsel %vm2612, %v2561, -inf
    %2632 = vmax.xlane.f32.xlu0 %v2631
    %v2633 = vpop.xlane.xlu0 %2632
    %v2634 = vsel %vm2612, %v2607, -inf
    %2635 = vmax.xlane.f32.xlu0 %v2634
    %v2636 = vpop.xlane.xlu0 %2635
    %v2637 = vsub.f32 %v2285, %v2615
    %v2638 = vsub.f32 %v2331, %v2618
    %v2639 = vsub.f32 %v2377, %v2621
    %v2640 = vsub.f32 %v2423, %v2624
    %v2641 = vsub.f32 %v2469, %v2627
    %v2642 = vsub.f32 %v2515, %v2630
    %v2643 = vsub.f32 %v2561, %v2633
    %v2644 = vsub.f32 %v2607, %v2636
    %v2645 = vmul.f32 %v2637, 1.442695
    %v2646 = vpow.pop %v2645
    %v2647 = vmul.f32 %v2638, 1.442695
    %v2648 = vpow.pop %v2647
    %v2649 = vmul.f32 %v2639, 1.442695
    %v2650 = vpow.pop %v2649
    %v2651 = vmul.f32 %v2640, 1.442695
    %v2652 = vpow.pop %v2651
    %v2653 = vmul.f32 %v2641, 1.442695
    %v2654 = vpow.pop %v2653
    %v2655 = vmul.f32 %v2642, 1.442695
    %v2656 = vpow.pop %v2655
    %v2657 = vmul.f32 %v2643, 1.442695
    %v2658 = vpow.pop %v2657
    %v2659 = vmul.f32 %v2644, 1.442695
    %v2660 = vpow.pop %v2659
    %v2661 = vsel %vm2612, %v2646, 0.0
    %2662 = vadd.xlane.f32.xlu0 %v2661
    %v2663 = vpop.xlane.xlu0 %2662
    %v2664 = vsel %vm2612, %v2648, 0.0
    %2665 = vadd.xlane.f32.xlu0 %v2664
    %v2666 = vpop.xlane.xlu0 %2665
    %v2667 = vsel %vm2612, %v2650, 0.0
    %2668 = vadd.xlane.f32.xlu0 %v2667
    %v2669 = vpop.xlane.xlu0 %2668
    %v2670 = vsel %vm2612, %v2652, 0.0
    %2671 = vadd.xlane.f32.xlu0 %v2670
    %v2672 = vpop.xlane.xlu0 %2671
    %v2673 = vsel %vm2612, %v2654, 0.0
    %2674 = vadd.xlane.f32.xlu0 %v2673
    %v2675 = vpop.xlane.xlu0 %2674
    %v2676 = vsel %vm2612, %v2656, 0.0
    %2677 = vadd.xlane.f32.xlu0 %v2676
    %v2678 = vpop.xlane.xlu0 %2677
    %v2679 = vsel %vm2612, %v2658, 0.0
    %2680 = vadd.xlane.f32.xlu0 %v2679
    %v2681 = vpop.xlane.xlu0 %2680
    %v2682 = vsel %vm2612, %v2660, 0.0
    %2683 = vadd.xlane.f32.xlu0 %v2682
    %v2684 = vpop.xlane.xlu0 %2683
    %v2685 = vrcp.pop %v2663
    %v2686 = vrcp.pop %v2666
    %v2687 = vrcp.pop %v2669
    %v2688 = vrcp.pop %v2672
    %v2689 = vrcp.pop %v2675
    %v2690 = vrcp.pop %v2678
    %v2691 = vrcp.pop %v2681
    %v2692 = vrcp.pop %v2684
    %v2693 = vmul.f32 %v2646, %v2685
    %v2694 = vmul.f32 %v2648, %v2686
    %v2695 = vmul.f32 %v2650, %v2687
    %v2696 = vmul.f32 %v2652, %v2688
    %v2697 = vmul.f32 %v2654, %v2689
    %v2698 = vmul.f32 %v2656, %v2690
    %v2699 = vmul.f32 %v2658, %v2691
    %v2700 = vmul.f32 %v2660, %v2692
    %v2701 = vpack.c.bf16 %v2693, %v2693
    %v2702 = vpack.c.bf16 %v2694, %v2694
    %v2703 = vpack.c.bf16 %v2695, %v2695
    %v2704 = vpack.c.bf16 %v2696, %v2696
    %v2705 = vpack.c.bf16 %v2697, %v2697
    %v2706 = vpack.c.bf16 %v2698, %v2698
    %v2707 = vpack.c.bf16 %v2699, %v2699
    %v2708 = vpack.c.bf16 %v2700, %v2700
    %v2710 = vsel %vm2612, %v2701, 0
    %2712 = vmatprep.subr.bf16.mxu0 0
    %2713 = vmatpush1.bf16.msra.mxu0 %v2188
    %2714 = vmatprep.subr.bf16.mxu0 0
    %2715 = vmatpush1.bf16.msra.mxu0 0
    %2716 = vmatprep.subr.bf16.mxu0 0
    %2717 = vmatpush1.bf16.msra.mxu0 0
    %2718 = vmatprep.subr.bf16.mxu0 0
    %2719 = vmatpush1.bf16.msra.mxu0 0
    %2720 = vmatprep.subr.bf16.mxu0 0
    %2721 = vmatpush1.bf16.msra.mxu0 0
    %2722 = vmatprep.subr.bf16.mxu0 0
    %2723 = vmatpush1.bf16.msra.mxu0 0
    %2724 = vmatprep.subr.bf16.mxu0 0
    %2725 = vmatpush1.bf16.msra.mxu0 0
    %2726 = vmatprep.subr.bf16.mxu0 0
    %2727 = vmatpush1.bf16.msra.mxu0 0
    %2728 = vmatprep.subr.bf16.mxu0 0
    %2729 = vmatpush1.bf16.msra.mxu0 0
    %2730 = vmatprep.subr.bf16.mxu0 0
    %2731 = vmatpush1.bf16.msra.mxu0 0
    %2732 = vmatprep.subr.bf16.mxu0 0
    %2733 = vmatpush1.bf16.msra.mxu0 0
    %2734 = vmatprep.subr.bf16.mxu0 0
    %2735 = vmatpush1.bf16.msra.mxu0 0
    %2736 = vmatprep.subr.bf16.mxu0 0
    %2737 = vmatpush1.bf16.msra.mxu0 0
    %2738 = vmatprep.subr.bf16.mxu0 0
    %2739 = vmatpush1.bf16.msra.mxu0 0
    %2740 = vmatprep.subr.bf16.mxu0 0
    %2741 = vmatpush1.bf16.msra.mxu0 0
    %2742 = vmatprep.subr.bf16.mxu0 0
    %2743 = vmatpush1.bf16.msra.mxu0 0
    %2744 = vmatprep.mubr.bf16.mxu0 0
    %2745 = vmatmul.mubr.bf16.gmra.mrb[0].mxu0 %v2710
    %v2746 = vpop.f32.mrb[0].mxu0
    %v2747 = vadd.f32 0.0, %v2746
    %v2748 = vpop.f32.mrb[0].mxu0
    %v2749 = vpop.f32.mrb[0].mxu0
    %v2750 = vpop.f32.mrb[0].mxu0
    %2751 = vdwg.mxu0
    %v2753 = vsel %vm2612, %v2702, 0
    %2755 = vmatprep.subr.bf16.mxu0 0
    %2756 = vmatpush1.bf16.msra.mxu0 %v2189
    %2757 = vmatprep.subr.bf16.mxu0 0
    %2758 = vmatpush1.bf16.msra.mxu0 0
    %2759 = vmatprep.subr.bf16.mxu0 0
    %2760 = vmatpush1.bf16.msra.mxu0 0
    %2761 = vmatprep.subr.bf16.mxu0 0
    %2762 = vmatpush1.bf16.msra.mxu0 0
    %2763 = vmatprep.subr.bf16.mxu0 0
    %2764 = vmatpush1.bf16.msra.mxu0 0
    %2765 = vmatprep.subr.bf16.mxu0 0
    %2766 = vmatpush1.bf16.msra.mxu0 0
    %2767 = vmatprep.subr.bf16.mxu0 0
    %2768 = vmatpush1.bf16.msra.mxu0 0
    %2769 = vmatprep.subr.bf16.mxu0 0
    %2770 = vmatpush1.bf16.msra.mxu0 0
    %2771 = vmatprep.subr.bf16.mxu0 0
    %2772 = vmatpush1.bf16.msra.mxu0 0
    %2773 = vmatprep.subr.bf16.mxu0 0
    %2774 = vmatpush1.bf16.msra.mxu0 0
    %2775 = vmatprep.subr.bf16.mxu0 0
    %2776 = vmatpush1.bf16.msra.mxu0 0
    %2777 = vmatprep.subr.bf16.mxu0 0
    %2778 = vmatpush1.bf16.msra.mxu0 0
    %2779 = vmatprep.subr.bf16.mxu0 0
    %2780 = vmatpush1.bf16.msra.mxu0 0
    %2781 = vmatprep.subr.bf16.mxu0 0
    %2782 = vmatpush1.bf16.msra.mxu0 0
    %2783 = vmatprep.subr.bf16.mxu0 0
    %2784 = vmatpush1.bf16.msra.mxu0 0
    %2785 = vmatprep.subr.bf16.mxu0 0
    %2786 = vmatpush1.bf16.msra.mxu0 0
    %2787 = vmatprep.mubr.bf16.mxu0 0
    %2788 = vmatmul.mubr.bf16.gmra.mrb[0].mxu0 %v2753
    %v2789 = vpop.f32.mrb[0].mxu0
    %v2790 = vadd.f32 0.0, %v2789
    %v2791 = vpop.f32.mrb[0].mxu0
    %v2792 = vpop.f32.mrb[0].mxu0
    %v2793 = vpop.f32.mrb[0].mxu0
    %2794 = vdwg.mxu0
    %v2796 = vsel %vm2612, %v2703, 0
    %2798 = vmatprep.subr.bf16.mxu0 0
    %2799 = vmatpush1.bf16.msra.mxu0 %v2190
    %2800 = vmatprep.subr.bf16.mxu0 0
    %2801 = vmatpush1.bf16.msra.mxu0 0
    %2802 = vmatprep.subr.bf16.mxu0 0
    %2803 = vmatpush1.bf16.msra.mxu0 0
    %2804 = vmatprep.subr.bf16.mxu0 0
    %2805 = vmatpush1.bf16.msra.mxu0 0
    %2806 = vmatprep.subr.bf16.mxu0 0
    %2807 = vmatpush1.bf16.msra.mxu0 0
    %2808 = vmatprep.subr.bf16.mxu0 0
    %2809 = vmatpush1.bf16.msra.mxu0 0
    %2810 = vmatprep.subr.bf16.mxu0 0
    %2811 = vmatpush1.bf16.msra.mxu0 0
    %2812 = vmatprep.subr.bf16.mxu0 0
    %2813 = vmatpush1.bf16.msra.mxu0 0
    %2814 = vmatprep.subr.bf16.mxu0 0
    %2815 = vmatpush1.bf16.msra.mxu0 0
    %2816 = vmatprep.subr.bf16.mxu0 0
    %2817 = vmatpush1.bf16.msra.mxu0 0
    %2818 = vmatprep.subr.bf16.mxu0 0
    %2819 = vmatpush1.bf16.msra.mxu0 0
    %2820 = vmatprep.subr.bf16.mxu0 0
    %2821 = vmatpush1.bf16.msra.mxu0 0
    %2822 = vmatprep.subr.bf16.mxu0 0
    %2823 = vmatpush1.bf16.msra.mxu0 0
    %2824 = vmatprep.subr.bf16.mxu0 0
    %2825 = vmatpush1.bf16.msra.mxu0 0
    %2826 = vmatprep.subr.bf16.mxu0 0
    %2827 = vmatpush1.bf16.msra.mxu0 0
    %2828 = vmatprep.subr.bf16.mxu0 0
    %2829 = vmatpush1.bf16.msra.mxu0 0
    %2830 = vmatprep.mubr.bf16.mxu0 0
    %2831 = vmatmul.mubr.bf16.gmra.mrb[0].mxu0 %v2796
    %v2832 = vpop.f32.mrb[0].mxu0
    %v2833 = vadd.f32 0.0, %v2832
    %v2834 = vpop.f32.mrb[0].mxu0
    %v2835 = vpop.f32.mrb[0].mxu0
    %v2836 = vpop.f32.mrb[0].mxu0
    %2837 = vdwg.mxu0
    %v2839 = vsel %vm2612, %v2704, 0
    %2841 = vmatprep.subr.bf16.mxu0 0
    %2842 = vmatpush1.bf16.msra.mxu0 %v2191
    %2843 = vmatprep.subr.bf16.mxu0 0
    %2844 = vmatpush1.bf16.msra.mxu0 0
    %2845 = vmatprep.subr.bf16.mxu0 0
    %2846 = vmatpush1.bf16.msra.mxu0 0
    %2847 = vmatprep.subr.bf16.mxu0 0
    %2848 = vmatpush1.bf16.msra.mxu0 0
    %2849 = vmatprep.subr.bf16.mxu0 0
    %2850 = vmatpush1.bf16.msra.mxu0 0
    %2851 = vmatprep.subr.bf16.mxu0 0
    %2852 = vmatpush1.bf16.msra.mxu0 0
    %2853 = vmatprep.subr.bf16.mxu0 0
    %2854 = vmatpush1.bf16.msra.mxu0 0
    %2855 = vmatprep.subr.bf16.mxu0 0
    %2856 = vmatpush1.bf16.msra.mxu0 0
    %2857 = vmatprep.subr.bf16.mxu0 0
    %2858 = vmatpush1.bf16.msra.mxu0 0
    %2859 = vmatprep.subr.bf16.mxu0 0
    %2860 = vmatpush1.bf16.msra.mxu0 0
    %2861 = vmatprep.subr.bf16.mxu0 0
    %2862 = vmatpush1.bf16.msra.mxu0 0
    %2863 = vmatprep.subr.bf16.mxu0 0
    %2864 = vmatpush1.bf16.msra.mxu0 0
    %2865 = vmatprep.subr.bf16.mxu0 0
    %2866 = vmatpush1.bf16.msra.mxu0 0
    %2867 = vmatprep.subr.bf16.mxu0 0
    %2868 = vmatpush1.bf16.msra.mxu0 0
    %2869 = vmatprep.subr.bf16.mxu0 0
    %2870 = vmatpush1.bf16.msra.mxu0 0
    %2871 = vmatprep.subr.bf16.mxu0 0
    %2872 = vmatpush1.bf16.msra.mxu0 0
    %2873 = vmatprep.mubr.bf16.mxu0 0
    %2874 = vmatmul.mubr.bf16.gmra.mrb[0].mxu0 %v2839
    %v2875 = vpop.f32.mrb[0].mxu0
    %v2876 = vadd.f32 0.0, %v2875
    %v2877 = vpop.f32.mrb[0].mxu0
    %v2878 = vpop.f32.mrb[0].mxu0
    %v2879 = vpop.f32.mrb[0].mxu0
    %2880 = vdwg.mxu0
    %v2882 = vsel %vm2612, %v2705, 0
    %2884 = vmatprep.subr.bf16.mxu0 0
    %2885 = vmatpush1.bf16.msra.mxu0 %v2192
    %2886 = vmatprep.subr.bf16.mxu0 0
    %2887 = vmatpush1.bf16.msra.mxu0 0
    %2888 = vmatprep.subr.bf16.mxu0 0
    %2889 = vmatpush1.bf16.msra.mxu0 0
    %2890 = vmatprep.subr.bf16.mxu0 0
    %2891 = vmatpush1.bf16.msra.mxu0 0
    %2892 = vmatprep.subr.bf16.mxu0 0
    %2893 = vmatpush1.bf16.msra.mxu0 0
    %2894 = vmatprep.subr.bf16.mxu0 0
    %2895 = vmatpush1.bf16.msra.mxu0 0
    %2896 = vmatprep.subr.bf16.mxu0 0
    %2897 = vmatpush1.bf16.msra.mxu0 0
    %2898 = vmatprep.subr.bf16.mxu0 0
    %2899 = vmatpush1.bf16.msra.mxu0 0
    %2900 = vmatprep.subr.bf16.mxu0 0
    %2901 = vmatpush1.bf16.msra.mxu0 0
    %2902 = vmatprep.subr.bf16.mxu0 0
    %2903 = vmatpush1.bf16.msra.mxu0 0
    %2904 = vmatprep.subr.bf16.mxu0 0
    %2905 = vmatpush1.bf16.msra.mxu0 0
    %2906 = vmatprep.subr.bf16.mxu0 0
    %2907 = vmatpush1.bf16.msra.mxu0 0
    %2908 = vmatprep.subr.bf16.mxu0 0
    %2909 = vmatpush1.bf16.msra.mxu0 0
    %2910 = vmatprep.subr.bf16.mxu0 0
    %2911 = vmatpush1.bf16.msra.mxu0 0
    %2912 = vmatprep.subr.bf16.mxu0 0
    %2913 = vmatpush1.bf16.msra.mxu0 0
    %2914 = vmatprep.subr.bf16.mxu0 0
    %2915 = vmatpush1.bf16.msra.mxu0 0
    %2916 = vmatprep.mubr.bf16.mxu0 0
    %2917 = vmatmul.mubr.bf16.gmra.mrb[0].mxu0 %v2882
    %v2918 = vpop.f32.mrb[0].mxu0
    %v2919 = vadd.f32 0.0, %v2918
    %v2920 = vpop.f32.mrb[0].mxu0
    %v2921 = vpop.f32.mrb[0].mxu0
    %v2922 = vpop.f32.mrb[0].mxu0
    %2923 = vdwg.mxu0
    %v2925 = vsel %vm2612, %v2706, 0
    %2927 = vmatprep.subr.bf16.mxu0 0
    %2928 = vmatpush1.bf16.msra.mxu0 %v2193
    %2929 = vmatprep.subr.bf16.mxu0 0
    %2930 = vmatpush1.bf16.msra.mxu0 0
    %2931 = vmatprep.subr.bf16.mxu0 0
    %2932 = vmatpush1.bf16.msra.mxu0 0
    %2933 = vmatprep.subr.bf16.mxu0 0
    %2934 = vmatpush1.bf16.msra.mxu0 0
    %2935 = vmatprep.subr.bf16.mxu0 0
    %2936 = vmatpush1.bf16.msra.mxu0 0
    %2937 = vmatprep.subr.bf16.mxu0 0
    %2938 = vmatpush1.bf16.msra.mxu0 0
    %2939 = vmatprep.subr.bf16.mxu0 0
    %2940 = vmatpush1.bf16.msra.mxu0 0
    %2941 = vmatprep.subr.bf16.mxu0 0
    %2942 = vmatpush1.bf16.msra.mxu0 0
    %2943 = vmatprep.subr.bf16.mxu0 0
    %2944 = vmatpush1.bf16.msra.mxu0 0
    %2945 = vmatprep.subr.bf16.mxu0 0
    %2946 = vmatpush1.bf16.msra.mxu0 0
    %2947 = vmatprep.subr.bf16.mxu0 0
    %2948 = vmatpush1.bf16.msra.mxu0 0
    %2949 = vmatprep.subr.bf16.mxu0 0
    %2950 = vmatpush1.bf16.msra.mxu0 0
    %2951 = vmatprep.subr.bf16.mxu0 0
    %2952 = vmatpush1.bf16.msra.mxu0 0
    %2953 = vmatprep.subr.bf16.mxu0 0
    %2954 = vmatpush1.bf16.msra.mxu0 0
    %2955 = vmatprep.subr.bf16.mxu0 0
    %2956 = vmatpush1.bf16.msra.mxu0 0
    %2957 = vmatprep.subr.bf16.mxu0 0
    %2958 = vmatpush1.bf16.msra.mxu0 0
    %2959 = vmatprep.mubr.bf16.mxu0 0
    %2960 = vmatmul.mubr.bf16.gmra.mrb[0].mxu0 %v2925
    %v2961 = vpop.f32.mrb[0].mxu0
    %v2962 = vadd.f32 0.0, %v2961
    %v2963 = vpop.f32.mrb[0].mxu0
    %v2964 = vpop.f32.mrb[0].mxu0
    %v2965 = vpop.f32.mrb[0].mxu0
    %2966 = vdwg.mxu0
    %v2968 = vsel %vm2612, %v2707, 0
    %2970 = vmatprep.subr.bf16.mxu0 0
    %2971 = vmatpush1.bf16.msra.mxu0 %v2194
    %2972 = vmatprep.subr.bf16.mxu0 0
    %2973 = vmatpush1.bf16.msra.mxu0 0
    %2974 = vmatprep.subr.bf16.mxu0 0
    %2975 = vmatpush1.bf16.msra.mxu0 0
    %2976 = vmatprep.subr.bf16.mxu0 0
    %2977 = vmatpush1.bf16.msra.mxu0 0
    %2978 = vmatprep.subr.bf16.mxu0 0
    %2979 = vmatpush1.bf16.msra.mxu0 0
    %2980 = vmatprep.subr.bf16.mxu0 0
    %2981 = vmatpush1.bf16.msra.mxu0 0
    %2982 = vmatprep.subr.bf16.mxu0 0
    %2983 = vmatpush1.bf16.msra.mxu0 0
    %2984 = vmatprep.subr.bf16.mxu0 0
    %2985 = vmatpush1.bf16.msra.mxu0 0
    %2986 = vmatprep.subr.bf16.mxu0 0
    %2987 = vmatpush1.bf16.msra.mxu0 0
    %2988 = vmatprep.subr.bf16.mxu0 0
    %2989 = vmatpush1.bf16.msra.mxu0 0
    %2990 = vmatprep.subr.bf16.mxu0 0
    %2991 = vmatpush1.bf16.msra.mxu0 0
    %2992 = vmatprep.subr.bf16.mxu0 0
    %2993 = vmatpush1.bf16.msra.mxu0 0
    %2994 = vmatprep.subr.bf16.mxu0 0
    %2995 = vmatpush1.bf16.msra.mxu0 0
    %2996 = vmatprep.subr.bf16.mxu0 0
    %2997 = vmatpush1.bf16.msra.mxu0 0
    %2998 = vmatprep.subr.bf16.mxu0 0
    %2999 = vmatpush1.bf16.msra.mxu0 0
    %3000 = vmatprep.subr.bf16.mxu0 0
    %3001 = vmatpush1.bf16.msra.mxu0 0
    %3002 = vmatprep.mubr.bf16.mxu0 0
    %3003 = vmatmul.mubr.bf16.gmra.mrb[0].mxu0 %v2968
    %v3004 = vpop.f32.mrb[0].mxu0
    %v3005 = vadd.f32 0.0, %v3004
    %v3006 = vpop.f32.mrb[0].mxu0
    %v3007 = vpop.f32.mrb[0].mxu0
    %v3008 = vpop.f32.mrb[0].mxu0
    %3009 = vdwg.mxu0
    %v3011 = vsel %vm2612, %v2708, 0
    %3013 = vmatprep.subr.bf16.mxu0 0
    %3014 = vmatpush1.bf16.msra.mxu0 %v2195
    %3015 = vmatprep.subr.bf16.mxu0 0
    %3016 = vmatpush1.bf16.msra.mxu0 0
    %3017 = vmatprep.subr.bf16.mxu0 0
    %3018 = vmatpush1.bf16.msra.mxu0 0
    %3019 = vmatprep.subr.bf16.mxu0 0
    %3020 = vmatpush1.bf16.msra.mxu0 0
    %3021 = vmatprep.subr.bf16.mxu0 0
    %3022 = vmatpush1.bf16.msra.mxu0 0
    %3023 = vmatprep.subr.bf16.mxu0 0
    %3024 = vmatpush1.bf16.msra.mxu0 0
    %3025 = vmatprep.subr.bf16.mxu0 0
    %3026 = vmatpush1.bf16.msra.mxu0 0
    %3027 = vmatprep.subr.bf16.mxu0 0
    %3028 = vmatpush1.bf16.msra.mxu0 0
    %3029 = vmatprep.subr.bf16.mxu0 0
    %3030 = vmatpush1.bf16.msra.mxu0 0
    %3031 = vmatprep.subr.bf16.mxu0 0
    %3032 = vmatpush1.bf16.msra.mxu0 0
    %3033 = vmatprep.subr.bf16.mxu0 0
    %3034 = vmatpush1.bf16.msra.mxu0 0
    %3035 = vmatprep.subr.bf16.mxu0 0
    %3036 = vmatpush1.bf16.msra.mxu0 0
    %3037 = vmatprep.subr.bf16.mxu0 0
    %3038 = vmatpush1.bf16.msra.mxu0 0
    %3039 = vmatprep.subr.bf16.mxu0 0
    %3040 = vmatpush1.bf16.msra.mxu0 0
    %3041 = vmatprep.subr.bf16.mxu0 0
    %3042 = vmatpush1.bf16.msra.mxu0 0
    %3043 = vmatprep.subr.bf16.mxu0 0
    %3044 = vmatpush1.bf16.msra.mxu0 0
    %3045 = vmatprep.mubr.bf16.mxu0 0
    %3046 = vmatmul.mubr.bf16.gmra.mrb[0].mxu0 %v3011
    %v3047 = vpop.f32.mrb[0].mxu0
    %v3048 = vadd.f32 0.0, %v3047
    %v3049 = vpop.f32.mrb[0].mxu0
    %v3050 = vpop.f32.mrb[0].mxu0
    %v3051 = vpop.f32.mrb[0].mxu0
    %3052 = vdwg.mxu0
    %3054 = vrot.lane.b32.xlu0 %v2790, 32
    %v3055 = vpop.permute.xlu0 %3054
    %3058 = vrot.lane.b32.xlu0 %v2833, 64
    %v3059 = vpop.permute.xlu0 %3058
    %3062 = vrot.lane.b32.xlu0 %v2876, 96
    %v3063 = vpop.permute.xlu0 %3062
    %v3065 = vsel %vm728, %v2747, %v3055
    %v3066 = vsel %vm1576, %v3065, %v3059
    %v3067 = vsel %vm1578, %v3066, %v3063
    %3069 = vrot.lane.b32.xlu0 %v2962, 32
    %v3070 = vpop.permute.xlu0 %3069
    %3073 = vrot.lane.b32.xlu0 %v3005, 64
    %v3074 = vpop.permute.xlu0 %3073
    %3077 = vrot.lane.b32.xlu0 %v3048, 96
    %v3078 = vpop.permute.xlu0 %3077
    %v3080 = vsel %vm728, %v2919, %v3070
    %v3081 = vsel %vm1576, %v3080, %v3074
    %v3082 = vsel %vm1578, %v3081, %v3078
    %v3083 = vpack.c.bf16 %v3082, %v3067
    %v3084 = vld [vmem:[#allocation13] sm:$0xf]
    %v3085 = vld [vmem:[#allocation13 + $0x4] sm:$0xf]
    %v3086 = vld [vmem:[#allocation13 + $0x8] sm:$0xf]
    %v3087 = vld [vmem:[#allocation13 + $0xc] sm:$0xf]
    %v3088 = vld [vmem:[#allocation13 + $0x10] sm:$0xf]
    %v3089 = vld [vmem:[#allocation13 + $0x14] sm:$0xf]
    %v3090 = vld [vmem:[#allocation13 + $0x18] sm:$0xf]
    %v3091 = vld [vmem:[#allocation13 + $0x1c] sm:$0xf]
    %v3092 = vld [vmem:[#allocation13 + $0x20] sm:$0xf]
    %v3093 = vld [vmem:[#allocation13 + $0x24] sm:$0xf]
    %v3094 = vld [vmem:[#allocation13 + $0x28] sm:$0xf]
    %v3095 = vld [vmem:[#allocation13 + $0x2c] sm:$0xf]
    %v3096 = vld [vmem:[#allocation13 + $0x30] sm:$0xf]
    %v3097 = vld [vmem:[#allocation13 + $0x34] sm:$0xf]
    %v3098 = vld [vmem:[#allocation13 + $0x38] sm:$0xf]
    %v3099 = vld [vmem:[#allocation13 + $0x3c] sm:$0xf]
    %v3100 = vld [vmem:[%s16] sm:$0x1]
    %v3102 = vlaneseq
    %v3103 = vshrl.u32 %v3102, 7
    %v3104 = vsub.s32 0, %v3103
    %v3105 = vrot.slane %v3100, %v3104
    %v3123 = vunpack.c.l.b16 %v3084
    %v3124 = vunpack.c.l.b16 %v3085
    %v3125 = vunpack.c.l.b16 %v3086
    %v3126 = vunpack.c.l.b16 %v3087
    %v3127 = vunpack.c.l.b16 %v3088
    %v3128 = vunpack.c.l.b16 %v3089
    %v3129 = vunpack.c.l.b16 %v3090
    %v3130 = vunpack.c.l.b16 %v3091
    %v3131 = vunpack.c.l.b16 %v3092
    %v3132 = vunpack.c.l.b16 %v3093
    %v3133 = vunpack.c.l.b16 %v3094
    %v3134 = vunpack.c.l.b16 %v3095
    %v3135 = vunpack.c.l.b16 %v3096
    %v3136 = vunpack.c.l.b16 %v3097
    %v3137 = vunpack.c.l.b16 %v3098
    %v3138 = vunpack.c.l.b16 %v3099
    %v3139 = vpack.c.b16 %v3124, %v3123
    %v3140 = vpack.c.b16 %v3126, %v3125
    %v3141 = vpack.c.b16 %v3128, %v3127
    %v3142 = vpack.c.b16 %v3130, %v3129
    %v3143 = vpack.c.b16 %v3132, %v3131
    %v3144 = vpack.c.b16 %v3134, %v3133
    %v3145 = vpack.c.b16 %v3136, %v3135
    %v3146 = vpack.c.b16 %v3138, %v3137
    %3155 = vmatprep.subr.bf16.mxu0 0
    %3156 = vmatpush1.bf16.xpose.msra.mxu0 %v3139
    %3157 = vmatprep.subr.bf16.mxu0 0
    %3158 = vmatpush1.bf16.xpose.msra.mxu0 %v3140
    %3159 = vmatprep.subr.bf16.mxu0 0
    %3160 = vmatpush1.bf16.xpose.msra.mxu0 %v3141
    %3161 = vmatprep.subr.bf16.mxu0 0
    %3162 = vmatpush1.bf16.xpose.msra.mxu0 %v3142
    %3163 = vmatprep.subr.bf16.mxu0 0
    %3164 = vmatpush1.bf16.xpose.msra.mxu0 %v3143
    %3165 = vmatprep.subr.bf16.mxu0 0
    %3166 = vmatpush1.bf16.xpose.msra.mxu0 %v3144
    %3167 = vmatprep.subr.bf16.mxu0 0
    %3168 = vmatpush1.bf16.xpose.msra.mxu0 %v3145
    %3169 = vmatprep.subr.bf16.mxu0 0
    %3170 = vmatpush1.bf16.xpose.msra.mxu0 %v3146
    %3171 = vmatprep.subr.bf16.mxu0 0
    %3172 = vmatpush1.bf16.xpose.msra.mxu0 0
    %3173 = vmatprep.subr.bf16.mxu0 0
    %3174 = vmatpush1.bf16.xpose.msra.mxu0 0
    %3175 = vmatprep.subr.bf16.mxu0 0
    %3176 = vmatpush1.bf16.xpose.msra.mxu0 0
    %3177 = vmatprep.subr.bf16.mxu0 0
    %3178 = vmatpush1.bf16.xpose.msra.mxu0 0
    %3179 = vmatprep.subr.bf16.mxu0 0
    %3180 = vmatpush1.bf16.xpose.msra.mxu0 0
    %3181 = vmatprep.subr.bf16.mxu0 0
    %3182 = vmatpush1.bf16.xpose.msra.mxu0 0
    %3183 = vmatprep.subr.bf16.mxu0 0
    %3184 = vmatpush1.bf16.xpose.msra.mxu0 0
    %3185 = vmatprep.subr.bf16.mxu0 0
    %3186 = vmatpush1.bf16.xpose.msra.mxu0 0
    %3187 = vmatprep.mubr.bf16.mxu0 0
    %3188 = vmatmul.mubr.bf16.gmra.mrb[0].mxu0 %v3083
    %v3189 = vpop.f32.mrb[0].mxu0
    %v3190 = vadd.f32 %v3105, %v3189
    %v3191 = vpop.f32.mrb[0].mxu0
    %v3192 = vpop.f32.mrb[0].mxu0
    %v3193 = vadd.f32 %v3105, %v3192
    %v3194 = vpop.f32.mrb[0].mxu0
    %3195 = vdwg.mxu0
    %v3196 = vadd.f32 %v3190, %v1752
    %v3197 = vadd.f32 %v3193, %v1753
    %v3198 = vld [vmem:[%s17] sm:$0x1]
    %v3199 = vld [vmem:[#allocation14] sm:$0x1]
    %3200 = vadd.xlane.f32.xlu0 %v3196
    %v3201 = vpop.xlane.xlu0 %3200
    %3202 = vadd.xlane.f32.xlu0 %v3197
    %v3203 = vpop.xlane.xlu0 %3202
    %v3204 = vmul.f32 %v3201, 0.03125
    %v3205 = vmul.f32 %v3203, 0.03125
    %v3206 = vmul.f32 %v3196, %v3196
    %v3207 = vmul.f32 %v3197, %v3197
    %3208 = vadd.xlane.f32.xlu0 %v3206
    %v3209 = vpop.xlane.xlu0 %3208
    %3210 = vadd.xlane.f32.xlu0 %v3207
    %v3211 = vpop.xlane.xlu0 %3210
    %v3212 = vmul.f32 %v3209, 0.03125
    %v3213 = vmul.f32 %v3211, 0.03125
    %v3214 = vmul.f32 %v3204, %v3204
    %v3215 = vmul.f32 %v3205, %v3205
    %v3216 = vsub.f32 %v3212, %v3214
    %v3217 = vsub.f32 %v3213, %v3215
    %v3218 = vsub.f32 %v3196, %v3204
    %v3219 = vsub.f32 %v3197, %v3205
    %v3220 = vadd.f32 %v3216, 1e-05
    %v3221 = vadd.f32 %v3217, 1e-05
    %v3222 = vrsqrt.pop %v3220
    %v3223 = vrsqrt.pop %v3221
    %v3224 = vmul.f32 %v3218, %v3222
    %v3225 = vmul.f32 %v3219, %v3223
    %v3227 = vlaneseq
    %v3228 = vshrl.u32 %v3227, 7
    %v3229 = vsub.s32 0, %v3228
    %v3230 = vrot.slane %v3198, %v3229
    %v3232 = vmul.f32 %v3224, %v3230
    %v3233 = vmul.f32 %v3225, %v3230
    %v3235 = vlaneseq
    %v3236 = vshrl.u32 %v3235, 7
    %v3237 = vsub.s32 0, %v3236
    %v3238 = vrot.slane %v3199, %v3237
    %v3240 = vadd.f32 %v3232, %v3238
    %v3241 = vadd.f32 %v3233, %v3238
    %v3242 = vpack.c.bf16 %v3241, %v3240
    %v3243 = vld [vmem:[#allocation16] sm:$0xf]
    %v3244 = vld [vmem:[#allocation16 + $0x4] sm:$0xf]
    %v3245 = vld [vmem:[#allocation16 + $0x8] sm:$0xf]
    %v3246 = vld [vmem:[#allocation16 + $0xc] sm:$0xf]
    %v3247 = vld [vmem:[#allocation16 + $0x10] sm:$0xf]
    %v3248 = vld [vmem:[#allocation16 + $0x14] sm:$0xf]
    %v3249 = vld [vmem:[#allocation16 + $0x18] sm:$0xf]
    %v3250 = vld [vmem:[#allocation16 + $0x1c] sm:$0xf]
    %v3251 = vld [vmem:[#allocation16 + $0x20] sm:$0xf]
    %v3252 = vld [vmem:[#allocation16 + $0x24] sm:$0xf]
    %v3253 = vld [vmem:[#allocation16 + $0x28] sm:$0xf]
    %v3254 = vld [vmem:[#allocation16 + $0x2c] sm:$0xf]
    %v3255 = vld [vmem:[#allocation16 + $0x30] sm:$0xf]
    %v3256 = vld [vmem:[#allocation16 + $0x34] sm:$0xf]
    %v3257 = vld [vmem:[#allocation16 + $0x38] sm:$0xf]
    %v3258 = vld [vmem:[#allocation16 + $0x3c] sm:$0xf]
    %v3259 = vld [vmem:[#allocation17] sm:$0x1]
    %v3261 = vlaneseq
    %v3262 = vshrl.u32 %v3261, 7
    %v3263 = vsub.s32 0, %v3262
    %v3264 = vrot.slane %v3259, %v3263
    %v3282 = vunpack.c.l.b16 %v3243
    %v3283 = vunpack.c.l.b16 %v3244
    %v3284 = vunpack.c.l.b16 %v3245
    %v3285 = vunpack.c.l.b16 %v3246
    %v3286 = vunpack.c.l.b16 %v3247
    %v3287 = vunpack.c.l.b16 %v3248
    %v3288 = vunpack.c.l.b16 %v3249
    %v3289 = vunpack.c.l.b16 %v3250
    %v3290 = vunpack.c.l.b16 %v3251
    %v3291 = vunpack.c.l.b16 %v3252
    %v3292 = vunpack.c.l.b16 %v3253
    %v3293 = vunpack.c.l.b16 %v3254
    %v3294 = vunpack.c.l.b16 %v3255
    %v3295 = vunpack.c.l.b16 %v3256
    %v3296 = vunpack.c.l.b16 %v3257
    %v3297 = vunpack.c.l.b16 %v3258
    %v3298 = vpack.c.b16 %v3283, %v3282
    %v3299 = vpack.c.b16 %v3285, %v3284
    %v3300 = vpack.c.b16 %v3287, %v3286
    %v3301 = vpack.c.b16 %v3289, %v3288
    %v3302 = vpack.c.b16 %v3291, %v3290
    %v3303 = vpack.c.b16 %v3293, %v3292
    %v3304 = vpack.c.b16 %v3295, %v3294
    %v3305 = vpack.c.b16 %v3297, %v3296
    %3314 = vmatprep.subr.bf16.mxu0 0
    %3315 = vmatpush1.bf16.xpose.msra.mxu0 %v3298
    %3316 = vmatprep.subr.bf16.mxu0 0
    %3317 = vmatpush1.bf16.xpose.msra.mxu0 %v3299
    %3318 = vmatprep.subr.bf16.mxu0 0
    %3319 = vmatpush1.bf16.xpose.msra.mxu0 %v3300
    %3320 = vmatprep.subr.bf16.mxu0 0
    %3321 = vmatpush1.bf16.xpose.msra.mxu0 %v3301
    %3322 = vmatprep.subr.bf16.mxu0 0
    %3323 = vmatpush1.bf16.xpose.msra.mxu0 %v3302
    %3324 = vmatprep.subr.bf16.mxu0 0
    %3325 = vmatpush1.bf16.xpose.msra.mxu0 %v3303
    %3326 = vmatprep.subr.bf16.mxu0 0
    %3327 = vmatpush1.bf16.xpose.msra.mxu0 %v3304
    %3328 = vmatprep.subr.bf16.mxu0 0
    %3329 = vmatpush1.bf16.xpose.msra.mxu0 %v3305
    %3330 = vmatprep.subr.bf16.mxu0 0
    %3331 = vmatpush1.bf16.xpose.msra.mxu0 0
    %3332 = vmatprep.subr.bf16.mxu0 0
    %3333 = vmatpush1.bf16.xpose.msra.mxu0 0
    %3334 = vmatprep.subr.bf16.mxu0 0
    %3335 = vmatpush1.bf16.xpose.msra.mxu0 0
    %3336 = vmatprep.subr.bf16.mxu0 0
    %3337 = vmatpush1.bf16.xpose.msra.mxu0 0
    %3338 = vmatprep.subr.bf16.mxu0 0
    %3339 = vmatpush1.bf16.xpose.msra.mxu0 0
    %3340 = vmatprep.subr.bf16.mxu0 0
    %3341 = vmatpush1.bf16.xpose.msra.mxu0 0
    %3342 = vmatprep.subr.bf16.mxu0 0
    %3343 = vmatpush1.bf16.xpose.msra.mxu0 0
    %3344 = vmatprep.subr.bf16.mxu0 0
    %3345 = vmatpush1.bf16.xpose.msra.mxu0 0
    %3346 = vmatprep.mubr.bf16.mxu0 0
    %3347 = vmatmul.mubr.bf16.gmra.mrb[0].mxu0 %v3242
    %v3348 = vpop.f32.mrb[0].mxu0
    %v3349 = vadd.f32 %v3264, %v3348
    %v3350 = vpop.f32.mrb[0].mxu0
    %v3351 = vpop.f32.mrb[0].mxu0
    %v3352 = vadd.f32 %v3264, %v3351
    %v3353 = vpop.f32.mrb[0].mxu0
    %3354 = vdwg.mxu0
    %v3355 = vmax.f32 %v3349, 0.0
    %v3356 = vmax.f32 %v3352, 0.0
    %v3357 = vpack.c.bf16 %v3356, %v3355
    %v3358 = vld [vmem:[#allocation19] sm:$0xf]
    %v3359 = vld [vmem:[#allocation19 + $0x4] sm:$0xf]
    %v3360 = vld [vmem:[#allocation19 + $0x8] sm:$0xf]
    %v3361 = vld [vmem:[#allocation19 + $0xc] sm:$0xf]
    %v3362 = vld [vmem:[#allocation19 + $0x10] sm:$0xf]
    %v3363 = vld [vmem:[#allocation19 + $0x14] sm:$0xf]
    %v3364 = vld [vmem:[#allocation19 + $0x18] sm:$0xf]
    %v3365 = vld [vmem:[#allocation19 + $0x1c] sm:$0xf]
    %v3366 = vld [vmem:[#allocation19 + $0x20] sm:$0xf]
    %v3367 = vld [vmem:[#allocation19 + $0x24] sm:$0xf]
    %v3368 = vld [vmem:[#allocation19 + $0x28] sm:$0xf]
    %v3369 = vld [vmem:[#allocation19 + $0x2c] sm:$0xf]
    %v3370 = vld [vmem:[#allocation19 + $0x30] sm:$0xf]
    %v3371 = vld [vmem:[#allocation19 + $0x34] sm:$0xf]
    %v3372 = vld [vmem:[#allocation19 + $0x38] sm:$0xf]
    %v3373 = vld [vmem:[#allocation19 + $0x3c] sm:$0xf]
    %v3374 = vld [vmem:[#allocation20] sm:$0x1]
    %v3376 = vlaneseq
    %v3377 = vshrl.u32 %v3376, 7
    %v3378 = vsub.s32 0, %v3377
    %v3379 = vrot.slane %v3374, %v3378
    %v3397 = vunpack.c.l.b16 %v3358
    %v3398 = vunpack.c.l.b16 %v3359
    %v3399 = vunpack.c.l.b16 %v3360
    %v3400 = vunpack.c.l.b16 %v3361
    %v3401 = vunpack.c.l.b16 %v3362
    %v3402 = vunpack.c.l.b16 %v3363
    %v3403 = vunpack.c.l.b16 %v3364
    %v3404 = vunpack.c.l.b16 %v3365
    %v3405 = vunpack.c.l.b16 %v3366
    %v3406 = vunpack.c.l.b16 %v3367
    %v3407 = vunpack.c.l.b16 %v3368
    %v3408 = vunpack.c.l.b16 %v3369
    %v3409 = vunpack.c.l.b16 %v3370
    %v3410 = vunpack.c.l.b16 %v3371
    %v3411 = vunpack.c.l.b16 %v3372
    %v3412 = vunpack.c.l.b16 %v3373
    %v3413 = vpack.c.b16 %v3398, %v3397
    %v3414 = vpack.c.b16 %v3400, %v3399
    %v3415 = vpack.c.b16 %v3402, %v3401
    %v3416 = vpack.c.b16 %v3404, %v3403
    %v3417 = vpack.c.b16 %v3406, %v3405
    %v3418 = vpack.c.b16 %v3408, %v3407
    %v3419 = vpack.c.b16 %v3410, %v3409
    %v3420 = vpack.c.b16 %v3412, %v3411
    %3429 = vmatprep.subr.bf16.mxu0 0
    %3430 = vmatpush1.bf16.xpose.msra.mxu0 %v3413
    %3431 = vmatprep.subr.bf16.mxu0 0
    %3432 = vmatpush1.bf16.xpose.msra.mxu0 %v3414
    %3433 = vmatprep.subr.bf16.mxu0 0
    %3434 = vmatpush1.bf16.xpose.msra.mxu0 %v3415
    %3435 = vmatprep.subr.bf16.mxu0 0
    %3436 = vmatpush1.bf16.xpose.msra.mxu0 %v3416
    %3437 = vmatprep.subr.bf16.mxu0 0
    %3438 = vmatpush1.bf16.xpose.msra.mxu0 %v3417
    %3439 = vmatprep.subr.bf16.mxu0 0
    %3440 = vmatpush1.bf16.xpose.msra.mxu0 %v3418
    %3441 = vmatprep.subr.bf16.mxu0 0
    %3442 = vmatpush1.bf16.xpose.msra.mxu0 %v3419
    %3443 = vmatprep.subr.bf16.mxu0 0
    %3444 = vmatpush1.bf16.xpose.msra.mxu0 %v3420
    %3445 = vmatprep.subr.bf16.mxu0 0
    %3446 = vmatpush1.bf16.xpose.msra.mxu0 0
    %3447 = vmatprep.subr.bf16.mxu0 0
    %3448 = vmatpush1.bf16.xpose.msra.mxu0 0
    %3449 = vmatprep.subr.bf16.mxu0 0
    %3450 = vmatpush1.bf16.xpose.msra.mxu0 0
    %3451 = vmatprep.subr.bf16.mxu0 0
    %3452 = vmatpush1.bf16.xpose.msra.mxu0 0
    %3453 = vmatprep.subr.bf16.mxu0 0
    %3454 = vmatpush1.bf16.xpose.msra.mxu0 0
    %3455 = vmatprep.subr.bf16.mxu0 0
    %3456 = vmatpush1.bf16.xpose.msra.mxu0 0
    %3457 = vmatprep.subr.bf16.mxu0 0
    %3458 = vmatpush1.bf16.xpose.msra.mxu0 0
    %3459 = vmatprep.subr.bf16.mxu0 0
    %3460 = vmatpush1.bf16.xpose.msra.mxu0 0
    %3461 = vmatprep.mubr.bf16.mxu0 0
    %3462 = vmatmul.mubr.bf16.gmra.mrb[0].mxu0 %v3357
    %v3463 = vpop.f32.mrb[0].mxu0
    %v3464 = vadd.f32 %v3379, %v3463
    %v3465 = vpop.f32.mrb[0].mxu0
    %v3466 = vpop.f32.mrb[0].mxu0
    %v3467 = vadd.f32 %v3379, %v3466
    %v3468 = vpop.f32.mrb[0].mxu0
    %3469 = vdwg.mxu0
    %v3470 = vadd.f32 %v3240, %v3464
    %v3471 = vadd.f32 %v3241, %v3467
    %v3472 = vld [vmem:[#allocation22] sm:$0x1]
    %v3473 = vld [vmem:[#allocation23] sm:$0x1]
    %3474 = vadd.xlane.f32.xlu0 %v3470
    %v3475 = vpop.xlane.xlu0 %3474
    %3476 = vadd.xlane.f32.xlu0 %v3471
    %v3477 = vpop.xlane.xlu0 %3476
    %v3478 = vmul.f32 %v3475, 0.03125
    %v3479 = vmul.f32 %v3477, 0.03125
    %v3480 = vmul.f32 %v3470, %v3470
    %v3481 = vmul.f32 %v3471, %v3471
    %3482 = vadd.xlane.f32.xlu0 %v3480
    %v3483 = vpop.xlane.xlu0 %3482
    %3484 = vadd.xlane.f32.xlu0 %v3481
    %v3485 = vpop.xlane.xlu0 %3484
    %v3486 = vmul.f32 %v3483, 0.03125
    %v3487 = vmul.f32 %v3485, 0.03125
    %v3488 = vmul.f32 %v3478, %v3478
    %v3489 = vmul.f32 %v3479, %v3479
    %v3490 = vsub.f32 %v3486, %v3488
    %v3491 = vsub.f32 %v3487, %v3489
    %v3492 = vsub.f32 %v3470, %v3478
    %v3493 = vsub.f32 %v3471, %v3479
    %v3494 = vadd.f32 %v3490, 1e-05
    %v3495 = vadd.f32 %v3491, 1e-05
    %v3496 = vrsqrt.pop %v3494
    %v3497 = vrsqrt.pop %v3495
    %v3498 = vmul.f32 %v3492, %v3496
    %v3499 = vmul.f32 %v3493, %v3497
    %v3501 = vlaneseq
    %v3502 = vshrl.u32 %v3501, 7
    %v3503 = vsub.s32 0, %v3502
    %v3504 = vrot.slane %v3472, %v3503
    %v3506 = vmul.f32 %v3498, %v3504
    %v3507 = vmul.f32 %v3499, %v3504
    %v3509 = vlaneseq
    %v3510 = vshrl.u32 %v3509, 7
    %v3511 = vsub.s32 0, %v3510
    %v3512 = vrot.slane %v3473, %v3511
    %v3514 = vadd.f32 %v3506, %v3512
    %v3515 = vadd.f32 %v3507, %v3512
    %v3516 = vpack.c.bf16 %v3515, %v3514
    %s3517 = scalar_lea.vmem [#allocation7], 192
    %v3518 = vld [vmem:[%s3517] sm:$0xf]
    %v3519 = vld [vmem:[%s3517 + $0x4] sm:$0xf]
    %v3520 = vld [vmem:[%s3517 + $0x8] sm:$0xf]
    %v3521 = vld [vmem:[%s3517 + $0xc] sm:$0xf]
    %v3522 = vld [vmem:[%s3517 + $0x10] sm:$0xf]
    %v3523 = vld [vmem:[%s3517 + $0x14] sm:$0xf]
    %v3524 = vld [vmem:[%s3517 + $0x18] sm:$0xf]
    %v3525 = vld [vmem:[%s3517 + $0x1c] sm:$0xf]
    %v3526 = vld [vmem:[%s3517 + $0x20] sm:$0xf]
    %v3527 = vld [vmem:[%s3517 + $0x24] sm:$0xf]
    %v3528 = vld [vmem:[%s3517 + $0x28] sm:$0xf]
    %v3529 = vld [vmem:[%s3517 + $0x2c] sm:$0xf]
    %v3530 = vld [vmem:[%s3517 + $0x30] sm:$0xf]
    %v3531 = vld [vmem:[%s3517 + $0x34] sm:$0xf]
    %v3532 = vld [vmem:[%s3517 + $0x38] sm:$0xf]
    %v3533 = vld [vmem:[%s3517 + $0x3c] sm:$0xf]
    %v3534 = vld [vmem:[%s3517 + $0x40] sm:$0xf]
    %v3535 = vld [vmem:[%s3517 + $0x44] sm:$0xf]
    %v3536 = vld [vmem:[%s3517 + $0x48] sm:$0xf]
    %v3537 = vld [vmem:[%s3517 + $0x4c] sm:$0xf]
    %v3538 = vld [vmem:[%s3517 + $0x50] sm:$0xf]
    %v3539 = vld [vmem:[%s3517 + $0x54] sm:$0xf]
    %v3540 = vld [vmem:[%s3517 + $0x58] sm:$0xf]
    %v3541 = vld [vmem:[%s3517 + $0x5c] sm:$0xf]
    %v3542 = vld [vmem:[%s3517 + $0x60] sm:$0xf]
    %v3543 = vld [vmem:[%s3517 + $0x64] sm:$0xf]
    %v3544 = vld [vmem:[%s3517 + $0x68] sm:$0xf]
    %v3545 = vld [vmem:[%s3517 + $0x6c] sm:$0xf]
    %v3546 = vld [vmem:[%s3517 + $0x70] sm:$0xf]
    %v3547 = vld [vmem:[%s3517 + $0x74] sm:$0xf]
    %v3548 = vld [vmem:[%s3517 + $0x78] sm:$0xf]
    %v3549 = vld [vmem:[%s3517 + $0x7c] sm:$0xf]
    %v3550 = vld [vmem:[%s3517 + $0x80] sm:$0xf]
    %v3551 = vld [vmem:[%s3517 + $0x84] sm:$0xf]
    %v3552 = vld [vmem:[%s3517 + $0x88] sm:$0xf]
    %v3553 = vld [vmem:[%s3517 + $0x8c] sm:$0xf]
    %v3554 = vld [vmem:[%s3517 + $0x90] sm:$0xf]
    %v3555 = vld [vmem:[%s3517 + $0x94] sm:$0xf]
    %v3556 = vld [vmem:[%s3517 + $0x98] sm:$0xf]
    %v3557 = vld [vmem:[%s3517 + $0x9c] sm:$0xf]
    %v3558 = vld [vmem:[%s3517 + $0xa0] sm:$0xf]
    %v3559 = vld [vmem:[%s3517 + $0xa4] sm:$0xf]
    %v3560 = vld [vmem:[%s3517 + $0xa8] sm:$0xf]
    %v3561 = vld [vmem:[%s3517 + $0xac] sm:$0xf]
    %v3562 = vld [vmem:[%s3517 + $0xb0] sm:$0xf]
    %v3563 = vld [vmem:[%s3517 + $0xb4] sm:$0xf]
    %v3564 = vld [vmem:[%s3517 + $0xb8] sm:$0xf]
    %v3565 = vld [vmem:[%s3517 + $0xbc] sm:$0xf]
    %s3566 = scalar_lea.vmem %s6, 3
    %v3567 = vld [vmem:[%s3566] sm:$0x7]
    %v3569 = vlaneseq
    %v3570 = vshrl.u32 %v3569, 7
    %v3571 = vsub.s32 0, %v3570
    %v3572 = vrot.slane %v3567, %v3571
    %v3573 = vlaneseq
    %v3574 = vshrl.u32 %v3573, 7
    %v3575 = vsub.s32 1, %v3574
    %v3576 = vrot.slane %v3567, %v3575
    %v3577 = vlaneseq
    %v3578 = vshrl.u32 %v3577, 7
    %v3579 = vsub.s32 2, %v3578
    %v3580 = vrot.slane %v3567, %v3579
    %v3632 = vunpack.c.l.b16 %v3518
    %v3633 = vunpack.c.l.b16 %v3519
    %v3634 = vunpack.c.l.b16 %v3520
    %v3635 = vunpack.c.l.b16 %v3521
    %v3636 = vunpack.c.l.b16 %v3522
    %v3637 = vunpack.c.l.b16 %v3523
    %v3638 = vunpack.c.l.b16 %v3524
    %v3639 = vunpack.c.l.b16 %v3525
    %v3640 = vunpack.c.l.b16 %v3526
    %v3641 = vunpack.c.l.b16 %v3527
    %v3642 = vunpack.c.l.b16 %v3528
    %v3643 = vunpack.c.l.b16 %v3529
    %v3644 = vunpack.c.l.b16 %v3530
    %v3645 = vunpack.c.l.b16 %v3531
    %v3646 = vunpack.c.l.b16 %v3532
    %v3647 = vunpack.c.l.b16 %v3533
    %v3648 = vunpack.c.l.b16 %v3534
    %v3649 = vunpack.c.l.b16 %v3535
    %v3650 = vunpack.c.l.b16 %v3536
    %v3651 = vunpack.c.l.b16 %v3537
    %v3652 = vunpack.c.l.b16 %v3538
    %v3653 = vunpack.c.l.b16 %v3539
    %v3654 = vunpack.c.l.b16 %v3540
    %v3655 = vunpack.c.l.b16 %v3541
    %v3656 = vunpack.c.l.b16 %v3542
    %v3657 = vunpack.c.l.b16 %v3543
    %v3658 = vunpack.c.l.b16 %v3544
    %v3659 = vunpack.c.l.b16 %v3545
    %v3660 = vunpack.c.l.b16 %v3546
    %v3661 = vunpack.c.l.b16 %v3547
    %v3662 = vunpack.c.l.b16 %v3548
    %v3663 = vunpack.c.l.b16 %v3549
    %v3664 = vunpack.c.l.b16 %v3550
    %v3665 = vunpack.c.l.b16 %v3551
    %v3666 = vunpack.c.l.b16 %v3552
    %v3667 = vunpack.c.l.b16 %v3553
    %v3668 = vunpack.c.l.b16 %v3554
    %v3669 = vunpack.c.l.b16 %v3555
    %v3670 = vunpack.c.l.b16 %v3556
    %v3671 = vunpack.c.l.b16 %v3557
    %v3672 = vunpack.c.l.b16 %v3558
    %v3673 = vunpack.c.l.b16 %v3559
    %v3674 = vunpack.c.l.b16 %v3560
    %v3675 = vunpack.c.l.b16 %v3561
    %v3676 = vunpack.c.l.b16 %v3562
    %v3677 = vunpack.c.l.b16 %v3563
    %v3678 = vunpack.c.l.b16 %v3564
    %v3679 = vunpack.c.l.b16 %v3565
    %v3680 = vpack.c.b16 %v3633, %v3632
    %v3681 = vpack.c.b16 %v3635, %v3634
    %v3682 = vpack.c.b16 %v3637, %v3636
    %v3683 = vpack.c.b16 %v3639, %v3638
    %v3684 = vpack.c.b16 %v3641, %v3640
    %v3685 = vpack.c.b16 %v3643, %v3642
    %v3686 = vpack.c.b16 %v3645, %v3644
    %v3687 = vpack.c.b16 %v3647, %v3646
    %v3688 = vpack.c.b16 %v3649, %v3648
    %v3689 = vpack.c.b16 %v3651, %v3650
    %v3690 = vpack.c.b16 %v3653, %v3652
    %v3691 = vpack.c.b16 %v3655, %v3654
    %v3692 = vpack.c.b16 %v3657, %v3656
    %v3693 = vpack.c.b16 %v3659, %v3658
    %v3694 = vpack.c.b16 %v3661, %v3660
    %v3695 = vpack.c.b16 %v3663, %v3662
    %v3696 = vpack.c.b16 %v3665, %v3664
    %v3697 = vpack.c.b16 %v3667, %v3666
    %v3698 = vpack.c.b16 %v3669, %v3668
    %v3699 = vpack.c.b16 %v3671, %v3670
    %v3700 = vpack.c.b16 %v3673, %v3672
    %v3701 = vpack.c.b16 %v3675, %v3674
    %v3702 = vpack.c.b16 %v3677, %v3676
    %v3703 = vpack.c.b16 %v3679, %v3678
    %3728 = vmatprep.subr.bf16.mxu0 0
    %3729 = vmatpush1.bf16.xpose.msra.mxu0 %v3680
    %3730 = vmatprep.subr.bf16.mxu0 0
    %3731 = vmatpush1.bf16.xpose.msra.mxu0 %v3681
    %3732 = vmatprep.subr.bf16.mxu0 0
    %3733 = vmatpush1.bf16.xpose.msra.mxu0 %v3682
    %3734 = vmatprep.subr.bf16.mxu0 0
    %3735 = vmatpush1.bf16.xpose.msra.mxu0 %v3683
    %3736 = vmatprep.subr.bf16.mxu0 0
    %3737 = vmatpush1.bf16.xpose.msra.mxu0 %v3684
    %3738 = vmatprep.subr.bf16.mxu0 0
    %3739 = vmatpush1.bf16.xpose.msra.mxu0 %v3685
    %3740 = vmatprep.subr.bf16.mxu0 0
    %3741 = vmatpush1.bf16.xpose.msra.mxu0 %v3686
    %3742 = vmatprep.subr.bf16.mxu0 0
    %3743 = vmatpush1.bf16.xpose.msra.mxu0 %v3687
    %3744 = vmatprep.subr.bf16.mxu0 0
    %3745 = vmatpush1.bf16.xpose.msra.mxu0 %v3688
    %3746 = vmatprep.subr.bf16.mxu0 0
    %3747 = vmatpush1.bf16.xpose.msra.mxu0 %v3689
    %3748 = vmatprep.subr.bf16.mxu0 0
    %3749 = vmatpush1.bf16.xpose.msra.mxu0 %v3690
    %3750 = vmatprep.subr.bf16.mxu0 0
    %3751 = vmatpush1.bf16.xpose.msra.mxu0 %v3691
    %3752 = vmatprep.subr.bf16.mxu0 0
    %3753 = vmatpush1.bf16.xpose.msra.mxu0 %v3692
    %3754 = vmatprep.subr.bf16.mxu0 0
    %3755 = vmatpush1.bf16.xpose.msra.mxu0 %v3693
    %3756 = vmatprep.subr.bf16.mxu0 0
    %3757 = vmatpush1.bf16.xpose.msra.mxu0 %v3694
    %3758 = vmatprep.subr.bf16.mxu0 0
    %3759 = vmatpush1.bf16.xpose.msra.mxu0 %v3695
    %3760 = vmatprep.mubr.bf16.mxu0 0
    %3761 = vmatmul.mubr.bf16.gmra.mrb[0].mxu0 %v3516
    %v3762 = vpop.f32.mrb[0].mxu0
    %v3763 = vadd.f32 %v3572, %v3762
    %v3764 = vpop.f32.mrb[0].mxu0
    %v3765 = vadd.f32 %v3576, %v3764
    %v3766 = vpop.f32.mrb[0].mxu0
    %v3767 = vadd.f32 %v3572, %v3766
    %v3768 = vpop.f32.mrb[0].mxu0
    %v3769 = vadd.f32 %v3576, %v3768
    %3770 = vdwg.mxu0
    %3771 = vmatprep.subr.bf16.mxu0 0
    %3772 = vmatpush1.bf16.xpose.msra.mxu0 %v3696
    %3773 = vmatprep.subr.bf16.mxu0 0
    %3774 = vmatpush1.bf16.xpose.msra.mxu0 %v3697
    %3775 = vmatprep.subr.bf16.mxu0 0
    %3776 = vmatpush1.bf16.xpose.msra.mxu0 %v3698
    %3777 = vmatprep.subr.bf16.mxu0 0
    %3778 = vmatpush1.bf16.xpose.msra.mxu0 %v3699
    %3779 = vmatprep.subr.bf16.mxu0 0
    %3780 = vmatpush1.bf16.xpose.msra.mxu0 %v3700
    %3781 = vmatprep.subr.bf16.mxu0 0
    %3782 = vmatpush1.bf16.xpose.msra.mxu0 %v3701
    %3783 = vmatprep.subr.bf16.mxu0 0
    %3784 = vmatpush1.bf16.xpose.msra.mxu0 %v3702
    %3785 = vmatprep.subr.bf16.mxu0 0
    %3786 = vmatpush1.bf16.xpose.msra.mxu0 %v3703
    %3787 = vmatprep.subr.bf16.mxu0 0
    %3788 = vmatpush1.bf16.xpose.msra.mxu0 0
    %3789 = vmatprep.subr.bf16.mxu0 0
    %3790 = vmatpush1.bf16.xpose.msra.mxu0 0
    %3791 = vmatprep.subr.bf16.mxu0 0
    %3792 = vmatpush1.bf16.xpose.msra.mxu0 0
    %3793 = vmatprep.subr.bf16.mxu0 0
    %3794 = vmatpush1.bf16.xpose.msra.mxu0 0
    %3795 = vmatprep.subr.bf16.mxu0 0
    %3796 = vmatpush1.bf16.xpose.msra.mxu0 0
    %3797 = vmatprep.subr.bf16.mxu0 0
    %3798 = vmatpush1.bf16.xpose.msra.mxu0 0
    %3799 = vmatprep.subr.bf16.mxu0 0
    %3800 = vmatpush1.bf16.xpose.msra.mxu0 0
    %3801 = vmatprep.subr.bf16.mxu0 0
    %3802 = vmatpush1.bf16.xpose.msra.mxu0 0
    %3803 = vmatprep.mubr.bf16.mxu0 0
    %3804 = vmatmul.mubr.bf16.gmra.mrb[0].mxu0 %v3516
    %v3805 = vpop.f32.mrb[0].mxu0
    %v3806 = vadd.f32 %v3580, %v3805
    %v3807 = vpop.f32.mrb[0].mxu0
    %v3808 = vpop.f32.mrb[0].mxu0
    %v3809 = vadd.f32 %v3580, %v3808
    %v3810 = vpop.f32.mrb[0].mxu0
    %3811 = vdwg.mxu0
    %3813 = vrot.lane.b32.xlu0 %v3763, 96
    %v3814 = vpop.permute.xlu0 %3813
    %3816 = vrot.lane.b32.xlu0 %v3763, 64
    %v3817 = vpop.permute.xlu0 %3816
    %3819 = vrot.lane.b32.xlu0 %v3763, 32
    %v3820 = vpop.permute.xlu0 %3819
    %3823 = vrot.lane.b32.xlu0 %v3767, 96
    %v3824 = vpop.permute.xlu0 %3823
    %3826 = vrot.lane.b32.xlu0 %v3767, 64
    %v3827 = vpop.permute.xlu0 %3826
    %3829 = vrot.lane.b32.xlu0 %v3767, 32
    %v3830 = vpop.permute.xlu0 %3829
    %v3832 = vpack.c.bf16 %v3763, %v3763
    %v3833 = vpack.c.bf16 %v3814, %v3814
    %v3834 = vpack.c.bf16 %v3817, %v3817
    %v3835 = vpack.c.bf16 %v3820, %v3820
    %v3836 = vpack.c.bf16 %v3767, %v3767
    %v3837 = vpack.c.bf16 %v3824, %v3824
    %v3838 = vpack.c.bf16 %v3827, %v3827
    %v3839 = vpack.c.bf16 %v3830, %v3830
    %3841 = vrot.lane.b32.xlu0 %v3765, 96
    %v3842 = vpop.permute.xlu0 %3841
    %3844 = vrot.lane.b32.xlu0 %v3765, 64
    %v3845 = vpop.permute.xlu0 %3844
    %3847 = vrot.lane.b32.xlu0 %v3765, 32
    %v3848 = vpop.permute.xlu0 %3847
    %3851 = vrot.lane.b32.xlu0 %v3769, 96
    %v3852 = vpop.permute.xlu0 %3851
    %3854 = vrot.lane.b32.xlu0 %v3769, 64
    %v3855 = vpop.permute.xlu0 %3854
    %3857 = vrot.lane.b32.xlu0 %v3769, 32
    %v3858 = vpop.permute.xlu0 %3857
    %v3860 = vpack.c.bf16 %v3765, %v3765
    %v3861 = vpack.c.bf16 %v3842, %v3842
    %v3862 = vpack.c.bf16 %v3845, %v3845
    %v3863 = vpack.c.bf16 %v3848, %v3848
    %v3864 = vpack.c.bf16 %v3769, %v3769
    %v3865 = vpack.c.bf16 %v3852, %v3852
    %v3866 = vpack.c.bf16 %v3855, %v3855
    %v3867 = vpack.c.bf16 %v3858, %v3858
    %3869 = vrot.lane.b32.xlu0 %v3806, 96
    %v3870 = vpop.permute.xlu0 %3869
    %3872 = vrot.lane.b32.xlu0 %v3806, 64
    %v3873 = vpop.permute.xlu0 %3872
    %3875 = vrot.lane.b32.xlu0 %v3806, 32
    %v3876 = vpop.permute.xlu0 %3875
    %3879 = vrot.lane.b32.xlu0 %v3809, 96
    %v3880 = vpop.permute.xlu0 %3879
    %3882 = vrot.lane.b32.xlu0 %v3809, 64
    %v3883 = vpop.permute.xlu0 %3882
    %3885 = vrot.lane.b32.xlu0 %v3809, 32
    %v3886 = vpop.permute.xlu0 %3885
    %v3888 = vpack.c.bf16 %v3806, %v3806
    %v3889 = vpack.c.bf16 %v3870, %v3870
    %v3890 = vpack.c.bf16 %v3873, %v3873
    %v3891 = vpack.c.bf16 %v3876, %v3876
    %v3892 = vpack.c.bf16 %v3809, %v3809
    %v3893 = vpack.c.bf16 %v3880, %v3880
    %v3894 = vpack.c.bf16 %v3883, %v3883
    %v3895 = vpack.c.bf16 %v3886, %v3886
    %v3897 = vsel %vm728, %v3832, 0
    %v3900 = vsel %vm728, %v3860, 0
    %3902 = vmatprep.subr.bf16.mxu0 0
    %3903 = vmatpush1.bf16.xpose.msra.mxu0 %v3900
    %3904 = vmatprep.subr.bf16.mxu0 0
    %3905 = vmatpush1.bf16.xpose.msra.mxu0 0
    %3906 = vmatprep.subr.bf16.mxu0 0
    %3907 = vmatpush1.bf16.xpose.msra.mxu0 0
    %3908 = vmatprep.subr.bf16.mxu0 0
    %3909 = vmatpush1.bf16.xpose.msra.mxu0 0
    %3910 = vmatprep.subr.bf16.mxu0 0
    %3911 = vmatpush1.bf16.xpose.msra.mxu0 0
    %3912 = vmatprep.subr.bf16.mxu0 0
    %3913 = vmatpush1.bf16.xpose.msra.mxu0 0
    %3914 = vmatprep.subr.bf16.mxu0 0
    %3915 = vmatpush1.bf16.xpose.msra.mxu0 0
    %3916 = vmatprep.subr.bf16.mxu0 0
    %3917 = vmatpush1.bf16.xpose.msra.mxu0 0
    %3918 = vmatprep.subr.bf16.mxu0 0
    %3919 = vmatpush1.bf16.xpose.msra.mxu0 0
    %3920 = vmatprep.subr.bf16.mxu0 0
    %3921 = vmatpush1.bf16.xpose.msra.mxu0 0
    %3922 = vmatprep.subr.bf16.mxu0 0
    %3923 = vmatpush1.bf16.xpose.msra.mxu0 0
    %3924 = vmatprep.subr.bf16.mxu0 0
    %3925 = vmatpush1.bf16.xpose.msra.mxu0 0
    %3926 = vmatprep.subr.bf16.mxu0 0
    %3927 = vmatpush1.bf16.xpose.msra.mxu0 0
    %3928 = vmatprep.subr.bf16.mxu0 0
    %3929 = vmatpush1.bf16.xpose.msra.mxu0 0
    %3930 = vmatprep.subr.bf16.mxu0 0
    %3931 = vmatpush1.bf16.xpose.msra.mxu0 0
    %3932 = vmatprep.subr.bf16.mxu0 0
    %3933 = vmatpush1.bf16.xpose.msra.mxu0 0
    %3934 = vmatprep.mubr.bf16.mxu0 0
    %3935 = vmatmul.mubr.bf16.gmra.mrb[0].mxu0 %v3897
    %v3936 = vpop.f32.mrb[0].mxu0
    %v3937 = vadd.f32 %v691, %v3936
    %v3938 = vpop.f32.mrb[0].mxu0
    %v3939 = vpop.f32.mrb[0].mxu0
    %v3940 = vpop.f32.mrb[0].mxu0
    %3941 = vdwg.mxu0
    %v3943 = vsel %vm728, %v3833, 0
    %v3946 = vsel %vm728, %v3861, 0
    %3948 = vmatprep.subr.bf16.mxu0 0
    %3949 = vmatpush1.bf16.xpose.msra.mxu0 %v3946
    %3950 = vmatprep.subr.bf16.mxu0 0
    %3951 = vmatpush1.bf16.xpose.msra.mxu0 0
    %3952 = vmatprep.subr.bf16.mxu0 0
    %3953 = vmatpush1.bf16.xpose.msra.mxu0 0
    %3954 = vmatprep.subr.bf16.mxu0 0
    %3955 = vmatpush1.bf16.xpose.msra.mxu0 0
    %3956 = vmatprep.subr.bf16.mxu0 0
    %3957 = vmatpush1.bf16.xpose.msra.mxu0 0
    %3958 = vmatprep.subr.bf16.mxu0 0
    %3959 = vmatpush1.bf16.xpose.msra.mxu0 0
    %3960 = vmatprep.subr.bf16.mxu0 0
    %3961 = vmatpush1.bf16.xpose.msra.mxu0 0
    %3962 = vmatprep.subr.bf16.mxu0 0
    %3963 = vmatpush1.bf16.xpose.msra.mxu0 0
    %3964 = vmatprep.subr.bf16.mxu0 0
    %3965 = vmatpush1.bf16.xpose.msra.mxu0 0
    %3966 = vmatprep.subr.bf16.mxu0 0
    %3967 = vmatpush1.bf16.xpose.msra.mxu0 0
    %3968 = vmatprep.subr.bf16.mxu0 0
    %3969 = vmatpush1.bf16.xpose.msra.mxu0 0
    %3970 = vmatprep.subr.bf16.mxu0 0
    %3971 = vmatpush1.bf16.xpose.msra.mxu0 0
    %3972 = vmatprep.subr.bf16.mxu0 0
    %3973 = vmatpush1.bf16.xpose.msra.mxu0 0
    %3974 = vmatprep.subr.bf16.mxu0 0
    %3975 = vmatpush1.bf16.xpose.msra.mxu0 0
    %3976 = vmatprep.subr.bf16.mxu0 0
    %3977 = vmatpush1.bf16.xpose.msra.mxu0 0
    %3978 = vmatprep.subr.bf16.mxu0 0
    %3979 = vmatpush1.bf16.xpose.msra.mxu0 0
    %3980 = vmatprep.mubr.bf16.mxu0 0
    %3981 = vmatmul.mubr.bf16.gmra.mrb[0].mxu0 %v3943
    %v3982 = vpop.f32.mrb[0].mxu0
    %v3983 = vadd.f32 %v695, %v3982
    %v3984 = vpop.f32.mrb[0].mxu0
    %v3985 = vpop.f32.mrb[0].mxu0
    %v3986 = vpop.f32.mrb[0].mxu0
    %3987 = vdwg.mxu0
    %v3989 = vsel %vm728, %v3834, 0
    %v3992 = vsel %vm728, %v3862, 0
    %3994 = vmatprep.subr.bf16.mxu0 0
    %3995 = vmatpush1.bf16.xpose.msra.mxu0 %v3992
    %3996 = vmatprep.subr.bf16.mxu0 0
    %3997 = vmatpush1.bf16.xpose.msra.mxu0 0
    %3998 = vmatprep.subr.bf16.mxu0 0
    %3999 = vmatpush1.bf16.xpose.msra.mxu0 0
    %4000 = vmatprep.subr.bf16.mxu0 0
    %4001 = vmatpush1.bf16.xpose.msra.mxu0 0
    %4002 = vmatprep.subr.bf16.mxu0 0
    %4003 = vmatpush1.bf16.xpose.msra.mxu0 0
    %4004 = vmatprep.subr.bf16.mxu0 0
    %4005 = vmatpush1.bf16.xpose.msra.mxu0 0
    %4006 = vmatprep.subr.bf16.mxu0 0
    %4007 = vmatpush1.bf16.xpose.msra.mxu0 0
    %4008 = vmatprep.subr.bf16.mxu0 0
    %4009 = vmatpush1.bf16.xpose.msra.mxu0 0
    %4010 = vmatprep.subr.bf16.mxu0 0
    %4011 = vmatpush1.bf16.xpose.msra.mxu0 0
    %4012 = vmatprep.subr.bf16.mxu0 0
    %4013 = vmatpush1.bf16.xpose.msra.mxu0 0
    %4014 = vmatprep.subr.bf16.mxu0 0
    %4015 = vmatpush1.bf16.xpose.msra.mxu0 0
    %4016 = vmatprep.subr.bf16.mxu0 0
    %4017 = vmatpush1.bf16.xpose.msra.mxu0 0
    %4018 = vmatprep.subr.bf16.mxu0 0
    %4019 = vmatpush1.bf16.xpose.msra.mxu0 0
    %4020 = vmatprep.subr.bf16.mxu0 0
    %4021 = vmatpush1.bf16.xpose.msra.mxu0 0
    %4022 = vmatprep.subr.bf16.mxu0 0
    %4023 = vmatpush1.bf16.xpose.msra.mxu0 0
    %4024 = vmatprep.subr.bf16.mxu0 0
    %4025 = vmatpush1.bf16.xpose.msra.mxu0 0
    %4026 = vmatprep.mubr.bf16.mxu0 0
    %4027 = vmatmul.mubr.bf16.gmra.mrb[0].mxu0 %v3989
    %v4028 = vpop.f32.mrb[0].mxu0
    %v4029 = vadd.f32 %v699, %v4028
    %v4030 = vpop.f32.mrb[0].mxu0
    %v4031 = vpop.f32.mrb[0].mxu0
    %v4032 = vpop.f32.mrb[0].mxu0
    %4033 = vdwg.mxu0
    %v4035 = vsel %vm728, %v3835, 0
    %v4038 = vsel %vm728, %v3863, 0
    %4040 = vmatprep.subr.bf16.mxu0 0
    %4041 = vmatpush1.bf16.xpose.msra.mxu0 %v4038
    %4042 = vmatprep.subr.bf16.mxu0 0
    %4043 = vmatpush1.bf16.xpose.msra.mxu0 0
    %4044 = vmatprep.subr.bf16.mxu0 0
    %4045 = vmatpush1.bf16.xpose.msra.mxu0 0
    %4046 = vmatprep.subr.bf16.mxu0 0
    %4047 = vmatpush1.bf16.xpose.msra.mxu0 0
    %4048 = vmatprep.subr.bf16.mxu0 0
    %4049 = vmatpush1.bf16.xpose.msra.mxu0 0
    %4050 = vmatprep.subr.bf16.mxu0 0
    %4051 = vmatpush1.bf16.xpose.msra.mxu0 0
    %4052 = vmatprep.subr.bf16.mxu0 0
    %4053 = vmatpush1.bf16.xpose.msra.mxu0 0
    %4054 = vmatprep.subr.bf16.mxu0 0
    %4055 = vmatpush1.bf16.xpose.msra.mxu0 0
    %4056 = vmatprep.subr.bf16.mxu0 0
    %4057 = vmatpush1.bf16.xpose.msra.mxu0 0
    %4058 = vmatprep.subr.bf16.mxu0 0
    %4059 = vmatpush1.bf16.xpose.msra.mxu0 0
    %4060 = vmatprep.subr.bf16.mxu0 0
    %4061 = vmatpush1.bf16.xpose.msra.mxu0 0
    %4062 = vmatprep.subr.bf16.mxu0 0
    %4063 = vmatpush1.bf16.xpose.msra.mxu0 0
    %4064 = vmatprep.subr.bf16.mxu0 0
    %4065 = vmatpush1.bf16.xpose.msra.mxu0 0
    %4066 = vmatprep.subr.bf16.mxu0 0
    %4067 = vmatpush1.bf16.xpose.msra.mxu0 0
    %4068 = vmatprep.subr.bf16.mxu0 0
    %4069 = vmatpush1.bf16.xpose.msra.mxu0 0
    %4070 = vmatprep.subr.bf16.mxu0 0
    %4071 = vmatpush1.bf16.xpose.msra.mxu0 0
    %4072 = vmatprep.mubr.bf16.mxu0 0
    %4073 = vmatmul.mubr.bf16.gmra.mrb[0].mxu0 %v4035
    %v4074 = vpop.f32.mrb[0].mxu0
    %v4075 = vadd.f32 %v703, %v4074
    %v4076 = vpop.f32.mrb[0].mxu0
    %v4077 = vpop.f32.mrb[0].mxu0
    %v4078 = vpop.f32.mrb[0].mxu0
    %4079 = vdwg.mxu0
    %v4081 = vsel %vm728, %v3836, 0
    %v4084 = vsel %vm728, %v3864, 0
    %4086 = vmatprep.subr.bf16.mxu0 0
    %4087 = vmatpush1.bf16.xpose.msra.mxu0 %v4084
    %4088 = vmatprep.subr.bf16.mxu0 0
    %4089 = vmatpush1.bf16.xpose.msra.mxu0 0
    %4090 = vmatprep.subr.bf16.mxu0 0
    %4091 = vmatpush1.bf16.xpose.msra.mxu0 0
    %4092 = vmatprep.subr.bf16.mxu0 0
    %4093 = vmatpush1.bf16.xpose.msra.mxu0 0
    %4094 = vmatprep.subr.bf16.mxu0 0
    %4095 = vmatpush1.bf16.xpose.msra.mxu0 0
    %4096 = vmatprep.subr.bf16.mxu0 0
    %4097 = vmatpush1.bf16.xpose.msra.mxu0 0
    %4098 = vmatprep.subr.bf16.mxu0 0
    %4099 = vmatpush1.bf16.xpose.msra.mxu0 0
    %4100 = vmatprep.subr.bf16.mxu0 0
    %4101 = vmatpush1.bf16.xpose.msra.mxu0 0
    %4102 = vmatprep.subr.bf16.mxu0 0
    %4103 = vmatpush1.bf16.xpose.msra.mxu0 0
    %4104 = vmatprep.subr.bf16.mxu0 0
    %4105 = vmatpush1.bf16.xpose.msra.mxu0 0
    %4106 = vmatprep.subr.bf16.mxu0 0
    %4107 = vmatpush1.bf16.xpose.msra.mxu0 0
    %4108 = vmatprep.subr.bf16.mxu0 0
    %4109 = vmatpush1.bf16.xpose.msra.mxu0 0
    %4110 = vmatprep.subr.bf16.mxu0 0
    %4111 = vmatpush1.bf16.xpose.msra.mxu0 0
    %4112 = vmatprep.subr.bf16.mxu0 0
    %4113 = vmatpush1.bf16.xpose.msra.mxu0 0
    %4114 = vmatprep.subr.bf16.mxu0 0
    %4115 = vmatpush1.bf16.xpose.msra.mxu0 0
    %4116 = vmatprep.subr.bf16.mxu0 0
    %4117 = vmatpush1.bf16.xpose.msra.mxu0 0
    %4118 = vmatprep.mubr.bf16.mxu0 0
    %4119 = vmatmul.mubr.bf16.gmra.mrb[0].mxu0 %v4081
    %v4120 = vpop.f32.mrb[0].mxu0
    %v4121 = vadd.f32 %v707, %v4120
    %v4122 = vpop.f32.mrb[0].mxu0
    %v4123 = vpop.f32.mrb[0].mxu0
    %v4124 = vpop.f32.mrb[0].mxu0
    %4125 = vdwg.mxu0
    %v4127 = vsel %vm728, %v3837, 0
    %v4130 = vsel %vm728, %v3865, 0
    %4132 = vmatprep.subr.bf16.mxu0 0
    %4133 = vmatpush1.bf16.xpose.msra.mxu0 %v4130
    %4134 = vmatprep.subr.bf16.mxu0 0
    %4135 = vmatpush1.bf16.xpose.msra.mxu0 0
    %4136 = vmatprep.subr.bf16.mxu0 0
    %4137 = vmatpush1.bf16.xpose.msra.mxu0 0
    %4138 = vmatprep.subr.bf16.mxu0 0
    %4139 = vmatpush1.bf16.xpose.msra.mxu0 0
    %4140 = vmatprep.subr.bf16.mxu0 0
    %4141 = vmatpush1.bf16.xpose.msra.mxu0 0
    %4142 = vmatprep.subr.bf16.mxu0 0
    %4143 = vmatpush1.bf16.xpose.msra.mxu0 0
    %4144 = vmatprep.subr.bf16.mxu0 0
    %4145 = vmatpush1.bf16.xpose.msra.mxu0 0
    %4146 = vmatprep.subr.bf16.mxu0 0
    %4147 = vmatpush1.bf16.xpose.msra.mxu0 0
    %4148 = vmatprep.subr.bf16.mxu0 0
    %4149 = vmatpush1.bf16.xpose.msra.mxu0 0
    %4150 = vmatprep.subr.bf16.mxu0 0
    %4151 = vmatpush1.bf16.xpose.msra.mxu0 0
    %4152 = vmatprep.subr.bf16.mxu0 0
    %4153 = vmatpush1.bf16.xpose.msra.mxu0 0
    %4154 = vmatprep.subr.bf16.mxu0 0
    %4155 = vmatpush1.bf16.xpose.msra.mxu0 0
    %4156 = vmatprep.subr.bf16.mxu0 0
    %4157 = vmatpush1.bf16.xpose.msra.mxu0 0
    %4158 = vmatprep.subr.bf16.mxu0 0
    %4159 = vmatpush1.bf16.xpose.msra.mxu0 0
    %4160 = vmatprep.subr.bf16.mxu0 0
    %4161 = vmatpush1.bf16.xpose.msra.mxu0 0
    %4162 = vmatprep.subr.bf16.mxu0 0
    %4163 = vmatpush1.bf16.xpose.msra.mxu0 0
    %4164 = vmatprep.mubr.bf16.mxu0 0
    %4165 = vmatmul.mubr.bf16.gmra.mrb[0].mxu0 %v4127
    %v4166 = vpop.f32.mrb[0].mxu0
    %v4167 = vadd.f32 %v711, %v4166
    %v4168 = vpop.f32.mrb[0].mxu0
    %v4169 = vpop.f32.mrb[0].mxu0
    %v4170 = vpop.f32.mrb[0].mxu0
    %4171 = vdwg.mxu0
    %v4173 = vsel %vm728, %v3838, 0
    %v4176 = vsel %vm728, %v3866, 0
    %4178 = vmatprep.subr.bf16.mxu0 0
    %4179 = vmatpush1.bf16.xpose.msra.mxu0 %v4176
    %4180 = vmatprep.subr.bf16.mxu0 0
    %4181 = vmatpush1.bf16.xpose.msra.mxu0 0
    %4182 = vmatprep.subr.bf16.mxu0 0
    %4183 = vmatpush1.bf16.xpose.msra.mxu0 0
    %4184 = vmatprep.subr.bf16.mxu0 0
    %4185 = vmatpush1.bf16.xpose.msra.mxu0 0
    %4186 = vmatprep.subr.bf16.mxu0 0
    %4187 = vmatpush1.bf16.xpose.msra.mxu0 0
    %4188 = vmatprep.subr.bf16.mxu0 0
    %4189 = vmatpush1.bf16.xpose.msra.mxu0 0
    %4190 = vmatprep.subr.bf16.mxu0 0
    %4191 = vmatpush1.bf16.xpose.msra.mxu0 0
    %4192 = vmatprep.subr.bf16.mxu0 0
    %4193 = vmatpush1.bf16.xpose.msra.mxu0 0
    %4194 = vmatprep.subr.bf16.mxu0 0
    %4195 = vmatpush1.bf16.xpose.msra.mxu0 0
    %4196 = vmatprep.subr.bf16.mxu0 0
    %4197 = vmatpush1.bf16.xpose.msra.mxu0 0
    %4198 = vmatprep.subr.bf16.mxu0 0
    %4199 = vmatpush1.bf16.xpose.msra.mxu0 0
    %4200 = vmatprep.subr.bf16.mxu0 0
    %4201 = vmatpush1.bf16.xpose.msra.mxu0 0
    %4202 = vmatprep.subr.bf16.mxu0 0
    %4203 = vmatpush1.bf16.xpose.msra.mxu0 0
    %4204 = vmatprep.subr.bf16.mxu0 0
    %4205 = vmatpush1.bf16.xpose.msra.mxu0 0
    %4206 = vmatprep.subr.bf16.mxu0 0
    %4207 = vmatpush1.bf16.xpose.msra.mxu0 0
    %4208 = vmatprep.subr.bf16.mxu0 0
    %4209 = vmatpush1.bf16.xpose.msra.mxu0 0
    %4210 = vmatprep.mubr.bf16.mxu0 0
    %4211 = vmatmul.mubr.bf16.gmra.mrb[0].mxu0 %v4173
    %v4212 = vpop.f32.mrb[0].mxu0
    %v4213 = vadd.f32 %v715, %v4212
    %v4214 = vpop.f32.mrb[0].mxu0
    %v4215 = vpop.f32.mrb[0].mxu0
    %v4216 = vpop.f32.mrb[0].mxu0
    %4217 = vdwg.mxu0
    %v4219 = vsel %vm728, %v3839, 0
    %v4222 = vsel %vm728, %v3867, 0
    %4224 = vmatprep.subr.bf16.mxu0 0
    %4225 = vmatpush1.bf16.xpose.msra.mxu0 %v4222
    %4226 = vmatprep.subr.bf16.mxu0 0
    %4227 = vmatpush1.bf16.xpose.msra.mxu0 0
    %4228 = vmatprep.subr.bf16.mxu0 0
    %4229 = vmatpush1.bf16.xpose.msra.mxu0 0
    %4230 = vmatprep.subr.bf16.mxu0 0
    %4231 = vmatpush1.bf16.xpose.msra.mxu0 0
    %4232 = vmatprep.subr.bf16.mxu0 0
    %4233 = vmatpush1.bf16.xpose.msra.mxu0 0
    %4234 = vmatprep.subr.bf16.mxu0 0
    %4235 = vmatpush1.bf16.xpose.msra.mxu0 0
    %4236 = vmatprep.subr.bf16.mxu0 0
    %4237 = vmatpush1.bf16.xpose.msra.mxu0 0
    %4238 = vmatprep.subr.bf16.mxu0 0
    %4239 = vmatpush1.bf16.xpose.msra.mxu0 0
    %4240 = vmatprep.subr.bf16.mxu0 0
    %4241 = vmatpush1.bf16.xpose.msra.mxu0 0
    %4242 = vmatprep.subr.bf16.mxu0 0
    %4243 = vmatpush1.bf16.xpose.msra.mxu0 0
    %4244 = vmatprep.subr.bf16.mxu0 0
    %4245 = vmatpush1.bf16.xpose.msra.mxu0 0
    %4246 = vmatprep.subr.bf16.mxu0 0
    %4247 = vmatpush1.bf16.xpose.msra.mxu0 0
    %4248 = vmatprep.subr.bf16.mxu0 0
    %4249 = vmatpush1.bf16.xpose.msra.mxu0 0
    %4250 = vmatprep.subr.bf16.mxu0 0
    %4251 = vmatpush1.bf16.xpose.msra.mxu0 0
    %4252 = vmatprep.subr.bf16.mxu0 0
    %4253 = vmatpush1.bf16.xpose.msra.mxu0 0
    %4254 = vmatprep.subr.bf16.mxu0 0
    %4255 = vmatpush1.bf16.xpose.msra.mxu0 0
    %4256 = vmatprep.mubr.bf16.mxu0 0
    %4257 = vmatmul.mubr.bf16.gmra.mrb[0].mxu0 %v4219
    %v4258 = vpop.f32.mrb[0].mxu0
    %v4259 = vadd.f32 %v719, %v4258
    %v4260 = vpop.f32.mrb[0].mxu0
    %v4261 = vpop.f32.mrb[0].mxu0
    %v4262 = vpop.f32.mrb[0].mxu0
    %4263 = vdwg.mxu0
    %v4264 = vsel %vm1097, %v3937, -inf
    %4265 = vmax.xlane.f32.xlu0 %v4264
    %v4266 = vpop.xlane.xlu0 %4265
    %v4267 = vsel %vm1097, %v3983, -inf
    %4268 = vmax.xlane.f32.xlu0 %v4267
    %v4269 = vpop.xlane.xlu0 %4268
    %v4270 = vsel %vm1097, %v4029, -inf
    %4271 = vmax.xlane.f32.xlu0 %v4270
    %v4272 = vpop.xlane.xlu0 %4271
    %v4273 = vsel %vm1097, %v4075, -inf
    %4274 = vmax.xlane.f32.xlu0 %v4273
    %v4275 = vpop.xlane.xlu0 %4274
    %v4276 = vsel %vm1097, %v4121, -inf
    %4277 = vmax.xlane.f32.xlu0 %v4276
    %v4278 = vpop.xlane.xlu0 %4277
    %v4279 = vsel %vm1097, %v4167, -inf
    %4280 = vmax.xlane.f32.xlu0 %v4279
    %v4281 = vpop.xlane.xlu0 %4280
    %v4282 = vsel %vm1097, %v4213, -inf
    %4283 = vmax.xlane.f32.xlu0 %v4282
    %v4284 = vpop.xlane.xlu0 %4283
    %v4285 = vsel %vm1097, %v4259, -inf
    %4286 = vmax.xlane.f32.xlu0 %v4285
    %v4287 = vpop.xlane.xlu0 %4286
    %v4288 = vsub.f32 %v3937, %v4266
    %v4289 = vsub.f32 %v3983, %v4269
    %v4290 = vsub.f32 %v4029, %v4272
    %v4291 = vsub.f32 %v4075, %v4275
    %v4292 = vsub.f32 %v4121, %v4278
    %v4293 = vsub.f32 %v4167, %v4281
    %v4294 = vsub.f32 %v4213, %v4284
    %v4295 = vsub.f32 %v4259, %v4287
    %v4296 = vmul.f32 %v4288, 1.442695
    %v4297 = vpow.pop %v4296
    %v4298 = vmul.f32 %v4289, 1.442695
    %v4299 = vpow.pop %v4298
    %v4300 = vmul.f32 %v4290, 1.442695
    %v4301 = vpow.pop %v4300
    %v4302 = vmul.f32 %v4291, 1.442695
    %v4303 = vpow.pop %v4302
    %v4304 = vmul.f32 %v4292, 1.442695
    %v4305 = vpow.pop %v4304
    %v4306 = vmul.f32 %v4293, 1.442695
    %v4307 = vpow.pop %v4306
    %v4308 = vmul.f32 %v4294, 1.442695
    %v4309 = vpow.pop %v4308
    %v4310 = vmul.f32 %v4295, 1.442695
    %v4311 = vpow.pop %v4310
    %v4312 = vsel %vm1097, %v4297, 0.0
    %4313 = vadd.xlane.f32.xlu0 %v4312
    %v4314 = vpop.xlane.xlu0 %4313
    %v4315 = vsel %vm1097, %v4299, 0.0
    %4316 = vadd.xlane.f32.xlu0 %v4315
    %v4317 = vpop.xlane.xlu0 %4316
    %v4318 = vsel %vm1097, %v4301, 0.0
    %4319 = vadd.xlane.f32.xlu0 %v4318
    %v4320 = vpop.xlane.xlu0 %4319
    %v4321 = vsel %vm1097, %v4303, 0.0
    %4322 = vadd.xlane.f32.xlu0 %v4321
    %v4323 = vpop.xlane.xlu0 %4322
    %v4324 = vsel %vm1097, %v4305, 0.0
    %4325 = vadd.xlane.f32.xlu0 %v4324
    %v4326 = vpop.xlane.xlu0 %4325
    %v4327 = vsel %vm1097, %v4307, 0.0
    %4328 = vadd.xlane.f32.xlu0 %v4327
    %v4329 = vpop.xlane.xlu0 %4328
    %v4330 = vsel %vm1097, %v4309, 0.0
    %4331 = vadd.xlane.f32.xlu0 %v4330
    %v4332 = vpop.xlane.xlu0 %4331
    %v4333 = vsel %vm1097, %v4311, 0.0
    %4334 = vadd.xlane.f32.xlu0 %v4333
    %v4335 = vpop.xlane.xlu0 %4334
    %v4336 = vrcp.pop %v4314
    %v4337 = vrcp.pop %v4317
    %v4338 = vrcp.pop %v4320
    %v4339 = vrcp.pop %v4323
    %v4340 = vrcp.pop %v4326
    %v4341 = vrcp.pop %v4329
    %v4342 = vrcp.pop %v4332
    %v4343 = vrcp.pop %v4335
    %v4344 = vmul.f32 %v4297, %v4336
    %v4345 = vmul.f32 %v4299, %v4337
    %v4346 = vmul.f32 %v4301, %v4338
    %v4347 = vmul.f32 %v4303, %v4339
    %v4348 = vmul.f32 %v4305, %v4340
    %v4349 = vmul.f32 %v4307, %v4341
    %v4350 = vmul.f32 %v4309, %v4342
    %v4351 = vmul.f32 %v4311, %v4343
    %v4352 = vpack.c.bf16 %v4344, %v4344
    %v4353 = vpack.c.bf16 %v4345, %v4345
    %v4354 = vpack.c.bf16 %v4346, %v4346
    %v4355 = vpack.c.bf16 %v4347, %v4347
    %v4356 = vpack.c.bf16 %v4348, %v4348
    %v4357 = vpack.c.bf16 %v4349, %v4349
    %v4358 = vpack.c.bf16 %v4350, %v4350
    %v4359 = vpack.c.bf16 %v4351, %v4351
    %v4361 = vsel %vm1097, %v4352, 0
    %v4364 = vsel %vm1197, %v3888, 0
    %4366 = vmatprep.subr.bf16.mxu0 0
    %4367 = vmatpush1.bf16.msra.mxu0 %v4364
    %4368 = vmatprep.subr.bf16.mxu0 0
    %4369 = vmatpush1.bf16.msra.mxu0 0
    %4370 = vmatprep.subr.bf16.mxu0 0
    %4371 = vmatpush1.bf16.msra.mxu0 0
    %4372 = vmatprep.subr.bf16.mxu0 0
    %4373 = vmatpush1.bf16.msra.mxu0 0
    %4374 = vmatprep.subr.bf16.mxu0 0
    %4375 = vmatpush1.bf16.msra.mxu0 0
    %4376 = vmatprep.subr.bf16.mxu0 0
    %4377 = vmatpush1.bf16.msra.mxu0 0
    %4378 = vmatprep.subr.bf16.mxu0 0
    %4379 = vmatpush1.bf16.msra.mxu0 0
    %4380 = vmatprep.subr.bf16.mxu0 0
    %4381 = vmatpush1.bf16.msra.mxu0 0
    %4382 = vmatprep.subr.bf16.mxu0 0
    %4383 = vmatpush1.bf16.msra.mxu0 0
    %4384 = vmatprep.subr.bf16.mxu0 0
    %4385 = vmatpush1.bf16.msra.mxu0 0
    %4386 = vmatprep.subr.bf16.mxu0 0
    %4387 = vmatpush1.bf16.msra.mxu0 0
    %4388 = vmatprep.subr.bf16.mxu0 0
    %4389 = vmatpush1.bf16.msra.mxu0 0
    %4390 = vmatprep.subr.bf16.mxu0 0
    %4391 = vmatpush1.bf16.msra.mxu0 0
    %4392 = vmatprep.subr.bf16.mxu0 0
    %4393 = vmatpush1.bf16.msra.mxu0 0
    %4394 = vmatprep.subr.bf16.mxu0 0
    %4395 = vmatpush1.bf16.msra.mxu0 0
    %4396 = vmatprep.subr.bf16.mxu0 0
    %4397 = vmatpush1.bf16.msra.mxu0 0
    %4398 = vmatprep.mubr.bf16.mxu0 0
    %4399 = vmatmul.mubr.bf16.gmra.mrb[0].mxu0 %v4361
    %v4400 = vpop.f32.mrb[0].mxu0
    %v4401 = vadd.f32 0.0, %v4400
    %v4402 = vpop.f32.mrb[0].mxu0
    %v4403 = vpop.f32.mrb[0].mxu0
    %v4404 = vpop.f32.mrb[0].mxu0
    %4405 = vdwg.mxu0
    %v4407 = vsel %vm1097, %v4353, 0
    %v4410 = vsel %vm1197, %v3889, 0
    %4412 = vmatprep.subr.bf16.mxu0 0
    %4413 = vmatpush1.bf16.msra.mxu0 %v4410
    %4414 = vmatprep.subr.bf16.mxu0 0
    %4415 = vmatpush1.bf16.msra.mxu0 0
    %4416 = vmatprep.subr.bf16.mxu0 0
    %4417 = vmatpush1.bf16.msra.mxu0 0
    %4418 = vmatprep.subr.bf16.mxu0 0
    %4419 = vmatpush1.bf16.msra.mxu0 0
    %4420 = vmatprep.subr.bf16.mxu0 0
    %4421 = vmatpush1.bf16.msra.mxu0 0
    %4422 = vmatprep.subr.bf16.mxu0 0
    %4423 = vmatpush1.bf16.msra.mxu0 0
    %4424 = vmatprep.subr.bf16.mxu0 0
    %4425 = vmatpush1.bf16.msra.mxu0 0
    %4426 = vmatprep.subr.bf16.mxu0 0
    %4427 = vmatpush1.bf16.msra.mxu0 0
    %4428 = vmatprep.subr.bf16.mxu0 0
    %4429 = vmatpush1.bf16.msra.mxu0 0
    %4430 = vmatprep.subr.bf16.mxu0 0
    %4431 = vmatpush1.bf16.msra.mxu0 0
    %4432 = vmatprep.subr.bf16.mxu0 0
    %4433 = vmatpush1.bf16.msra.mxu0 0
    %4434 = vmatprep.subr.bf16.mxu0 0
    %4435 = vmatpush1.bf16.msra.mxu0 0
    %4436 = vmatprep.subr.bf16.mxu0 0
    %4437 = vmatpush1.bf16.msra.mxu0 0
    %4438 = vmatprep.subr.bf16.mxu0 0
    %4439 = vmatpush1.bf16.msra.mxu0 0
    %4440 = vmatprep.subr.bf16.mxu0 0
    %4441 = vmatpush1.bf16.msra.mxu0 0
    %4442 = vmatprep.subr.bf16.mxu0 0
    %4443 = vmatpush1.bf16.msra.mxu0 0
    %4444 = vmatprep.mubr.bf16.mxu0 0
    %4445 = vmatmul.mubr.bf16.gmra.mrb[0].mxu0 %v4407
    %v4446 = vpop.f32.mrb[0].mxu0
    %v4447 = vadd.f32 0.0, %v4446
    %v4448 = vpop.f32.mrb[0].mxu0
    %v4449 = vpop.f32.mrb[0].mxu0
    %v4450 = vpop.f32.mrb[0].mxu0
    %4451 = vdwg.mxu0
    %v4453 = vsel %vm1097, %v4354, 0
    %v4456 = vsel %vm1197, %v3890, 0
    %4458 = vmatprep.subr.bf16.mxu0 0
    %4459 = vmatpush1.bf16.msra.mxu0 %v4456
    %4460 = vmatprep.subr.bf16.mxu0 0
    %4461 = vmatpush1.bf16.msra.mxu0 0
    %4462 = vmatprep.subr.bf16.mxu0 0
    %4463 = vmatpush1.bf16.msra.mxu0 0
    %4464 = vmatprep.subr.bf16.mxu0 0
    %4465 = vmatpush1.bf16.msra.mxu0 0
    %4466 = vmatprep.subr.bf16.mxu0 0
    %4467 = vmatpush1.bf16.msra.mxu0 0
    %4468 = vmatprep.subr.bf16.mxu0 0
    %4469 = vmatpush1.bf16.msra.mxu0 0
    %4470 = vmatprep.subr.bf16.mxu0 0
    %4471 = vmatpush1.bf16.msra.mxu0 0
    %4472 = vmatprep.subr.bf16.mxu0 0
    %4473 = vmatpush1.bf16.msra.mxu0 0
    %4474 = vmatprep.subr.bf16.mxu0 0
    %4475 = vmatpush1.bf16.msra.mxu0 0
    %4476 = vmatprep.subr.bf16.mxu0 0
    %4477 = vmatpush1.bf16.msra.mxu0 0
    %4478 = vmatprep.subr.bf16.mxu0 0
    %4479 = vmatpush1.bf16.msra.mxu0 0
    %4480 = vmatprep.subr.bf16.mxu0 0
    %4481 = vmatpush1.bf16.msra.mxu0 0
    %4482 = vmatprep.subr.bf16.mxu0 0
    %4483 = vmatpush1.bf16.msra.mxu0 0
    %4484 = vmatprep.subr.bf16.mxu0 0
    %4485 = vmatpush1.bf16.msra.mxu0 0
    %4486 = vmatprep.subr.bf16.mxu0 0
    %4487 = vmatpush1.bf16.msra.mxu0 0
    %4488 = vmatprep.subr.bf16.mxu0 0
    %4489 = vmatpush1.bf16.msra.mxu0 0
    %4490 = vmatprep.mubr.bf16.mxu0 0
    %4491 = vmatmul.mubr.bf16.gmra.mrb[0].mxu0 %v4453
    %v4492 = vpop.f32.mrb[0].mxu0
    %v4493 = vadd.f32 0.0, %v4492
    %v4494 = vpop.f32.mrb[0].mxu0
    %v4495 = vpop.f32.mrb[0].mxu0
    %v4496 = vpop.f32.mrb[0].mxu0
    %4497 = vdwg.mxu0
    %v4499 = vsel %vm1097, %v4355, 0
    %v4502 = vsel %vm1197, %v3891, 0
    %4504 = vmatprep.subr.bf16.mxu0 0
    %4505 = vmatpush1.bf16.msra.mxu0 %v4502
    %4506 = vmatprep.subr.bf16.mxu0 0
    %4507 = vmatpush1.bf16.msra.mxu0 0
    %4508 = vmatprep.subr.bf16.mxu0 0
    %4509 = vmatpush1.bf16.msra.mxu0 0
    %4510 = vmatprep.subr.bf16.mxu0 0
    %4511 = vmatpush1.bf16.msra.mxu0 0
    %4512 = vmatprep.subr.bf16.mxu0 0
    %4513 = vmatpush1.bf16.msra.mxu0 0
    %4514 = vmatprep.subr.bf16.mxu0 0
    %4515 = vmatpush1.bf16.msra.mxu0 0
    %4516 = vmatprep.subr.bf16.mxu0 0
    %4517 = vmatpush1.bf16.msra.mxu0 0
    %4518 = vmatprep.subr.bf16.mxu0 0
    %4519 = vmatpush1.bf16.msra.mxu0 0
    %4520 = vmatprep.subr.bf16.mxu0 0
    %4521 = vmatpush1.bf16.msra.mxu0 0
    %4522 = vmatprep.subr.bf16.mxu0 0
    %4523 = vmatpush1.bf16.msra.mxu0 0
    %4524 = vmatprep.subr.bf16.mxu0 0
    %4525 = vmatpush1.bf16.msra.mxu0 0
    %4526 = vmatprep.subr.bf16.mxu0 0
    %4527 = vmatpush1.bf16.msra.mxu0 0
    %4528 = vmatprep.subr.bf16.mxu0 0
    %4529 = vmatpush1.bf16.msra.mxu0 0
    %4530 = vmatprep.subr.bf16.mxu0 0
    %4531 = vmatpush1.bf16.msra.mxu0 0
    %4532 = vmatprep.subr.bf16.mxu0 0
    %4533 = vmatpush1.bf16.msra.mxu0 0
    %4534 = vmatprep.subr.bf16.mxu0 0
    %4535 = vmatpush1.bf16.msra.mxu0 0
    %4536 = vmatprep.mubr.bf16.mxu0 0
    %4537 = vmatmul.mubr.bf16.gmra.mrb[0].mxu0 %v4499
    %v4538 = vpop.f32.mrb[0].mxu0
    %v4539 = vadd.f32 0.0, %v4538
    %v4540 = vpop.f32.mrb[0].mxu0
    %v4541 = vpop.f32.mrb[0].mxu0
    %v4542 = vpop.f32.mrb[0].mxu0
    %4543 = vdwg.mxu0
    %v4545 = vsel %vm1097, %v4356, 0
    %v4548 = vsel %vm1197, %v3892, 0
    %4550 = vmatprep.subr.bf16.mxu0 0
    %4551 = vmatpush1.bf16.msra.mxu0 %v4548
    %4552 = vmatprep.subr.bf16.mxu0 0
    %4553 = vmatpush1.bf16.msra.mxu0 0
    %4554 = vmatprep.subr.bf16.mxu0 0
    %4555 = vmatpush1.bf16.msra.mxu0 0
    %4556 = vmatprep.subr.bf16.mxu0 0
    %4557 = vmatpush1.bf16.msra.mxu0 0
    %4558 = vmatprep.subr.bf16.mxu0 0
    %4559 = vmatpush1.bf16.msra.mxu0 0
    %4560 = vmatprep.subr.bf16.mxu0 0
    %4561 = vmatpush1.bf16.msra.mxu0 0
    %4562 = vmatprep.subr.bf16.mxu0 0
    %4563 = vmatpush1.bf16.msra.mxu0 0
    %4564 = vmatprep.subr.bf16.mxu0 0
    %4565 = vmatpush1.bf16.msra.mxu0 0
    %4566 = vmatprep.subr.bf16.mxu0 0
    %4567 = vmatpush1.bf16.msra.mxu0 0
    %4568 = vmatprep.subr.bf16.mxu0 0
    %4569 = vmatpush1.bf16.msra.mxu0 0
    %4570 = vmatprep.subr.bf16.mxu0 0
    %4571 = vmatpush1.bf16.msra.mxu0 0
    %4572 = vmatprep.subr.bf16.mxu0 0
    %4573 = vmatpush1.bf16.msra.mxu0 0
    %4574 = vmatprep.subr.bf16.mxu0 0
    %4575 = vmatpush1.bf16.msra.mxu0 0
    %4576 = vmatprep.subr.bf16.mxu0 0
    %4577 = vmatpush1.bf16.msra.mxu0 0
    %4578 = vmatprep.subr.bf16.mxu0 0
    %4579 = vmatpush1.bf16.msra.mxu0 0
    %4580 = vmatprep.subr.bf16.mxu0 0
    %4581 = vmatpush1.bf16.msra.mxu0 0
    %4582 = vmatprep.mubr.bf16.mxu0 0
    %4583 = vmatmul.mubr.bf16.gmra.mrb[0].mxu0 %v4545
    %v4584 = vpop.f32.mrb[0].mxu0
    %v4585 = vadd.f32 0.0, %v4584
    %v4586 = vpop.f32.mrb[0].mxu0
    %v4587 = vpop.f32.mrb[0].mxu0
    %v4588 = vpop.f32.mrb[0].mxu0
    %4589 = vdwg.mxu0
    %v4591 = vsel %vm1097, %v4357, 0
    %v4594 = vsel %vm1197, %v3893, 0
    %4596 = vmatprep.subr.bf16.mxu0 0
    %4597 = vmatpush1.bf16.msra.mxu0 %v4594
    %4598 = vmatprep.subr.bf16.mxu0 0
    %4599 = vmatpush1.bf16.msra.mxu0 0
    %4600 = vmatprep.subr.bf16.mxu0 0
    %4601 = vmatpush1.bf16.msra.mxu0 0
    %4602 = vmatprep.subr.bf16.mxu0 0
    %4603 = vmatpush1.bf16.msra.mxu0 0
    %4604 = vmatprep.subr.bf16.mxu0 0
    %4605 = vmatpush1.bf16.msra.mxu0 0
    %4606 = vmatprep.subr.bf16.mxu0 0
    %4607 = vmatpush1.bf16.msra.mxu0 0
    %4608 = vmatprep.subr.bf16.mxu0 0
    %4609 = vmatpush1.bf16.msra.mxu0 0
    %4610 = vmatprep.subr.bf16.mxu0 0
    %4611 = vmatpush1.bf16.msra.mxu0 0
    %4612 = vmatprep.subr.bf16.mxu0 0
    %4613 = vmatpush1.bf16.msra.mxu0 0
    %4614 = vmatprep.subr.bf16.mxu0 0
    %4615 = vmatpush1.bf16.msra.mxu0 0
    %4616 = vmatprep.subr.bf16.mxu0 0
    %4617 = vmatpush1.bf16.msra.mxu0 0
    %4618 = vmatprep.subr.bf16.mxu0 0
    %4619 = vmatpush1.bf16.msra.mxu0 0
    %4620 = vmatprep.subr.bf16.mxu0 0
    %4621 = vmatpush1.bf16.msra.mxu0 0
    %4622 = vmatprep.subr.bf16.mxu0 0
    %4623 = vmatpush1.bf16.msra.mxu0 0
    %4624 = vmatprep.subr.bf16.mxu0 0
    %4625 = vmatpush1.bf16.msra.mxu0 0
    %4626 = vmatprep.subr.bf16.mxu0 0
    %4627 = vmatpush1.bf16.msra.mxu0 0
    %4628 = vmatprep.mubr.bf16.mxu0 0
    %4629 = vmatmul.mubr.bf16.gmra.mrb[0].mxu0 %v4591
    %v4630 = vpop.f32.mrb[0].mxu0
    %v4631 = vadd.f32 0.0, %v4630
    %v4632 = vpop.f32.mrb[0].mxu0
    %v4633 = vpop.f32.mrb[0].mxu0
    %v4634 = vpop.f32.mrb[0].mxu0
    %4635 = vdwg.mxu0
    %v4637 = vsel %vm1097, %v4358, 0
    %v4640 = vsel %vm1197, %v3894, 0
    %4642 = vmatprep.subr.bf16.mxu0 0
    %4643 = vmatpush1.bf16.msra.mxu0 %v4640
    %4644 = vmatprep.subr.bf16.mxu0 0
    %4645 = vmatpush1.bf16.msra.mxu0 0
    %4646 = vmatprep.subr.bf16.mxu0 0
    %4647 = vmatpush1.bf16.msra.mxu0 0
    %4648 = vmatprep.subr.bf16.mxu0 0
    %4649 = vmatpush1.bf16.msra.mxu0 0
    %4650 = vmatprep.subr.bf16.mxu0 0
    %4651 = vmatpush1.bf16.msra.mxu0 0
    %4652 = vmatprep.subr.bf16.mxu0 0
    %4653 = vmatpush1.bf16.msra.mxu0 0
    %4654 = vmatprep.subr.bf16.mxu0 0
    %4655 = vmatpush1.bf16.msra.mxu0 0
    %4656 = vmatprep.subr.bf16.mxu0 0
    %4657 = vmatpush1.bf16.msra.mxu0 0
    %4658 = vmatprep.subr.bf16.mxu0 0
    %4659 = vmatpush1.bf16.msra.mxu0 0
    %4660 = vmatprep.subr.bf16.mxu0 0
    %4661 = vmatpush1.bf16.msra.mxu0 0
    %4662 = vmatprep.subr.bf16.mxu0 0
    %4663 = vmatpush1.bf16.msra.mxu0 0
    %4664 = vmatprep.subr.bf16.mxu0 0
    %4665 = vmatpush1.bf16.msra.mxu0 0
    %4666 = vmatprep.subr.bf16.mxu0 0
    %4667 = vmatpush1.bf16.msra.mxu0 0
    %4668 = vmatprep.subr.bf16.mxu0 0
    %4669 = vmatpush1.bf16.msra.mxu0 0
    %4670 = vmatprep.subr.bf16.mxu0 0
    %4671 = vmatpush1.bf16.msra.mxu0 0
    %4672 = vmatprep.subr.bf16.mxu0 0
    %4673 = vmatpush1.bf16.msra.mxu0 0
    %4674 = vmatprep.mubr.bf16.mxu0 0
    %4675 = vmatmul.mubr.bf16.gmra.mrb[0].mxu0 %v4637
    %v4676 = vpop.f32.mrb[0].mxu0
    %v4677 = vadd.f32 0.0, %v4676
    %v4678 = vpop.f32.mrb[0].mxu0
    %v4679 = vpop.f32.mrb[0].mxu0
    %v4680 = vpop.f32.mrb[0].mxu0
    %4681 = vdwg.mxu0
    %v4683 = vsel %vm1097, %v4359, 0
    %v4686 = vsel %vm1197, %v3895, 0
    %4688 = vmatprep.subr.bf16.mxu0 0
    %4689 = vmatpush1.bf16.msra.mxu0 %v4686
    %4690 = vmatprep.subr.bf16.mxu0 0
    %4691 = vmatpush1.bf16.msra.mxu0 0
    %4692 = vmatprep.subr.bf16.mxu0 0
    %4693 = vmatpush1.bf16.msra.mxu0 0
    %4694 = vmatprep.subr.bf16.mxu0 0
    %4695 = vmatpush1.bf16.msra.mxu0 0
    %4696 = vmatprep.subr.bf16.mxu0 0
    %4697 = vmatpush1.bf16.msra.mxu0 0
    %4698 = vmatprep.subr.bf16.mxu0 0
    %4699 = vmatpush1.bf16.msra.mxu0 0
    %4700 = vmatprep.subr.bf16.mxu0 0
    %4701 = vmatpush1.bf16.msra.mxu0 0
    %4702 = vmatprep.subr.bf16.mxu0 0
    %4703 = vmatpush1.bf16.msra.mxu0 0
    %4704 = vmatprep.subr.bf16.mxu0 0
    %4705 = vmatpush1.bf16.msra.mxu0 0
    %4706 = vmatprep.subr.bf16.mxu0 0
    %4707 = vmatpush1.bf16.msra.mxu0 0
    %4708 = vmatprep.subr.bf16.mxu0 0
    %4709 = vmatpush1.bf16.msra.mxu0 0
    %4710 = vmatprep.subr.bf16.mxu0 0
    %4711 = vmatpush1.bf16.msra.mxu0 0
    %4712 = vmatprep.subr.bf16.mxu0 0
    %4713 = vmatpush1.bf16.msra.mxu0 0
    %4714 = vmatprep.subr.bf16.mxu0 0
    %4715 = vmatpush1.bf16.msra.mxu0 0
    %4716 = vmatprep.subr.bf16.mxu0 0
    %4717 = vmatpush1.bf16.msra.mxu0 0
    %4718 = vmatprep.subr.bf16.mxu0 0
    %4719 = vmatpush1.bf16.msra.mxu0 0
    %4720 = vmatprep.mubr.bf16.mxu0 0
    %4721 = vmatmul.mubr.bf16.gmra.mrb[0].mxu0 %v4683
    %v4722 = vpop.f32.mrb[0].mxu0
    %v4723 = vadd.f32 0.0, %v4722
    %v4724 = vpop.f32.mrb[0].mxu0
    %v4725 = vpop.f32.mrb[0].mxu0
    %v4726 = vpop.f32.mrb[0].mxu0
    %4727 = vdwg.mxu0
    %4729 = vrot.lane.b32.xlu0 %v4447, 32
    %v4730 = vpop.permute.xlu0 %4729
    %4733 = vrot.lane.b32.xlu0 %v4493, 64
    %v4734 = vpop.permute.xlu0 %4733
    %4737 = vrot.lane.b32.xlu0 %v4539, 96
    %v4738 = vpop.permute.xlu0 %4737
    %v4740 = vsel %vm728, %v4401, %v4730
    %v4741 = vsel %vm1576, %v4740, %v4734
    %v4742 = vsel %vm1578, %v4741, %v4738
    %4744 = vrot.lane.b32.xlu0 %v4631, 32
    %v4745 = vpop.permute.xlu0 %4744
    %4748 = vrot.lane.b32.xlu0 %v4677, 64
    %v4749 = vpop.permute.xlu0 %4748
    %4752 = vrot.lane.b32.xlu0 %v4723, 96
    %v4753 = vpop.permute.xlu0 %4752
    %v4755 = vsel %vm728, %v4585, %v4745
    %v4756 = vsel %vm1576, %v4755, %v4749
    %v4757 = vsel %vm1578, %v4756, %v4753
    %v4758 = vpack.c.bf16 %v4757, %v4742
    %s4759 = scalar_lea.vmem [#allocation8], 64
    %v4760 = vld [vmem:[%s4759] sm:$0xf]
    %v4761 = vld [vmem:[%s4759 + $0x4] sm:$0xf]
    %v4762 = vld [vmem:[%s4759 + $0x8] sm:$0xf]
    %v4763 = vld [vmem:[%s4759 + $0xc] sm:$0xf]
    %v4764 = vld [vmem:[%s4759 + $0x10] sm:$0xf]
    %v4765 = vld [vmem:[%s4759 + $0x14] sm:$0xf]
    %v4766 = vld [vmem:[%s4759 + $0x18] sm:$0xf]
    %v4767 = vld [vmem:[%s4759 + $0x1c] sm:$0xf]
    %v4768 = vld [vmem:[%s4759 + $0x20] sm:$0xf]
    %v4769 = vld [vmem:[%s4759 + $0x24] sm:$0xf]
    %v4770 = vld [vmem:[%s4759 + $0x28] sm:$0xf]
    %v4771 = vld [vmem:[%s4759 + $0x2c] sm:$0xf]
    %v4772 = vld [vmem:[%s4759 + $0x30] sm:$0xf]
    %v4773 = vld [vmem:[%s4759 + $0x34] sm:$0xf]
    %v4774 = vld [vmem:[%s4759 + $0x38] sm:$0xf]
    %v4775 = vld [vmem:[%s4759 + $0x3c] sm:$0xf]
    %s4776 = scalar_lea.vmem %s8, 1
    %v4777 = vld [vmem:[%s4776] sm:$0x1]
    %v4779 = vlaneseq
    %v4780 = vshrl.u32 %v4779, 7
    %v4781 = vsub.s32 0, %v4780
    %v4782 = vrot.slane %v4777, %v4781
    %v4800 = vunpack.c.l.b16 %v4760
    %v4801 = vunpack.c.l.b16 %v4761
    %v4802 = vunpack.c.l.b16 %v4762
    %v4803 = vunpack.c.l.b16 %v4763
    %v4804 = vunpack.c.l.b16 %v4764
    %v4805 = vunpack.c.l.b16 %v4765
    %v4806 = vunpack.c.l.b16 %v4766
    %v4807 = vunpack.c.l.b16 %v4767
    %v4808 = vunpack.c.l.b16 %v4768
    %v4809 = vunpack.c.l.b16 %v4769
    %v4810 = vunpack.c.l.b16 %v4770
    %v4811 = vunpack.c.l.b16 %v4771
    %v4812 = vunpack.c.l.b16 %v4772
    %v4813 = vunpack.c.l.b16 %v4773
    %v4814 = vunpack.c.l.b16 %v4774
    %v4815 = vunpack.c.l.b16 %v4775
    %v4816 = vpack.c.b16 %v4801, %v4800
    %v4817 = vpack.c.b16 %v4803, %v4802
    %v4818 = vpack.c.b16 %v4805, %v4804
    %v4819 = vpack.c.b16 %v4807, %v4806
    %v4820 = vpack.c.b16 %v4809, %v4808
    %v4821 = vpack.c.b16 %v4811, %v4810
    %v4822 = vpack.c.b16 %v4813, %v4812
    %v4823 = vpack.c.b16 %v4815, %v4814
    %4832 = vmatprep.subr.bf16.mxu0 0
    %4833 = vmatpush1.bf16.xpose.msra.mxu0 %v4816
    %4834 = vmatprep.subr.bf16.mxu0 0
    %4835 = vmatpush1.bf16.xpose.msra.mxu0 %v4817
    %4836 = vmatprep.subr.bf16.mxu0 0
    %4837 = vmatpush1.bf16.xpose.msra.mxu0 %v4818
    %4838 = vmatprep.subr.bf16.mxu0 0
    %4839 = vmatpush1.bf16.xpose.msra.mxu0 %v4819
    %4840 = vmatprep.subr.bf16.mxu0 0
    %4841 = vmatpush1.bf16.xpose.msra.mxu0 %v4820
    %4842 = vmatprep.subr.bf16.mxu0 0
    %4843 = vmatpush1.bf16.xpose.msra.mxu0 %v4821
    %4844 = vmatprep.subr.bf16.mxu0 0
    %4845 = vmatpush1.bf16.xpose.msra.mxu0 %v4822
    %4846 = vmatprep.subr.bf16.mxu0 0
    %4847 = vmatpush1.bf16.xpose.msra.mxu0 %v4823
    %4848 = vmatprep.subr.bf16.mxu0 0
    %4849 = vmatpush1.bf16.xpose.msra.mxu0 0
    %4850 = vmatprep.subr.bf16.mxu0 0
    %4851 = vmatpush1.bf16.xpose.msra.mxu0 0
    %4852 = vmatprep.subr.bf16.mxu0 0
    %4853 = vmatpush1.bf16.xpose.msra.mxu0 0
    %4854 = vmatprep.subr.bf16.mxu0 0
    %4855 = vmatpush1.bf16.xpose.msra.mxu0 0
    %4856 = vmatprep.subr.bf16.mxu0 0
    %4857 = vmatpush1.bf16.xpose.msra.mxu0 0
    %4858 = vmatprep.subr.bf16.mxu0 0
    %4859 = vmatpush1.bf16.xpose.msra.mxu0 0
    %4860 = vmatprep.subr.bf16.mxu0 0
    %4861 = vmatpush1.bf16.xpose.msra.mxu0 0
    %4862 = vmatprep.subr.bf16.mxu0 0
    %4863 = vmatpush1.bf16.xpose.msra.mxu0 0
    %4864 = vmatprep.mubr.bf16.mxu0 0
    %4865 = vmatmul.mubr.bf16.gmra.mrb[0].mxu0 %v4758
    %v4866 = vpop.f32.mrb[0].mxu0
    %v4867 = vadd.f32 %v4782, %v4866
    %v4868 = vpop.f32.mrb[0].mxu0
    %v4869 = vpop.f32.mrb[0].mxu0
    %v4870 = vadd.f32 %v4782, %v4869
    %v4871 = vpop.f32.mrb[0].mxu0
    %4872 = vdwg.mxu0
    %v4873 = vadd.f32 %v4867, %v3514
    %v4874 = vadd.f32 %v4870, %v3515
    %s4875 = scalar_lea.vmem %s9, 1
    %v4876 = vld [vmem:[%s4875] sm:$0x1]
    %s4877 = scalar_lea.vmem %s10, 1
    %v4878 = vld [vmem:[%s4877] sm:$0x1]
    %4879 = vadd.xlane.f32.xlu0 %v4873
    %v4880 = vpop.xlane.xlu0 %4879
    %4881 = vadd.xlane.f32.xlu0 %v4874
    %v4882 = vpop.xlane.xlu0 %4881
    %v4883 = vmul.f32 %v4880, 0.03125
    %v4884 = vmul.f32 %v4882, 0.03125
    %v4885 = vmul.f32 %v4873, %v4873
    %v4886 = vmul.f32 %v4874, %v4874
    %4887 = vadd.xlane.f32.xlu0 %v4885
    %v4888 = vpop.xlane.xlu0 %4887
    %4889 = vadd.xlane.f32.xlu0 %v4886
    %v4890 = vpop.xlane.xlu0 %4889
    %v4891 = vmul.f32 %v4888, 0.03125
    %v4892 = vmul.f32 %v4890, 0.03125
    %v4893 = vmul.f32 %v4883, %v4883
    %v4894 = vmul.f32 %v4884, %v4884
    %v4895 = vsub.f32 %v4891, %v4893
    %v4896 = vsub.f32 %v4892, %v4894
    %v4897 = vsub.f32 %v4873, %v4883
    %v4898 = vsub.f32 %v4874, %v4884
    %v4899 = vadd.f32 %v4895, 1e-05
    %v4900 = vadd.f32 %v4896, 1e-05
    %v4901 = vrsqrt.pop %v4899
    %v4902 = vrsqrt.pop %v4900
    %v4903 = vmul.f32 %v4897, %v4901
    %v4904 = vmul.f32 %v4898, %v4902
    %v4906 = vlaneseq
    %v4907 = vshrl.u32 %v4906, 7
    %v4908 = vsub.s32 0, %v4907
    %v4909 = vrot.slane %v4876, %v4908
    %v4911 = vmul.f32 %v4903, %v4909
    %v4912 = vmul.f32 %v4904, %v4909
    %v4914 = vlaneseq
    %v4915 = vshrl.u32 %v4914, 7
    %v4916 = vsub.s32 0, %v4915
    %v4917 = vrot.slane %v4878, %v4916
    %v4919 = vadd.f32 %v4911, %v4917
    %v4920 = vadd.f32 %v4912, %v4917
    %v4921 = vpack.c.bf16 %v4920, %v4919
    %s4922 = scalar_lea.vmem [#allocation10], 64
    %v4923 = vld [vmem:[%s4922] sm:$0xf]
    %v4924 = vld [vmem:[%s4922 + $0x4] sm:$0xf]
    %v4925 = vld [vmem:[%s4922 + $0x8] sm:$0xf]
    %v4926 = vld [vmem:[%s4922 + $0xc] sm:$0xf]
    %v4927 = vld [vmem:[%s4922 + $0x10] sm:$0xf]
    %v4928 = vld [vmem:[%s4922 + $0x14] sm:$0xf]
    %v4929 = vld [vmem:[%s4922 + $0x18] sm:$0xf]
    %v4930 = vld [vmem:[%s4922 + $0x1c] sm:$0xf]
    %v4931 = vld [vmem:[%s4922 + $0x20] sm:$0xf]
    %v4932 = vld [vmem:[%s4922 + $0x24] sm:$0xf]
    %v4933 = vld [vmem:[%s4922 + $0x28] sm:$0xf]
    %v4934 = vld [vmem:[%s4922 + $0x2c] sm:$0xf]
    %v4935 = vld [vmem:[%s4922 + $0x30] sm:$0xf]
    %v4936 = vld [vmem:[%s4922 + $0x34] sm:$0xf]
    %v4937 = vld [vmem:[%s4922 + $0x38] sm:$0xf]
    %v4938 = vld [vmem:[%s4922 + $0x3c] sm:$0xf]
    %s4939 = scalar_lea.vmem %s12, 1
    %v4940 = vld [vmem:[%s4939] sm:$0x1]
    %v4942 = vlaneseq
    %v4943 = vshrl.u32 %v4942, 7
    %v4944 = vsub.s32 0, %v4943
    %v4945 = vrot.slane %v4940, %v4944
    %v4963 = vunpack.c.l.b16 %v4923
    %v4964 = vunpack.c.l.b16 %v4924
    %v4965 = vunpack.c.l.b16 %v4925
    %v4966 = vunpack.c.l.b16 %v4926
    %v4967 = vunpack.c.l.b16 %v4927
    %v4968 = vunpack.c.l.b16 %v4928
    %v4969 = vunpack.c.l.b16 %v4929
    %v4970 = vunpack.c.l.b16 %v4930
    %v4971 = vunpack.c.l.b16 %v4931
    %v4972 = vunpack.c.l.b16 %v4932
    %v4973 = vunpack.c.l.b16 %v4933
    %v4974 = vunpack.c.l.b16 %v4934
    %v4975 = vunpack.c.l.b16 %v4935
    %v4976 = vunpack.c.l.b16 %v4936
    %v4977 = vunpack.c.l.b16 %v4937
    %v4978 = vunpack.c.l.b16 %v4938
    %v4979 = vpack.c.b16 %v4964, %v4963
    %v4980 = vpack.c.b16 %v4966, %v4965
    %v4981 = vpack.c.b16 %v4968, %v4967
    %v4982 = vpack.c.b16 %v4970, %v4969
    %v4983 = vpack.c.b16 %v4972, %v4971
    %v4984 = vpack.c.b16 %v4974, %v4973
    %v4985 = vpack.c.b16 %v4976, %v4975
    %v4986 = vpack.c.b16 %v4978, %v4977
    %4995 = vmatprep.subr.bf16.mxu0 0
    %4996 = vmatpush1.bf16.xpose.msra.mxu0 %v4979
    %4997 = vmatprep.subr.bf16.mxu0 0
    %4998 = vmatpush1.bf16.xpose.msra.mxu0 %v4980
    %4999 = vmatprep.subr.bf16.mxu0 0
    %5000 = vmatpush1.bf16.xpose.msra.mxu0 %v4981
    %5001 = vmatprep.subr.bf16.mxu0 0
    %5002 = vmatpush1.bf16.xpose.msra.mxu0 %v4982
    %5003 = vmatprep.subr.bf16.mxu0 0
    %5004 = vmatpush1.bf16.xpose.msra.mxu0 %v4983
    %5005 = vmatprep.subr.bf16.mxu0 0
    %5006 = vmatpush1.bf16.xpose.msra.mxu0 %v4984
    %5007 = vmatprep.subr.bf16.mxu0 0
    %5008 = vmatpush1.bf16.xpose.msra.mxu0 %v4985
    %5009 = vmatprep.subr.bf16.mxu0 0
    %5010 = vmatpush1.bf16.xpose.msra.mxu0 %v4986
    %5011 = vmatprep.subr.bf16.mxu0 0
    %5012 = vmatpush1.bf16.xpose.msra.mxu0 0
    %5013 = vmatprep.subr.bf16.mxu0 0
    %5014 = vmatpush1.bf16.xpose.msra.mxu0 0
    %5015 = vmatprep.subr.bf16.mxu0 0
    %5016 = vmatpush1.bf16.xpose.msra.mxu0 0
    %5017 = vmatprep.subr.bf16.mxu0 0
    %5018 = vmatpush1.bf16.xpose.msra.mxu0 0
    %5019 = vmatprep.subr.bf16.mxu0 0
    %5020 = vmatpush1.bf16.xpose.msra.mxu0 0
    %5021 = vmatprep.subr.bf16.mxu0 0
    %5022 = vmatpush1.bf16.xpose.msra.mxu0 0
    %5023 = vmatprep.subr.bf16.mxu0 0
    %5024 = vmatpush1.bf16.xpose.msra.mxu0 0
    %5025 = vmatprep.subr.bf16.mxu0 0
    %5026 = vmatpush1.bf16.xpose.msra.mxu0 0
    %5027 = vmatprep.mubr.bf16.mxu0 0
    %5028 = vmatmul.mubr.bf16.gmra.mrb[0].mxu0 %v4921
    %v5029 = vpop.f32.mrb[0].mxu0
    %v5030 = vadd.f32 %v4945, %v5029
    %v5031 = vpop.f32.mrb[0].mxu0
    %v5032 = vpop.f32.mrb[0].mxu0
    %v5033 = vadd.f32 %v4945, %v5032
    %v5034 = vpop.f32.mrb[0].mxu0
    %5035 = vdwg.mxu0
    %s5036 = scalar_lea.vmem [#allocation11], 128
    %v5037 = vld [vmem:[%s5036] sm:$0xf]
    %v5038 = vld [vmem:[%s5036 + $0x4] sm:$0xf]
    %v5039 = vld [vmem:[%s5036 + $0x8] sm:$0xf]
    %v5040 = vld [vmem:[%s5036 + $0xc] sm:$0xf]
    %v5041 = vld [vmem:[%s5036 + $0x10] sm:$0xf]
    %v5042 = vld [vmem:[%s5036 + $0x14] sm:$0xf]
    %v5043 = vld [vmem:[%s5036 + $0x18] sm:$0xf]
    %v5044 = vld [vmem:[%s5036 + $0x1c] sm:$0xf]
    %v5045 = vld [vmem:[%s5036 + $0x20] sm:$0xf]
    %v5046 = vld [vmem:[%s5036 + $0x24] sm:$0xf]
    %v5047 = vld [vmem:[%s5036 + $0x28] sm:$0xf]
    %v5048 = vld [vmem:[%s5036 + $0x2c] sm:$0xf]
    %v5049 = vld [vmem:[%s5036 + $0x30] sm:$0xf]
    %v5050 = vld [vmem:[%s5036 + $0x34] sm:$0xf]
    %v5051 = vld [vmem:[%s5036 + $0x38] sm:$0xf]
    %v5052 = vld [vmem:[%s5036 + $0x3c] sm:$0xf]
    %v5053 = vld [vmem:[%s5036 + $0x40] sm:$0xf]
    %v5054 = vld [vmem:[%s5036 + $0x44] sm:$0xf]
    %v5055 = vld [vmem:[%s5036 + $0x48] sm:$0xf]
    %v5056 = vld [vmem:[%s5036 + $0x4c] sm:$0xf]
    %v5057 = vld [vmem:[%s5036 + $0x50] sm:$0xf]
    %v5058 = vld [vmem:[%s5036 + $0x54] sm:$0xf]
    %v5059 = vld [vmem:[%s5036 + $0x58] sm:$0xf]
    %v5060 = vld [vmem:[%s5036 + $0x5c] sm:$0xf]
    %v5061 = vld [vmem:[%s5036 + $0x60] sm:$0xf]
    %v5062 = vld [vmem:[%s5036 + $0x64] sm:$0xf]
    %v5063 = vld [vmem:[%s5036 + $0x68] sm:$0xf]
    %v5064 = vld [vmem:[%s5036 + $0x6c] sm:$0xf]
    %v5065 = vld [vmem:[%s5036 + $0x70] sm:$0xf]
    %v5066 = vld [vmem:[%s5036 + $0x74] sm:$0xf]
    %v5067 = vld [vmem:[%s5036 + $0x78] sm:$0xf]
    %v5068 = vld [vmem:[%s5036 + $0x7c] sm:$0xf]
    %s5069 = scalar_lea.vmem %s14, 2
    %v5070 = vld [vmem:[%s5069] sm:$0x3]
    %v5072 = vlaneseq
    %v5073 = vshrl.u32 %v5072, 7
    %v5074 = vsub.s32 0, %v5073
    %v5075 = vrot.slane %v5070, %v5074
    %v5076 = vlaneseq
    %v5077 = vshrl.u32 %v5076, 7
    %v5078 = vsub.s32 1, %v5077
    %v5079 = vrot.slane %v5070, %v5078
    %v5114 = vunpack.c.l.b16 %v5037
    %v5115 = vunpack.c.l.b16 %v5038
    %v5116 = vunpack.c.l.b16 %v5039
    %v5117 = vunpack.c.l.b16 %v5040
    %v5118 = vunpack.c.l.b16 %v5041
    %v5119 = vunpack.c.l.b16 %v5042
    %v5120 = vunpack.c.l.b16 %v5043
    %v5121 = vunpack.c.l.b16 %v5044
    %v5122 = vunpack.c.l.b16 %v5045
    %v5123 = vunpack.c.l.b16 %v5046
    %v5124 = vunpack.c.l.b16 %v5047
    %v5125 = vunpack.c.l.b16 %v5048
    %v5126 = vunpack.c.l.b16 %v5049
    %v5127 = vunpack.c.l.b16 %v5050
    %v5128 = vunpack.c.l.b16 %v5051
    %v5129 = vunpack.c.l.b16 %v5052
    %v5130 = vunpack.c.l.b16 %v5053
    %v5131 = vunpack.c.l.b16 %v5054
    %v5132 = vunpack.c.l.b16 %v5055
    %v5133 = vunpack.c.l.b16 %v5056
    %v5134 = vunpack.c.l.b16 %v5057
    %v5135 = vunpack.c.l.b16 %v5058
    %v5136 = vunpack.c.l.b16 %v5059
    %v5137 = vunpack.c.l.b16 %v5060
    %v5138 = vunpack.c.l.b16 %v5061
    %v5139 = vunpack.c.l.b16 %v5062
    %v5140 = vunpack.c.l.b16 %v5063
    %v5141 = vunpack.c.l.b16 %v5064
    %v5142 = vunpack.c.l.b16 %v5065
    %v5143 = vunpack.c.l.b16 %v5066
    %v5144 = vunpack.c.l.b16 %v5067
    %v5145 = vunpack.c.l.b16 %v5068
    %v5146 = vpack.c.b16 %v5115, %v5114
    %v5147 = vpack.c.b16 %v5117, %v5116
    %v5148 = vpack.c.b16 %v5119, %v5118
    %v5149 = vpack.c.b16 %v5121, %v5120
    %v5150 = vpack.c.b16 %v5123, %v5122
    %v5151 = vpack.c.b16 %v5125, %v5124
    %v5152 = vpack.c.b16 %v5127, %v5126
    %v5153 = vpack.c.b16 %v5129, %v5128
    %v5154 = vpack.c.b16 %v5131, %v5130
    %v5155 = vpack.c.b16 %v5133, %v5132
    %v5156 = vpack.c.b16 %v5135, %v5134
    %v5157 = vpack.c.b16 %v5137, %v5136
    %v5158 = vpack.c.b16 %v5139, %v5138
    %v5159 = vpack.c.b16 %v5141, %v5140
    %v5160 = vpack.c.b16 %v5143, %v5142
    %v5161 = vpack.c.b16 %v5145, %v5144
    %5178 = vmatprep.subr.bf16.mxu0 0
    %5179 = vmatpush1.bf16.xpose.msra.mxu0 %v5146
    %5180 = vmatprep.subr.bf16.mxu0 0
    %5181 = vmatpush1.bf16.xpose.msra.mxu0 %v5147
    %5182 = vmatprep.subr.bf16.mxu0 0
    %5183 = vmatpush1.bf16.xpose.msra.mxu0 %v5148
    %5184 = vmatprep.subr.bf16.mxu0 0
    %5185 = vmatpush1.bf16.xpose.msra.mxu0 %v5149
    %5186 = vmatprep.subr.bf16.mxu0 0
    %5187 = vmatpush1.bf16.xpose.msra.mxu0 %v5150
    %5188 = vmatprep.subr.bf16.mxu0 0
    %5189 = vmatpush1.bf16.xpose.msra.mxu0 %v5151
    %5190 = vmatprep.subr.bf16.mxu0 0
    %5191 = vmatpush1.bf16.xpose.msra.mxu0 %v5152
    %5192 = vmatprep.subr.bf16.mxu0 0
    %5193 = vmatpush1.bf16.xpose.msra.mxu0 %v5153
    %5194 = vmatprep.subr.bf16.mxu0 0
    %5195 = vmatpush1.bf16.xpose.msra.mxu0 %v5154
    %5196 = vmatprep.subr.bf16.mxu0 0
    %5197 = vmatpush1.bf16.xpose.msra.mxu0 %v5155
    %5198 = vmatprep.subr.bf16.mxu0 0
    %5199 = vmatpush1.bf16.xpose.msra.mxu0 %v5156
    %5200 = vmatprep.subr.bf16.mxu0 0
    %5201 = vmatpush1.bf16.xpose.msra.mxu0 %v5157
    %5202 = vmatprep.subr.bf16.mxu0 0
    %5203 = vmatpush1.bf16.xpose.msra.mxu0 %v5158
    %5204 = vmatprep.subr.bf16.mxu0 0
    %5205 = vmatpush1.bf16.xpose.msra.mxu0 %v5159
    %5206 = vmatprep.subr.bf16.mxu0 0
    %5207 = vmatpush1.bf16.xpose.msra.mxu0 %v5160
    %5208 = vmatprep.subr.bf16.mxu0 0
    %5209 = vmatpush1.bf16.xpose.msra.mxu0 %v5161
    %5210 = vmatprep.mubr.bf16.mxu0 0
    %5211 = vmatmul.mubr.bf16.gmra.mrb[0].mxu0 %v1919
    %v5212 = vpop.f32.mrb[0].mxu0
    %v5213 = vadd.f32 %v5075, %v5212
    %v5214 = vpop.f32.mrb[0].mxu0
    %v5215 = vadd.f32 %v5079, %v5214
    %v5216 = vpop.f32.mrb[0].mxu0
    %v5217 = vadd.f32 %v5075, %v5216
    %v5218 = vpop.f32.mrb[0].mxu0
    %v5219 = vadd.f32 %v5079, %v5218
    %5220 = vmatprep.mubr.bf16.mxu0 0
    %5221 = vmatmul.mubr.bf16.gmra.mrb[0].mxu0 %v1920
    %v5222 = vpop.f32.mrb[0].mxu0
    %v5223 = vadd.f32 %v5075, %v5222
    %v5224 = vpop.f32.mrb[0].mxu0
    %v5225 = vadd.f32 %v5079, %v5224
    %v5226 = vpop.f32.mrb[0].mxu0
    %v5227 = vadd.f32 %v5075, %v5226
    %v5228 = vpop.f32.mrb[0].mxu0
    %v5229 = vadd.f32 %v5079, %v5228
    %5230 = vdwg.mxu0
    %5232 = vrot.lane.b32.xlu0 %v5030, 96
    %v5233 = vpop.permute.xlu0 %5232
    %5235 = vrot.lane.b32.xlu0 %v5030, 64
    %v5236 = vpop.permute.xlu0 %5235
    %5238 = vrot.lane.b32.xlu0 %v5030, 32
    %v5239 = vpop.permute.xlu0 %5238
    %5242 = vrot.lane.b32.xlu0 %v5033, 96
    %v5243 = vpop.permute.xlu0 %5242
    %5245 = vrot.lane.b32.xlu0 %v5033, 64
    %v5246 = vpop.permute.xlu0 %5245
    %5248 = vrot.lane.b32.xlu0 %v5033, 32
    %v5249 = vpop.permute.xlu0 %5248
    %v5251 = vpack.c.bf16 %v5030, %v5030
    %v5252 = vpack.c.bf16 %v5233, %v5233
    %v5253 = vpack.c.bf16 %v5236, %v5236
    %v5254 = vpack.c.bf16 %v5239, %v5239
    %v5255 = vpack.c.bf16 %v5033, %v5033
    %v5256 = vpack.c.bf16 %v5243, %v5243
    %v5257 = vpack.c.bf16 %v5246, %v5246
    %v5258 = vpack.c.bf16 %v5249, %v5249
    %5261 = vrot.lane.b32.xlu0 %v5213, 96
    %v5262 = vpop.permute.xlu0 %5261
    %5263 = vrot.lane.b32.xlu0 %v5217, 96
    %v5264 = vpop.permute.xlu0 %5263
    %5267 = vrot.lane.b32.xlu0 %v5213, 64
    %v5268 = vpop.permute.xlu0 %5267
    %5269 = vrot.lane.b32.xlu0 %v5217, 64
    %v5270 = vpop.permute.xlu0 %5269
    %5273 = vrot.lane.b32.xlu0 %v5213, 32
    %v5274 = vpop.permute.xlu0 %5273
    %5275 = vrot.lane.b32.xlu0 %v5217, 32
    %v5276 = vpop.permute.xlu0 %5275
    %5281 = vrot.lane.b32.xlu0 %v5223, 96
    %v5282 = vpop.permute.xlu0 %5281
    %5283 = vrot.lane.b32.xlu0 %v5227, 96
    %v5284 = vpop.permute.xlu0 %5283
    %5287 = vrot.lane.b32.xlu0 %v5223, 64
    %v5288 = vpop.permute.xlu0 %5287
    %5289 = vrot.lane.b32.xlu0 %v5227, 64
    %v5290 = vpop.permute.xlu0 %5289
    %5293 = vrot.lane.b32.xlu0 %v5223, 32
    %v5294 = vpop.permute.xlu0 %5293
    %5295 = vrot.lane.b32.xlu0 %v5227, 32
    %v5296 = vpop.permute.xlu0 %5295
    %v5299 = vpack.c.bf16 %v5217, %v5213
    %v5300 = vpack.c.bf16 %v5264, %v5262
    %v5301 = vpack.c.bf16 %v5270, %v5268
    %v5302 = vpack.c.bf16 %v5276, %v5274
    %v5303 = vpack.c.bf16 %v5227, %v5223
    %v5304 = vpack.c.bf16 %v5284, %v5282
    %v5305 = vpack.c.bf16 %v5290, %v5288
    %v5306 = vpack.c.bf16 %v5296, %v5294
    %5309 = vrot.lane.b32.xlu0 %v5215, 96
    %v5310 = vpop.permute.xlu0 %5309
    %5311 = vrot.lane.b32.xlu0 %v5219, 96
    %v5312 = vpop.permute.xlu0 %5311
    %5315 = vrot.lane.b32.xlu0 %v5215, 64
    %v5316 = vpop.permute.xlu0 %5315
    %5317 = vrot.lane.b32.xlu0 %v5219, 64
    %v5318 = vpop.permute.xlu0 %5317
    %5321 = vrot.lane.b32.xlu0 %v5215, 32
    %v5322 = vpop.permute.xlu0 %5321
    %5323 = vrot.lane.b32.xlu0 %v5219, 32
    %v5324 = vpop.permute.xlu0 %5323
    %5329 = vrot.lane.b32.xlu0 %v5225, 96
    %v5330 = vpop.permute.xlu0 %5329
    %5331 = vrot.lane.b32.xlu0 %v5229, 96
    %v5332 = vpop.permute.xlu0 %5331
    %5335 = vrot.lane.b32.xlu0 %v5225, 64
    %v5336 = vpop.permute.xlu0 %5335
    %5337 = vrot.lane.b32.xlu0 %v5229, 64
    %v5338 = vpop.permute.xlu0 %5337
    %5341 = vrot.lane.b32.xlu0 %v5225, 32
    %v5342 = vpop.permute.xlu0 %5341
    %5343 = vrot.lane.b32.xlu0 %v5229, 32
    %v5344 = vpop.permute.xlu0 %5343
    %v5347 = vpack.c.bf16 %v5219, %v5215
    %v5348 = vpack.c.bf16 %v5312, %v5310
    %v5349 = vpack.c.bf16 %v5318, %v5316
    %v5350 = vpack.c.bf16 %v5324, %v5322
    %v5351 = vpack.c.bf16 %v5229, %v5225
    %v5352 = vpack.c.bf16 %v5332, %v5330
    %v5353 = vpack.c.bf16 %v5338, %v5336
    %v5354 = vpack.c.bf16 %v5344, %v5342
    %v5356 = vsel %vm728, %v5251, 0
    %v5359 = vsel %vm728, %v5299, 0
    %5361 = vmatprep.subr.bf16.mxu0 0
    %5362 = vmatpush1.bf16.xpose.msra.mxu0 %v5359
    %5363 = vmatprep.subr.bf16.mxu0 0
    %5364 = vmatpush1.bf16.xpose.msra.mxu0 0
    %5365 = vmatprep.subr.bf16.mxu0 0
    %5366 = vmatpush1.bf16.xpose.msra.mxu0 0
    %5367 = vmatprep.subr.bf16.mxu0 0
    %5368 = vmatpush1.bf16.xpose.msra.mxu0 0
    %5369 = vmatprep.subr.bf16.mxu0 0
    %5370 = vmatpush1.bf16.xpose.msra.mxu0 0
    %5371 = vmatprep.subr.bf16.mxu0 0
    %5372 = vmatpush1.bf16.xpose.msra.mxu0 0
    %5373 = vmatprep.subr.bf16.mxu0 0
    %5374 = vmatpush1.bf16.xpose.msra.mxu0 0
    %5375 = vmatprep.subr.bf16.mxu0 0
    %5376 = vmatpush1.bf16.xpose.msra.mxu0 0
    %5377 = vmatprep.subr.bf16.mxu0 0
    %5378 = vmatpush1.bf16.xpose.msra.mxu0 0
    %5379 = vmatprep.subr.bf16.mxu0 0
    %5380 = vmatpush1.bf16.xpose.msra.mxu0 0
    %5381 = vmatprep.subr.bf16.mxu0 0
    %5382 = vmatpush1.bf16.xpose.msra.mxu0 0
    %5383 = vmatprep.subr.bf16.mxu0 0
    %5384 = vmatpush1.bf16.xpose.msra.mxu0 0
    %5385 = vmatprep.subr.bf16.mxu0 0
    %5386 = vmatpush1.bf16.xpose.msra.mxu0 0
    %5387 = vmatprep.subr.bf16.mxu0 0
    %5388 = vmatpush1.bf16.xpose.msra.mxu0 0
    %5389 = vmatprep.subr.bf16.mxu0 0
    %5390 = vmatpush1.bf16.xpose.msra.mxu0 0
    %5391 = vmatprep.subr.bf16.mxu0 0
    %5392 = vmatpush1.bf16.xpose.msra.mxu0 0
    %5393 = vmatprep.mubr.bf16.mxu0 0
    %5394 = vmatmul.mubr.bf16.gmra.mrb[0].mxu0 %v5356
    %v5395 = vpop.f32.mrb[0].mxu0
    %v5396 = vadd.f32 %v2207, %v5395
    %v5397 = vpop.f32.mrb[0].mxu0
    %v5398 = vpop.f32.mrb[0].mxu0
    %v5399 = vpop.f32.mrb[0].mxu0
    %5400 = vdwg.mxu0
    %v5402 = vsel %vm728, %v5252, 0
    %v5405 = vsel %vm728, %v5300, 0
    %5407 = vmatprep.subr.bf16.mxu0 0
    %5408 = vmatpush1.bf16.xpose.msra.mxu0 %v5405
    %5409 = vmatprep.subr.bf16.mxu0 0
    %5410 = vmatpush1.bf16.xpose.msra.mxu0 0
    %5411 = vmatprep.subr.bf16.mxu0 0
    %5412 = vmatpush1.bf16.xpose.msra.mxu0 0
    %5413 = vmatprep.subr.bf16.mxu0 0
    %5414 = vmatpush1.bf16.xpose.msra.mxu0 0
    %5415 = vmatprep.subr.bf16.mxu0 0
    %5416 = vmatpush1.bf16.xpose.msra.mxu0 0
    %5417 = vmatprep.subr.bf16.mxu0 0
    %5418 = vmatpush1.bf16.xpose.msra.mxu0 0
    %5419 = vmatprep.subr.bf16.mxu0 0
    %5420 = vmatpush1.bf16.xpose.msra.mxu0 0
    %5421 = vmatprep.subr.bf16.mxu0 0
    %5422 = vmatpush1.bf16.xpose.msra.mxu0 0
    %5423 = vmatprep.subr.bf16.mxu0 0
    %5424 = vmatpush1.bf16.xpose.msra.mxu0 0
    %5425 = vmatprep.subr.bf16.mxu0 0
    %5426 = vmatpush1.bf16.xpose.msra.mxu0 0
    %5427 = vmatprep.subr.bf16.mxu0 0
    %5428 = vmatpush1.bf16.xpose.msra.mxu0 0
    %5429 = vmatprep.subr.bf16.mxu0 0
    %5430 = vmatpush1.bf16.xpose.msra.mxu0 0
    %5431 = vmatprep.subr.bf16.mxu0 0
    %5432 = vmatpush1.bf16.xpose.msra.mxu0 0
    %5433 = vmatprep.subr.bf16.mxu0 0
    %5434 = vmatpush1.bf16.xpose.msra.mxu0 0
    %5435 = vmatprep.subr.bf16.mxu0 0
    %5436 = vmatpush1.bf16.xpose.msra.mxu0 0
    %5437 = vmatprep.subr.bf16.mxu0 0
    %5438 = vmatpush1.bf16.xpose.msra.mxu0 0
    %5439 = vmatprep.mubr.bf16.mxu0 0
    %5440 = vmatmul.mubr.bf16.gmra.mrb[0].mxu0 %v5402
    %v5441 = vpop.f32.mrb[0].mxu0
    %v5442 = vadd.f32 %v2211, %v5441
    %v5443 = vpop.f32.mrb[0].mxu0
    %v5444 = vpop.f32.mrb[0].mxu0
    %v5445 = vpop.f32.mrb[0].mxu0
    %5446 = vdwg.mxu0
    %v5448 = vsel %vm728, %v5253, 0
    %v5451 = vsel %vm728, %v5301, 0
    %5453 = vmatprep.subr.bf16.mxu0 0
    %5454 = vmatpush1.bf16.xpose.msra.mxu0 %v5451
    %5455 = vmatprep.subr.bf16.mxu0 0
    %5456 = vmatpush1.bf16.xpose.msra.mxu0 0
    %5457 = vmatprep.subr.bf16.mxu0 0
    %5458 = vmatpush1.bf16.xpose.msra.mxu0 0
    %5459 = vmatprep.subr.bf16.mxu0 0
    %5460 = vmatpush1.bf16.xpose.msra.mxu0 0
    %5461 = vmatprep.subr.bf16.mxu0 0
    %5462 = vmatpush1.bf16.xpose.msra.mxu0 0
    %5463 = vmatprep.subr.bf16.mxu0 0
    %5464 = vmatpush1.bf16.xpose.msra.mxu0 0
    %5465 = vmatprep.subr.bf16.mxu0 0
    %5466 = vmatpush1.bf16.xpose.msra.mxu0 0
    %5467 = vmatprep.subr.bf16.mxu0 0
    %5468 = vmatpush1.bf16.xpose.msra.mxu0 0
    %5469 = vmatprep.subr.bf16.mxu0 0
    %5470 = vmatpush1.bf16.xpose.msra.mxu0 0
    %5471 = vmatprep.subr.bf16.mxu0 0
    %5472 = vmatpush1.bf16.xpose.msra.mxu0 0
    %5473 = vmatprep.subr.bf16.mxu0 0
    %5474 = vmatpush1.bf16.xpose.msra.mxu0 0
    %5475 = vmatprep.subr.bf16.mxu0 0
    %5476 = vmatpush1.bf16.xpose.msra.mxu0 0
    %5477 = vmatprep.subr.bf16.mxu0 0
    %5478 = vmatpush1.bf16.xpose.msra.mxu0 0
    %5479 = vmatprep.subr.bf16.mxu0 0
    %5480 = vmatpush1.bf16.xpose.msra.mxu0 0
    %5481 = vmatprep.subr.bf16.mxu0 0
    %5482 = vmatpush1.bf16.xpose.msra.mxu0 0
    %5483 = vmatprep.subr.bf16.mxu0 0
    %5484 = vmatpush1.bf16.xpose.msra.mxu0 0
    %5485 = vmatprep.mubr.bf16.mxu0 0
    %5486 = vmatmul.mubr.bf16.gmra.mrb[0].mxu0 %v5448
    %v5487 = vpop.f32.mrb[0].mxu0
    %v5488 = vadd.f32 %v2215, %v5487
    %v5489 = vpop.f32.mrb[0].mxu0
    %v5490 = vpop.f32.mrb[0].mxu0
    %v5491 = vpop.f32.mrb[0].mxu0
    %5492 = vdwg.mxu0
    %v5494 = vsel %vm728, %v5254, 0
    %v5497 = vsel %vm728, %v5302, 0
    %5499 = vmatprep.subr.bf16.mxu0 0
    %5500 = vmatpush1.bf16.xpose.msra.mxu0 %v5497
    %5501 = vmatprep.subr.bf16.mxu0 0
    %5502 = vmatpush1.bf16.xpose.msra.mxu0 0
    %5503 = vmatprep.subr.bf16.mxu0 0
    %5504 = vmatpush1.bf16.xpose.msra.mxu0 0
    %5505 = vmatprep.subr.bf16.mxu0 0
    %5506 = vmatpush1.bf16.xpose.msra.mxu0 0
    %5507 = vmatprep.subr.bf16.mxu0 0
    %5508 = vmatpush1.bf16.xpose.msra.mxu0 0
    %5509 = vmatprep.subr.bf16.mxu0 0
    %5510 = vmatpush1.bf16.xpose.msra.mxu0 0
    %5511 = vmatprep.subr.bf16.mxu0 0
    %5512 = vmatpush1.bf16.xpose.msra.mxu0 0
    %5513 = vmatprep.subr.bf16.mxu0 0
    %5514 = vmatpush1.bf16.xpose.msra.mxu0 0
    %5515 = vmatprep.subr.bf16.mxu0 0
    %5516 = vmatpush1.bf16.xpose.msra.mxu0 0
    %5517 = vmatprep.subr.bf16.mxu0 0
    %5518 = vmatpush1.bf16.xpose.msra.mxu0 0
    %5519 = vmatprep.subr.bf16.mxu0 0
    %5520 = vmatpush1.bf16.xpose.msra.mxu0 0
    %5521 = vmatprep.subr.bf16.mxu0 0
    %5522 = vmatpush1.bf16.xpose.msra.mxu0 0
    %5523 = vmatprep.subr.bf16.mxu0 0
    %5524 = vmatpush1.bf16.xpose.msra.mxu0 0
    %5525 = vmatprep.subr.bf16.mxu0 0
    %5526 = vmatpush1.bf16.xpose.msra.mxu0 0
    %5527 = vmatprep.subr.bf16.mxu0 0
    %5528 = vmatpush1.bf16.xpose.msra.mxu0 0
    %5529 = vmatprep.subr.bf16.mxu0 0
    %5530 = vmatpush1.bf16.xpose.msra.mxu0 0
    %5531 = vmatprep.mubr.bf16.mxu0 0
    %5532 = vmatmul.mubr.bf16.gmra.mrb[0].mxu0 %v5494
    %v5533 = vpop.f32.mrb[0].mxu0
    %v5534 = vadd.f32 %v2219, %v5533
    %v5535 = vpop.f32.mrb[0].mxu0
    %v5536 = vpop.f32.mrb[0].mxu0
    %v5537 = vpop.f32.mrb[0].mxu0
    %5538 = vdwg.mxu0
    %v5540 = vsel %vm728, %v5255, 0
    %v5543 = vsel %vm728, %v5303, 0
    %5545 = vmatprep.subr.bf16.mxu0 0
    %5546 = vmatpush1.bf16.xpose.msra.mxu0 %v5543
    %5547 = vmatprep.subr.bf16.mxu0 0
    %5548 = vmatpush1.bf16.xpose.msra.mxu0 0
    %5549 = vmatprep.subr.bf16.mxu0 0
    %5550 = vmatpush1.bf16.xpose.msra.mxu0 0
    %5551 = vmatprep.subr.bf16.mxu0 0
    %5552 = vmatpush1.bf16.xpose.msra.mxu0 0
    %5553 = vmatprep.subr.bf16.mxu0 0
    %5554 = vmatpush1.bf16.xpose.msra.mxu0 0
    %5555 = vmatprep.subr.bf16.mxu0 0
    %5556 = vmatpush1.bf16.xpose.msra.mxu0 0
    %5557 = vmatprep.subr.bf16.mxu0 0
    %5558 = vmatpush1.bf16.xpose.msra.mxu0 0
    %5559 = vmatprep.subr.bf16.mxu0 0
    %5560 = vmatpush1.bf16.xpose.msra.mxu0 0
    %5561 = vmatprep.subr.bf16.mxu0 0
    %5562 = vmatpush1.bf16.xpose.msra.mxu0 0
    %5563 = vmatprep.subr.bf16.mxu0 0
    %5564 = vmatpush1.bf16.xpose.msra.mxu0 0
    %5565 = vmatprep.subr.bf16.mxu0 0
    %5566 = vmatpush1.bf16.xpose.msra.mxu0 0
    %5567 = vmatprep.subr.bf16.mxu0 0
    %5568 = vmatpush1.bf16.xpose.msra.mxu0 0
    %5569 = vmatprep.subr.bf16.mxu0 0
    %5570 = vmatpush1.bf16.xpose.msra.mxu0 0
    %5571 = vmatprep.subr.bf16.mxu0 0
    %5572 = vmatpush1.bf16.xpose.msra.mxu0 0
    %5573 = vmatprep.subr.bf16.mxu0 0
    %5574 = vmatpush1.bf16.xpose.msra.mxu0 0
    %5575 = vmatprep.subr.bf16.mxu0 0
    %5576 = vmatpush1.bf16.xpose.msra.mxu0 0
    %5577 = vmatprep.mubr.bf16.mxu0 0
    %5578 = vmatmul.mubr.bf16.gmra.mrb[0].mxu0 %v5540
    %v5579 = vpop.f32.mrb[0].mxu0
    %v5580 = vadd.f32 %v2223, %v5579
    %v5581 = vpop.f32.mrb[0].mxu0
    %v5582 = vpop.f32.mrb[0].mxu0
    %v5583 = vpop.f32.mrb[0].mxu0
    %5584 = vdwg.mxu0
    %v5586 = vsel %vm728, %v5256, 0
    %v5589 = vsel %vm728, %v5304, 0
    %5591 = vmatprep.subr.bf16.mxu0 0
    %5592 = vmatpush1.bf16.xpose.msra.mxu0 %v5589
    %5593 = vmatprep.subr.bf16.mxu0 0
    %5594 = vmatpush1.bf16.xpose.msra.mxu0 0
    %5595 = vmatprep.subr.bf16.mxu0 0
    %5596 = vmatpush1.bf16.xpose.msra.mxu0 0
    %5597 = vmatprep.subr.bf16.mxu0 0
    %5598 = vmatpush1.bf16.xpose.msra.mxu0 0
    %5599 = vmatprep.subr.bf16.mxu0 0
    %5600 = vmatpush1.bf16.xpose.msra.mxu0 0
    %5601 = vmatprep.subr.bf16.mxu0 0
    %5602 = vmatpush1.bf16.xpose.msra.mxu0 0
    %5603 = vmatprep.subr.bf16.mxu0 0
    %5604 = vmatpush1.bf16.xpose.msra.mxu0 0
    %5605 = vmatprep.subr.bf16.mxu0 0
    %5606 = vmatpush1.bf16.xpose.msra.mxu0 0
    %5607 = vmatprep.subr.bf16.mxu0 0
    %5608 = vmatpush1.bf16.xpose.msra.mxu0 0
    %5609 = vmatprep.subr.bf16.mxu0 0
    %5610 = vmatpush1.bf16.xpose.msra.mxu0 0
    %5611 = vmatprep.subr.bf16.mxu0 0
    %5612 = vmatpush1.bf16.xpose.msra.mxu0 0
    %5613 = vmatprep.subr.bf16.mxu0 0
    %5614 = vmatpush1.bf16.xpose.msra.mxu0 0
    %5615 = vmatprep.subr.bf16.mxu0 0
    %5616 = vmatpush1.bf16.xpose.msra.mxu0 0
    %5617 = vmatprep.subr.bf16.mxu0 0
    %5618 = vmatpush1.bf16.xpose.msra.mxu0 0
    %5619 = vmatprep.subr.bf16.mxu0 0
    %5620 = vmatpush1.bf16.xpose.msra.mxu0 0
    %5621 = vmatprep.subr.bf16.mxu0 0
    %5622 = vmatpush1.bf16.xpose.msra.mxu0 0
    %5623 = vmatprep.mubr.bf16.mxu0 0
    %5624 = vmatmul.mubr.bf16.gmra.mrb[0].mxu0 %v5586
    %v5625 = vpop.f32.mrb[0].mxu0
    %v5626 = vadd.f32 %v2227, %v5625
    %v5627 = vpop.f32.mrb[0].mxu0
    %v5628 = vpop.f32.mrb[0].mxu0
    %v5629 = vpop.f32.mrb[0].mxu0
    %5630 = vdwg.mxu0
    %v5632 = vsel %vm728, %v5257, 0
    %v5635 = vsel %vm728, %v5305, 0
    %5637 = vmatprep.subr.bf16.mxu0 0
    %5638 = vmatpush1.bf16.xpose.msra.mxu0 %v5635
    %5639 = vmatprep.subr.bf16.mxu0 0
    %5640 = vmatpush1.bf16.xpose.msra.mxu0 0
    %5641 = vmatprep.subr.bf16.mxu0 0
    %5642 = vmatpush1.bf16.xpose.msra.mxu0 0
    %5643 = vmatprep.subr.bf16.mxu0 0
    %5644 = vmatpush1.bf16.xpose.msra.mxu0 0
    %5645 = vmatprep.subr.bf16.mxu0 0
    %5646 = vmatpush1.bf16.xpose.msra.mxu0 0
    %5647 = vmatprep.subr.bf16.mxu0 0
    %5648 = vmatpush1.bf16.xpose.msra.mxu0 0
    %5649 = vmatprep.subr.bf16.mxu0 0
    %5650 = vmatpush1.bf16.xpose.msra.mxu0 0
    %5651 = vmatprep.subr.bf16.mxu0 0
    %5652 = vmatpush1.bf16.xpose.msra.mxu0 0
    %5653 = vmatprep.subr.bf16.mxu0 0
    %5654 = vmatpush1.bf16.xpose.msra.mxu0 0
    %5655 = vmatprep.subr.bf16.mxu0 0
    %5656 = vmatpush1.bf16.xpose.msra.mxu0 0
    %5657 = vmatprep.subr.bf16.mxu0 0
    %5658 = vmatpush1.bf16.xpose.msra.mxu0 0
    %5659 = vmatprep.subr.bf16.mxu0 0
    %5660 = vmatpush1.bf16.xpose.msra.mxu0 0
    %5661 = vmatprep.subr.bf16.mxu0 0
    %5662 = vmatpush1.bf16.xpose.msra.mxu0 0
    %5663 = vmatprep.subr.bf16.mxu0 0
    %5664 = vmatpush1.bf16.xpose.msra.mxu0 0
    %5665 = vmatprep.subr.bf16.mxu0 0
    %5666 = vmatpush1.bf16.xpose.msra.mxu0 0
    %5667 = vmatprep.subr.bf16.mxu0 0
    %5668 = vmatpush1.bf16.xpose.msra.mxu0 0
    %5669 = vmatprep.mubr.bf16.mxu0 0
    %5670 = vmatmul.mubr.bf16.gmra.mrb[0].mxu0 %v5632
    %v5671 = vpop.f32.mrb[0].mxu0
    %v5672 = vadd.f32 %v2231, %v5671
    %v5673 = vpop.f32.mrb[0].mxu0
    %v5674 = vpop.f32.mrb[0].mxu0
    %v5675 = vpop.f32.mrb[0].mxu0
    %5676 = vdwg.mxu0
    %v5678 = vsel %vm728, %v5258, 0
    %v5681 = vsel %vm728, %v5306, 0
    %5683 = vmatprep.subr.bf16.mxu0 0
    %5684 = vmatpush1.bf16.xpose.msra.mxu0 %v5681
    %5685 = vmatprep.subr.bf16.mxu0 0
    %5686 = vmatpush1.bf16.xpose.msra.mxu0 0
    %5687 = vmatprep.subr.bf16.mxu0 0
    %5688 = vmatpush1.bf16.xpose.msra.mxu0 0
    %5689 = vmatprep.subr.bf16.mxu0 0
    %5690 = vmatpush1.bf16.xpose.msra.mxu0 0
    %5691 = vmatprep.subr.bf16.mxu0 0
    %5692 = vmatpush1.bf16.xpose.msra.mxu0 0
    %5693 = vmatprep.subr.bf16.mxu0 0
    %5694 = vmatpush1.bf16.xpose.msra.mxu0 0
    %5695 = vmatprep.subr.bf16.mxu0 0
    %5696 = vmatpush1.bf16.xpose.msra.mxu0 0
    %5697 = vmatprep.subr.bf16.mxu0 0
    %5698 = vmatpush1.bf16.xpose.msra.mxu0 0
    %5699 = vmatprep.subr.bf16.mxu0 0
    %5700 = vmatpush1.bf16.xpose.msra.mxu0 0
    %5701 = vmatprep.subr.bf16.mxu0 0
    %5702 = vmatpush1.bf16.xpose.msra.mxu0 0
    %5703 = vmatprep.subr.bf16.mxu0 0
    %5704 = vmatpush1.bf16.xpose.msra.mxu0 0
    %5705 = vmatprep.subr.bf16.mxu0 0
    %5706 = vmatpush1.bf16.xpose.msra.mxu0 0
    %5707 = vmatprep.subr.bf16.mxu0 0
    %5708 = vmatpush1.bf16.xpose.msra.mxu0 0
    %5709 = vmatprep.subr.bf16.mxu0 0
    %5710 = vmatpush1.bf16.xpose.msra.mxu0 0
    %5711 = vmatprep.subr.bf16.mxu0 0
    %5712 = vmatpush1.bf16.xpose.msra.mxu0 0
    %5713 = vmatprep.subr.bf16.mxu0 0
    %5714 = vmatpush1.bf16.xpose.msra.mxu0 0
    %5715 = vmatprep.mubr.bf16.mxu0 0
    %5716 = vmatmul.mubr.bf16.gmra.mrb[0].mxu0 %v5678
    %v5717 = vpop.f32.mrb[0].mxu0
    %v5718 = vadd.f32 %v2235, %v5717
    %v5719 = vpop.f32.mrb[0].mxu0
    %v5720 = vpop.f32.mrb[0].mxu0
    %v5721 = vpop.f32.mrb[0].mxu0
    %5722 = vdwg.mxu0
    %v5723 = vsel %vm2612, %v5396, -inf
    %5724 = vmax.xlane.f32.xlu0 %v5723
    %v5725 = vpop.xlane.xlu0 %5724
    %v5726 = vsel %vm2612, %v5442, -inf
    %5727 = vmax.xlane.f32.xlu0 %v5726
    %v5728 = vpop.xlane.xlu0 %5727
    %v5729 = vsel %vm2612, %v5488, -inf
    %5730 = vmax.xlane.f32.xlu0 %v5729
    %v5731 = vpop.xlane.xlu0 %5730
    %v5732 = vsel %vm2612, %v5534, -inf
    %5733 = vmax.xlane.f32.xlu0 %v5732
    %v5734 = vpop.xlane.xlu0 %5733
    %v5735 = vsel %vm2612, %v5580, -inf
    %5736 = vmax.xlane.f32.xlu0 %v5735
    %v5737 = vpop.xlane.xlu0 %5736
    %v5738 = vsel %vm2612, %v5626, -inf
    %5739 = vmax.xlane.f32.xlu0 %v5738
    %v5740 = vpop.xlane.xlu0 %5739
    %v5741 = vsel %vm2612, %v5672, -inf
    %5742 = vmax.xlane.f32.xlu0 %v5741
    %v5743 = vpop.xlane.xlu0 %5742
    %v5744 = vsel %vm2612, %v5718, -inf
    %5745 = vmax.xlane.f32.xlu0 %v5744
    %v5746 = vpop.xlane.xlu0 %5745
    %v5747 = vsub.f32 %v5396, %v5725
    %v5748 = vsub.f32 %v5442, %v5728
    %v5749 = vsub.f32 %v5488, %v5731
    %v5750 = vsub.f32 %v5534, %v5734
    %v5751 = vsub.f32 %v5580, %v5737
    %v5752 = vsub.f32 %v5626, %v5740
    %v5753 = vsub.f32 %v5672, %v5743
    %v5754 = vsub.f32 %v5718, %v5746
    %v5755 = vmul.f32 %v5747, 1.442695
    %v5756 = vpow.pop %v5755
    %v5757 = vmul.f32 %v5748, 1.442695
    %v5758 = vpow.pop %v5757
    %v5759 = vmul.f32 %v5749, 1.442695
    %v5760 = vpow.pop %v5759
    %v5761 = vmul.f32 %v5750, 1.442695
    %v5762 = vpow.pop %v5761
    %v5763 = vmul.f32 %v5751, 1.442695
    %v5764 = vpow.pop %v5763
    %v5765 = vmul.f32 %v5752, 1.442695
    %v5766 = vpow.pop %v5765
    %v5767 = vmul.f32 %v5753, 1.442695
    %v5768 = vpow.pop %v5767
    %v5769 = vmul.f32 %v5754, 1.442695
    %v5770 = vpow.pop %v5769
    %v5771 = vsel %vm2612, %v5756, 0.0
    %5772 = vadd.xlane.f32.xlu0 %v5771
    %v5773 = vpop.xlane.xlu0 %5772
    %v5774 = vsel %vm2612, %v5758, 0.0
    %5775 = vadd.xlane.f32.xlu0 %v5774
    %v5776 = vpop.xlane.xlu0 %5775
    %v5777 = vsel %vm2612, %v5760, 0.0
    %5778 = vadd.xlane.f32.xlu0 %v5777
    %v5779 = vpop.xlane.xlu0 %5778
    %v5780 = vsel %vm2612, %v5762, 0.0
    %5781 = vadd.xlane.f32.xlu0 %v5780
    %v5782 = vpop.xlane.xlu0 %5781
    %v5783 = vsel %vm2612, %v5764, 0.0
    %5784 = vadd.xlane.f32.xlu0 %v5783
    %v5785 = vpop.xlane.xlu0 %5784
    %v5786 = vsel %vm2612, %v5766, 0.0
    %5787 = vadd.xlane.f32.xlu0 %v5786
    %v5788 = vpop.xlane.xlu0 %5787
    %v5789 = vsel %vm2612, %v5768, 0.0
    %5790 = vadd.xlane.f32.xlu0 %v5789
    %v5791 = vpop.xlane.xlu0 %5790
    %v5792 = vsel %vm2612, %v5770, 0.0
    %5793 = vadd.xlane.f32.xlu0 %v5792
    %v5794 = vpop.xlane.xlu0 %5793
    %v5795 = vrcp.pop %v5773
    %v5796 = vrcp.pop %v5776
    %v5797 = vrcp.pop %v5779
    %v5798 = vrcp.pop %v5782
    %v5799 = vrcp.pop %v5785
    %v5800 = vrcp.pop %v5788
    %v5801 = vrcp.pop %v5791
    %v5802 = vrcp.pop %v5794
    %v5803 = vmul.f32 %v5756, %v5795
    %v5804 = vmul.f32 %v5758, %v5796
    %v5805 = vmul.f32 %v5760, %v5797
    %v5806 = vmul.f32 %v5762, %v5798
    %v5807 = vmul.f32 %v5764, %v5799
    %v5808 = vmul.f32 %v5766, %v5800
    %v5809 = vmul.f32 %v5768, %v5801
    %v5810 = vmul.f32 %v5770, %v5802
    %v5811 = vpack.c.bf16 %v5803, %v5803
    %v5812 = vpack.c.bf16 %v5804, %v5804
    %v5813 = vpack.c.bf16 %v5805, %v5805
    %v5814 = vpack.c.bf16 %v5806, %v5806
    %v5815 = vpack.c.bf16 %v5807, %v5807
    %v5816 = vpack.c.bf16 %v5808, %v5808
    %v5817 = vpack.c.bf16 %v5809, %v5809
    %v5818 = vpack.c.bf16 %v5810, %v5810
    %v5820 = vsel %vm2612, %v5811, 0
    %5822 = vmatprep.subr.bf16.mxu0 0
    %5823 = vmatpush1.bf16.msra.mxu0 %v5347
    %5824 = vmatprep.subr.bf16.mxu0 0
    %5825 = vmatpush1.bf16.msra.mxu0 0
    %5826 = vmatprep.subr.bf16.mxu0 0
    %5827 = vmatpush1.bf16.msra.mxu0 0
    %5828 = vmatprep.subr.bf16.mxu0 0
    %5829 = vmatpush1.bf16.msra.mxu0 0
    %5830 = vmatprep.subr.bf16.mxu0 0
    %5831 = vmatpush1.bf16.msra.mxu0 0
    %5832 = vmatprep.subr.bf16.mxu0 0
    %5833 = vmatpush1.bf16.msra.mxu0 0
    %5834 = vmatprep.subr.bf16.mxu0 0
    %5835 = vmatpush1.bf16.msra.mxu0 0
    %5836 = vmatprep.subr.bf16.mxu0 0
    %5837 = vmatpush1.bf16.msra.mxu0 0
    %5838 = vmatprep.subr.bf16.mxu0 0
    %5839 = vmatpush1.bf16.msra.mxu0 0
    %5840 = vmatprep.subr.bf16.mxu0 0
    %5841 = vmatpush1.bf16.msra.mxu0 0
    %5842 = vmatprep.subr.bf16.mxu0 0
    %5843 = vmatpush1.bf16.msra.mxu0 0
    %5844 = vmatprep.subr.bf16.mxu0 0
    %5845 = vmatpush1.bf16.msra.mxu0 0
    %5846 = vmatprep.subr.bf16.mxu0 0
    %5847 = vmatpush1.bf16.msra.mxu0 0
    %5848 = vmatprep.subr.bf16.mxu0 0
    %5849 = vmatpush1.bf16.msra.mxu0 0
    %5850 = vmatprep.subr.bf16.mxu0 0
    %5851 = vmatpush1.bf16.msra.mxu0 0
    %5852 = vmatprep.subr.bf16.mxu0 0
    %5853 = vmatpush1.bf16.msra.mxu0 0
    %5854 = vmatprep.mubr.bf16.mxu0 0
    %5855 = vmatmul.mubr.bf16.gmra.mrb[0].mxu0 %v5820
    %v5856 = vpop.f32.mrb[0].mxu0
    %v5857 = vadd.f32 0.0, %v5856
    %v5858 = vpop.f32.mrb[0].mxu0
    %v5859 = vpop.f32.mrb[0].mxu0
    %v5860 = vpop.f32.mrb[0].mxu0
    %5861 = vdwg.mxu0
    %v5863 = vsel %vm2612, %v5812, 0
    %5865 = vmatprep.subr.bf16.mxu0 0
    %5866 = vmatpush1.bf16.msra.mxu0 %v5348
    %5867 = vmatprep.subr.bf16.mxu0 0
    %5868 = vmatpush1.bf16.msra.mxu0 0
    %5869 = vmatprep.subr.bf16.mxu0 0
    %5870 = vmatpush1.bf16.msra.mxu0 0
    %5871 = vmatprep.subr.bf16.mxu0 0
    %5872 = vmatpush1.bf16.msra.mxu0 0
    %5873 = vmatprep.subr.bf16.mxu0 0
    %5874 = vmatpush1.bf16.msra.mxu0 0
    %5875 = vmatprep.subr.bf16.mxu0 0
    %5876 = vmatpush1.bf16.msra.mxu0 0
    %5877 = vmatprep.subr.bf16.mxu0 0
    %5878 = vmatpush1.bf16.msra.mxu0 0
    %5879 = vmatprep.subr.bf16.mxu0 0
    %5880 = vmatpush1.bf16.msra.mxu0 0
    %5881 = vmatprep.subr.bf16.mxu0 0
    %5882 = vmatpush1.bf16.msra.mxu0 0
    %5883 = vmatprep.subr.bf16.mxu0 0
    %5884 = vmatpush1.bf16.msra.mxu0 0
    %5885 = vmatprep.subr.bf16.mxu0 0
    %5886 = vmatpush1.bf16.msra.mxu0 0
    %5887 = vmatprep.subr.bf16.mxu0 0
    %5888 = vmatpush1.bf16.msra.mxu0 0
    %5889 = vmatprep.subr.bf16.mxu0 0
    %5890 = vmatpush1.bf16.msra.mxu0 0
    %5891 = vmatprep.subr.bf16.mxu0 0
    %5892 = vmatpush1.bf16.msra.mxu0 0
    %5893 = vmatprep.subr.bf16.mxu0 0
    %5894 = vmatpush1.bf16.msra.mxu0 0
    %5895 = vmatprep.subr.bf16.mxu0 0
    %5896 = vmatpush1.bf16.msra.mxu0 0
    %5897 = vmatprep.mubr.bf16.mxu0 0
    %5898 = vmatmul.mubr.bf16.gmra.mrb[0].mxu0 %v5863
    %v5899 = vpop.f32.mrb[0].mxu0
    %v5900 = vadd.f32 0.0, %v5899
    %v5901 = vpop.f32.mrb[0].mxu0
    %v5902 = vpop.f32.mrb[0].mxu0
    %v5903 = vpop.f32.mrb[0].mxu0
    %5904 = vdwg.mxu0
    %v5906 = vsel %vm2612, %v5813, 0
    %5908 = vmatprep.subr.bf16.mxu0 0
    %5909 = vmatpush1.bf16.msra.mxu0 %v5349
    %5910 = vmatprep.subr.bf16.mxu0 0
    %5911 = vmatpush1.bf16.msra.mxu0 0
    %5912 = vmatprep.subr.bf16.mxu0 0
    %5913 = vmatpush1.bf16.msra.mxu0 0
    %5914 = vmatprep.subr.bf16.mxu0 0
    %5915 = vmatpush1.bf16.msra.mxu0 0
    %5916 = vmatprep.subr.bf16.mxu0 0
    %5917 = vmatpush1.bf16.msra.mxu0 0
    %5918 = vmatprep.subr.bf16.mxu0 0
    %5919 = vmatpush1.bf16.msra.mxu0 0
    %5920 = vmatprep.subr.bf16.mxu0 0
    %5921 = vmatpush1.bf16.msra.mxu0 0
    %5922 = vmatprep.subr.bf16.mxu0 0
    %5923 = vmatpush1.bf16.msra.mxu0 0
    %5924 = vmatprep.subr.bf16.mxu0 0
    %5925 = vmatpush1.bf16.msra.mxu0 0
    %5926 = vmatprep.subr.bf16.mxu0 0
    %5927 = vmatpush1.bf16.msra.mxu0 0
    %5928 = vmatprep.subr.bf16.mxu0 0
    %5929 = vmatpush1.bf16.msra.mxu0 0
    %5930 = vmatprep.subr.bf16.mxu0 0
    %5931 = vmatpush1.bf16.msra.mxu0 0
    %5932 = vmatprep.subr.bf16.mxu0 0
    %5933 = vmatpush1.bf16.msra.mxu0 0
    %5934 = vmatprep.subr.bf16.mxu0 0
    %5935 = vmatpush1.bf16.msra.mxu0 0
    %5936 = vmatprep.subr.bf16.mxu0 0
    %5937 = vmatpush1.bf16.msra.mxu0 0
    %5938 = vmatprep.subr.bf16.mxu0 0
    %5939 = vmatpush1.bf16.msra.mxu0 0
    %5940 = vmatprep.mubr.bf16.mxu0 0
    %5941 = vmatmul.mubr.bf16.gmra.mrb[0].mxu0 %v5906
    %v5942 = vpop.f32.mrb[0].mxu0
    %v5943 = vadd.f32 0.0, %v5942
    %v5944 = vpop.f32.mrb[0].mxu0
    %v5945 = vpop.f32.mrb[0].mxu0
    %v5946 = vpop.f32.mrb[0].mxu0
    %5947 = vdwg.mxu0
    %v5949 = vsel %vm2612, %v5814, 0
    %5951 = vmatprep.subr.bf16.mxu0 0
    %5952 = vmatpush1.bf16.msra.mxu0 %v5350
    %5953 = vmatprep.subr.bf16.mxu0 0
    %5954 = vmatpush1.bf16.msra.mxu0 0
    %5955 = vmatprep.subr.bf16.mxu0 0
    %5956 = vmatpush1.bf16.msra.mxu0 0
    %5957 = vmatprep.subr.bf16.mxu0 0
    %5958 = vmatpush1.bf16.msra.mxu0 0
    %5959 = vmatprep.subr.bf16.mxu0 0
    %5960 = vmatpush1.bf16.msra.mxu0 0
    %5961 = vmatprep.subr.bf16.mxu0 0
    %5962 = vmatpush1.bf16.msra.mxu0 0
    %5963 = vmatprep.subr.bf16.mxu0 0
    %5964 = vmatpush1.bf16.msra.mxu0 0
    %5965 = vmatprep.subr.bf16.mxu0 0
    %5966 = vmatpush1.bf16.msra.mxu0 0
    %5967 = vmatprep.subr.bf16.mxu0 0
    %5968 = vmatpush1.bf16.msra.mxu0 0
    %5969 = vmatprep.subr.bf16.mxu0 0
    %5970 = vmatpush1.bf16.msra.mxu0 0
    %5971 = vmatprep.subr.bf16.mxu0 0
    %5972 = vmatpush1.bf16.msra.mxu0 0
    %5973 = vmatprep.subr.bf16.mxu0 0
    %5974 = vmatpush1.bf16.msra.mxu0 0
    %5975 = vmatprep.subr.bf16.mxu0 0
    %5976 = vmatpush1.bf16.msra.mxu0 0
    %5977 = vmatprep.subr.bf16.mxu0 0
    %5978 = vmatpush1.bf16.msra.mxu0 0
    %5979 = vmatprep.subr.bf16.mxu0 0
    %5980 = vmatpush1.bf16.msra.mxu0 0
    %5981 = vmatprep.subr.bf16.mxu0 0
    %5982 = vmatpush1.bf16.msra.mxu0 0
    %5983 = vmatprep.mubr.bf16.mxu0 0
    %5984 = vmatmul.mubr.bf16.gmra.mrb[0].mxu0 %v5949
    %v5985 = vpop.f32.mrb[0].mxu0
    %v5986 = vadd.f32 0.0, %v5985
    %v5987 = vpop.f32.mrb[0].mxu0
    %v5988 = vpop.f32.mrb[0].mxu0
    %v5989 = vpop.f32.mrb[0].mxu0
    %5990 = vdwg.mxu0
    %v5992 = vsel %vm2612, %v5815, 0
    %5994 = vmatprep.subr.bf16.mxu0 0
    %5995 = vmatpush1.bf16.msra.mxu0 %v5351
    %5996 = vmatprep.subr.bf16.mxu0 0
    %5997 = vmatpush1.bf16.msra.mxu0 0
    %5998 = vmatprep.subr.bf16.mxu0 0
    %5999 = vmatpush1.bf16.msra.mxu0 0
    %6000 = vmatprep.subr.bf16.mxu0 0
    %6001 = vmatpush1.bf16.msra.mxu0 0
    %6002 = vmatprep.subr.bf16.mxu0 0
    %6003 = vmatpush1.bf16.msra.mxu0 0
    %6004 = vmatprep.subr.bf16.mxu0 0
    %6005 = vmatpush1.bf16.msra.mxu0 0
    %6006 = vmatprep.subr.bf16.mxu0 0
    %6007 = vmatpush1.bf16.msra.mxu0 0
    %6008 = vmatprep.subr.bf16.mxu0 0
    %6009 = vmatpush1.bf16.msra.mxu0 0
    %6010 = vmatprep.subr.bf16.mxu0 0
    %6011 = vmatpush1.bf16.msra.mxu0 0
    %6012 = vmatprep.subr.bf16.mxu0 0
    %6013 = vmatpush1.bf16.msra.mxu0 0
    %6014 = vmatprep.subr.bf16.mxu0 0
    %6015 = vmatpush1.bf16.msra.mxu0 0
    %6016 = vmatprep.subr.bf16.mxu0 0
    %6017 = vmatpush1.bf16.msra.mxu0 0
    %6018 = vmatprep.subr.bf16.mxu0 0
    %6019 = vmatpush1.bf16.msra.mxu0 0
    %6020 = vmatprep.subr.bf16.mxu0 0
    %6021 = vmatpush1.bf16.msra.mxu0 0
    %6022 = vmatprep.subr.bf16.mxu0 0
    %6023 = vmatpush1.bf16.msra.mxu0 0
    %6024 = vmatprep.subr.bf16.mxu0 0
    %6025 = vmatpush1.bf16.msra.mxu0 0
    %6026 = vmatprep.mubr.bf16.mxu0 0
    %6027 = vmatmul.mubr.bf16.gmra.mrb[0].mxu0 %v5992
    %v6028 = vpop.f32.mrb[0].mxu0
    %v6029 = vadd.f32 0.0, %v6028
    %v6030 = vpop.f32.mrb[0].mxu0
    %v6031 = vpop.f32.mrb[0].mxu0
    %v6032 = vpop.f32.mrb[0].mxu0
    %6033 = vdwg.mxu0
    %v6035 = vsel %vm2612, %v5816, 0
    %6037 = vmatprep.subr.bf16.mxu0 0
    %6038 = vmatpush1.bf16.msra.mxu0 %v5352
    %6039 = vmatprep.subr.bf16.mxu0 0
    %6040 = vmatpush1.bf16.msra.mxu0 0
    %6041 = vmatprep.subr.bf16.mxu0 0
    %6042 = vmatpush1.bf16.msra.mxu0 0
    %6043 = vmatprep.subr.bf16.mxu0 0
    %6044 = vmatpush1.bf16.msra.mxu0 0
    %6045 = vmatprep.subr.bf16.mxu0 0
    %6046 = vmatpush1.bf16.msra.mxu0 0
    %6047 = vmatprep.subr.bf16.mxu0 0
    %6048 = vmatpush1.bf16.msra.mxu0 0
    %6049 = vmatprep.subr.bf16.mxu0 0
    %6050 = vmatpush1.bf16.msra.mxu0 0
    %6051 = vmatprep.subr.bf16.mxu0 0
    %6052 = vmatpush1.bf16.msra.mxu0 0
    %6053 = vmatprep.subr.bf16.mxu0 0
    %6054 = vmatpush1.bf16.msra.mxu0 0
    %6055 = vmatprep.subr.bf16.mxu0 0
    %6056 = vmatpush1.bf16.msra.mxu0 0
    %6057 = vmatprep.subr.bf16.mxu0 0
    %6058 = vmatpush1.bf16.msra.mxu0 0
    %6059 = vmatprep.subr.bf16.mxu0 0
    %6060 = vmatpush1.bf16.msra.mxu0 0
    %6061 = vmatprep.subr.bf16.mxu0 0
    %6062 = vmatpush1.bf16.msra.mxu0 0
    %6063 = vmatprep.subr.bf16.mxu0 0
    %6064 = vmatpush1.bf16.msra.mxu0 0
    %6065 = vmatprep.subr.bf16.mxu0 0
    %6066 = vmatpush1.bf16.msra.mxu0 0
    %6067 = vmatprep.subr.bf16.mxu0 0
    %6068 = vmatpush1.bf16.msra.mxu0 0
    %6069 = vmatprep.mubr.bf16.mxu0 0
    %6070 = vmatmul.mubr.bf16.gmra.mrb[0].mxu0 %v6035
    %v6071 = vpop.f32.mrb[0].mxu0
    %v6072 = vadd.f32 0.0, %v6071
    %v6073 = vpop.f32.mrb[0].mxu0
    %v6074 = vpop.f32.mrb[0].mxu0
    %v6075 = vpop.f32.mrb[0].mxu0
    %6076 = vdwg.mxu0
    %v6078 = vsel %vm2612, %v5817, 0
    %6080 = vmatprep.subr.bf16.mxu0 0
    %6081 = vmatpush1.bf16.msra.mxu0 %v5353
    %6082 = vmatprep.subr.bf16.mxu0 0
    %6083 = vmatpush1.bf16.msra.mxu0 0
    %6084 = vmatprep.subr.bf16.mxu0 0
    %6085 = vmatpush1.bf16.msra.mxu0 0
    %6086 = vmatprep.subr.bf16.mxu0 0
    %6087 = vmatpush1.bf16.msra.mxu0 0
    %6088 = vmatprep.subr.bf16.mxu0 0
    %6089 = vmatpush1.bf16.msra.mxu0 0
    %6090 = vmatprep.subr.bf16.mxu0 0
    %6091 = vmatpush1.bf16.msra.mxu0 0
    %6092 = vmatprep.subr.bf16.mxu0 0
    %6093 = vmatpush1.bf16.msra.mxu0 0
    %6094 = vmatprep.subr.bf16.mxu0 0
    %6095 = vmatpush1.bf16.msra.mxu0 0
    %6096 = vmatprep.subr.bf16.mxu0 0
    %6097 = vmatpush1.bf16.msra.mxu0 0
    %6098 = vmatprep.subr.bf16.mxu0 0
    %6099 = vmatpush1.bf16.msra.mxu0 0
    %6100 = vmatprep.subr.bf16.mxu0 0
    %6101 = vmatpush1.bf16.msra.mxu0 0
    %6102 = vmatprep.subr.bf16.mxu0 0
    %6103 = vmatpush1.bf16.msra.mxu0 0
    %6104 = vmatprep.subr.bf16.mxu0 0
    %6105 = vmatpush1.bf16.msra.mxu0 0
    %6106 = vmatprep.subr.bf16.mxu0 0
    %6107 = vmatpush1.bf16.msra.mxu0 0
    %6108 = vmatprep.subr.bf16.mxu0 0
    %6109 = vmatpush1.bf16.msra.mxu0 0
    %6110 = vmatprep.subr.bf16.mxu0 0
    %6111 = vmatpush1.bf16.msra.mxu0 0
    %6112 = vmatprep.mubr.bf16.mxu0 0
    %6113 = vmatmul.mubr.bf16.gmra.mrb[0].mxu0 %v6078
    %v6114 = vpop.f32.mrb[0].mxu0
    %v6115 = vadd.f32 0.0, %v6114
    %v6116 = vpop.f32.mrb[0].mxu0
    %v6117 = vpop.f32.mrb[0].mxu0
    %v6118 = vpop.f32.mrb[0].mxu0
    %6119 = vdwg.mxu0
    %v6121 = vsel %vm2612, %v5818, 0
    %6123 = vmatprep.subr.bf16.mxu0 0
    %6124 = vmatpush1.bf16.msra.mxu0 %v5354
    %6125 = vmatprep.subr.bf16.mxu0 0
    %6126 = vmatpush1.bf16.msra.mxu0 0
    %6127 = vmatprep.subr.bf16.mxu0 0
    %6128 = vmatpush1.bf16.msra.mxu0 0
    %6129 = vmatprep.subr.bf16.mxu0 0
    %6130 = vmatpush1.bf16.msra.mxu0 0
    %6131 = vmatprep.subr.bf16.mxu0 0
    %6132 = vmatpush1.bf16.msra.mxu0 0
    %6133 = vmatprep.subr.bf16.mxu0 0
    %6134 = vmatpush1.bf16.msra.mxu0 0
    %6135 = vmatprep.subr.bf16.mxu0 0
    %6136 = vmatpush1.bf16.msra.mxu0 0
    %6137 = vmatprep.subr.bf16.mxu0 0
    %6138 = vmatpush1.bf16.msra.mxu0 0
    %6139 = vmatprep.subr.bf16.mxu0 0
    %6140 = vmatpush1.bf16.msra.mxu0 0
    %6141 = vmatprep.subr.bf16.mxu0 0
    %6142 = vmatpush1.bf16.msra.mxu0 0
    %6143 = vmatprep.subr.bf16.mxu0 0
    %6144 = vmatpush1.bf16.msra.mxu0 0
    %6145 = vmatprep.subr.bf16.mxu0 0
    %6146 = vmatpush1.bf16.msra.mxu0 0
    %6147 = vmatprep.subr.bf16.mxu0 0
    %6148 = vmatpush1.bf16.msra.mxu0 0
    %6149 = vmatprep.subr.bf16.mxu0 0
    %6150 = vmatpush1.bf16.msra.mxu0 0
    %6151 = vmatprep.subr.bf16.mxu0 0
    %6152 = vmatpush1.bf16.msra.mxu0 0
    %6153 = vmatprep.subr.bf16.mxu0 0
    %6154 = vmatpush1.bf16.msra.mxu0 0
    %6155 = vmatprep.mubr.bf16.mxu0 0
    %6156 = vmatmul.mubr.bf16.gmra.mrb[0].mxu0 %v6121
    %v6157 = vpop.f32.mrb[0].mxu0
    %v6158 = vadd.f32 0.0, %v6157
    %v6159 = vpop.f32.mrb[0].mxu0
    %v6160 = vpop.f32.mrb[0].mxu0
    %v6161 = vpop.f32.mrb[0].mxu0
    %6162 = vdwg.mxu0
    %6164 = vrot.lane.b32.xlu0 %v5900, 32
    %v6165 = vpop.permute.xlu0 %6164
    %6168 = vrot.lane.b32.xlu0 %v5943, 64
    %v6169 = vpop.permute.xlu0 %6168
    %6172 = vrot.lane.b32.xlu0 %v5986, 96
    %v6173 = vpop.permute.xlu0 %6172
    %v6175 = vsel %vm728, %v5857, %v6165
    %v6176 = vsel %vm1576, %v6175, %v6169
    %v6177 = vsel %vm1578, %v6176, %v6173
    %6179 = vrot.lane.b32.xlu0 %v6072, 32
    %v6180 = vpop.permute.xlu0 %6179
    %6183 = vrot.lane.b32.xlu0 %v6115, 64
    %v6184 = vpop.permute.xlu0 %6183
    %6187 = vrot.lane.b32.xlu0 %v6158, 96
    %v6188 = vpop.permute.xlu0 %6187
    %v6190 = vsel %vm728, %v6029, %v6180
    %v6191 = vsel %vm1576, %v6190, %v6184
    %v6192 = vsel %vm1578, %v6191, %v6188
    %v6193 = vpack.c.bf16 %v6192, %v6177
    %s6194 = scalar_lea.vmem [#allocation13], 64
    %v6195 = vld [vmem:[%s6194] sm:$0xf]
    %v6196 = vld [vmem:[%s6194 + $0x4] sm:$0xf]
    %v6197 = vld [vmem:[%s6194 + $0x8] sm:$0xf]
    %v6198 = vld [vmem:[%s6194 + $0xc] sm:$0xf]
    %v6199 = vld [vmem:[%s6194 + $0x10] sm:$0xf]
    %v6200 = vld [vmem:[%s6194 + $0x14] sm:$0xf]
    %v6201 = vld [vmem:[%s6194 + $0x18] sm:$0xf]
    %v6202 = vld [vmem:[%s6194 + $0x1c] sm:$0xf]
    %v6203 = vld [vmem:[%s6194 + $0x20] sm:$0xf]
    %v6204 = vld [vmem:[%s6194 + $0x24] sm:$0xf]
    %v6205 = vld [vmem:[%s6194 + $0x28] sm:$0xf]
    %v6206 = vld [vmem:[%s6194 + $0x2c] sm:$0xf]
    %v6207 = vld [vmem:[%s6194 + $0x30] sm:$0xf]
    %v6208 = vld [vmem:[%s6194 + $0x34] sm:$0xf]
    %v6209 = vld [vmem:[%s6194 + $0x38] sm:$0xf]
    %v6210 = vld [vmem:[%s6194 + $0x3c] sm:$0xf]
    %s6211 = scalar_lea.vmem %s16, 1
    %v6212 = vld [vmem:[%s6211] sm:$0x1]
    %v6214 = vlaneseq
    %v6215 = vshrl.u32 %v6214, 7
    %v6216 = vsub.s32 0, %v6215
    %v6217 = vrot.slane %v6212, %v6216
    %v6235 = vunpack.c.l.b16 %v6195
    %v6236 = vunpack.c.l.b16 %v6196
    %v6237 = vunpack.c.l.b16 %v6197
    %v6238 = vunpack.c.l.b16 %v6198
    %v6239 = vunpack.c.l.b16 %v6199
    %v6240 = vunpack.c.l.b16 %v6200
    %v6241 = vunpack.c.l.b16 %v6201
    %v6242 = vunpack.c.l.b16 %v6202
    %v6243 = vunpack.c.l.b16 %v6203
    %v6244 = vunpack.c.l.b16 %v6204
    %v6245 = vunpack.c.l.b16 %v6205
    %v6246 = vunpack.c.l.b16 %v6206
    %v6247 = vunpack.c.l.b16 %v6207
    %v6248 = vunpack.c.l.b16 %v6208
    %v6249 = vunpack.c.l.b16 %v6209
    %v6250 = vunpack.c.l.b16 %v6210
    %v6251 = vpack.c.b16 %v6236, %v6235
    %v6252 = vpack.c.b16 %v6238, %v6237
    %v6253 = vpack.c.b16 %v6240, %v6239
    %v6254 = vpack.c.b16 %v6242, %v6241
    %v6255 = vpack.c.b16 %v6244, %v6243
    %v6256 = vpack.c.b16 %v6246, %v6245
    %v6257 = vpack.c.b16 %v6248, %v6247
    %v6258 = vpack.c.b16 %v6250, %v6249
    %6267 = vmatprep.subr.bf16.mxu0 0
    %6268 = vmatpush1.bf16.xpose.msra.mxu0 %v6251
    %6269 = vmatprep.subr.bf16.mxu0 0
    %6270 = vmatpush1.bf16.xpose.msra.mxu0 %v6252
    %6271 = vmatprep.subr.bf16.mxu0 0
    %6272 = vmatpush1.bf16.xpose.msra.mxu0 %v6253
    %6273 = vmatprep.subr.bf16.mxu0 0
    %6274 = vmatpush1.bf16.xpose.msra.mxu0 %v6254
    %6275 = vmatprep.subr.bf16.mxu0 0
    %6276 = vmatpush1.bf16.xpose.msra.mxu0 %v6255
    %6277 = vmatprep.subr.bf16.mxu0 0
    %6278 = vmatpush1.bf16.xpose.msra.mxu0 %v6256
    %6279 = vmatprep.subr.bf16.mxu0 0
    %6280 = vmatpush1.bf16.xpose.msra.mxu0 %v6257
    %6281 = vmatprep.subr.bf16.mxu0 0
    %6282 = vmatpush1.bf16.xpose.msra.mxu0 %v6258
    %6283 = vmatprep.subr.bf16.mxu0 0
    %6284 = vmatpush1.bf16.xpose.msra.mxu0 0
    %6285 = vmatprep.subr.bf16.mxu0 0
    %6286 = vmatpush1.bf16.xpose.msra.mxu0 0
    %6287 = vmatprep.subr.bf16.mxu0 0
    %6288 = vmatpush1.bf16.xpose.msra.mxu0 0
    %6289 = vmatprep.subr.bf16.mxu0 0
    %6290 = vmatpush1.bf16.xpose.msra.mxu0 0
    %6291 = vmatprep.subr.bf16.mxu0 0
    %6292 = vmatpush1.bf16.xpose.msra.mxu0 0
    %6293 = vmatprep.subr.bf16.mxu0 0
    %6294 = vmatpush1.bf16.xpose.msra.mxu0 0
    %6295 = vmatprep.subr.bf16.mxu0 0
    %6296 = vmatpush1.bf16.xpose.msra.mxu0 0
    %6297 = vmatprep.subr.bf16.mxu0 0
    %6298 = vmatpush1.bf16.xpose.msra.mxu0 0
    %6299 = vmatprep.mubr.bf16.mxu0 0
    %6300 = vmatmul.mubr.bf16.gmra.mrb[0].mxu0 %v6193
    %v6301 = vpop.f32.mrb[0].mxu0
    %v6302 = vadd.f32 %v6217, %v6301
    %v6303 = vpop.f32.mrb[0].mxu0
    %v6304 = vpop.f32.mrb[0].mxu0
    %v6305 = vadd.f32 %v6217, %v6304
    %v6306 = vpop.f32.mrb[0].mxu0
    %6307 = vdwg.mxu0
    %v6308 = vadd.f32 %v6302, %v4919
    %v6309 = vadd.f32 %v6305, %v4920
    %s6310 = scalar_lea.vmem %s17, 1
    %v6311 = vld [vmem:[%s6310] sm:$0x1]
    %s6312 = scalar_lea.vmem [#allocation14], 1
    %v6313 = vld [vmem:[%s6312] sm:$0x1]
    %6314 = vadd.xlane.f32.xlu0 %v6308
    %v6315 = vpop.xlane.xlu0 %6314
    %6316 = vadd.xlane.f32.xlu0 %v6309
    %v6317 = vpop.xlane.xlu0 %6316
    %v6318 = vmul.f32 %v6315, 0.03125
    %v6319 = vmul.f32 %v6317, 0.03125
    %v6320 = vmul.f32 %v6308, %v6308
    %v6321 = vmul.f32 %v6309, %v6309
    %6322 = vadd.xlane.f32.xlu0 %v6320
    %v6323 = vpop.xlane.xlu0 %6322
    %6324 = vadd.xlane.f32.xlu0 %v6321
    %v6325 = vpop.xlane.xlu0 %6324
    %v6326 = vmul.f32 %v6323, 0.03125
    %v6327 = vmul.f32 %v6325, 0.03125
    %v6328 = vmul.f32 %v6318, %v6318
    %v6329 = vmul.f32 %v6319, %v6319
    %v6330 = vsub.f32 %v6326, %v6328
    %v6331 = vsub.f32 %v6327, %v6329
    %v6332 = vsub.f32 %v6308, %v6318
    %v6333 = vsub.f32 %v6309, %v6319
    %v6334 = vadd.f32 %v6330, 1e-05
    %v6335 = vadd.f32 %v6331, 1e-05
    %v6336 = vrsqrt.pop %v6334
    %v6337 = vrsqrt.pop %v6335
    %v6338 = vmul.f32 %v6332, %v6336
    %v6339 = vmul.f32 %v6333, %v6337
    %v6341 = vlaneseq
    %v6342 = vshrl.u32 %v6341, 7
    %v6343 = vsub.s32 0, %v6342
    %v6344 = vrot.slane %v6311, %v6343
    %v6346 = vmul.f32 %v6338, %v6344
    %v6347 = vmul.f32 %v6339, %v6344
    %v6349 = vlaneseq
    %v6350 = vshrl.u32 %v6349, 7
    %v6351 = vsub.s32 0, %v6350
    %v6352 = vrot.slane %v6313, %v6351
    %v6354 = vadd.f32 %v6346, %v6352
    %v6355 = vadd.f32 %v6347, %v6352
    %v6356 = vpack.c.bf16 %v6355, %v6354
    %s6357 = scalar_lea.vmem [#allocation16], 64
    %v6358 = vld [vmem:[%s6357] sm:$0xf]
    %v6359 = vld [vmem:[%s6357 + $0x4] sm:$0xf]
    %v6360 = vld [vmem:[%s6357 + $0x8] sm:$0xf]
    %v6361 = vld [vmem:[%s6357 + $0xc] sm:$0xf]
    %v6362 = vld [vmem:[%s6357 + $0x10] sm:$0xf]
    %v6363 = vld [vmem:[%s6357 + $0x14] sm:$0xf]
    %v6364 = vld [vmem:[%s6357 + $0x18] sm:$0xf]
    %v6365 = vld [vmem:[%s6357 + $0x1c] sm:$0xf]
    %v6366 = vld [vmem:[%s6357 + $0x20] sm:$0xf]
    %v6367 = vld [vmem:[%s6357 + $0x24] sm:$0xf]
    %v6368 = vld [vmem:[%s6357 + $0x28] sm:$0xf]
    %v6369 = vld [vmem:[%s6357 + $0x2c] sm:$0xf]
    %v6370 = vld [vmem:[%s6357 + $0x30] sm:$0xf]
    %v6371 = vld [vmem:[%s6357 + $0x34] sm:$0xf]
    %v6372 = vld [vmem:[%s6357 + $0x38] sm:$0xf]
    %v6373 = vld [vmem:[%s6357 + $0x3c] sm:$0xf]
    %s6374 = scalar_lea.vmem [#allocation17], 1
    %v6375 = vld [vmem:[%s6374] sm:$0x1]
    %v6377 = vlaneseq
    %v6378 = vshrl.u32 %v6377, 7
    %v6379 = vsub.s32 0, %v6378
    %v6380 = vrot.slane %v6375, %v6379
    %v6398 = vunpack.c.l.b16 %v6358
    %v6399 = vunpack.c.l.b16 %v6359
    %v6400 = vunpack.c.l.b16 %v6360
    %v6401 = vunpack.c.l.b16 %v6361
    %v6402 = vunpack.c.l.b16 %v6362
    %v6403 = vunpack.c.l.b16 %v6363
    %v6404 = vunpack.c.l.b16 %v6364
    %v6405 = vunpack.c.l.b16 %v6365
    %v6406 = vunpack.c.l.b16 %v6366
    %v6407 = vunpack.c.l.b16 %v6367
    %v6408 = vunpack.c.l.b16 %v6368
    %v6409 = vunpack.c.l.b16 %v6369
    %v6410 = vunpack.c.l.b16 %v6370
    %v6411 = vunpack.c.l.b16 %v6371
    %v6412 = vunpack.c.l.b16 %v6372
    %v6413 = vunpack.c.l.b16 %v6373
    %v6414 = vpack.c.b16 %v6399, %v6398
    %v6415 = vpack.c.b16 %v6401, %v6400
    %v6416 = vpack.c.b16 %v6403, %v6402
    %v6417 = vpack.c.b16 %v6405, %v6404
    %v6418 = vpack.c.b16 %v6407, %v6406
    %v6419 = vpack.c.b16 %v6409, %v6408
    %v6420 = vpack.c.b16 %v6411, %v6410
    %v6421 = vpack.c.b16 %v6413, %v6412
    %6430 = vmatprep.subr.bf16.mxu0 0
    %6431 = vmatpush1.bf16.xpose.msra.mxu0 %v6414
    %6432 = vmatprep.subr.bf16.mxu0 0
    %6433 = vmatpush1.bf16.xpose.msra.mxu0 %v6415
    %6434 = vmatprep.subr.bf16.mxu0 0
    %6435 = vmatpush1.bf16.xpose.msra.mxu0 %v6416
    %6436 = vmatprep.subr.bf16.mxu0 0
    %6437 = vmatpush1.bf16.xpose.msra.mxu0 %v6417
    %6438 = vmatprep.subr.bf16.mxu0 0
    %6439 = vmatpush1.bf16.xpose.msra.mxu0 %v6418
    %6440 = vmatprep.subr.bf16.mxu0 0
    %6441 = vmatpush1.bf16.xpose.msra.mxu0 %v6419
    %6442 = vmatprep.subr.bf16.mxu0 0
    %6443 = vmatpush1.bf16.xpose.msra.mxu0 %v6420
    %6444 = vmatprep.subr.bf16.mxu0 0
    %6445 = vmatpush1.bf16.xpose.msra.mxu0 %v6421
    %6446 = vmatprep.subr.bf16.mxu0 0
    %6447 = vmatpush1.bf16.xpose.msra.mxu0 0
    %6448 = vmatprep.subr.bf16.mxu0 0
    %6449 = vmatpush1.bf16.xpose.msra.mxu0 0
    %6450 = vmatprep.subr.bf16.mxu0 0
    %6451 = vmatpush1.bf16.xpose.msra.mxu0 0
    %6452 = vmatprep.subr.bf16.mxu0 0
    %6453 = vmatpush1.bf16.xpose.msra.mxu0 0
    %6454 = vmatprep.subr.bf16.mxu0 0
    %6455 = vmatpush1.bf16.xpose.msra.mxu0 0
    %6456 = vmatprep.subr.bf16.mxu0 0
    %6457 = vmatpush1.bf16.xpose.msra.mxu0 0
    %6458 = vmatprep.subr.bf16.mxu0 0
    %6459 = vmatpush1.bf16.xpose.msra.mxu0 0
    %6460 = vmatprep.subr.bf16.mxu0 0
    %6461 = vmatpush1.bf16.xpose.msra.mxu0 0
    %6462 = vmatprep.mubr.bf16.mxu0 0
    %6463 = vmatmul.mubr.bf16.gmra.mrb[0].mxu0 %v6356
    %v6464 = vpop.f32.mrb[0].mxu0
    %v6465 = vadd.f32 %v6380, %v6464
    %v6466 = vpop.f32.mrb[0].mxu0
    %v6467 = vpop.f32.mrb[0].mxu0
    %v6468 = vadd.f32 %v6380, %v6467
    %v6469 = vpop.f32.mrb[0].mxu0
    %6470 = vdwg.mxu0
    %v6471 = vmax.f32 %v6465, 0.0
    %v6472 = vmax.f32 %v6468, 0.0
    %v6473 = vpack.c.bf16 %v6472, %v6471
    %s6474 = scalar_lea.vmem [#allocation19], 64
    %v6475 = vld [vmem:[%s6474] sm:$0xf]
    %v6476 = vld [vmem:[%s6474 + $0x4] sm:$0xf]
    %v6477 = vld [vmem:[%s6474 + $0x8] sm:$0xf]
    %v6478 = vld [vmem:[%s6474 + $0xc] sm:$0xf]
    %v6479 = vld [vmem:[%s6474 + $0x10] sm:$0xf]
    %v6480 = vld [vmem:[%s6474 + $0x14] sm:$0xf]
    %v6481 = vld [vmem:[%s6474 + $0x18] sm:$0xf]
    %v6482 = vld [vmem:[%s6474 + $0x1c] sm:$0xf]
    %v6483 = vld [vmem:[%s6474 + $0x20] sm:$0xf]
    %v6484 = vld [vmem:[%s6474 + $0x24] sm:$0xf]
    %v6485 = vld [vmem:[%s6474 + $0x28] sm:$0xf]
    %v6486 = vld [vmem:[%s6474 + $0x2c] sm:$0xf]
    %v6487 = vld [vmem:[%s6474 + $0x30] sm:$0xf]
    %v6488 = vld [vmem:[%s6474 + $0x34] sm:$0xf]
    %v6489 = vld [vmem:[%s6474 + $0x38] sm:$0xf]
    %v6490 = vld [vmem:[%s6474 + $0x3c] sm:$0xf]
    %s6491 = scalar_lea.vmem [#allocation20], 1
    %v6492 = vld [vmem:[%s6491] sm:$0x1]
    %v6494 = vlaneseq
    %v6495 = vshrl.u32 %v6494, 7
    %v6496 = vsub.s32 0, %v6495
    %v6497 = vrot.slane %v6492, %v6496
    %v6515 = vunpack.c.l.b16 %v6475
    %v6516 = vunpack.c.l.b16 %v6476
    %v6517 = vunpack.c.l.b16 %v6477
    %v6518 = vunpack.c.l.b16 %v6478
    %v6519 = vunpack.c.l.b16 %v6479
    %v6520 = vunpack.c.l.b16 %v6480
    %v6521 = vunpack.c.l.b16 %v6481
    %v6522 = vunpack.c.l.b16 %v6482
    %v6523 = vunpack.c.l.b16 %v6483
    %v6524 = vunpack.c.l.b16 %v6484
    %v6525 = vunpack.c.l.b16 %v6485
    %v6526 = vunpack.c.l.b16 %v6486
    %v6527 = vunpack.c.l.b16 %v6487
    %v6528 = vunpack.c.l.b16 %v6488
    %v6529 = vunpack.c.l.b16 %v6489
    %v6530 = vunpack.c.l.b16 %v6490
    %v6531 = vpack.c.b16 %v6516, %v6515
    %v6532 = vpack.c.b16 %v6518, %v6517
    %v6533 = vpack.c.b16 %v6520, %v6519
    %v6534 = vpack.c.b16 %v6522, %v6521
    %v6535 = vpack.c.b16 %v6524, %v6523
    %v6536 = vpack.c.b16 %v6526, %v6525
    %v6537 = vpack.c.b16 %v6528, %v6527
    %v6538 = vpack.c.b16 %v6530, %v6529
    %6547 = vmatprep.subr.bf16.mxu0 0
    %6548 = vmatpush1.bf16.xpose.msra.mxu0 %v6531
    %6549 = vmatprep.subr.bf16.mxu0 0
    %6550 = vmatpush1.bf16.xpose.msra.mxu0 %v6532
    %6551 = vmatprep.subr.bf16.mxu0 0
    %6552 = vmatpush1.bf16.xpose.msra.mxu0 %v6533
    %6553 = vmatprep.subr.bf16.mxu0 0
    %6554 = vmatpush1.bf16.xpose.msra.mxu0 %v6534
    %6555 = vmatprep.subr.bf16.mxu0 0
    %6556 = vmatpush1.bf16.xpose.msra.mxu0 %v6535
    %6557 = vmatprep.subr.bf16.mxu0 0
    %6558 = vmatpush1.bf16.xpose.msra.mxu0 %v6536
    %6559 = vmatprep.subr.bf16.mxu0 0
    %6560 = vmatpush1.bf16.xpose.msra.mxu0 %v6537
    %6561 = vmatprep.subr.bf16.mxu0 0
    %6562 = vmatpush1.bf16.xpose.msra.mxu0 %v6538
    %6563 = vmatprep.subr.bf16.mxu0 0
    %6564 = vmatpush1.bf16.xpose.msra.mxu0 0
    %6565 = vmatprep.subr.bf16.mxu0 0
    %6566 = vmatpush1.bf16.xpose.msra.mxu0 0
    %6567 = vmatprep.subr.bf16.mxu0 0
    %6568 = vmatpush1.bf16.xpose.msra.mxu0 0
    %6569 = vmatprep.subr.bf16.mxu0 0
    %6570 = vmatpush1.bf16.xpose.msra.mxu0 0
    %6571 = vmatprep.subr.bf16.mxu0 0
    %6572 = vmatpush1.bf16.xpose.msra.mxu0 0
    %6573 = vmatprep.subr.bf16.mxu0 0
    %6574 = vmatpush1.bf16.xpose.msra.mxu0 0
    %6575 = vmatprep.subr.bf16.mxu0 0
    %6576 = vmatpush1.bf16.xpose.msra.mxu0 0
    %6577 = vmatprep.subr.bf16.mxu0 0
    %6578 = vmatpush1.bf16.xpose.msra.mxu0 0
    %6579 = vmatprep.mubr.bf16.mxu0 0
    %6580 = vmatmul.mubr.bf16.gmra.mrb[0].mxu0 %v6473
    %v6581 = vpop.f32.mrb[0].mxu0
    %v6582 = vadd.f32 %v6497, %v6581
    %v6583 = vpop.f32.mrb[0].mxu0
    %v6584 = vpop.f32.mrb[0].mxu0
    %v6585 = vadd.f32 %v6497, %v6584
    %v6586 = vpop.f32.mrb[0].mxu0
    %6587 = vdwg.mxu0
    %v6588 = vadd.f32 %v6354, %v6582
    %v6589 = vadd.f32 %v6355, %v6585
    %s6590 = scalar_lea.vmem [#allocation22], 1
    %v6591 = vld [vmem:[%s6590] sm:$0x1]
    %s6592 = scalar_lea.vmem [#allocation23], 1
    %v6593 = vld [vmem:[%s6592] sm:$0x1]
    %6594 = vadd.xlane.f32.xlu0 %v6588
    %v6595 = vpop.xlane.xlu0 %6594
    %6596 = vadd.xlane.f32.xlu0 %v6589
    %v6597 = vpop.xlane.xlu0 %6596
    %v6598 = vmul.f32 %v6595, 0.03125
    %v6599 = vmul.f32 %v6597, 0.03125
    %v6600 = vmul.f32 %v6588, %v6588
    %v6601 = vmul.f32 %v6589, %v6589
    %6602 = vadd.xlane.f32.xlu0 %v6600
    %v6603 = vpop.xlane.xlu0 %6602
    %6604 = vadd.xlane.f32.xlu0 %v6601
    %v6605 = vpop.xlane.xlu0 %6604
    %v6606 = vmul.f32 %v6603, 0.03125
    %v6607 = vmul.f32 %v6605, 0.03125
    %v6608 = vmul.f32 %v6598, %v6598
    %v6609 = vmul.f32 %v6599, %v6599
    %v6610 = vsub.f32 %v6606, %v6608
    %v6611 = vsub.f32 %v6607, %v6609
    %v6612 = vsub.f32 %v6588, %v6598
    %v6613 = vsub.f32 %v6589, %v6599
    %v6614 = vadd.f32 %v6610, 1e-05
    %v6615 = vadd.f32 %v6611, 1e-05
    %v6616 = vrsqrt.pop %v6614
    %v6617 = vrsqrt.pop %v6615
    %v6618 = vmul.f32 %v6612, %v6616
    %v6619 = vmul.f32 %v6613, %v6617
    %v6621 = vlaneseq
    %v6622 = vshrl.u32 %v6621, 7
    %v6623 = vsub.s32 0, %v6622
    %v6624 = vrot.slane %v6591, %v6623
    %v6626 = vmul.f32 %v6618, %v6624
    %v6627 = vmul.f32 %v6619, %v6624
    %v6629 = vlaneseq
    %v6630 = vshrl.u32 %v6629, 7
    %v6631 = vsub.s32 0, %v6630
    %v6632 = vrot.slane %v6593, %v6631
    %v6634 = vadd.f32 %v6626, %v6632
    %v6635 = vadd.f32 %v6627, %v6632
    %v6636 = vpack.c.bf16 %v6635, %v6634
    %v6637 = vld [vmem:[%s25] sm:$0xf]
    %v6638 = vld [vmem:[%s25 + $0x4] sm:$0xf]
    %v6639 = vld [vmem:[%s25 + $0x8] sm:$0xf]
    %v6640 = vld [vmem:[%s25 + $0xc] sm:$0xf]
    %v6641 = vld [vmem:[%s25 + $0x10] sm:$0xf]
    %v6642 = vld [vmem:[%s25 + $0x14] sm:$0xf]
    %v6643 = vld [vmem:[%s25 + $0x18] sm:$0xf]
    %v6644 = vld [vmem:[%s25 + $0x1c] sm:$0xf]
    %v6645 = vld [vmem:[%s25 + $0x20] sm:$0xf]
    %v6646 = vld [vmem:[%s25 + $0x24] sm:$0xf]
    %v6647 = vld [vmem:[%s25 + $0x28] sm:$0xf]
    %v6648 = vld [vmem:[%s25 + $0x2c] sm:$0xf]
    %v6649 = vld [vmem:[%s25 + $0x30] sm:$0xf]
    %v6650 = vld [vmem:[%s25 + $0x34] sm:$0xf]
    %v6651 = vld [vmem:[%s25 + $0x38] sm:$0xf]
    %v6652 = vld [vmem:[%s25 + $0x3c] sm:$0xf]
    %v6653 = vld [vmem:[%s26] sm:$0x1]
    %v6655 = vlaneseq
    %v6656 = vshrl.u32 %v6655, 7
    %v6657 = vsub.s32 0, %v6656
    %v6658 = vrot.slane %v6653, %v6657
    %v6676 = vunpack.c.l.b16 %v6637
    %v6677 = vunpack.c.l.b16 %v6638
    %v6678 = vunpack.c.l.b16 %v6639
    %v6679 = vunpack.c.l.b16 %v6640
    %v6680 = vunpack.c.l.b16 %v6641
    %v6681 = vunpack.c.l.b16 %v6642
    %v6682 = vunpack.c.l.b16 %v6643
    %v6683 = vunpack.c.l.b16 %v6644
    %v6684 = vunpack.c.l.b16 %v6645
    %v6685 = vunpack.c.l.b16 %v6646
    %v6686 = vunpack.c.l.b16 %v6647
    %v6687 = vunpack.c.l.b16 %v6648
    %v6688 = vunpack.c.l.b16 %v6649
    %v6689 = vunpack.c.l.b16 %v6650
    %v6690 = vunpack.c.l.b16 %v6651
    %v6691 = vunpack.c.l.b16 %v6652
    %v6692 = vpack.c.b16 %v6677, %v6676
    %v6693 = vpack.c.b16 %v6679, %v6678
    %v6694 = vpack.c.b16 %v6681, %v6680
    %v6695 = vpack.c.b16 %v6683, %v6682
    %v6696 = vpack.c.b16 %v6685, %v6684
    %v6697 = vpack.c.b16 %v6687, %v6686
    %v6698 = vpack.c.b16 %v6689, %v6688
    %v6699 = vpack.c.b16 %v6691, %v6690
    %6708 = vmatprep.subr.bf16.mxu0 0
    %6709 = vmatpush1.bf16.xpose.msra.mxu0 %v6692
    %6710 = vmatprep.subr.bf16.mxu0 0
    %6711 = vmatpush1.bf16.xpose.msra.mxu0 %v6693
    %6712 = vmatprep.subr.bf16.mxu0 0
    %6713 = vmatpush1.bf16.xpose.msra.mxu0 %v6694
    %6714 = vmatprep.subr.bf16.mxu0 0
    %6715 = vmatpush1.bf16.xpose.msra.mxu0 %v6695
    %6716 = vmatprep.subr.bf16.mxu0 0
    %6717 = vmatpush1.bf16.xpose.msra.mxu0 %v6696
    %6718 = vmatprep.subr.bf16.mxu0 0
    %6719 = vmatpush1.bf16.xpose.msra.mxu0 %v6697
    %6720 = vmatprep.subr.bf16.mxu0 0
    %6721 = vmatpush1.bf16.xpose.msra.mxu0 %v6698
    %6722 = vmatprep.subr.bf16.mxu0 0
    %6723 = vmatpush1.bf16.xpose.msra.mxu0 %v6699
    %6724 = vmatprep.subr.bf16.mxu0 0
    %6725 = vmatpush1.bf16.xpose.msra.mxu0 0
    %6726 = vmatprep.subr.bf16.mxu0 0
    %6727 = vmatpush1.bf16.xpose.msra.mxu0 0
    %6728 = vmatprep.subr.bf16.mxu0 0
    %6729 = vmatpush1.bf16.xpose.msra.mxu0 0
    %6730 = vmatprep.subr.bf16.mxu0 0
    %6731 = vmatpush1.bf16.xpose.msra.mxu0 0
    %6732 = vmatprep.subr.bf16.mxu0 0
    %6733 = vmatpush1.bf16.xpose.msra.mxu0 0
    %6734 = vmatprep.subr.bf16.mxu0 0
    %6735 = vmatpush1.bf16.xpose.msra.mxu0 0
    %6736 = vmatprep.subr.bf16.mxu0 0
    %6737 = vmatpush1.bf16.xpose.msra.mxu0 0
    %6738 = vmatprep.subr.bf16.mxu0 0
    %6739 = vmatpush1.bf16.xpose.msra.mxu0 0
    %6740 = vmatprep.mubr.bf16.mxu0 0
    %6741 = vmatmul.mubr.bf16.gmra.mrb[0].mxu0 %v6636
    %v6742 = vpop.f32.mrb[0].mxu0
    %v6743 = vadd.f32 %v6658, %v6742
    %v6744 = vpop.f32.mrb[0].mxu0
    %v6745 = vpop.f32.mrb[0].mxu0
    %v6746 = vadd.f32 %v6658, %v6745
    %v6747 = vpop.f32.mrb[0].mxu0
    %6748 = vdwg.mxu0
    %6750 = vset.pattern.permute.xlu0 0
    %6751 = vperm.xlu0 %6750, %v300
    %v6752 = vpop.permute.xlu0 %6751
    %6755 = vset.pattern.permute.xlu0 0
    %6756 = vperm.xlu0 %6755, %v301
    %v6757 = vpop.permute.xlu0 %6756
    %v6759 = vmul.f32 %v6743, %v6752
    %v6760 = vmul.f32 %v6746, %v6757
    %6761 = vst [vmem:[#allocation25] sm:$0xff] %v6759
    %6762 = vst [vmem:[#allocation25 + $0x8] sm:$0xff] %v6760
    // Predicated region
    $region166: #{tpu_custom_call.1} parent=1 // pred_check
      _
    $region167: #{tpu_custom_call.1} parent=1 // pred_check_branch
      %6764 = sbr.rel (0) target = $region169
    $region168: #{tpu_custom_call.1} parent=1 // pred_region
      %s6766 = ssub.s32 256, 256
      %6767 = vsyncadd [#allocation4], %s6766
      %s6768 = sshll.u32 [#allocation25], 4
      %s6769 = int_to_ptr.vmem [resolvable:$true] %s6768
      %6774 = dma.vmem_to_hbm [thread:$0]  %s6769, 256, %s27, [#allocation4], 128, 128, 8
    $region169: #{tpu_custom_call.1} parent=1 // pred_fallthru
      _
    // Predicated region
    $region170: #{tpu_custom_call.1} parent=1 // pred_check
      _
    $region171: #{tpu_custom_call.1} parent=1 // pred_check_branch
      %6776 = sbr.rel (0) target = $region173
    $region172: #{tpu_custom_call.1} parent=1 // pred_region
      %6777 = dma.done [#allocation4], 256
    $region173: #{tpu_custom_call.1} parent=1 // pred_fallthru
      _
    %6778 = vsyncpa [#allocation3], 1
    %6779 = vsyncpa [#allocation6], 1
    %6780 = vsyncpa [#allocation9], 1
    %6781 = vsyncpa [#allocation12], 1
    %6782 = vsyncpa [#allocation15], 1
    %6783 = vsyncpa [#allocation18], 1
    %6784 = vsyncpa [#allocation21], 1
    %6785 = vsyncpa [#allocation24], 1
    %6786 = vsyncpa [#allocation4], 1

</llo_original>
